<compile_context>
chip_gen: v7x
topology: tpu7x:2x2x1
jax: 0.10.0
libtpu: 0.0.40
codegen_flags: <defaults>
</compile_context>

<pallas_src>
import jax
import jax.numpy as jnp
from jax.experimental import pallas as pl
from jax.experimental.pallas import tpu as pltpu

EPS = 1e-5                        # nn.BatchNorm2d default eps
VMEM_LIMIT = 48 * 1024 * 1024     # explicit scoped-VMEM budget (< v7x 64 MiB physical)


# ----------------------------- kernels ------------------------------------ #

def conv_stats_kernel(p_ref, w_ref, y_ref, sum_ref, sumsq_ref):
    """Pass 1: conv-as-matmul on the MXU for one row tile + per-tile BN stats.

    p_ref:   (tm, P*9*Cin) bf16 lane-packed im2col tile
    w_ref:   (P*9*Cin, P*Cout) bf16 (block-diagonal) weights, resident
    y_ref:   (tm, P*Cout) bf16 pre-BN conv output tile (lane-dense stores)
    sum_ref, sumsq_ref: (1, 1, P*Cout) f32 per-tile partial statistics
                        (distinct block per grid step -> grid is "parallel").
    """
    y = jnp.dot(p_ref[...], w_ref[...], preferred_element_type=jnp.float32)
    y_ref[...] = y.astype(y_ref.dtype)
    sum_ref[...] = jnp.sum(y, axis=0, keepdims=True).reshape(1, 1, -1)
    sumsq_ref[...] = jnp.sum(y * y, axis=0, keepdims=True).reshape(1, 1, -1)


def bn_relu_kernel(y_ref, scale_ref, shift_ref, o_ref):
    """Pass 2: folded BN affine (single FMA) + ReLU, bf16 in / bf16 out."""
    y = y_ref[...].astype(jnp.float32)
    o_ref[...] = jnp.maximum(y * scale_ref[...] + shift_ref[...], 0.0).astype(o_ref.dtype)


# ------------------------------ glue --------------------------------------- #

def im2col_stride2(x_nhwc):
    """3x3 / stride 2 / pad 1 patch extraction (plain JAX glue, bf16 input)."""
    n, h, w, c = x_nhwc.shape
    ho = (h - 1) // 2 + 1
    wo = (w - 1) // 2 + 1
    xp = jnp.pad(x_nhwc, ((0, 0), (1, 1), (1, 1), (0, 0)))
    cols = []
    for dh in range(3):
        for dw in range(3):
            cols.append(xp[:, dh:dh + 2 * ho:2, dw:dw + 2 * wo:2, :])
    p = jnp.stack(cols, axis=3)                 # (n, ho, wo, 9, c)
    return p.reshape(n * ho * wo, 9 * c), (n, ho, wo)


def _pick_tile_rows(m_rows, target):
    """Pass-1 row tile (packed rows): multiple of 16 (bf16 sublanes), <= target."""
    target = max(16, (target // 16) * 16)
    if m_rows <= target:
        return max(16, ((m_rows + 15) // 16) * 16)   # single (padded) tile
    return target                                     # tail handled by zero-padding


def _scale_tile(base, total, target):
    """Largest multiple of `base` that divides `total` and is <= target."""
    t = base
    while 2 * t <= target and total % (2 * t) == 0:
        t *= 2
    return t


def conv_bn_relu(x_nhwc, w_mat, gamma, beta, *, block_m=512, block_m_bn=2048):
    """One HRNet stage: conv3x3/s2/p1 + train-mode BN + ReLU.

    x_nhwc: NHWC activation (cast to bf16 here).
    w_mat:  pre-packed [P*9*Cin, P*Cout] bf16 weight matrix (block-diag if P>1).
    Returns NHWC bf16 activation.
    """
    cout = gamma.shape[0]
    pcout = w_mat.shape[1]
    pack = pcout // cout                               # lane-packing factor (2 for Cout=64)
    x_nhwc = x_nhwc.astype(jnp.bfloat16)               # bf16 BEFORE im2col (halves patch traffic)
    patches, (n, ho, wo) = im2col_stride2(x_nhwc)
    m, k = patches.shape
    pk = pack * k
    assert w_mat.shape[0] == pk

    # Row tiling over packed rows; pad with zero rows (zero rows are exact
    # no-ops for the BN sums since they divide by the true M).
    mr = -(-m // pack)
    tm = _pick_tile_rows(mr, block_m)
    mr_pad = -(-mr // tm) * tm
    m_pad = mr_pad * pack
    if m_pad != m:
        patches = jnp.pad(patches, ((0, m_pad - m), (0, 0)))
    patches = patches.reshape(mr_pad, pk)              # contiguous (free) reshape
    grid = (mr_pad // tm,)

    # ---- Pass 1: conv matmul tiles + per-tile partial BN statistics ---- #
    y, psum, psumsq = pl.pallas_call(
        conv_stats_kernel,
        out_shape=(
            jax.ShapeDtypeStruct((mr_pad, pcout), jnp.bfloat16),
            jax.ShapeDtypeStruct((grid[0], 1, pcout), jnp.float32),
            jax.ShapeDtypeStruct((grid[0], 1, pcout), jnp.float32),
        ),
        grid_spec=pltpu.PrefetchScalarGridSpec(
            num_scalar_prefetch=0,
            grid=grid,
            in_specs=[
                pl.BlockSpec((tm, pk), lambda i: (i, 0)),
                pl.BlockSpec((pk, pcout), lambda i: (0, 0)),
            ],
            out_specs=(
                pl.BlockSpec((tm, pcout), lambda i: (i, 0)),
                pl.BlockSpec((1, 1, pcout), lambda i: (i, 0, 0)),
                pl.BlockSpec((1, 1, pcout), lambda i: (i, 0, 0)),
            ),
        ),
        compiler_params=pltpu.CompilerParams(
            dimension_semantics=("parallel",),
            vmem_limit_bytes=VMEM_LIMIT),
    )(patches, w_mat)

    # ---- Tiny [Cout]-sized BN fold in f32 (tree-reduce the partials) ---- #
    ch_sum = psum.sum(axis=(0, 1)).reshape(pack, cout).sum(axis=0)
    ch_sumsq = psumsq.sum(axis=(0, 1)).reshape(pack, cout).sum(axis=0)
    mean = ch_sum / m
    var = jnp.maximum(ch_sumsq / m - mean * mean, 0.0)
    scale = gamma * jax.lax.rsqrt(var + EPS)
    shift = beta - mean * scale
    scale_p = jnp.tile(scale, pack).reshape(1, pcout)
    shift_p = jnp.tile(shift, pack).reshape(1, pcout)

    # ---- Pass 2: folded affine + ReLU (mem-bound -> bigger row tiles) ---- #
    tm2 = _scale_tile(tm, mr_pad, block_m_bn)
    out = pl.pallas_call(
        bn_relu_kernel,
        out_shape=jax.ShapeDtypeStruct((mr_pad, pcout), jnp.bfloat16),
        grid_spec=pltpu.PrefetchScalarGridSpec(
            num_scalar_prefetch=0,
            grid=(mr_pad // tm2,),
            in_specs=[
                pl.BlockSpec((tm2, pcout), lambda i: (i, 0)),
                pl.BlockSpec((1, pcout), lambda i: (0, 0)),
                pl.BlockSpec((1, pcout), lambda i: (0, 0)),
            ],
            out_specs=pl.BlockSpec((tm2, pcout), lambda i: (i, 0)),
        ),
        compiler_params=pltpu.CompilerParams(
            dimension_semantics=("parallel",),
            vmem_limit_bytes=VMEM_LIMIT),
    )(y, scale_p, shift_p)

    out = out.reshape(m_pad, cout)[:m]                  # drop zero-padding rows
    return out.reshape(n, ho, wo, cout)


def init_params(key):
    """Deterministic synthetic parameters matching SimpleHRNet.__init__ shapes."""
    stages = [(3, 64), (64, 128), (128, 256), (256, 512)]
    params = []
    for i, (cin, cout) in enumerate(stages):
        k = jax.random.fold_in(key, i)
        kw, kb = jax.random.split(k)
        fan_in = cin * 9
        w = jax.random.normal(kw, (cout, cin, 3, 3), jnp.float32) / jnp.sqrt(float(fan_in))
        b = jax.random.normal(kb, (cout,), jnp.float32) * 0.01  # cancelled by train-mode BN
        gamma = jnp.ones((cout,), jnp.float32)
        beta = jnp.zeros((cout,), jnp.float32)
        params.append((w, b, gamma, beta))
    return params


def prepare_params(params):
    """One-time weight repack hoisted out of the forward path.

    OIHW -> (kh, kw, cin, cout) -> [9*Cin, Cout]; for Cout < 128 build the
    block-diagonal [P*9*Cin, P*Cout] matrix so the matmul directly emits a
    lane-dense (128-wide) output.  bf16 cast done once here.
    """
    prepared = []
    for (w, _b, gamma, beta) in params:
        cout, cin = w.shape[0], w.shape[1]
        k = 9 * cin
        w_mat = jnp.transpose(w, (2, 3, 1, 0)).reshape(k, cout)
        pack = 128 // cout if (cout < 128 and 128 % cout == 0) else 1
        if pack > 1:
            w_mat = jnp.kron(jnp.eye(pack, dtype=w_mat.dtype), w_mat)
        prepared.append((w_mat.astype(jnp.bfloat16), gamma, beta))
    return prepared


def simple_hrnet_forward(x_nchw, prepared_params, *, block_m=512):
    if x_nchw.shape[1] == 1:                       # grayscale -> repeat to 3 channels
        x_nchw = jnp.repeat(x_nchw, 3, axis=1)
    # Single NHWC conversion + bf16 cast up front; stages chain in bf16 NHWC.
    x = jnp.transpose(x_nchw, (0, 2, 3, 1)).astype(jnp.bfloat16)
    feats = []
    for (w_mat, gamma, beta) in prepared_params:
        x = conv_bn_relu(x, w_mat, gamma, beta, block_m=block_m)
        # Returned feature list: f32 NCHW for PyTorch API parity.
        feats.append(jnp.transpose(x, (0, 3, 1, 2)).astype(jnp.float32))
    return feats


def _reference_stage(x, w, b, g, be):
    y = jax.lax.conv_general_dilated(
        x, w, (2, 2), ((1, 1), (1, 1)),
        dimension_numbers=("NCHW", "OIHW", "NCHW"))
    y = y + b[None, :, None, None]
    mu = y.mean(axis=(0, 2, 3), keepdims=True)
    var = ((y - mu) ** 2).mean(axis=(0, 2, 3), keepdims=True)
    out = (y - mu) * jax.lax.rsqrt(var + EPS)
    out = out * g[None, :, None, None] + be[None, :, None, None]
    return jnp.maximum(out, 0.0)


if __name__ == "__main__":
    key = jax.random.PRNGKey(0)
    params = init_params(key)
    prepared = prepare_params(params)     # one-time repack, outside the forward path
    # 32x32 keeps the deepest stage's batch statistics well-conditioned
    # (M=8 rows) while staying small.
    x = jax.random.normal(jax.random.fold_in(key, 100), (2, 3, 32, 32), jnp.float32)

    fwd = jax.jit(simple_hrnet_forward)
    feats = jax.block_until_ready(fwd(x, prepared))

    expected = [(2, 64, 16, 16), (2, 128, 8, 8), (2, 256, 4, 4), (2, 512, 2, 2)]
    assert [tuple(f.shape) for f in feats] == expected, [tuple(f.shape) for f in feats]

    # Numeric sanity check against plain-JAX f32 reference (per-stage, chained
    # on the Pallas features).  bf16 operands / bf16 y / bf16 activations bound
    # accuracy to ~1e-2 relative, hence the loose tolerance (documented).
    xr = x
    for (w, b, g, be), f in zip(params, feats):
        ref = _reference_stage(xr, w, b, g, be)
        err = float(jnp.max(jnp.abs(ref - f)))
        assert jnp.allclose(ref, f, atol=1e-1, rtol=5e-2), err
        xr = f

    # Explicitly exercise the multi-tile path (grid=4 in pass 1) so the
    # per-tile partial-stats reduction and the padded/packed layouts are hit.
    w_mat0, g0, be0 = prepared[0]
    x_nhwc = jnp.transpose(x, (0, 2, 3, 1))
    s1 = conv_bn_relu(x_nhwc, w_mat0, g0, be0, block_m=64)
    s1_nchw = jax.block_until_ready(jnp.transpose(s1, (0, 3, 1, 2)).astype(jnp.float32))
    w0, b0, _, _ = params[0]
    ref1 = _reference_stage(x, w0, b0, g0, be0)
    assert jnp.allclose(ref1, s1_nchw, atol=1e-1, rtol=5e-2), \
        float(jnp.max(jnp.abs(ref1 - s1_nchw)))

    print("KERNEL_OK")
</pallas_src>

<mosaic_0001>
module attributes {stable_mosaic.version = 11 : i64} {
  func.func @conv_stats_kernel(%arg0: i32, %arg1: memref<256x54xbf16, #tpu.memory_space<vmem>>, %arg2: memref<54x128xbf16, #tpu.memory_space<vmem>>, %arg3: memref<256x128xbf16, #tpu.memory_space<vmem>>, %arg4: memref<1x1x128xf32, #tpu.memory_space<vmem>>, %arg5: memref<1x1x128xf32, #tpu.memory_space<vmem>>) attributes {dimension_semantics = [#tpu.dimension_semantics<parallel>], iteration_bounds = array<i64: 1>, scalar_prefetch = 0 : i64, scratch_operands = 0 : i64, tpu.core_type = #tpu.core_type<tc>, window_params = [{transform_indices = @transform_0, window_bounds = array<i64: 256, 54>}, {pipeline_mode = #tpu.pipeline_mode<synchronous>, transform_indices = @transform_1, window_bounds = array<i64: 54, 128>}, {transform_indices = @transform_2, window_bounds = array<i64: 256, 128>}, {transform_indices = @transform_3, window_bounds = array<i64: 1, 1, 128>}, {transform_indices = @transform_4, window_bounds = array<i64: 1, 1, 128>}]} {
    %c0 = arith.constant 0 : index
    %c0_0 = arith.constant 0 : index
    %0 = vector.load %arg1[%c0, %c0_0] : memref<256x54xbf16, #tpu.memory_space<vmem>>, vector<256x54xbf16>
    %c0_1 = arith.constant 0 : index
    %c0_2 = arith.constant 0 : index
    %1 = vector.load %arg2[%c0_1, %c0_2] : memref<54x128xbf16, #tpu.memory_space<vmem>>, vector<54x128xbf16>
    %cst = arith.constant dense<0.000000e+00> : vector<256x128xf32>
    %2 = tpu.matmul %0, %1, %cst {dimension_numbers = #tpu.dot_dimension_numbers<[1], [0], [0], [1], [0, 0, 1, 1], [], []>} : vector<256x54xbf16>, vector<54x128xbf16>, vector<256x128xf32> -> vector<256x128xf32>
    %3 = arith.truncf %2 : vector<256x128xf32> to vector<256x128xbf16>
    %c0_3 = arith.constant 0 : index
    %c0_4 = arith.constant 0 : index
    %4 = vector.load %arg3[%c0_3, %c0_4] : memref<256x128xbf16, #tpu.memory_space<vmem>>, vector<256x128xbf16>
    tpu.vector_store %arg3[%c0_3, %c0_4], %3 {strides = array<i32>} : memref<256x128xbf16, #tpu.memory_space<vmem>>, vector<256x128xbf16>,
    %cst_5 = arith.constant dense<0.000000e+00> : vector<128xf32>
    %5 = vector.multi_reduction <add>, %2, %cst_5 [0] : vector<256x128xf32> to vector<128xf32>
    %6 = vector.shape_cast %5 : vector<128xf32> to vector<1x128xf32>
    %7 = vector.shape_cast %6 : vector<1x128xf32> to vector<1x1x128xf32>
    %c0_6 = arith.constant 0 : index
    %c0_7 = arith.constant 0 : index
    %c0_8 = arith.constant 0 : index
    %8 = vector.load %arg4[%c0_6, %c0_7, %c0_8] : memref<1x1x128xf32, #tpu.memory_space<vmem>>, vector<1x1x128xf32>
    tpu.vector_store %arg4[%c0_6, %c0_7, %c0_8], %7 {strides = array<i32>} : memref<1x1x128xf32, #tpu.memory_space<vmem>>, vector<1x1x128xf32>,
    %9 = arith.mulf %2, %2 : vector<256x128xf32>
    %cst_9 = arith.constant dense<0.000000e+00> : vector<128xf32>
    %10 = vector.multi_reduction <add>, %9, %cst_9 [0] : vector<256x128xf32> to vector<128xf32>
    %11 = vector.shape_cast %10 : vector<128xf32> to vector<1x128xf32>
    %12 = vector.shape_cast %11 : vector<1x128xf32> to vector<1x1x128xf32>
    %c0_10 = arith.constant 0 : index
    %c0_11 = arith.constant 0 : index
    %c0_12 = arith.constant 0 : index
    %13 = vector.load %arg5[%c0_10, %c0_11, %c0_12] : memref<1x1x128xf32, #tpu.memory_space<vmem>>, vector<1x1x128xf32>
    tpu.vector_store %arg5[%c0_10, %c0_11, %c0_12], %12 {strides = array<i32>} : memref<1x1x128xf32, #tpu.memory_space<vmem>>, vector<1x1x128xf32>,
    return
  }
  func.func @transform_0(%arg0: i32) -> (i32, i32) {
    %c0_i32 = arith.constant 0 : i32
    %c0_i32_0 = arith.constant 0 : i32
    return %arg0, %c0_i32 : i32, i32
  }
  func.func @transform_1(%arg0: i32) -> (i32, i32) {
    %c0_i32 = arith.constant 0 : i32
    %c0_i32_0 = arith.constant 0 : i32
    %c0_i32_1 = arith.constant 0 : i32
    return %c0_i32, %c0_i32_0 : i32, i32
  }
  func.func @transform_2(%arg0: i32) -> (i32, i32) {
    %c0_i32 = arith.constant 0 : i32
    %c0_i32_0 = arith.constant 0 : i32
    return %arg0, %c0_i32 : i32, i32
  }
  func.func @transform_3(%arg0: i32) -> (i32, i32, i32) {
    %c0_i32 = arith.constant 0 : i32
    %c0_i32_0 = arith.constant 0 : i32
    %c0_i32_1 = arith.constant 0 : i32
    return %arg0, %c0_i32, %c0_i32_0 : i32, i32, i32
  }
  func.func @transform_4(%arg0: i32) -> (i32, i32, i32) {
    %c0_i32 = arith.constant 0 : i32
    %c0_i32_0 = arith.constant 0 : i32
    %c0_i32_1 = arith.constant 0 : i32
    return %arg0, %c0_i32, %c0_i32_0 : i32, i32, i32
  }
}

module attributes {stable_mosaic.version = 11 : i64} {
  func.func @bn_relu_kernel(%arg0: i32, %arg1: memref<256x128xbf16, #tpu.memory_space<vmem>>, %arg2: memref<1x128xf32, #tpu.memory_space<vmem>>, %arg3: memref<1x128xf32, #tpu.memory_space<vmem>>, %arg4: memref<256x128xbf16, #tpu.memory_space<vmem>>) attributes {dimension_semantics = [#tpu.dimension_semantics<parallel>], iteration_bounds = array<i64: 1>, scalar_prefetch = 0 : i64, scratch_operands = 0 : i64, tpu.core_type = #tpu.core_type<tc>, window_params = [{transform_indices = @transform_0, window_bounds = array<i64: 256, 128>}, {pipeline_mode = #tpu.pipeline_mode<synchronous>, transform_indices = @transform_1, window_bounds = array<i64: 1, 128>}, {pipeline_mode = #tpu.pipeline_mode<synchronous>, transform_indices = @transform_2, window_bounds = array<i64: 1, 128>}, {transform_indices = @transform_3, window_bounds = array<i64: 256, 128>}]} {
    %c0 = arith.constant 0 : index
    %c0_0 = arith.constant 0 : index
    %0 = vector.load %arg1[%c0, %c0_0] : memref<256x128xbf16, #tpu.memory_space<vmem>>, vector<256x128xbf16>
    %1 = arith.extf %0 : vector<256x128xbf16> to vector<256x128xf32>
    %c0_1 = arith.constant 0 : index
    %c0_2 = arith.constant 0 : index
    %2 = vector.load %arg2[%c0_1, %c0_2] : memref<1x128xf32, #tpu.memory_space<vmem>>, vector<1x128xf32>
    %3 = vector.broadcast %2 : vector<1x128xf32> to vector<256x128xf32>
    %4 = arith.mulf %1, %3 : vector<256x128xf32>
    %c0_3 = arith.constant 0 : index
    %c0_4 = arith.constant 0 : index
    %5 = vector.load %arg3[%c0_3, %c0_4] : memref<1x128xf32, #tpu.memory_space<vmem>>, vector<1x128xf32>
    %6 = vector.broadcast %5 : vector<1x128xf32> to vector<256x128xf32>
    %7 = arith.addf %4, %6 : vector<256x128xf32>
    %cst = arith.constant 0.000000e+00 : f32
    %8 = vector.broadcast %cst : f32 to vector<256x128xf32>
    %9 = arith.maximumf %7, %8 : vector<256x128xf32>
    %10 = arith.truncf %9 : vector<256x128xf32> to vector<256x128xbf16>
    %c0_5 = arith.constant 0 : index
    %c0_6 = arith.constant 0 : index
    %11 = vector.load %arg4[%c0_5, %c0_6] : memref<256x128xbf16, #tpu.memory_space<vmem>>, vector<256x128xbf16>
    tpu.vector_store %arg4[%c0_5, %c0_6], %10 {strides = array<i32>} : memref<256x128xbf16, #tpu.memory_space<vmem>>, vector<256x128xbf16>,
    return
  }
  func.func @transform_0(%arg0: i32) -> (i32, i32) {
    %c0_i32 = arith.constant 0 : i32
    %c0_i32_0 = arith.constant 0 : i32
    return %arg0, %c0_i32 : i32, i32
  }
  func.func @transform_1(%arg0: i32) -> (i32, i32) {
    %c0_i32 = arith.constant 0 : i32
    %c0_i32_0 = arith.constant 0 : i32
    %c0_i32_1 = arith.constant 0 : i32
    return %c0_i32, %c0_i32_0 : i32, i32
  }
  func.func @transform_2(%arg0: i32) -> (i32, i32) {
    %c0_i32 = arith.constant 0 : i32
    %c0_i32_0 = arith.constant 0 : i32
    %c0_i32_1 = arith.constant 0 : i32
    return %c0_i32, %c0_i32_0 : i32, i32
  }
  func.func @transform_3(%arg0: i32) -> (i32, i32) {
    %c0_i32 = arith.constant 0 : i32
    %c0_i32_0 = arith.constant 0 : i32
    return %arg0, %c0_i32 : i32, i32
  }
}

module attributes {stable_mosaic.version = 11 : i64} {
  func.func @conv_stats_kernel(%arg0: i32, %arg1: memref<128x576xbf16, #tpu.memory_space<vmem>>, %arg2: memref<576x128xbf16, #tpu.memory_space<vmem>>, %arg3: memref<128x128xbf16, #tpu.memory_space<vmem>>, %arg4: memref<1x1x128xf32, #tpu.memory_space<vmem>>, %arg5: memref<1x1x128xf32, #tpu.memory_space<vmem>>) attributes {dimension_semantics = [#tpu.dimension_semantics<parallel>], iteration_bounds = array<i64: 1>, scalar_prefetch = 0 : i64, scratch_operands = 0 : i64, tpu.core_type = #tpu.core_type<tc>, window_params = [{transform_indices = @transform_0, window_bounds = array<i64: 128, 576>}, {pipeline_mode = #tpu.pipeline_mode<synchronous>, transform_indices = @transform_1, window_bounds = array<i64: 576, 128>}, {transform_indices = @transform_2, window_bounds = array<i64: 128, 128>}, {transform_indices = @transform_3, window_bounds = array<i64: 1, 1, 128>}, {transform_indices = @transform_4, window_bounds = array<i64: 1, 1, 128>}]} {
    %c0 = arith.constant 0 : index
    %c0_0 = arith.constant 0 : index
    %0 = vector.load %arg1[%c0, %c0_0] : memref<128x576xbf16, #tpu.memory_space<vmem>>, vector<128x576xbf16>
    %c0_1 = arith.constant 0 : index
    %c0_2 = arith.constant 0 : index
    %1 = vector.load %arg2[%c0_1, %c0_2] : memref<576x128xbf16, #tpu.memory_space<vmem>>, vector<576x128xbf16>
    %cst = arith.constant dense<0.000000e+00> : vector<128x128xf32>
    %2 = tpu.matmul %0, %1, %cst {dimension_numbers = #tpu.dot_dimension_numbers<[1], [0], [0], [1], [0, 0, 1, 1], [], []>} : vector<128x576xbf16>, vector<576x128xbf16>, vector<128x128xf32> -> vector<128x128xf32>
    %3 = arith.truncf %2 : vector<128x128xf32> to vector<128x128xbf16>
    %c0_3 = arith.constant 0 : index
    %c0_4 = arith.constant 0 : index
    %4 = vector.load %arg3[%c0_3, %c0_4] : memref<128x128xbf16, #tpu.memory_space<vmem>>, vector<128x128xbf16>
    tpu.vector_store %arg3[%c0_3, %c0_4], %3 {strides = array<i32>} : memref<128x128xbf16, #tpu.memory_space<vmem>>, vector<128x128xbf16>,
    %cst_5 = arith.constant dense<0.000000e+00> : vector<128xf32>
    %5 = vector.multi_reduction <add>, %2, %cst_5 [0] : vector<128x128xf32> to vector<128xf32>
    %6 = vector.shape_cast %5 : vector<128xf32> to vector<1x128xf32>
    %7 = vector.shape_cast %6 : vector<1x128xf32> to vector<1x1x128xf32>
    %c0_6 = arith.constant 0 : index
    %c0_7 = arith.constant 0 : index
    %c0_8 = arith.constant 0 : index
    %8 = vector.load %arg4[%c0_6, %c0_7, %c0_8] : memref<1x1x128xf32, #tpu.memory_space<vmem>>, vector<1x1x128xf32>
    tpu.vector_store %arg4[%c0_6, %c0_7, %c0_8], %7 {strides = array<i32>} : memref<1x1x128xf32, #tpu.memory_space<vmem>>, vector<1x1x128xf32>,
    %9 = arith.mulf %2, %2 : vector<128x128xf32>
    %cst_9 = arith.constant dense<0.000000e+00> : vector<128xf32>
    %10 = vector.multi_reduction <add>, %9, %cst_9 [0] : vector<128x128xf32> to vector<128xf32>
    %11 = vector.shape_cast %10 : vector<128xf32> to vector<1x128xf32>
    %12 = vector.shape_cast %11 : vector<1x128xf32> to vector<1x1x128xf32>
    %c0_10 = arith.constant 0 : index
    %c0_11 = arith.constant 0 : index
    %c0_12 = arith.constant 0 : index
    %13 = vector.load %arg5[%c0_10, %c0_11, %c0_12] : memref<1x1x128xf32, #tpu.memory_space<vmem>>, vector<1x1x128xf32>
    tpu.vector_store %arg5[%c0_10, %c0_11, %c0_12], %12 {strides = array<i32>} : memref<1x1x128xf32, #tpu.memory_space<vmem>>, vector<1x1x128xf32>,
    return
  }
  func.func @transform_0(%arg0: i32) -> (i32, i32) {
    %c0_i32 = arith.constant 0 : i32
    %c0_i32_0 = arith.constant 0 : i32
    return %arg0, %c0_i32 : i32, i32
  }
  func.func @transform_1(%arg0: i32) -> (i32, i32) {
    %c0_i32 = arith.constant 0 : i32
    %c0_i32_0 = arith.constant 0 : i32
    %c0_i32_1 = arith.constant 0 : i32
    return %c0_i32, %c0_i32_0 : i32, i32
  }
  func.func @transform_2(%arg0: i32) -> (i32, i32) {
    %c0_i32 = arith.constant 0 : i32
    %c0_i32_0 = arith.constant 0 : i32
    return %arg0, %c0_i32 : i32, i32
  }
  func.func @transform_3(%arg0: i32) -> (i32, i32, i32) {
    %c0_i32 = arith.constant 0 : i32
    %c0_i32_0 = arith.constant 0 : i32
    %c0_i32_1 = arith.constant 0 : i32
    return %arg0, %c0_i32, %c0_i32_0 : i32, i32, i32
  }
  func.func @transform_4(%arg0: i32) -> (i32, i32, i32) {
    %c0_i32 = arith.constant 0 : i32
    %c0_i32_0 = arith.constant 0 : i32
    %c0_i32_1 = arith.constant 0 : i32
    return %arg0, %c0_i32, %c0_i32_0 : i32, i32, i32
  }
}

module attributes {stable_mosaic.version = 11 : i64} {
  func.func @bn_relu_kernel(%arg0: i32, %arg1: memref<128x128xbf16, #tpu.memory_space<vmem>>, %arg2: memref<1x128xf32, #tpu.memory_space<vmem>>, %arg3: memref<1x128xf32, #tpu.memory_space<vmem>>, %arg4: memref<128x128xbf16, #tpu.memory_space<vmem>>) attributes {dimension_semantics = [#tpu.dimension_semantics<parallel>], iteration_bounds = array<i64: 1>, scalar_prefetch = 0 : i64, scratch_operands = 0 : i64, tpu.core_type = #tpu.core_type<tc>, window_params = [{transform_indices = @transform_0, window_bounds = array<i64: 128, 128>}, {pipeline_mode = #tpu.pipeline_mode<synchronous>, transform_indices = @transform_1, window_bounds = array<i64: 1, 128>}, {pipeline_mode = #tpu.pipeline_mode<synchronous>, transform_indices = @transform_2, window_bounds = array<i64: 1, 128>}, {transform_indices = @transform_3, window_bounds = array<i64: 128, 128>}]} {
    %c0 = arith.constant 0 : index
    %c0_0 = arith.constant 0 : index
    %0 = vector.load %arg1[%c0, %c0_0] : memref<128x128xbf16, #tpu.memory_space<vmem>>, vector<128x128xbf16>
    %1 = arith.extf %0 : vector<128x128xbf16> to vector<128x128xf32>
    %c0_1 = arith.constant 0 : index
    %c0_2 = arith.constant 0 : index
    %2 = vector.load %arg2[%c0_1, %c0_2] : memref<1x128xf32, #tpu.memory_space<vmem>>, vector<1x128xf32>
    %3 = vector.broadcast %2 : vector<1x128xf32> to vector<128x128xf32>
    %4 = arith.mulf %1, %3 : vector<128x128xf32>
    %c0_3 = arith.constant 0 : index
    %c0_4 = arith.constant 0 : index
    %5 = vector.load %arg3[%c0_3, %c0_4] : memref<1x128xf32, #tpu.memory_space<vmem>>, vector<1x128xf32>
    %6 = vector.broadcast %5 : vector<1x128xf32> to vector<128x128xf32>
    %7 = arith.addf %4, %6 : vector<128x128xf32>
    %cst = arith.constant 0.000000e+00 : f32
    %8 = vector.broadcast %cst : f32 to vector<128x128xf32>
    %9 = arith.maximumf %7, %8 : vector<128x128xf32>
    %10 = arith.truncf %9 : vector<128x128xf32> to vector<128x128xbf16>
    %c0_5 = arith.constant 0 : index
    %c0_6 = arith.constant 0 : index
    %11 = vector.load %arg4[%c0_5, %c0_6] : memref<128x128xbf16, #tpu.memory_space<vmem>>, vector<128x128xbf16>
    tpu.vector_store %arg4[%c0_5, %c0_6], %10 {strides = array<i32>} : memref<128x128xbf16, #tpu.memory_space<vmem>>, vector<128x128xbf16>,
    return
  }
  func.func @transform_0(%arg0: i32) -> (i32, i32) {
    %c0_i32 = arith.constant 0 : i32
    %c0_i32_0 = arith.constant 0 : i32
    return %arg0, %c0_i32 : i32, i32
  }
  func.func @transform_1(%arg0: i32) -> (i32, i32) {
    %c0_i32 = arith.constant 0 : i32
    %c0_i32_0 = arith.constant 0 : i32
    %c0_i32_1 = arith.constant 0 : i32
    return %c0_i32, %c0_i32_0 : i32, i32
  }
  func.func @transform_2(%arg0: i32) -> (i32, i32) {
    %c0_i32 = arith.constant 0 : i32
    %c0_i32_0 = arith.constant 0 : i32
    %c0_i32_1 = arith.constant 0 : i32
    return %c0_i32, %c0_i32_0 : i32, i32
  }
  func.func @transform_3(%arg0: i32) -> (i32, i32) {
    %c0_i32 = arith.constant 0 : i32
    %c0_i32_0 = arith.constant 0 : i32
    return %arg0, %c0_i32 : i32, i32
  }
}

module attributes {stable_mosaic.version = 11 : i64} {
  func.func @conv_stats_kernel(%arg0: i32, %arg1: memref<32x1152xbf16, #tpu.memory_space<vmem>>, %arg2: memref<1152x256xbf16, #tpu.memory_space<vmem>>, %arg3: memref<32x256xbf16, #tpu.memory_space<vmem>>, %arg4: memref<1x1x256xf32, #tpu.memory_space<vmem>>, %arg5: memref<1x1x256xf32, #tpu.memory_space<vmem>>) attributes {dimension_semantics = [#tpu.dimension_semantics<parallel>], iteration_bounds = array<i64: 1>, scalar_prefetch = 0 : i64, scratch_operands = 0 : i64, tpu.core_type = #tpu.core_type<tc>, window_params = [{transform_indices = @transform_0, window_bounds = array<i64: 32, 1152>}, {pipeline_mode = #tpu.pipeline_mode<synchronous>, transform_indices = @transform_1, window_bounds = array<i64: 1152, 256>}, {transform_indices = @transform_2, window_bounds = array<i64: 32, 256>}, {transform_indices = @transform_3, window_bounds = array<i64: 1, 1, 256>}, {transform_indices = @transform_4, window_bounds = array<i64: 1, 1, 256>}]} {
    %c0 = arith.constant 0 : index
    %c0_0 = arith.constant 0 : index
    %0 = vector.load %arg1[%c0, %c0_0] : memref<32x1152xbf16, #tpu.memory_space<vmem>>, vector<32x1152xbf16>
    %c0_1 = arith.constant 0 : index
    %c0_2 = arith.constant 0 : index
    %1 = vector.load %arg2[%c0_1, %c0_2] : memref<1152x256xbf16, #tpu.memory_space<vmem>>, vector<1152x256xbf16>
    %cst = arith.constant dense<0.000000e+00> : vector<32x256xf32>
    %2 = tpu.matmul %0, %1, %cst {dimension_numbers = #tpu.dot_dimension_numbers<[1], [0], [0], [1], [0, 0, 1, 1], [], []>} : vector<32x1152xbf16>, vector<1152x256xbf16>, vector<32x256xf32> -> vector<32x256xf32>
    %3 = arith.truncf %2 : vector<32x256xf32> to vector<32x256xbf16>
    %c0_3 = arith.constant 0 : index
    %c0_4 = arith.constant 0 : index
    %4 = vector.load %arg3[%c0_3, %c0_4] : memref<32x256xbf16, #tpu.memory_space<vmem>>, vector<32x256xbf16>
    tpu.vector_store %arg3[%c0_3, %c0_4], %3 {strides = array<i32>} : memref<32x256xbf16, #tpu.memory_space<vmem>>, vector<32x256xbf16>,
    %cst_5 = arith.constant dense<0.000000e+00> : vector<256xf32>
    %5 = vector.multi_reduction <add>, %2, %cst_5 [0] : vector<32x256xf32> to vector<256xf32>
    %6 = vector.shape_cast %5 : vector<256xf32> to vector<1x256xf32>
    %7 = vector.shape_cast %6 : vector<1x256xf32> to vector<1x1x256xf32>
    %c0_6 = arith.constant 0 : index
    %c0_7 = arith.constant 0 : index
    %c0_8 = arith.constant 0 : index
    %8 = vector.load %arg4[%c0_6, %c0_7, %c0_8] : memref<1x1x256xf32, #tpu.memory_space<vmem>>, vector<1x1x256xf32>
    tpu.vector_store %arg4[%c0_6, %c0_7, %c0_8], %7 {strides = array<i32>} : memref<1x1x256xf32, #tpu.memory_space<vmem>>, vector<1x1x256xf32>,
    %9 = arith.mulf %2, %2 : vector<32x256xf32>
    %cst_9 = arith.constant dense<0.000000e+00> : vector<256xf32>
    %10 = vector.multi_reduction <add>, %9, %cst_9 [0] : vector<32x256xf32> to vector<256xf32>
    %11 = vector.shape_cast %10 : vector<256xf32> to vector<1x256xf32>
    %12 = vector.shape_cast %11 : vector<1x256xf32> to vector<1x1x256xf32>
    %c0_10 = arith.constant 0 : index
    %c0_11 = arith.constant 0 : index
    %c0_12 = arith.constant 0 : index
    %13 = vector.load %arg5[%c0_10, %c0_11, %c0_12] : memref<1x1x256xf32, #tpu.memory_space<vmem>>, vector<1x1x256xf32>
    tpu.vector_store %arg5[%c0_10, %c0_11, %c0_12], %12 {strides = array<i32>} : memref<1x1x256xf32, #tpu.memory_space<vmem>>, vector<1x1x256xf32>,
    return
  }
  func.func @transform_0(%arg0: i32) -> (i32, i32) {
    %c0_i32 = arith.constant 0 : i32
    %c0_i32_0 = arith.constant 0 : i32
    return %arg0, %c0_i32 : i32, i32
  }
  func.func @transform_1(%arg0: i32) -> (i32, i32) {
    %c0_i32 = arith.constant 0 : i32
    %c0_i32_0 = arith.constant 0 : i32
    %c0_i32_1 = arith.constant 0 : i32
    return %c0_i32, %c0_i32_0 : i32, i32
  }
  func.func @transform_2(%arg0: i32) -> (i32, i32) {
    %c0_i32 = arith.constant 0 : i32
    %c0_i32_0 = arith.constant 0 : i32
    return %arg0, %c0_i32 : i32, i32
  }
  func.func @transform_3(%arg0: i32) -> (i32, i32, i32) {
    %c0_i32 = arith.constant 0 : i32
    %c0_i32_0 = arith.constant 0 : i32
    %c0_i32_1 = arith.constant 0 : i32
    return %arg0, %c0_i32, %c0_i32_0 : i32, i32, i32
  }
  func.func @transform_4(%arg0: i32) -> (i32, i32, i32) {
    %c0_i32 = arith.constant 0 : i32
    %c0_i32_0 = arith.constant 0 : i32
    %c0_i32_1 = arith.constant 0 : i32
    return %arg0, %c0_i32, %c0_i32_0 : i32, i32, i32
  }
}

module attributes {stable_mosaic.version = 11 : i64} {
  func.func @bn_relu_kernel(%arg0: i32, %arg1: memref<32x256xbf16, #tpu.memory_space<vmem>>, %arg2: memref<1x256xf32, #tpu.memory_space<vmem>>, %arg3: memref<1x256xf32, #tpu.memory_space<vmem>>, %arg4: memref<32x256xbf16, #tpu.memory_space<vmem>>) attributes {dimension_semantics = [#tpu.dimension_semantics<parallel>], iteration_bounds = array<i64: 1>, scalar_prefetch = 0 : i64, scratch_operands = 0 : i64, tpu.core_type = #tpu.core_type<tc>, window_params = [{transform_indices = @transform_0, window_bounds = array<i64: 32, 256>}, {pipeline_mode = #tpu.pipeline_mode<synchronous>, transform_indices = @transform_1, window_bounds = array<i64: 1, 256>}, {pipeline_mode = #tpu.pipeline_mode<synchronous>, transform_indices = @transform_2, window_bounds = array<i64: 1, 256>}, {transform_indices = @transform_3, window_bounds = array<i64: 32, 256>}]} {
    %c0 = arith.constant 0 : index
    %c0_0 = arith.constant 0 : index
    %0 = vector.load %arg1[%c0, %c0_0] : memref<32x256xbf16, #tpu.memory_space<vmem>>, vector<32x256xbf16>
    %1 = arith.extf %0 : vector<32x256xbf16> to vector<32x256xf32>
    %c0_1 = arith.constant 0 : index
    %c0_2 = arith.constant 0 : index
    %2 = vector.load %arg2[%c0_1, %c0_2] : memref<1x256xf32, #tpu.memory_space<vmem>>, vector<1x256xf32>
    %3 = vector.broadcast %2 : vector<1x256xf32> to vector<32x256xf32>
    %4 = arith.mulf %1, %3 : vector<32x256xf32>
    %c0_3 = arith.constant 0 : index
    %c0_4 = arith.constant 0 : index
    %5 = vector.load %arg3[%c0_3, %c0_4] : memref<1x256xf32, #tpu.memory_space<vmem>>, vector<1x256xf32>
    %6 = vector.broadcast %5 : vector<1x256xf32> to vector<32x256xf32>
    %7 = arith.addf %4, %6 : vector<32x256xf32>
    %cst = arith.constant 0.000000e+00 : f32
    %8 = vector.broadcast %cst : f32 to vector<32x256xf32>
    %9 = arith.maximumf %7, %8 : vector<32x256xf32>
    %10 = arith.truncf %9 : vector<32x256xf32> to vector<32x256xbf16>
    %c0_5 = arith.constant 0 : index
    %c0_6 = arith.constant 0 : index
    %11 = vector.load %arg4[%c0_5, %c0_6] : memref<32x256xbf16, #tpu.memory_space<vmem>>, vector<32x256xbf16>
    tpu.vector_store %arg4[%c0_5, %c0_6], %10 {strides = array<i32>} : memref<32x256xbf16, #tpu.memory_space<vmem>>, vector<32x256xbf16>,
    return
  }
  func.func @transform_0(%arg0: i32) -> (i32, i32) {
    %c0_i32 = arith.constant 0 : i32
    %c0_i32_0 = arith.constant 0 : i32
    return %arg0, %c0_i32 : i32, i32
  }
  func.func @transform_1(%arg0: i32) -> (i32, i32) {
    %c0_i32 = arith.constant 0 : i32
    %c0_i32_0 = arith.constant 0 : i32
    %c0_i32_1 = arith.constant 0 : i32
    return %c0_i32, %c0_i32_0 : i32, i32
  }
  func.func @transform_2(%arg0: i32) -> (i32, i32) {
    %c0_i32 = arith.constant 0 : i32
    %c0_i32_0 = arith.constant 0 : i32
    %c0_i32_1 = arith.constant 0 : i32
    return %c0_i32, %c0_i32_0 : i32, i32
  }
  func.func @transform_3(%arg0: i32) -> (i32, i32) {
    %c0_i32 = arith.constant 0 : i32
    %c0_i32_0 = arith.constant 0 : i32
    return %arg0, %c0_i32 : i32, i32
  }
}

module attributes {stable_mosaic.version = 11 : i64} {
  func.func @bn_relu_kernel(%arg0: i32, %arg1: memref<16x512xbf16, #tpu.memory_space<vmem>>, %arg2: memref<1x512xf32, #tpu.memory_space<vmem>>, %arg3: memref<1x512xf32, #tpu.memory_space<vmem>>, %arg4: memref<16x512xbf16, #tpu.memory_space<vmem>>) attributes {dimension_semantics = [#tpu.dimension_semantics<parallel>], iteration_bounds = array<i64: 1>, scalar_prefetch = 0 : i64, scratch_operands = 0 : i64, tpu.core_type = #tpu.core_type<tc>, window_params = [{transform_indices = @transform_0, window_bounds = array<i64: 16, 512>}, {pipeline_mode = #tpu.pipeline_mode<synchronous>, transform_indices = @transform_1, window_bounds = array<i64: 1, 512>}, {pipeline_mode = #tpu.pipeline_mode<synchronous>, transform_indices = @transform_2, window_bounds = array<i64: 1, 512>}, {transform_indices = @transform_3, window_bounds = array<i64: 16, 512>}]} {
    %c0 = arith.constant 0 : index
    %c0_0 = arith.constant 0 : index
    %0 = vector.load %arg1[%c0, %c0_0] : memref<16x512xbf16, #tpu.memory_space<vmem>>, vector<16x512xbf16>
    %1 = arith.extf %0 : vector<16x512xbf16> to vector<16x512xf32>
    %c0_1 = arith.constant 0 : index
    %c0_2 = arith.constant 0 : index
    %2 = vector.load %arg2[%c0_1, %c0_2] : memref<1x512xf32, #tpu.memory_space<vmem>>, vector<1x512xf32>
    %3 = vector.broadcast %2 : vector<1x512xf32> to vector<16x512xf32>
    %4 = arith.mulf %1, %3 : vector<16x512xf32>
    %c0_3 = arith.constant 0 : index
    %c0_4 = arith.constant 0 : index
    %5 = vector.load %arg3[%c0_3, %c0_4] : memref<1x512xf32, #tpu.memory_space<vmem>>, vector<1x512xf32>
    %6 = vector.broadcast %5 : vector<1x512xf32> to vector<16x512xf32>
    %7 = arith.addf %4, %6 : vector<16x512xf32>
    %cst = arith.constant 0.000000e+00 : f32
    %8 = vector.broadcast %cst : f32 to vector<16x512xf32>
    %9 = arith.maximumf %7, %8 : vector<16x512xf32>
    %10 = arith.truncf %9 : vector<16x512xf32> to vector<16x512xbf16>
    %c0_5 = arith.constant 0 : index
    %c0_6 = arith.constant 0 : index
    %11 = vector.load %arg4[%c0_5, %c0_6] : memref<16x512xbf16, #tpu.memory_space<vmem>>, vector<16x512xbf16>
    tpu.vector_store %arg4[%c0_5, %c0_6], %10 {strides = array<i32>} : memref<16x512xbf16, #tpu.memory_space<vmem>>, vector<16x512xbf16>,
    return
  }
  func.func @transform_0(%arg0: i32) -> (i32, i32) {
    %c0_i32 = arith.constant 0 : i32
    %c0_i32_0 = arith.constant 0 : i32
    return %arg0, %c0_i32 : i32, i32
  }
  func.func @transform_1(%arg0: i32) -> (i32, i32) {
    %c0_i32 = arith.constant 0 : i32
    %c0_i32_0 = arith.constant 0 : i32
    %c0_i32_1 = arith.constant 0 : i32
    return %c0_i32, %c0_i32_0 : i32, i32
  }
  func.func @transform_2(%arg0: i32) -> (i32, i32) {
    %c0_i32 = arith.constant 0 : i32
    %c0_i32_0 = arith.constant 0 : i32
    %c0_i32_1 = arith.constant 0 : i32
    return %c0_i32, %c0_i32_0 : i32, i32
  }
  func.func @transform_3(%arg0: i32) -> (i32, i32) {
    %c0_i32 = arith.constant 0 : i32
    %c0_i32_0 = arith.constant 0 : i32
    return %arg0, %c0_i32 : i32, i32
  }
}

module attributes {stable_mosaic.version = 11 : i64} {
  func.func @conv_stats_kernel(%arg0: i32, %arg1: memref<16x2304xbf16, #tpu.memory_space<vmem>>, %arg2: memref<2304x512xbf16, #tpu.memory_space<vmem>>, %arg3: memref<16x512xbf16, #tpu.memory_space<vmem>>, %arg4: memref<1x1x512xf32, #tpu.memory_space<vmem>>, %arg5: memref<1x1x512xf32, #tpu.memory_space<vmem>>) attributes {dimension_semantics = [#tpu.dimension_semantics<parallel>], iteration_bounds = array<i64: 1>, scalar_prefetch = 0 : i64, scratch_operands = 0 : i64, tpu.core_type = #tpu.core_type<tc>, window_params = [{transform_indices = @transform_0, window_bounds = array<i64: 16, 2304>}, {pipeline_mode = #tpu.pipeline_mode<synchronous>, transform_indices = @transform_1, window_bounds = array<i64: 2304, 512>}, {transform_indices = @transform_2, window_bounds = array<i64: 16, 512>}, {transform_indices = @transform_3, window_bounds = array<i64: 1, 1, 512>}, {transform_indices = @transform_4, window_bounds = array<i64: 1, 1, 512>}]} {
    %c0 = arith.constant 0 : index
    %c0_0 = arith.constant 0 : index
    %0 = vector.load %arg1[%c0, %c0_0] : memref<16x2304xbf16, #tpu.memory_space<vmem>>, vector<16x2304xbf16>
    %c0_1 = arith.constant 0 : index
    %c0_2 = arith.constant 0 : index
    %1 = vector.load %arg2[%c0_1, %c0_2] : memref<2304x512xbf16, #tpu.memory_space<vmem>>, vector<2304x512xbf16>
    %cst = arith.constant dense<0.000000e+00> : vector<16x512xf32>
    %2 = tpu.matmul %0, %1, %cst {dimension_numbers = #tpu.dot_dimension_numbers<[1], [0], [0], [1], [0, 0, 1, 1], [], []>} : vector<16x2304xbf16>, vector<2304x512xbf16>, vector<16x512xf32> -> vector<16x512xf32>
    %3 = arith.truncf %2 : vector<16x512xf32> to vector<16x512xbf16>
    %c0_3 = arith.constant 0 : index
    %c0_4 = arith.constant 0 : index
    %4 = vector.load %arg3[%c0_3, %c0_4] : memref<16x512xbf16, #tpu.memory_space<vmem>>, vector<16x512xbf16>
    tpu.vector_store %arg3[%c0_3, %c0_4], %3 {strides = array<i32>} : memref<16x512xbf16, #tpu.memory_space<vmem>>, vector<16x512xbf16>,
    %cst_5 = arith.constant dense<0.000000e+00> : vector<512xf32>
    %5 = vector.multi_reduction <add>, %2, %cst_5 [0] : vector<16x512xf32> to vector<512xf32>
    %6 = vector.shape_cast %5 : vector<512xf32> to vector<1x512xf32>
    %7 = vector.shape_cast %6 : vector<1x512xf32> to vector<1x1x512xf32>
    %c0_6 = arith.constant 0 : index
    %c0_7 = arith.constant 0 : index
    %c0_8 = arith.constant 0 : index
    %8 = vector.load %arg4[%c0_6, %c0_7, %c0_8] : memref<1x1x512xf32, #tpu.memory_space<vmem>>, vector<1x1x512xf32>
    tpu.vector_store %arg4[%c0_6, %c0_7, %c0_8], %7 {strides = array<i32>} : memref<1x1x512xf32, #tpu.memory_space<vmem>>, vector<1x1x512xf32>,
    %9 = arith.mulf %2, %2 : vector<16x512xf32>
    %cst_9 = arith.constant dense<0.000000e+00> : vector<512xf32>
    %10 = vector.multi_reduction <add>, %9, %cst_9 [0] : vector<16x512xf32> to vector<512xf32>
    %11 = vector.shape_cast %10 : vector<512xf32> to vector<1x512xf32>
    %12 = vector.shape_cast %11 : vector<1x512xf32> to vector<1x1x512xf32>
    %c0_10 = arith.constant 0 : index
    %c0_11 = arith.constant 0 : index
    %c0_12 = arith.constant 0 : index
    %13 = vector.load %arg5[%c0_10, %c0_11, %c0_12] : memref<1x1x512xf32, #tpu.memory_space<vmem>>, vector<1x1x512xf32>
    tpu.vector_store %arg5[%c0_10, %c0_11, %c0_12], %12 {strides = array<i32>} : memref<1x1x512xf32, #tpu.memory_space<vmem>>, vector<1x1x512xf32>,
    return
  }
  func.func @transform_0(%arg0: i32) -> (i32, i32) {
    %c0_i32 = arith.constant 0 : i32
    %c0_i32_0 = arith.constant 0 : i32
    return %arg0, %c0_i32 : i32, i32
  }
  func.func @transform_1(%arg0: i32) -> (i32, i32) {
    %c0_i32 = arith.constant 0 : i32
    %c0_i32_0 = arith.constant 0 : i32
    %c0_i32_1 = arith.constant 0 : i32
    return %c0_i32, %c0_i32_0 : i32, i32
  }
  func.func @transform_2(%arg0: i32) -> (i32, i32) {
    %c0_i32 = arith.constant 0 : i32
    %c0_i32_0 = arith.constant 0 : i32
    return %arg0, %c0_i32 : i32, i32
  }
  func.func @transform_3(%arg0: i32) -> (i32, i32, i32) {
    %c0_i32 = arith.constant 0 : i32
    %c0_i32_0 = arith.constant 0 : i32
    %c0_i32_1 = arith.constant 0 : i32
    return %arg0, %c0_i32, %c0_i32_0 : i32, i32, i32
  }
  func.func @transform_4(%arg0: i32) -> (i32, i32, i32) {
    %c0_i32 = arith.constant 0 : i32
    %c0_i32_0 = arith.constant 0 : i32
    %c0_i32_1 = arith.constant 0 : i32
    return %arg0, %c0_i32, %c0_i32_0 : i32, i32, i32
  }
}

</mosaic_0001>

<llo_original>
// kernel: tile.19
$region0: #{tile.19}
  #allocation0 [shape = 's32[1]{0}', space=sflag, size = 0x4, scoped, tag = 'scoped memory for tile.19']
  %s0 = inlined_call_operand.vmem [shape: f32[64], index: 0, kind: input, shape index: {}]
  %s1 = inlined_call_operand.vmem [shape: f32[2,64], index: 1, kind: output, shape index: {}]
  // Predicated region
  $region2: #{tile.19} parent=0 // pred_check
    _
  $region3: #{tile.19} parent=0 // pred_check_branch
    %3 = sbr.rel (0) target = $region5
  $region4: #{tile.19} parent=0 // pred_region
    _
  $region5: #{tile.19} parent=0 // pred_fallthru
    _
  %v4 = vld [vmem:[%s0] ss:$0 sm:$0xff]
  %5 = vst [vmem:[%s1] sm:$0x3] %v4

// kernel: tile.20
$region0: #{tile.20}
  %s0 = inlined_call_operand.vmem [shape: f32[2,64], index: 0, kind: input, shape index: {}]
  %s1 = inlined_call_operand.vmem [shape: f32[1,128], index: 1, kind: output, shape index: {}]
  $region1: #{tile.20} parent=0
    #allocation0 [shape = 'u8[4096]{0}', space=vmem, size = 0x1000, scoped, tag = 'scoped mem for output reshape']
    #allocation1 [shape = 'u8[4096]{0}', space=vmem, size = 0x1000, scoped, tag = 'scoped mem for input reshape']
    %s3 = sshllo.u32 0, 2
    %v4 = vld [vmem:[%s0] sm:%s3]
    %5 = vst [vmem:[#allocation1] sm:%s3] %v4
    %v6 = vld [vmem:[#allocation1] sm:$0x1]
    %vm7 = vcmask 523264
    %8 = vst.msk [vmem:[#allocation0] sm:$0x1] %vm7, %v6
    %s9 = scalar_lea.vmem [#allocation1], 1
    %v10 = vld [vmem:[%s9] sm:$0x1]
    %11 = vrot.lane.b32.xlu0 %v10, 64
    %v12 = vpop.permute.xlu0 %11
    %vm13 = vcmask 1048064
    %14 = vst.msk [vmem:[#allocation0] sm:$0x1] %vm13, %v12
    %s16 = sshllo.u32 0, 1
    %v18 = vld [vmem:[#allocation0] sm:%s16]
    %s19 = sshllo.u32 0, 1
    %20 = vst [vmem:[%s1] sm:%s19] %v18

// kernel: simple_hrnet_forward.8
$region0: #{simple_hrnet_forward.8}
  #allocation0 [shape = 'u32[]', space=smem, size = 0x4, offset = 0x4, fixed_abs, tag = 'smem constant byte address 0x4 - core index']
  #allocation1 [shape = 'u32[144,128]{1,0:T(1,128)}', space=vmem, size = 0x12000, scoped, tag = 'internal scratch']
  %s0 = inlined_call_operand.vmem [shape: bf16[256,54], index: 0, kind: input, shape index: {}]
  %s1 = inlined_call_operand.vmem [shape: bf16[54,128], index: 1, kind: input, shape index: {}]
  %s2 = inlined_call_operand.vmem [shape: bf16[256,128], index: 2, kind: output, shape index: {0}]
  %s3 = inlined_call_operand.vmem [shape: f32[1,1,128], index: 3, kind: output, shape index: {1}]
  %s4 = inlined_call_operand.vmem [shape: f32[1,1,128], index: 4, kind: output, shape index: {2}]
  %5 = xla_tuple %s2, %s3, %s4
  %s6 = sld [smem:[#allocation0]]
  $region34: #{simple_hrnet_forward.8} parent=0
    _
  %s8 = ssub.s32 1, %s6
  %s9 = scalar_select 0, %s8, %s6
  // Predicated region
  $region2: #{simple_hrnet_forward.8} parent=0 // pred_check
    _
  $region3: #{simple_hrnet_forward.8} parent=0 // pred_check_branch
    %11 = sbr.rel (0) target = $region5
  $region4: #{simple_hrnet_forward.8} parent=0 // pred_region
    _
  $region5: #{simple_hrnet_forward.8} parent=0 // pred_fallthru
    _
  // Predicated region
  $region6: #{simple_hrnet_forward.8} parent=0 // pred_check
    _
  $region7: #{simple_hrnet_forward.8} parent=0 // pred_check_branch
    %13 = sbr.rel (0) target = $region9
  $region8: #{simple_hrnet_forward.8} parent=0 // pred_region
    _
  $region9: #{simple_hrnet_forward.8} parent=0 // pred_fallthru
    _
  %v15 = vld [vmem:[%s0] sm:$0xf]
  %v16 = vld [vmem:[%s0 + $0x4] sm:$0xf]
  %v17 = vld [vmem:[%s0 + $0x8] sm:$0xf]
  %v18 = vld [vmem:[%s0 + $0xc] sm:$0xf]
  %v19 = vld [vmem:[%s0 + $0x10] sm:$0xf]
  %v20 = vld [vmem:[%s0 + $0x14] sm:$0xf]
  %v21 = vld [vmem:[%s0 + $0x18] sm:$0xf]
  %v22 = vld [vmem:[%s0 + $0x1c] sm:$0xf]
  %v23 = vld [vmem:[%s0 + $0x20] sm:$0xf]
  %v24 = vld [vmem:[%s0 + $0x24] sm:$0xf]
  %v25 = vld [vmem:[%s0 + $0x28] sm:$0xf]
  %v26 = vld [vmem:[%s0 + $0x2c] sm:$0xf]
  %v27 = vld [vmem:[%s0 + $0x30] sm:$0xf]
  %v28 = vld [vmem:[%s0 + $0x34] sm:$0xf]
  %v29 = vld [vmem:[%s0 + $0x38] sm:$0xf]
  %v30 = vld [vmem:[%s0 + $0x3c] sm:$0xf]
  %v31 = vld [vmem:[%s0 + $0x40] sm:$0xf]
  %v32 = vld [vmem:[%s0 + $0x44] sm:$0xf]
  %v33 = vld [vmem:[%s0 + $0x48] sm:$0xf]
  %v34 = vld [vmem:[%s0 + $0x4c] sm:$0xf]
  %v35 = vld [vmem:[%s0 + $0x50] sm:$0xf]
  %v36 = vld [vmem:[%s0 + $0x54] sm:$0xf]
  %v37 = vld [vmem:[%s0 + $0x58] sm:$0xf]
  %v38 = vld [vmem:[%s0 + $0x5c] sm:$0xf]
  %v39 = vld [vmem:[%s0 + $0x60] sm:$0xf]
  %v40 = vld [vmem:[%s0 + $0x64] sm:$0xf]
  %v41 = vld [vmem:[%s0 + $0x68] sm:$0xf]
  %v42 = vld [vmem:[%s0 + $0x6c] sm:$0xf]
  %v43 = vld [vmem:[%s0 + $0x70] sm:$0xf]
  %v44 = vld [vmem:[%s0 + $0x74] sm:$0xf]
  %v45 = vld [vmem:[%s0 + $0x78] sm:$0xf]
  %v46 = vld [vmem:[%s0 + $0x7c] sm:$0xf]
  %v47 = vld [vmem:[%s1] sm:$0xf]
  %v48 = vld [vmem:[%s1 + $0x4] sm:$0xf]
  %v49 = vld [vmem:[%s1 + $0x8] sm:$0xf]
  %v50 = vld [vmem:[%s1 + $0xc] sm:$0xf]
  %v51 = vld [vmem:[%s1 + $0x10] sm:$0xf]
  %v52 = vld [vmem:[%s1 + $0x14] sm:$0xf]
  %v53 = vld [vmem:[%s1 + $0x18] sm:$0x7]
  %v86 = vunpack.c.l.b16 %v15
  %v87 = vunpack.c.l.b16 %v16
  %v88 = vunpack.c.l.b16 %v17
  %v89 = vunpack.c.l.b16 %v18
  %v90 = vunpack.c.l.b16 %v19
  %v91 = vunpack.c.l.b16 %v20
  %v92 = vunpack.c.l.b16 %v21
  %v93 = vunpack.c.l.b16 %v22
  %v94 = vunpack.c.l.b16 %v23
  %v95 = vunpack.c.l.b16 %v24
  %v96 = vunpack.c.l.b16 %v25
  %v97 = vunpack.c.l.b16 %v26
  %v98 = vunpack.c.l.b16 %v27
  %v99 = vunpack.c.l.b16 %v28
  %v100 = vunpack.c.l.b16 %v29
  %v101 = vunpack.c.l.b16 %v30
  %v102 = vunpack.c.l.b16 %v31
  %v103 = vunpack.c.l.b16 %v32
  %v104 = vunpack.c.l.b16 %v33
  %v105 = vunpack.c.l.b16 %v34
  %v106 = vunpack.c.l.b16 %v35
  %v107 = vunpack.c.l.b16 %v36
  %v108 = vunpack.c.l.b16 %v37
  %v109 = vunpack.c.l.b16 %v38
  %v110 = vunpack.c.l.b16 %v39
  %v111 = vunpack.c.l.b16 %v40
  %v112 = vunpack.c.l.b16 %v41
  %v113 = vunpack.c.l.b16 %v42
  %v114 = vunpack.c.l.b16 %v43
  %v115 = vunpack.c.l.b16 %v44
  %v116 = vunpack.c.l.b16 %v45
  %v117 = vunpack.c.l.b16 %v46
  %v118 = vpack.c.b16 %v87, %v86
  %v119 = vpack.c.b16 %v89, %v88
  %v120 = vpack.c.b16 %v91, %v90
  %v121 = vpack.c.b16 %v93, %v92
  %v122 = vpack.c.b16 %v95, %v94
  %v123 = vpack.c.b16 %v97, %v96
  %v124 = vpack.c.b16 %v99, %v98
  %v125 = vpack.c.b16 %v101, %v100
  %v126 = vpack.c.b16 %v103, %v102
  %v127 = vpack.c.b16 %v105, %v104
  %v128 = vpack.c.b16 %v107, %v106
  %v129 = vpack.c.b16 %v109, %v108
  %v130 = vpack.c.b16 %v111, %v110
  %v131 = vpack.c.b16 %v113, %v112
  %v132 = vpack.c.b16 %v115, %v114
  %v133 = vpack.c.b16 %v117, %v116
  %v141 = vunpack.c.l.b16 %v47
  %v142 = vunpack.c.l.b16 %v48
  %v143 = vunpack.c.l.b16 %v49
  %v144 = vunpack.c.l.b16 %v50
  %v145 = vunpack.c.l.b16 %v51
  %v146 = vunpack.c.l.b16 %v52
  %v147 = vunpack.c.l.b16 %v53
  %v148 = vpack.c.b16 %v142, %v141
  %v149 = vpack.c.b16 %v144, %v143
  %v150 = vpack.c.b16 %v146, %v145
  %v151 = vpack.c.b16 %v147, %v147
  %vm155 = vcmask 441344
  %v157 = vsel %vm155, %v118, 0
  %v160 = vsel %vm155, %v119, 0
  %v163 = vsel %vm155, %v120, 0
  %v166 = vsel %vm155, %v121, 0
  %v169 = vsel %vm155, %v122, 0
  %v172 = vsel %vm155, %v123, 0
  %v175 = vsel %vm155, %v124, 0
  %v178 = vsel %vm155, %v125, 0
  %v181 = vsel %vm155, %v126, 0
  %v184 = vsel %vm155, %v127, 0
  %v187 = vsel %vm155, %v128, 0
  %v190 = vsel %vm155, %v129, 0
  %v193 = vsel %vm155, %v130, 0
  %v196 = vsel %vm155, %v131, 0
  %v199 = vsel %vm155, %v132, 0
  %v202 = vsel %vm155, %v133, 0
  %vm204 = vcmask 1042432
  %v206 = vsel %vm204, %v151, 0
  %208 = vmatprep.subr.bf16.mxu0 0
  %209 = vmatpush1.bf16.msra.mxu0 %v148
  %210 = vmatprep.subr.bf16.mxu0 0
  %211 = vmatpush1.bf16.msra.mxu0 %v149
  %212 = vmatprep.subr.bf16.mxu0 0
  %213 = vmatpush1.bf16.msra.mxu0 %v150
  %214 = vmatprep.subr.bf16.mxu0 0
  %215 = vmatpush1.bf16.msra.mxu0 %v206
  %216 = vmatprep.subr.bf16.mxu0 0
  %217 = vmatpush1.bf16.msra.mxu0 0
  %218 = vmatprep.subr.bf16.mxu0 0
  %219 = vmatpush1.bf16.msra.mxu0 0
  %220 = vmatprep.subr.bf16.mxu0 0
  %221 = vmatpush1.bf16.msra.mxu0 0
  %222 = vmatprep.subr.bf16.mxu0 0
  %223 = vmatpush1.bf16.msra.mxu0 0
  %224 = vmatprep.subr.bf16.mxu0 0
  %225 = vmatpush1.bf16.msra.mxu0 0
  %226 = vmatprep.subr.bf16.mxu0 0
  %227 = vmatpush1.bf16.msra.mxu0 0
  %228 = vmatprep.subr.bf16.mxu0 0
  %229 = vmatpush1.bf16.msra.mxu0 0
  %230 = vmatprep.subr.bf16.mxu0 0
  %231 = vmatpush1.bf16.msra.mxu0 0
  %232 = vmatprep.subr.bf16.mxu0 0
  %233 = vmatpush1.bf16.msra.mxu0 0
  %234 = vmatprep.subr.bf16.mxu0 0
  %235 = vmatpush1.bf16.msra.mxu0 0
  %236 = vmatprep.subr.bf16.mxu0 0
  %237 = vmatpush1.bf16.msra.mxu0 0
  %238 = vmatprep.subr.bf16.mxu0 0
  %239 = vmatpush1.bf16.msra.mxu0 0
  %240 = vmatprep.mubr.bf16.mxu0 0
  %241 = vmatmul.mubr.bf16.gmra.mrb[0].mxu0 %v157
  %v242 = vpop.f32.mrb[0].mxu0
  %v243 = vadd.f32 0.0, %v242
  %v244 = vpop.f32.mrb[0].mxu0
  %v245 = vpop.f32.mrb[0].mxu0
  %v246 = vadd.f32 0.0, %v245
  %v247 = vpop.f32.mrb[0].mxu0
  %248 = vmatprep.mubr.bf16.mxu0 0
  %249 = vmatmul.mubr.bf16.gmra.mrb[0].mxu0 %v160
  %v250 = vpop.f32.mrb[0].mxu0
  %v251 = vadd.f32 0.0, %v250
  %v252 = vpop.f32.mrb[0].mxu0
  %v253 = vpop.f32.mrb[0].mxu0
  %v254 = vadd.f32 0.0, %v253
  %v255 = vpop.f32.mrb[0].mxu0
  %256 = vmatprep.mubr.bf16.mxu0 0
  %257 = vmatmul.mubr.bf16.gmra.mrb[0].mxu0 %v163
  %v258 = vpop.f32.mrb[0].mxu0
  %v259 = vadd.f32 0.0, %v258
  %v260 = vpop.f32.mrb[0].mxu0
  %v261 = vpop.f32.mrb[0].mxu0
  %v262 = vadd.f32 0.0, %v261
  %v263 = vpop.f32.mrb[0].mxu0
  %264 = vmatprep.mubr.bf16.mxu0 0
  %265 = vmatmul.mubr.bf16.gmra.mrb[0].mxu0 %v166
  %v266 = vpop.f32.mrb[0].mxu0
  %v267 = vadd.f32 0.0, %v266
  %v268 = vpop.f32.mrb[0].mxu0
  %v269 = vpop.f32.mrb[0].mxu0
  %v270 = vadd.f32 0.0, %v269
  %v271 = vpop.f32.mrb[0].mxu0
  %272 = vmatprep.mubr.bf16.mxu0 0
  %273 = vmatmul.mubr.bf16.gmra.mrb[0].mxu0 %v169
  %v274 = vpop.f32.mrb[0].mxu0
  %v275 = vadd.f32 0.0, %v274
  %v276 = vpop.f32.mrb[0].mxu0
  %v277 = vpop.f32.mrb[0].mxu0
  %v278 = vadd.f32 0.0, %v277
  %v279 = vpop.f32.mrb[0].mxu0
  %280 = vmatprep.mubr.bf16.mxu0 0
  %281 = vmatmul.mubr.bf16.gmra.mrb[0].mxu0 %v172
  %v282 = vpop.f32.mrb[0].mxu0
  %v283 = vadd.f32 0.0, %v282
  %v284 = vpop.f32.mrb[0].mxu0
  %v285 = vpop.f32.mrb[0].mxu0
  %v286 = vadd.f32 0.0, %v285
  %v287 = vpop.f32.mrb[0].mxu0
  %288 = vmatprep.mubr.bf16.mxu0 0
  %289 = vmatmul.mubr.bf16.gmra.mrb[0].mxu0 %v175
  %v290 = vpop.f32.mrb[0].mxu0
  %v291 = vadd.f32 0.0, %v290
  %v292 = vpop.f32.mrb[0].mxu0
  %v293 = vpop.f32.mrb[0].mxu0
  %v294 = vadd.f32 0.0, %v293
  %v295 = vpop.f32.mrb[0].mxu0
  %296 = vmatprep.mubr.bf16.mxu0 0
  %297 = vmatmul.mubr.bf16.gmra.mrb[0].mxu0 %v178
  %v298 = vpop.f32.mrb[0].mxu0
  %v299 = vadd.f32 0.0, %v298
  %v300 = vpop.f32.mrb[0].mxu0
  %v301 = vpop.f32.mrb[0].mxu0
  %v302 = vadd.f32 0.0, %v301
  %v303 = vpop.f32.mrb[0].mxu0
  %304 = vmatprep.mubr.bf16.mxu0 0
  %305 = vmatmul.mubr.bf16.gmra.mrb[0].mxu0 %v181
  %v306 = vpop.f32.mrb[0].mxu0
  %v307 = vadd.f32 0.0, %v306
  %v308 = vpop.f32.mrb[0].mxu0
  %v309 = vpop.f32.mrb[0].mxu0
  %v310 = vadd.f32 0.0, %v309
  %v311 = vpop.f32.mrb[0].mxu0
  %312 = vmatprep.mubr.bf16.mxu0 0
  %313 = vmatmul.mubr.bf16.gmra.mrb[0].mxu0 %v184
  %v314 = vpop.f32.mrb[0].mxu0
  %v315 = vadd.f32 0.0, %v314
  %v316 = vpop.f32.mrb[0].mxu0
  %v317 = vpop.f32.mrb[0].mxu0
  %v318 = vadd.f32 0.0, %v317
  %v319 = vpop.f32.mrb[0].mxu0
  %320 = vmatprep.mubr.bf16.mxu0 0
  %321 = vmatmul.mubr.bf16.gmra.mrb[0].mxu0 %v187
  %v322 = vpop.f32.mrb[0].mxu0
  %v323 = vadd.f32 0.0, %v322
  %v324 = vpop.f32.mrb[0].mxu0
  %v325 = vpop.f32.mrb[0].mxu0
  %v326 = vadd.f32 0.0, %v325
  %v327 = vpop.f32.mrb[0].mxu0
  %328 = vmatprep.mubr.bf16.mxu0 0
  %329 = vmatmul.mubr.bf16.gmra.mrb[0].mxu0 %v190
  %v330 = vpop.f32.mrb[0].mxu0
  %v331 = vadd.f32 0.0, %v330
  %v332 = vpop.f32.mrb[0].mxu0
  %v333 = vpop.f32.mrb[0].mxu0
  %v334 = vadd.f32 0.0, %v333
  %v335 = vpop.f32.mrb[0].mxu0
  %336 = vmatprep.mubr.bf16.mxu0 0
  %337 = vmatmul.mubr.bf16.gmra.mrb[0].mxu0 %v193
  %v338 = vpop.f32.mrb[0].mxu0
  %v339 = vadd.f32 0.0, %v338
  %v340 = vpop.f32.mrb[0].mxu0
  %v341 = vpop.f32.mrb[0].mxu0
  %v342 = vadd.f32 0.0, %v341
  %v343 = vpop.f32.mrb[0].mxu0
  %344 = vmatprep.mubr.bf16.mxu0 0
  %345 = vmatmul.mubr.bf16.gmra.mrb[0].mxu0 %v196
  %v346 = vpop.f32.mrb[0].mxu0
  %v347 = vadd.f32 0.0, %v346
  %v348 = vpop.f32.mrb[0].mxu0
  %v349 = vpop.f32.mrb[0].mxu0
  %v350 = vadd.f32 0.0, %v349
  %v351 = vpop.f32.mrb[0].mxu0
  %352 = vmatprep.mubr.bf16.mxu0 0
  %353 = vmatmul.mubr.bf16.gmra.mrb[0].mxu0 %v199
  %v354 = vpop.f32.mrb[0].mxu0
  %v355 = vadd.f32 0.0, %v354
  %v356 = vpop.f32.mrb[0].mxu0
  %v357 = vpop.f32.mrb[0].mxu0
  %v358 = vadd.f32 0.0, %v357
  %v359 = vpop.f32.mrb[0].mxu0
  %360 = vmatprep.mubr.bf16.mxu0 0
  %361 = vmatmul.mubr.bf16.gmra.mrb[0].mxu0 %v202
  %v362 = vpop.f32.mrb[0].mxu0
  %v363 = vadd.f32 0.0, %v362
  %v364 = vpop.f32.mrb[0].mxu0
  %v365 = vpop.f32.mrb[0].mxu0
  %v366 = vadd.f32 0.0, %v365
  %v367 = vpop.f32.mrb[0].mxu0
  %368 = vdwg.mxu0
  %v369 = vpack.c.bf16 %v246, %v243
  %v370 = vpack.c.bf16 %v254, %v251
  %v371 = vpack.c.bf16 %v262, %v259
  %v372 = vpack.c.bf16 %v270, %v267
  %v373 = vpack.c.bf16 %v278, %v275
  %v374 = vpack.c.bf16 %v286, %v283
  %v375 = vpack.c.bf16 %v294, %v291
  %v376 = vpack.c.bf16 %v302, %v299
  %v377 = vpack.c.bf16 %v310, %v307
  %v378 = vpack.c.bf16 %v318, %v315
  %v379 = vpack.c.bf16 %v326, %v323
  %v380 = vpack.c.bf16 %v334, %v331
  %v381 = vpack.c.bf16 %v342, %v339
  %v382 = vpack.c.bf16 %v350, %v347
  %v383 = vpack.c.bf16 %v358, %v355
  %v384 = vpack.c.bf16 %v366, %v363
  %v401 = vunpack.c.l.b16 %v369
  %v402 = vunpack.c.h.b16 %v369
  %v403 = vunpack.c.l.b16 %v370
  %v404 = vunpack.c.h.b16 %v370
  %v405 = vunpack.c.l.b16 %v371
  %v406 = vunpack.c.h.b16 %v371
  %v407 = vunpack.c.l.b16 %v372
  %v408 = vunpack.c.h.b16 %v372
  %v409 = vunpack.c.l.b16 %v373
  %v410 = vunpack.c.h.b16 %v373
  %v411 = vunpack.c.l.b16 %v374
  %v412 = vunpack.c.h.b16 %v374
  %v413 = vunpack.c.l.b16 %v375
  %v414 = vunpack.c.h.b16 %v375
  %v415 = vunpack.c.l.b16 %v376
  %v416 = vunpack.c.h.b16 %v376
  %v417 = vunpack.c.l.b16 %v377
  %v418 = vunpack.c.h.b16 %v377
  %v419 = vunpack.c.l.b16 %v378
  %v420 = vunpack.c.h.b16 %v378
  %v421 = vunpack.c.l.b16 %v379
  %v422 = vunpack.c.h.b16 %v379
  %v423 = vunpack.c.l.b16 %v380
  %v424 = vunpack.c.h.b16 %v380
  %v425 = vunpack.c.l.b16 %v381
  %v426 = vunpack.c.h.b16 %v381
  %v427 = vunpack.c.l.b16 %v382
  %v428 = vunpack.c.h.b16 %v382
  %v429 = vunpack.c.l.b16 %v383
  %v430 = vunpack.c.h.b16 %v383
  %v431 = vunpack.c.l.b16 %v384
  %v432 = vunpack.c.h.b16 %v384
  %v433 = vpack.c.b16 %v401, %v401
  %v434 = vpack.c.b16 %v402, %v402
  %v435 = vpack.c.b16 %v403, %v403
  %v436 = vpack.c.b16 %v404, %v404
  %v437 = vpack.c.b16 %v405, %v405
  %v438 = vpack.c.b16 %v406, %v406
  %v439 = vpack.c.b16 %v407, %v407
  %v440 = vpack.c.b16 %v408, %v408
  %v441 = vpack.c.b16 %v409, %v409
  %v442 = vpack.c.b16 %v410, %v410
  %v443 = vpack.c.b16 %v411, %v411
  %v444 = vpack.c.b16 %v412, %v412
  %v445 = vpack.c.b16 %v413, %v413
  %v446 = vpack.c.b16 %v414, %v414
  %v447 = vpack.c.b16 %v415, %v415
  %v448 = vpack.c.b16 %v416, %v416
  %v449 = vpack.c.b16 %v417, %v417
  %v450 = vpack.c.b16 %v418, %v418
  %v451 = vpack.c.b16 %v419, %v419
  %v452 = vpack.c.b16 %v420, %v420
  %v453 = vpack.c.b16 %v421, %v421
  %v454 = vpack.c.b16 %v422, %v422
  %v455 = vpack.c.b16 %v423, %v423
  %v456 = vpack.c.b16 %v424, %v424
  %v457 = vpack.c.b16 %v425, %v425
  %v458 = vpack.c.b16 %v426, %v426
  %v459 = vpack.c.b16 %v427, %v427
  %v460 = vpack.c.b16 %v428, %v428
  %v461 = vpack.c.b16 %v429, %v429
  %v462 = vpack.c.b16 %v430, %v430
  %v463 = vpack.c.b16 %v431, %v431
  %v464 = vpack.c.b16 %v432, %v432
  %497 = vst [vmem:[%s2] sm:$0xf] %v433
  %498 = vst [vmem:[%s2 + $0x4] sm:$0xf] %v434
  %499 = vst [vmem:[%s2 + $0x8] sm:$0xf] %v435
  %500 = vst [vmem:[%s2 + $0xc] sm:$0xf] %v436
  %501 = vst [vmem:[%s2 + $0x10] sm:$0xf] %v437
  %502 = vst [vmem:[%s2 + $0x14] sm:$0xf] %v438
  %503 = vst [vmem:[%s2 + $0x18] sm:$0xf] %v439
  %504 = vst [vmem:[%s2 + $0x1c] sm:$0xf] %v440
  %505 = vst [vmem:[%s2 + $0x20] sm:$0xf] %v441
  %506 = vst [vmem:[%s2 + $0x24] sm:$0xf] %v442
  %507 = vst [vmem:[%s2 + $0x28] sm:$0xf] %v443
  %508 = vst [vmem:[%s2 + $0x2c] sm:$0xf] %v444
  %509 = vst [vmem:[%s2 + $0x30] sm:$0xf] %v445
  %510 = vst [vmem:[%s2 + $0x34] sm:$0xf] %v446
  %511 = vst [vmem:[%s2 + $0x38] sm:$0xf] %v447
  %512 = vst [vmem:[%s2 + $0x3c] sm:$0xf] %v448
  %513 = vst [vmem:[%s2 + $0x40] sm:$0xf] %v449
  %514 = vst [vmem:[%s2 + $0x44] sm:$0xf] %v450
  %515 = vst [vmem:[%s2 + $0x48] sm:$0xf] %v451
  %516 = vst [vmem:[%s2 + $0x4c] sm:$0xf] %v452
  %517 = vst [vmem:[%s2 + $0x50] sm:$0xf] %v453
  %518 = vst [vmem:[%s2 + $0x54] sm:$0xf] %v454
  %519 = vst [vmem:[%s2 + $0x58] sm:$0xf] %v455
  %520 = vst [vmem:[%s2 + $0x5c] sm:$0xf] %v456
  %521 = vst [vmem:[%s2 + $0x60] sm:$0xf] %v457
  %522 = vst [vmem:[%s2 + $0x64] sm:$0xf] %v458
  %523 = vst [vmem:[%s2 + $0x68] sm:$0xf] %v459
  %524 = vst [vmem:[%s2 + $0x6c] sm:$0xf] %v460
  %525 = vst [vmem:[%s2 + $0x70] sm:$0xf] %v461
  %526 = vst [vmem:[%s2 + $0x74] sm:$0xf] %v462
  %527 = vst [vmem:[%s2 + $0x78] sm:$0xf] %v463
  %528 = vst [vmem:[%s2 + $0x7c] sm:$0xf] %v464
  %v529 = vadd.f32 %v243, %v246
  %v530 = vadd.f32 %v529, %v251
  %v531 = vadd.f32 %v530, %v254
  %v532 = vadd.f32 %v531, %v259
  %v533 = vadd.f32 %v532, %v262
  %v534 = vadd.f32 %v533, %v267
  %v535 = vadd.f32 %v534, %v270
  %v536 = vadd.f32 %v535, %v275
  %v537 = vadd.f32 %v536, %v278
  %v538 = vadd.f32 %v537, %v283
  %v539 = vadd.f32 %v538, %v286
  %v540 = vadd.f32 %v539, %v291
  %v541 = vadd.f32 %v540, %v294
  %v542 = vadd.f32 %v541, %v299
  %v543 = vadd.f32 %v542, %v302
  %v544 = vadd.f32 %v543, %v307
  %v545 = vadd.f32 %v544, %v310
  %v546 = vadd.f32 %v545, %v315
  %v547 = vadd.f32 %v546, %v318
  %v548 = vadd.f32 %v547, %v323
  %v549 = vadd.f32 %v548, %v326
  %v550 = vadd.f32 %v549, %v331
  %v551 = vadd.f32 %v550, %v334
  %v552 = vadd.f32 %v551, %v339
  %v553 = vadd.f32 %v552, %v342
  %v554 = vadd.f32 %v553, %v347
  %v555 = vadd.f32 %v554, %v350
  %v556 = vadd.f32 %v555, %v355
  %v557 = vadd.f32 %v556, %v358
  %v558 = vadd.f32 %v557, %v363
  %v559 = vadd.f32 %v558, %v366
  %v560 = vrot.slane %v559, 4
  %v561 = vadd.f32 %v559, %v560
  %v562 = vrot.slane %v561, 2
  %v563 = vadd.f32 %v561, %v562
  %v564 = vrot.slane %v563, 1
  %v565 = vadd.f32 %v563, %v564
  %566 = vst [vmem:[%s3] sm:$0x1] %v565
  %v567 = vmul.f32 %v243, %v243
  %v568 = vmul.f32 %v246, %v246
  %v569 = vmul.f32 %v251, %v251
  %v570 = vmul.f32 %v254, %v254
  %v571 = vmul.f32 %v259, %v259
  %v572 = vmul.f32 %v262, %v262
  %v573 = vmul.f32 %v267, %v267
  %v574 = vmul.f32 %v270, %v270
  %v575 = vmul.f32 %v275, %v275
  %v576 = vmul.f32 %v278, %v278
  %v577 = vmul.f32 %v283, %v283
  %v578 = vmul.f32 %v286, %v286
  %v579 = vmul.f32 %v291, %v291
  %v580 = vmul.f32 %v294, %v294
  %v581 = vmul.f32 %v299, %v299
  %v582 = vmul.f32 %v302, %v302
  %v583 = vmul.f32 %v307, %v307
  %v584 = vmul.f32 %v310, %v310
  %v585 = vmul.f32 %v315, %v315
  %v586 = vmul.f32 %v318, %v318
  %v587 = vmul.f32 %v323, %v323
  %v588 = vmul.f32 %v326, %v326
  %v589 = vmul.f32 %v331, %v331
  %v590 = vmul.f32 %v334, %v334
  %v591 = vmul.f32 %v339, %v339
  %v592 = vmul.f32 %v342, %v342
  %v593 = vmul.f32 %v347, %v347
  %v594 = vmul.f32 %v350, %v350
  %v595 = vmul.f32 %v355, %v355
  %v596 = vmul.f32 %v358, %v358
  %v597 = vmul.f32 %v363, %v363
  %v598 = vmul.f32 %v366, %v366
  %v599 = vadd.f32 %v567, %v568
  %v600 = vadd.f32 %v599, %v569
  %v601 = vadd.f32 %v600, %v570
  %v602 = vadd.f32 %v601, %v571
  %v603 = vadd.f32 %v602, %v572
  %v604 = vadd.f32 %v603, %v573
  %v605 = vadd.f32 %v604, %v574
  %v606 = vadd.f32 %v605, %v575
  %v607 = vadd.f32 %v606, %v576
  %v608 = vadd.f32 %v607, %v577
  %v609 = vadd.f32 %v608, %v578
  %v610 = vadd.f32 %v609, %v579
  %v611 = vadd.f32 %v610, %v580
  %v612 = vadd.f32 %v611, %v581
  %v613 = vadd.f32 %v612, %v582
  %v614 = vadd.f32 %v613, %v583
  %v615 = vadd.f32 %v614, %v584
  %v616 = vadd.f32 %v615, %v585
  %v617 = vadd.f32 %v616, %v586
  %v618 = vadd.f32 %v617, %v587
  %v619 = vadd.f32 %v618, %v588
  %v620 = vadd.f32 %v619, %v589
  %v621 = vadd.f32 %v620, %v590
  %v622 = vadd.f32 %v621, %v591
  %v623 = vadd.f32 %v622, %v592
  %v624 = vadd.f32 %v623, %v593
  %v625 = vadd.f32 %v624, %v594
  %v626 = vadd.f32 %v625, %v595
  %v627 = vadd.f32 %v626, %v596
  %v628 = vadd.f32 %v627, %v597
  %v629 = vadd.f32 %v628, %v598
  %v630 = vrot.slane %v629, 4
  %v631 = vadd.f32 %v629, %v630
  %v632 = vrot.slane %v631, 2
  %v633 = vadd.f32 %v631, %v632
  %v634 = vrot.slane %v633, 1
  %v635 = vadd.f32 %v633, %v634
  %636 = vst [vmem:[%s4] sm:$0x1] %v635
  // Predicated region
  $region10: #{simple_hrnet_forward.8} parent=0 // pred_check
    _
  $region11: #{simple_hrnet_forward.8} parent=0 // pred_check_branch
    %638 = sbr.rel (0) target = $region13
  $region12: #{simple_hrnet_forward.8} parent=0 // pred_region
    _
  $region13: #{simple_hrnet_forward.8} parent=0 // pred_fallthru
    _
  // Predicated region
  $region14: #{simple_hrnet_forward.8} parent=0 // pred_check
    _
  $region15: #{simple_hrnet_forward.8} parent=0 // pred_check_branch
    %640 = sbr.rel (0) target = $region17
  $region16: #{simple_hrnet_forward.8} parent=0 // pred_region
    _
  $region17: #{simple_hrnet_forward.8} parent=0 // pred_fallthru
    _
  // Predicated region
  $region18: #{simple_hrnet_forward.8} parent=0 // pred_check
    _
  $region19: #{simple_hrnet_forward.8} parent=0 // pred_check_branch
    %642 = sbr.rel (0) target = $region21
  $region20: #{simple_hrnet_forward.8} parent=0 // pred_region
    _
  $region21: #{simple_hrnet_forward.8} parent=0 // pred_fallthru
    _
  // Predicated region
  $region22: #{simple_hrnet_forward.8} parent=0 // pred_check
    _
  $region23: #{simple_hrnet_forward.8} parent=0 // pred_check_branch
    %644 = sbr.rel (0) target = $region25
  $region24: #{simple_hrnet_forward.8} parent=0 // pred_region
    _
  $region25: #{simple_hrnet_forward.8} parent=0 // pred_fallthru
    _
  // Predicated region
  $region26: #{simple_hrnet_forward.8} parent=0 // pred_check
    _
  $region27: #{simple_hrnet_forward.8} parent=0 // pred_check_branch
    %646 = sbr.rel (0) target = $region29
  $region28: #{simple_hrnet_forward.8} parent=0 // pred_region
    _
  $region29: #{simple_hrnet_forward.8} parent=0 // pred_fallthru
    _
  // Predicated region
  $region30: #{simple_hrnet_forward.8} parent=0 // pred_check
    _
  $region31: #{simple_hrnet_forward.8} parent=0 // pred_check_branch
    %648 = sbr.rel (0) target = $region33
  $region32: #{simple_hrnet_forward.8} parent=0 // pred_region
    _
  $region33: #{simple_hrnet_forward.8} parent=0 // pred_fallthru
    _

// kernel: simple_hrnet_forward.9
$region0: #{simple_hrnet_forward.9}
  #allocation0 [shape = 'u32[]', space=smem, size = 0x4, offset = 0x4, fixed_abs, tag = 'smem constant byte address 0x4 - core index']
  #allocation1 [shape = 'u32[144,128]{1,0:T(1,128)}', space=vmem, size = 0x12000, scoped, tag = 'internal scratch']
  %s0 = inlined_call_operand.vmem [shape: bf16[256,128], index: 0, kind: input, shape index: {}]
  %s1 = inlined_call_operand.vmem [shape: f32[1,128], index: 1, kind: input, shape index: {}]
  %s2 = inlined_call_operand.vmem [shape: f32[1,128], index: 2, kind: input, shape index: {}]
  %s3 = inlined_call_operand.vmem [shape: bf16[256,128], index: 3, kind: output, shape index: {}]
  %s4 = sld [smem:[#allocation0]]
  $region22: #{simple_hrnet_forward.9} parent=0
    _
  %s6 = ssub.s32 1, %s4
  %s7 = scalar_select 0, %s6, %s4
  // Predicated region
  $region2: #{simple_hrnet_forward.9} parent=0 // pred_check
    _
  $region3: #{simple_hrnet_forward.9} parent=0 // pred_check_branch
    %9 = sbr.rel (0) target = $region5
  $region4: #{simple_hrnet_forward.9} parent=0 // pred_region
    _
  $region5: #{simple_hrnet_forward.9} parent=0 // pred_fallthru
    _
  // Predicated region
  $region6: #{simple_hrnet_forward.9} parent=0 // pred_check
    _
  $region7: #{simple_hrnet_forward.9} parent=0 // pred_check_branch
    %11 = sbr.rel (0) target = $region9
  $region8: #{simple_hrnet_forward.9} parent=0 // pred_region
    _
  $region9: #{simple_hrnet_forward.9} parent=0 // pred_fallthru
    _
  // Predicated region
  $region10: #{simple_hrnet_forward.9} parent=0 // pred_check
    _
  $region11: #{simple_hrnet_forward.9} parent=0 // pred_check_branch
    %13 = sbr.rel (0) target = $region13
  $region12: #{simple_hrnet_forward.9} parent=0 // pred_region
    _
  $region13: #{simple_hrnet_forward.9} parent=0 // pred_fallthru
    _
  %v14 = vld [vmem:[%s0] sm:$0xf]
  %v15 = vld [vmem:[%s0 + $0x4] sm:$0xf]
  %v16 = vld [vmem:[%s0 + $0x8] sm:$0xf]
  %v17 = vld [vmem:[%s0 + $0xc] sm:$0xf]
  %v18 = vld [vmem:[%s0 + $0x10] sm:$0xf]
  %v19 = vld [vmem:[%s0 + $0x14] sm:$0xf]
  %v20 = vld [vmem:[%s0 + $0x18] sm:$0xf]
  %v21 = vld [vmem:[%s0 + $0x1c] sm:$0xf]
  %v22 = vld [vmem:[%s0 + $0x20] sm:$0xf]
  %v23 = vld [vmem:[%s0 + $0x24] sm:$0xf]
  %v24 = vld [vmem:[%s0 + $0x28] sm:$0xf]
  %v25 = vld [vmem:[%s0 + $0x2c] sm:$0xf]
  %v26 = vld [vmem:[%s0 + $0x30] sm:$0xf]
  %v27 = vld [vmem:[%s0 + $0x34] sm:$0xf]
  %v28 = vld [vmem:[%s0 + $0x38] sm:$0xf]
  %v29 = vld [vmem:[%s0 + $0x3c] sm:$0xf]
  %v30 = vld [vmem:[%s0 + $0x40] sm:$0xf]
  %v31 = vld [vmem:[%s0 + $0x44] sm:$0xf]
  %v32 = vld [vmem:[%s0 + $0x48] sm:$0xf]
  %v33 = vld [vmem:[%s0 + $0x4c] sm:$0xf]
  %v34 = vld [vmem:[%s0 + $0x50] sm:$0xf]
  %v35 = vld [vmem:[%s0 + $0x54] sm:$0xf]
  %v36 = vld [vmem:[%s0 + $0x58] sm:$0xf]
  %v37 = vld [vmem:[%s0 + $0x5c] sm:$0xf]
  %v38 = vld [vmem:[%s0 + $0x60] sm:$0xf]
  %v39 = vld [vmem:[%s0 + $0x64] sm:$0xf]
  %v40 = vld [vmem:[%s0 + $0x68] sm:$0xf]
  %v41 = vld [vmem:[%s0 + $0x6c] sm:$0xf]
  %v42 = vld [vmem:[%s0 + $0x70] sm:$0xf]
  %v43 = vld [vmem:[%s0 + $0x74] sm:$0xf]
  %v44 = vld [vmem:[%s0 + $0x78] sm:$0xf]
  %v45 = vld [vmem:[%s0 + $0x7c] sm:$0xf]
  %v46 = vunpack.c.l.bf16 %v14
  %v47 = vunpack.c.l.bf16 %v15
  %v48 = vunpack.c.l.bf16 %v16
  %v49 = vunpack.c.l.bf16 %v17
  %v50 = vunpack.c.l.bf16 %v18
  %v51 = vunpack.c.l.bf16 %v19
  %v52 = vunpack.c.l.bf16 %v20
  %v53 = vunpack.c.l.bf16 %v21
  %v54 = vunpack.c.l.bf16 %v22
  %v55 = vunpack.c.l.bf16 %v23
  %v56 = vunpack.c.l.bf16 %v24
  %v57 = vunpack.c.l.bf16 %v25
  %v58 = vunpack.c.l.bf16 %v26
  %v59 = vunpack.c.l.bf16 %v27
  %v60 = vunpack.c.l.bf16 %v28
  %v61 = vunpack.c.l.bf16 %v29
  %v62 = vunpack.c.l.bf16 %v30
  %v63 = vunpack.c.l.bf16 %v31
  %v64 = vunpack.c.l.bf16 %v32
  %v65 = vunpack.c.l.bf16 %v33
  %v66 = vunpack.c.l.bf16 %v34
  %v67 = vunpack.c.l.bf16 %v35
  %v68 = vunpack.c.l.bf16 %v36
  %v69 = vunpack.c.l.bf16 %v37
  %v70 = vunpack.c.l.bf16 %v38
  %v71 = vunpack.c.l.bf16 %v39
  %v72 = vunpack.c.l.bf16 %v40
  %v73 = vunpack.c.l.bf16 %v41
  %v74 = vunpack.c.l.bf16 %v42
  %v75 = vunpack.c.l.bf16 %v43
  %v76 = vunpack.c.l.bf16 %v44
  %v77 = vunpack.c.l.bf16 %v45
  %v78 = vld [vmem:[%s1] sm:$0x1]
  %v80 = vlaneseq
  %v81 = vshrl.u32 %v80, 7
  %v82 = vsub.s32 0, %v81
  %v83 = vrot.slane %v78, %v82
  %v85 = vmul.f32 %v46, %v83
  %v86 = vmul.f32 %v47, %v83
  %v87 = vmul.f32 %v48, %v83
  %v88 = vmul.f32 %v49, %v83
  %v89 = vmul.f32 %v50, %v83
  %v90 = vmul.f32 %v51, %v83
  %v91 = vmul.f32 %v52, %v83
  %v92 = vmul.f32 %v53, %v83
  %v93 = vmul.f32 %v54, %v83
  %v94 = vmul.f32 %v55, %v83
  %v95 = vmul.f32 %v56, %v83
  %v96 = vmul.f32 %v57, %v83
  %v97 = vmul.f32 %v58, %v83
  %v98 = vmul.f32 %v59, %v83
  %v99 = vmul.f32 %v60, %v83
  %v100 = vmul.f32 %v61, %v83
  %v101 = vmul.f32 %v62, %v83
  %v102 = vmul.f32 %v63, %v83
  %v103 = vmul.f32 %v64, %v83
  %v104 = vmul.f32 %v65, %v83
  %v105 = vmul.f32 %v66, %v83
  %v106 = vmul.f32 %v67, %v83
  %v107 = vmul.f32 %v68, %v83
  %v108 = vmul.f32 %v69, %v83
  %v109 = vmul.f32 %v70, %v83
  %v110 = vmul.f32 %v71, %v83
  %v111 = vmul.f32 %v72, %v83
  %v112 = vmul.f32 %v73, %v83
  %v113 = vmul.f32 %v74, %v83
  %v114 = vmul.f32 %v75, %v83
  %v115 = vmul.f32 %v76, %v83
  %v116 = vmul.f32 %v77, %v83
  %v117 = vld [vmem:[%s2] sm:$0x1]
  %v119 = vlaneseq
  %v120 = vshrl.u32 %v119, 7
  %v121 = vsub.s32 0, %v120
  %v122 = vrot.slane %v117, %v121
  %v124 = vadd.f32 %v85, %v122
  %v125 = vadd.f32 %v86, %v122
  %v126 = vadd.f32 %v87, %v122
  %v127 = vadd.f32 %v88, %v122
  %v128 = vadd.f32 %v89, %v122
  %v129 = vadd.f32 %v90, %v122
  %v130 = vadd.f32 %v91, %v122
  %v131 = vadd.f32 %v92, %v122
  %v132 = vadd.f32 %v93, %v122
  %v133 = vadd.f32 %v94, %v122
  %v134 = vadd.f32 %v95, %v122
  %v135 = vadd.f32 %v96, %v122
  %v136 = vadd.f32 %v97, %v122
  %v137 = vadd.f32 %v98, %v122
  %v138 = vadd.f32 %v99, %v122
  %v139 = vadd.f32 %v100, %v122
  %v140 = vadd.f32 %v101, %v122
  %v141 = vadd.f32 %v102, %v122
  %v142 = vadd.f32 %v103, %v122
  %v143 = vadd.f32 %v104, %v122
  %v144 = vadd.f32 %v105, %v122
  %v145 = vadd.f32 %v106, %v122
  %v146 = vadd.f32 %v107, %v122
  %v147 = vadd.f32 %v108, %v122
  %v148 = vadd.f32 %v109, %v122
  %v149 = vadd.f32 %v110, %v122
  %v150 = vadd.f32 %v111, %v122
  %v151 = vadd.f32 %v112, %v122
  %v152 = vadd.f32 %v113, %v122
  %v153 = vadd.f32 %v114, %v122
  %v154 = vadd.f32 %v115, %v122
  %v155 = vadd.f32 %v116, %v122
  %v156 = vmax.f32 %v124, 0.0
  %v157 = vmax.f32 %v125, 0.0
  %v158 = vmax.f32 %v126, 0.0
  %v159 = vmax.f32 %v127, 0.0
  %v160 = vmax.f32 %v128, 0.0
  %v161 = vmax.f32 %v129, 0.0
  %v162 = vmax.f32 %v130, 0.0
  %v163 = vmax.f32 %v131, 0.0
  %v164 = vmax.f32 %v132, 0.0
  %v165 = vmax.f32 %v133, 0.0
  %v166 = vmax.f32 %v134, 0.0
  %v167 = vmax.f32 %v135, 0.0
  %v168 = vmax.f32 %v136, 0.0
  %v169 = vmax.f32 %v137, 0.0
  %v170 = vmax.f32 %v138, 0.0
  %v171 = vmax.f32 %v139, 0.0
  %v172 = vmax.f32 %v140, 0.0
  %v173 = vmax.f32 %v141, 0.0
  %v174 = vmax.f32 %v142, 0.0
  %v175 = vmax.f32 %v143, 0.0
  %v176 = vmax.f32 %v144, 0.0
  %v177 = vmax.f32 %v145, 0.0
  %v178 = vmax.f32 %v146, 0.0
  %v179 = vmax.f32 %v147, 0.0
  %v180 = vmax.f32 %v148, 0.0
  %v181 = vmax.f32 %v149, 0.0
  %v182 = vmax.f32 %v150, 0.0
  %v183 = vmax.f32 %v151, 0.0
  %v184 = vmax.f32 %v152, 0.0
  %v185 = vmax.f32 %v153, 0.0
  %v186 = vmax.f32 %v154, 0.0
  %v187 = vmax.f32 %v155, 0.0
  %v188 = vpack.c.bf16 %v157, %v156
  %v189 = vpack.c.bf16 %v159, %v158
  %v190 = vpack.c.bf16 %v161, %v160
  %v191 = vpack.c.bf16 %v163, %v162
  %v192 = vpack.c.bf16 %v165, %v164
  %v193 = vpack.c.bf16 %v167, %v166
  %v194 = vpack.c.bf16 %v169, %v168
  %v195 = vpack.c.bf16 %v171, %v170
  %v196 = vpack.c.bf16 %v173, %v172
  %v197 = vpack.c.bf16 %v175, %v174
  %v198 = vpack.c.bf16 %v177, %v176
  %v199 = vpack.c.bf16 %v179, %v178
  %v200 = vpack.c.bf16 %v181, %v180
  %v201 = vpack.c.bf16 %v183, %v182
  %v202 = vpack.c.bf16 %v185, %v184
  %v203 = vpack.c.bf16 %v187, %v186
  %v220 = vunpack.c.l.b16 %v188
  %v221 = vunpack.c.h.b16 %v188
  %v222 = vunpack.c.l.b16 %v189
  %v223 = vunpack.c.h.b16 %v189
  %v224 = vunpack.c.l.b16 %v190
  %v225 = vunpack.c.h.b16 %v190
  %v226 = vunpack.c.l.b16 %v191
  %v227 = vunpack.c.h.b16 %v191
  %v228 = vunpack.c.l.b16 %v192
  %v229 = vunpack.c.h.b16 %v192
  %v230 = vunpack.c.l.b16 %v193
  %v231 = vunpack.c.h.b16 %v193
  %v232 = vunpack.c.l.b16 %v194
  %v233 = vunpack.c.h.b16 %v194
  %v234 = vunpack.c.l.b16 %v195
  %v235 = vunpack.c.h.b16 %v195
  %v236 = vunpack.c.l.b16 %v196
  %v237 = vunpack.c.h.b16 %v196
  %v238 = vunpack.c.l.b16 %v197
  %v239 = vunpack.c.h.b16 %v197
  %v240 = vunpack.c.l.b16 %v198
  %v241 = vunpack.c.h.b16 %v198
  %v242 = vunpack.c.l.b16 %v199
  %v243 = vunpack.c.h.b16 %v199
  %v244 = vunpack.c.l.b16 %v200
  %v245 = vunpack.c.h.b16 %v200
  %v246 = vunpack.c.l.b16 %v201
  %v247 = vunpack.c.h.b16 %v201
  %v248 = vunpack.c.l.b16 %v202
  %v249 = vunpack.c.h.b16 %v202
  %v250 = vunpack.c.l.b16 %v203
  %v251 = vunpack.c.h.b16 %v203
  %v252 = vpack.c.b16 %v220, %v220
  %v253 = vpack.c.b16 %v221, %v221
  %v254 = vpack.c.b16 %v222, %v222
  %v255 = vpack.c.b16 %v223, %v223
  %v256 = vpack.c.b16 %v224, %v224
  %v257 = vpack.c.b16 %v225, %v225
  %v258 = vpack.c.b16 %v226, %v226
  %v259 = vpack.c.b16 %v227, %v227
  %v260 = vpack.c.b16 %v228, %v228
  %v261 = vpack.c.b16 %v229, %v229
  %v262 = vpack.c.b16 %v230, %v230
  %v263 = vpack.c.b16 %v231, %v231
  %v264 = vpack.c.b16 %v232, %v232
  %v265 = vpack.c.b16 %v233, %v233
  %v266 = vpack.c.b16 %v234, %v234
  %v267 = vpack.c.b16 %v235, %v235
  %v268 = vpack.c.b16 %v236, %v236
  %v269 = vpack.c.b16 %v237, %v237
  %v270 = vpack.c.b16 %v238, %v238
  %v271 = vpack.c.b16 %v239, %v239
  %v272 = vpack.c.b16 %v240, %v240
  %v273 = vpack.c.b16 %v241, %v241
  %v274 = vpack.c.b16 %v242, %v242
  %v275 = vpack.c.b16 %v243, %v243
  %v276 = vpack.c.b16 %v244, %v244
  %v277 = vpack.c.b16 %v245, %v245
  %v278 = vpack.c.b16 %v246, %v246
  %v279 = vpack.c.b16 %v247, %v247
  %v280 = vpack.c.b16 %v248, %v248
  %v281 = vpack.c.b16 %v249, %v249
  %v282 = vpack.c.b16 %v250, %v250
  %v283 = vpack.c.b16 %v251, %v251
  %316 = vst [vmem:[%s3] sm:$0xf] %v252
  %317 = vst [vmem:[%s3 + $0x4] sm:$0xf] %v253
  %318 = vst [vmem:[%s3 + $0x8] sm:$0xf] %v254
  %319 = vst [vmem:[%s3 + $0xc] sm:$0xf] %v255
  %320 = vst [vmem:[%s3 + $0x10] sm:$0xf] %v256
  %321 = vst [vmem:[%s3 + $0x14] sm:$0xf] %v257
  %322 = vst [vmem:[%s3 + $0x18] sm:$0xf] %v258
  %323 = vst [vmem:[%s3 + $0x1c] sm:$0xf] %v259
  %324 = vst [vmem:[%s3 + $0x20] sm:$0xf] %v260
  %325 = vst [vmem:[%s3 + $0x24] sm:$0xf] %v261
  %326 = vst [vmem:[%s3 + $0x28] sm:$0xf] %v262
  %327 = vst [vmem:[%s3 + $0x2c] sm:$0xf] %v263
  %328 = vst [vmem:[%s3 + $0x30] sm:$0xf] %v264
  %329 = vst [vmem:[%s3 + $0x34] sm:$0xf] %v265
  %330 = vst [vmem:[%s3 + $0x38] sm:$0xf] %v266
  %331 = vst [vmem:[%s3 + $0x3c] sm:$0xf] %v267
  %332 = vst [vmem:[%s3 + $0x40] sm:$0xf] %v268
  %333 = vst [vmem:[%s3 + $0x44] sm:$0xf] %v269
  %334 = vst [vmem:[%s3 + $0x48] sm:$0xf] %v270
  %335 = vst [vmem:[%s3 + $0x4c] sm:$0xf] %v271
  %336 = vst [vmem:[%s3 + $0x50] sm:$0xf] %v272
  %337 = vst [vmem:[%s3 + $0x54] sm:$0xf] %v273
  %338 = vst [vmem:[%s3 + $0x58] sm:$0xf] %v274
  %339 = vst [vmem:[%s3 + $0x5c] sm:$0xf] %v275
  %340 = vst [vmem:[%s3 + $0x60] sm:$0xf] %v276
  %341 = vst [vmem:[%s3 + $0x64] sm:$0xf] %v277
  %342 = vst [vmem:[%s3 + $0x68] sm:$0xf] %v278
  %343 = vst [vmem:[%s3 + $0x6c] sm:$0xf] %v279
  %344 = vst [vmem:[%s3 + $0x70] sm:$0xf] %v280
  %345 = vst [vmem:[%s3 + $0x74] sm:$0xf] %v281
  %346 = vst [vmem:[%s3 + $0x78] sm:$0xf] %v282
  %347 = vst [vmem:[%s3 + $0x7c] sm:$0xf] %v283
  // Predicated region
  $region14: #{simple_hrnet_forward.9} parent=0 // pred_check
    _
  $region15: #{simple_hrnet_forward.9} parent=0 // pred_check_branch
    %349 = sbr.rel (0) target = $region17
  $region16: #{simple_hrnet_forward.9} parent=0 // pred_region
    _
  $region17: #{simple_hrnet_forward.9} parent=0 // pred_fallthru
    _
  // Predicated region
  $region18: #{simple_hrnet_forward.9} parent=0 // pred_check
    _
  $region19: #{simple_hrnet_forward.9} parent=0 // pred_check_branch
    %351 = sbr.rel (0) target = $region21
  $region20: #{simple_hrnet_forward.9} parent=0 // pred_region
    _
  $region21: #{simple_hrnet_forward.9} parent=0 // pred_fallthru
    _

// kernel: simple_hrnet_forward.11
$region0: #{simple_hrnet_forward.11}
  #allocation0 [shape = 'u32[]', space=smem, size = 0x4, offset = 0x4, fixed_abs, tag = 'smem constant byte address 0x4 - core index']
  #allocation1 [shape = 'u32[144,128]{1,0:T(1,128)}', space=vmem, size = 0x12000, scoped, tag = 'internal scratch']
  %s0 = inlined_call_operand.vmem [shape: bf16[128,128], index: 0, kind: input, shape index: {}]
  %s1 = inlined_call_operand.vmem [shape: f32[1,128], index: 1, kind: input, shape index: {}]
  %s2 = inlined_call_operand.vmem [shape: f32[1,128], index: 2, kind: input, shape index: {}]
  %s3 = inlined_call_operand.vmem [shape: bf16[128,128], index: 3, kind: output, shape index: {}]
  %s4 = sld [smem:[#allocation0]]
  $region22: #{simple_hrnet_forward.11} parent=0
    _
  %s6 = ssub.s32 1, %s4
  %s7 = scalar_select 0, %s6, %s4
  // Predicated region
  $region2: #{simple_hrnet_forward.11} parent=0 // pred_check
    _
  $region3: #{simple_hrnet_forward.11} parent=0 // pred_check_branch
    %9 = sbr.rel (0) target = $region5
  $region4: #{simple_hrnet_forward.11} parent=0 // pred_region
    _
  $region5: #{simple_hrnet_forward.11} parent=0 // pred_fallthru
    _
  // Predicated region
  $region6: #{simple_hrnet_forward.11} parent=0 // pred_check
    _
  $region7: #{simple_hrnet_forward.11} parent=0 // pred_check_branch
    %11 = sbr.rel (0) target = $region9
  $region8: #{simple_hrnet_forward.11} parent=0 // pred_region
    _
  $region9: #{simple_hrnet_forward.11} parent=0 // pred_fallthru
    _
  // Predicated region
  $region10: #{simple_hrnet_forward.11} parent=0 // pred_check
    _
  $region11: #{simple_hrnet_forward.11} parent=0 // pred_check_branch
    %13 = sbr.rel (0) target = $region13
  $region12: #{simple_hrnet_forward.11} parent=0 // pred_region
    _
  $region13: #{simple_hrnet_forward.11} parent=0 // pred_fallthru
    _
  %v14 = vld [vmem:[%s0] sm:$0xf]
  %v15 = vld [vmem:[%s0 + $0x4] sm:$0xf]
  %v16 = vld [vmem:[%s0 + $0x8] sm:$0xf]
  %v17 = vld [vmem:[%s0 + $0xc] sm:$0xf]
  %v18 = vld [vmem:[%s0 + $0x10] sm:$0xf]
  %v19 = vld [vmem:[%s0 + $0x14] sm:$0xf]
  %v20 = vld [vmem:[%s0 + $0x18] sm:$0xf]
  %v21 = vld [vmem:[%s0 + $0x1c] sm:$0xf]
  %v22 = vld [vmem:[%s0 + $0x20] sm:$0xf]
  %v23 = vld [vmem:[%s0 + $0x24] sm:$0xf]
  %v24 = vld [vmem:[%s0 + $0x28] sm:$0xf]
  %v25 = vld [vmem:[%s0 + $0x2c] sm:$0xf]
  %v26 = vld [vmem:[%s0 + $0x30] sm:$0xf]
  %v27 = vld [vmem:[%s0 + $0x34] sm:$0xf]
  %v28 = vld [vmem:[%s0 + $0x38] sm:$0xf]
  %v29 = vld [vmem:[%s0 + $0x3c] sm:$0xf]
  %v30 = vunpack.c.l.bf16 %v14
  %v31 = vunpack.c.l.bf16 %v15
  %v32 = vunpack.c.l.bf16 %v16
  %v33 = vunpack.c.l.bf16 %v17
  %v34 = vunpack.c.l.bf16 %v18
  %v35 = vunpack.c.l.bf16 %v19
  %v36 = vunpack.c.l.bf16 %v20
  %v37 = vunpack.c.l.bf16 %v21
  %v38 = vunpack.c.l.bf16 %v22
  %v39 = vunpack.c.l.bf16 %v23
  %v40 = vunpack.c.l.bf16 %v24
  %v41 = vunpack.c.l.bf16 %v25
  %v42 = vunpack.c.l.bf16 %v26
  %v43 = vunpack.c.l.bf16 %v27
  %v44 = vunpack.c.l.bf16 %v28
  %v45 = vunpack.c.l.bf16 %v29
  %v46 = vld [vmem:[%s1] sm:$0x1]
  %v48 = vlaneseq
  %v49 = vshrl.u32 %v48, 7
  %v50 = vsub.s32 0, %v49
  %v51 = vrot.slane %v46, %v50
  %v53 = vmul.f32 %v30, %v51
  %v54 = vmul.f32 %v31, %v51
  %v55 = vmul.f32 %v32, %v51
  %v56 = vmul.f32 %v33, %v51
  %v57 = vmul.f32 %v34, %v51
  %v58 = vmul.f32 %v35, %v51
  %v59 = vmul.f32 %v36, %v51
  %v60 = vmul.f32 %v37, %v51
  %v61 = vmul.f32 %v38, %v51
  %v62 = vmul.f32 %v39, %v51
  %v63 = vmul.f32 %v40, %v51
  %v64 = vmul.f32 %v41, %v51
  %v65 = vmul.f32 %v42, %v51
  %v66 = vmul.f32 %v43, %v51
  %v67 = vmul.f32 %v44, %v51
  %v68 = vmul.f32 %v45, %v51
  %v69 = vld [vmem:[%s2] sm:$0x1]
  %v71 = vlaneseq
  %v72 = vshrl.u32 %v71, 7
  %v73 = vsub.s32 0, %v72
  %v74 = vrot.slane %v69, %v73
  %v76 = vadd.f32 %v53, %v74
  %v77 = vadd.f32 %v54, %v74
  %v78 = vadd.f32 %v55, %v74
  %v79 = vadd.f32 %v56, %v74
  %v80 = vadd.f32 %v57, %v74
  %v81 = vadd.f32 %v58, %v74
  %v82 = vadd.f32 %v59, %v74
  %v83 = vadd.f32 %v60, %v74
  %v84 = vadd.f32 %v61, %v74
  %v85 = vadd.f32 %v62, %v74
  %v86 = vadd.f32 %v63, %v74
  %v87 = vadd.f32 %v64, %v74
  %v88 = vadd.f32 %v65, %v74
  %v89 = vadd.f32 %v66, %v74
  %v90 = vadd.f32 %v67, %v74
  %v91 = vadd.f32 %v68, %v74
  %v92 = vmax.f32 %v76, 0.0
  %v93 = vmax.f32 %v77, 0.0
  %v94 = vmax.f32 %v78, 0.0
  %v95 = vmax.f32 %v79, 0.0
  %v96 = vmax.f32 %v80, 0.0
  %v97 = vmax.f32 %v81, 0.0
  %v98 = vmax.f32 %v82, 0.0
  %v99 = vmax.f32 %v83, 0.0
  %v100 = vmax.f32 %v84, 0.0
  %v101 = vmax.f32 %v85, 0.0
  %v102 = vmax.f32 %v86, 0.0
  %v103 = vmax.f32 %v87, 0.0
  %v104 = vmax.f32 %v88, 0.0
  %v105 = vmax.f32 %v89, 0.0
  %v106 = vmax.f32 %v90, 0.0
  %v107 = vmax.f32 %v91, 0.0
  %v108 = vpack.c.bf16 %v93, %v92
  %v109 = vpack.c.bf16 %v95, %v94
  %v110 = vpack.c.bf16 %v97, %v96
  %v111 = vpack.c.bf16 %v99, %v98
  %v112 = vpack.c.bf16 %v101, %v100
  %v113 = vpack.c.bf16 %v103, %v102
  %v114 = vpack.c.bf16 %v105, %v104
  %v115 = vpack.c.bf16 %v107, %v106
  %v124 = vunpack.c.l.b16 %v108
  %v125 = vunpack.c.h.b16 %v108
  %v126 = vunpack.c.l.b16 %v109
  %v127 = vunpack.c.h.b16 %v109
  %v128 = vunpack.c.l.b16 %v110
  %v129 = vunpack.c.h.b16 %v110
  %v130 = vunpack.c.l.b16 %v111
  %v131 = vunpack.c.h.b16 %v111
  %v132 = vunpack.c.l.b16 %v112
  %v133 = vunpack.c.h.b16 %v112
  %v134 = vunpack.c.l.b16 %v113
  %v135 = vunpack.c.h.b16 %v113
  %v136 = vunpack.c.l.b16 %v114
  %v137 = vunpack.c.h.b16 %v114
  %v138 = vunpack.c.l.b16 %v115
  %v139 = vunpack.c.h.b16 %v115
  %v140 = vpack.c.b16 %v124, %v124
  %v141 = vpack.c.b16 %v125, %v125
  %v142 = vpack.c.b16 %v126, %v126
  %v143 = vpack.c.b16 %v127, %v127
  %v144 = vpack.c.b16 %v128, %v128
  %v145 = vpack.c.b16 %v129, %v129
  %v146 = vpack.c.b16 %v130, %v130
  %v147 = vpack.c.b16 %v131, %v131
  %v148 = vpack.c.b16 %v132, %v132
  %v149 = vpack.c.b16 %v133, %v133
  %v150 = vpack.c.b16 %v134, %v134
  %v151 = vpack.c.b16 %v135, %v135
  %v152 = vpack.c.b16 %v136, %v136
  %v153 = vpack.c.b16 %v137, %v137
  %v154 = vpack.c.b16 %v138, %v138
  %v155 = vpack.c.b16 %v139, %v139
  %172 = vst [vmem:[%s3] sm:$0xf] %v140
  %173 = vst [vmem:[%s3 + $0x4] sm:$0xf] %v141
  %174 = vst [vmem:[%s3 + $0x8] sm:$0xf] %v142
  %175 = vst [vmem:[%s3 + $0xc] sm:$0xf] %v143
  %176 = vst [vmem:[%s3 + $0x10] sm:$0xf] %v144
  %177 = vst [vmem:[%s3 + $0x14] sm:$0xf] %v145
  %178 = vst [vmem:[%s3 + $0x18] sm:$0xf] %v146
  %179 = vst [vmem:[%s3 + $0x1c] sm:$0xf] %v147
  %180 = vst [vmem:[%s3 + $0x20] sm:$0xf] %v148
  %181 = vst [vmem:[%s3 + $0x24] sm:$0xf] %v149
  %182 = vst [vmem:[%s3 + $0x28] sm:$0xf] %v150
  %183 = vst [vmem:[%s3 + $0x2c] sm:$0xf] %v151
  %184 = vst [vmem:[%s3 + $0x30] sm:$0xf] %v152
  %185 = vst [vmem:[%s3 + $0x34] sm:$0xf] %v153
  %186 = vst [vmem:[%s3 + $0x38] sm:$0xf] %v154
  %187 = vst [vmem:[%s3 + $0x3c] sm:$0xf] %v155
  // Predicated region
  $region14: #{simple_hrnet_forward.11} parent=0 // pred_check
    _
  $region15: #{simple_hrnet_forward.11} parent=0 // pred_check_branch
    %189 = sbr.rel (0) target = $region17
  $region16: #{simple_hrnet_forward.11} parent=0 // pred_region
    _
  $region17: #{simple_hrnet_forward.11} parent=0 // pred_fallthru
    _
  // Predicated region
  $region18: #{simple_hrnet_forward.11} parent=0 // pred_check
    _
  $region19: #{simple_hrnet_forward.11} parent=0 // pred_check_branch
    %191 = sbr.rel (0) target = $region21
  $region20: #{simple_hrnet_forward.11} parent=0 // pred_region
    _
  $region21: #{simple_hrnet_forward.11} parent=0 // pred_fallthru
    _

// kernel: simple_hrnet_forward.10
$region0: #{simple_hrnet_forward.10}
  #allocation0 [shape = 'u32[]', space=smem, size = 0x4, offset = 0x4, fixed_abs, tag = 'smem constant byte address 0x4 - core index']
  #allocation1 [shape = 'u32[144,128]{1,0:T(1,128)}', space=vmem, size = 0x12000, scoped, tag = 'internal scratch']
  %s0 = inlined_call_operand.vmem [shape: bf16[128,576], index: 0, kind: input, shape index: {}]
  %s1 = inlined_call_operand.vmem [shape: bf16[576,128], index: 1, kind: input, shape index: {}]
  %s2 = inlined_call_operand.vmem [shape: bf16[128,128], index: 2, kind: output, shape index: {0}]
  %s3 = inlined_call_operand.vmem [shape: f32[1,1,128], index: 3, kind: output, shape index: {1}]
  %s4 = inlined_call_operand.vmem [shape: f32[1,1,128], index: 4, kind: output, shape index: {2}]
  %5 = xla_tuple %s2, %s3, %s4
  %s6 = sld [smem:[#allocation0]]
  $region34: #{simple_hrnet_forward.10} parent=0
    _
  %s8 = ssub.s32 1, %s6
  %s9 = scalar_select 0, %s8, %s6
  // Predicated region
  $region2: #{simple_hrnet_forward.10} parent=0 // pred_check
    _
  $region3: #{simple_hrnet_forward.10} parent=0 // pred_check_branch
    %11 = sbr.rel (0) target = $region5
  $region4: #{simple_hrnet_forward.10} parent=0 // pred_region
    _
  $region5: #{simple_hrnet_forward.10} parent=0 // pred_fallthru
    _
  // Predicated region
  $region6: #{simple_hrnet_forward.10} parent=0 // pred_check
    _
  $region7: #{simple_hrnet_forward.10} parent=0 // pred_check_branch
    %13 = sbr.rel (0) target = $region9
  $region8: #{simple_hrnet_forward.10} parent=0 // pred_region
    _
  $region9: #{simple_hrnet_forward.10} parent=0 // pred_fallthru
    _
  %v15 = vld [vmem:[%s0] sm:$0xff]
  %v16 = vld [vmem:[%s0 + $0x8] sm:$0xff]
  %v17 = vld [vmem:[%s0 + $0x10] sm:$0xf]
  %v18 = vld [vmem:[%s0 + $0x14] sm:$0xff]
  %v19 = vld [vmem:[%s0 + $0x1c] sm:$0xff]
  %v20 = vld [vmem:[%s0 + $0x24] sm:$0xf]
  %v21 = vld [vmem:[%s0 + $0x28] sm:$0xff]
  %v22 = vld [vmem:[%s0 + $0x30] sm:$0xff]
  %v23 = vld [vmem:[%s0 + $0x38] sm:$0xf]
  %v24 = vld [vmem:[%s0 + $0x3c] sm:$0xff]
  %v25 = vld [vmem:[%s0 + $0x44] sm:$0xff]
  %v26 = vld [vmem:[%s0 + $0x4c] sm:$0xf]
  %v27 = vld [vmem:[%s0 + $0x50] sm:$0xff]
  %v28 = vld [vmem:[%s0 + $0x58] sm:$0xff]
  %v29 = vld [vmem:[%s0 + $0x60] sm:$0xf]
  %v30 = vld [vmem:[%s0 + $0x64] sm:$0xff]
  %v31 = vld [vmem:[%s0 + $0x6c] sm:$0xff]
  %v32 = vld [vmem:[%s0 + $0x74] sm:$0xf]
  %v33 = vld [vmem:[%s0 + $0x78] sm:$0xff]
  %v34 = vld [vmem:[%s0 + $0x80] sm:$0xff]
  %v35 = vld [vmem:[%s0 + $0x88] sm:$0xf]
  %v36 = vld [vmem:[%s0 + $0x8c] sm:$0xff]
  %v37 = vld [vmem:[%s0 + $0x94] sm:$0xff]
  %v38 = vld [vmem:[%s0 + $0x9c] sm:$0xf]
  %v39 = vld [vmem:[%s0 + $0xa0] sm:$0xff]
  %v40 = vld [vmem:[%s0 + $0xa8] sm:$0xff]
  %v41 = vld [vmem:[%s0 + $0xb0] sm:$0xf]
  %v42 = vld [vmem:[%s0 + $0xb4] sm:$0xff]
  %v43 = vld [vmem:[%s0 + $0xbc] sm:$0xff]
  %v44 = vld [vmem:[%s0 + $0xc4] sm:$0xf]
  %v45 = vld [vmem:[%s0 + $0xc8] sm:$0xff]
  %v46 = vld [vmem:[%s0 + $0xd0] sm:$0xff]
  %v47 = vld [vmem:[%s0 + $0xd8] sm:$0xf]
  %v48 = vld [vmem:[%s0 + $0xdc] sm:$0xff]
  %v49 = vld [vmem:[%s0 + $0xe4] sm:$0xff]
  %v50 = vld [vmem:[%s0 + $0xec] sm:$0xf]
  %v51 = vld [vmem:[%s0 + $0xf0] sm:$0xff]
  %v52 = vld [vmem:[%s0 + $0xf8] sm:$0xff]
  %v53 = vld [vmem:[%s0 + $0x100] sm:$0xf]
  %v54 = vld [vmem:[%s0 + $0x104] sm:$0xff]
  %v55 = vld [vmem:[%s0 + $0x10c] sm:$0xff]
  %v56 = vld [vmem:[%s0 + $0x114] sm:$0xf]
  %v57 = vld [vmem:[%s0 + $0x118] sm:$0xff]
  %v58 = vld [vmem:[%s0 + $0x120] sm:$0xff]
  %v59 = vld [vmem:[%s0 + $0x128] sm:$0xf]
  %v60 = vld [vmem:[%s0 + $0x12c] sm:$0xff]
  %v61 = vld [vmem:[%s0 + $0x134] sm:$0xff]
  %v62 = vld [vmem:[%s0 + $0x13c] sm:$0xf]
  %v63 = vld [vmem:[%s1] sm:$0xf]
  %v64 = vld [vmem:[%s1 + $0x4] sm:$0xf]
  %v65 = vld [vmem:[%s1 + $0x8] sm:$0xf]
  %v66 = vld [vmem:[%s1 + $0xc] sm:$0xf]
  %v67 = vld [vmem:[%s1 + $0x10] sm:$0xf]
  %v68 = vld [vmem:[%s1 + $0x14] sm:$0xf]
  %v69 = vld [vmem:[%s1 + $0x18] sm:$0xf]
  %v70 = vld [vmem:[%s1 + $0x1c] sm:$0xf]
  %v71 = vld [vmem:[%s1 + $0x20] sm:$0xf]
  %v72 = vld [vmem:[%s1 + $0x24] sm:$0xf]
  %v73 = vld [vmem:[%s1 + $0x28] sm:$0xf]
  %v74 = vld [vmem:[%s1 + $0x2c] sm:$0xf]
  %v75 = vld [vmem:[%s1 + $0x30] sm:$0xf]
  %v76 = vld [vmem:[%s1 + $0x34] sm:$0xf]
  %v77 = vld [vmem:[%s1 + $0x38] sm:$0xf]
  %v78 = vld [vmem:[%s1 + $0x3c] sm:$0xf]
  %v79 = vld [vmem:[%s1 + $0x40] sm:$0xf]
  %v80 = vld [vmem:[%s1 + $0x44] sm:$0xf]
  %v81 = vld [vmem:[%s1 + $0x48] sm:$0xf]
  %v82 = vld [vmem:[%s1 + $0x4c] sm:$0xf]
  %v83 = vld [vmem:[%s1 + $0x50] sm:$0xf]
  %v84 = vld [vmem:[%s1 + $0x54] sm:$0xf]
  %v85 = vld [vmem:[%s1 + $0x58] sm:$0xf]
  %v86 = vld [vmem:[%s1 + $0x5c] sm:$0xf]
  %v87 = vld [vmem:[%s1 + $0x60] sm:$0xf]
  %v88 = vld [vmem:[%s1 + $0x64] sm:$0xf]
  %v89 = vld [vmem:[%s1 + $0x68] sm:$0xf]
  %v90 = vld [vmem:[%s1 + $0x6c] sm:$0xf]
  %v91 = vld [vmem:[%s1 + $0x70] sm:$0xf]
  %v92 = vld [vmem:[%s1 + $0x74] sm:$0xf]
  %v93 = vld [vmem:[%s1 + $0x78] sm:$0xf]
  %v94 = vld [vmem:[%s1 + $0x7c] sm:$0xf]
  %v95 = vld [vmem:[%s1 + $0x80] sm:$0xf]
  %v96 = vld [vmem:[%s1 + $0x84] sm:$0xf]
  %v97 = vld [vmem:[%s1 + $0x88] sm:$0xf]
  %v98 = vld [vmem:[%s1 + $0x8c] sm:$0xf]
  %v99 = vld [vmem:[%s1 + $0x90] sm:$0xf]
  %v100 = vld [vmem:[%s1 + $0x94] sm:$0xf]
  %v101 = vld [vmem:[%s1 + $0x98] sm:$0xf]
  %v102 = vld [vmem:[%s1 + $0x9c] sm:$0xf]
  %v103 = vld [vmem:[%s1 + $0xa0] sm:$0xf]
  %v104 = vld [vmem:[%s1 + $0xa4] sm:$0xf]
  %v105 = vld [vmem:[%s1 + $0xa8] sm:$0xf]
  %v106 = vld [vmem:[%s1 + $0xac] sm:$0xf]
  %v107 = vld [vmem:[%s1 + $0xb0] sm:$0xf]
  %v108 = vld [vmem:[%s1 + $0xb4] sm:$0xf]
  %v109 = vld [vmem:[%s1 + $0xb8] sm:$0xf]
  %v110 = vld [vmem:[%s1 + $0xbc] sm:$0xf]
  %v111 = vld [vmem:[%s1 + $0xc0] sm:$0xf]
  %v112 = vld [vmem:[%s1 + $0xc4] sm:$0xf]
  %v113 = vld [vmem:[%s1 + $0xc8] sm:$0xf]
  %v114 = vld [vmem:[%s1 + $0xcc] sm:$0xf]
  %v115 = vld [vmem:[%s1 + $0xd0] sm:$0xf]
  %v116 = vld [vmem:[%s1 + $0xd4] sm:$0xf]
  %v117 = vld [vmem:[%s1 + $0xd8] sm:$0xf]
  %v118 = vld [vmem:[%s1 + $0xdc] sm:$0xf]
  %v119 = vld [vmem:[%s1 + $0xe0] sm:$0xf]
  %v120 = vld [vmem:[%s1 + $0xe4] sm:$0xf]
  %v121 = vld [vmem:[%s1 + $0xe8] sm:$0xf]
  %v122 = vld [vmem:[%s1 + $0xec] sm:$0xf]
  %v123 = vld [vmem:[%s1 + $0xf0] sm:$0xf]
  %v124 = vld [vmem:[%s1 + $0xf4] sm:$0xf]
  %v125 = vld [vmem:[%s1 + $0xf8] sm:$0xf]
  %v126 = vld [vmem:[%s1 + $0xfc] sm:$0xf]
  %v127 = vld [vmem:[%s1 + $0x100] sm:$0xf]
  %v128 = vld [vmem:[%s1 + $0x104] sm:$0xf]
  %v129 = vld [vmem:[%s1 + $0x108] sm:$0xf]
  %v130 = vld [vmem:[%s1 + $0x10c] sm:$0xf]
  %v131 = vld [vmem:[%s1 + $0x110] sm:$0xf]
  %v132 = vld [vmem:[%s1 + $0x114] sm:$0xf]
  %v133 = vld [vmem:[%s1 + $0x118] sm:$0xf]
  %v134 = vld [vmem:[%s1 + $0x11c] sm:$0xf]
  %v183 = vunpack.c.l.b16 %v15
  %v184 = vunpack.c.h.b16 %v15
  %v185 = vunpack.c.l.b16 %v16
  %v186 = vunpack.c.h.b16 %v16
  %v187 = vunpack.c.l.b16 %v17
  %v188 = vunpack.c.l.b16 %v18
  %v189 = vunpack.c.h.b16 %v18
  %v190 = vunpack.c.l.b16 %v19
  %v191 = vunpack.c.h.b16 %v19
  %v192 = vunpack.c.l.b16 %v20
  %v193 = vunpack.c.l.b16 %v21
  %v194 = vunpack.c.h.b16 %v21
  %v195 = vunpack.c.l.b16 %v22
  %v196 = vunpack.c.h.b16 %v22
  %v197 = vunpack.c.l.b16 %v23
  %v198 = vunpack.c.l.b16 %v24
  %v199 = vunpack.c.h.b16 %v24
  %v200 = vunpack.c.l.b16 %v25
  %v201 = vunpack.c.h.b16 %v25
  %v202 = vunpack.c.l.b16 %v26
  %v203 = vunpack.c.l.b16 %v27
  %v204 = vunpack.c.h.b16 %v27
  %v205 = vunpack.c.l.b16 %v28
  %v206 = vunpack.c.h.b16 %v28
  %v207 = vunpack.c.l.b16 %v29
  %v208 = vunpack.c.l.b16 %v30
  %v209 = vunpack.c.h.b16 %v30
  %v210 = vunpack.c.l.b16 %v31
  %v211 = vunpack.c.h.b16 %v31
  %v212 = vunpack.c.l.b16 %v32
  %v213 = vunpack.c.l.b16 %v33
  %v214 = vunpack.c.h.b16 %v33
  %v215 = vunpack.c.l.b16 %v34
  %v216 = vunpack.c.h.b16 %v34
  %v217 = vunpack.c.l.b16 %v35
  %v218 = vunpack.c.l.b16 %v36
  %v219 = vunpack.c.h.b16 %v36
  %v220 = vunpack.c.l.b16 %v37
  %v221 = vunpack.c.h.b16 %v37
  %v222 = vunpack.c.l.b16 %v38
  %v223 = vunpack.c.l.b16 %v39
  %v224 = vunpack.c.h.b16 %v39
  %v225 = vunpack.c.l.b16 %v40
  %v226 = vunpack.c.h.b16 %v40
  %v227 = vunpack.c.l.b16 %v41
  %v228 = vunpack.c.l.b16 %v42
  %v229 = vunpack.c.h.b16 %v42
  %v230 = vunpack.c.l.b16 %v43
  %v231 = vunpack.c.h.b16 %v43
  %v232 = vunpack.c.l.b16 %v44
  %v233 = vunpack.c.l.b16 %v45
  %v234 = vunpack.c.h.b16 %v45
  %v235 = vunpack.c.l.b16 %v46
  %v236 = vunpack.c.h.b16 %v46
  %v237 = vunpack.c.l.b16 %v47
  %v238 = vunpack.c.l.b16 %v48
  %v239 = vunpack.c.h.b16 %v48
  %v240 = vunpack.c.l.b16 %v49
  %v241 = vunpack.c.h.b16 %v49
  %v242 = vunpack.c.l.b16 %v50
  %v243 = vunpack.c.l.b16 %v51
  %v244 = vunpack.c.h.b16 %v51
  %v245 = vunpack.c.l.b16 %v52
  %v246 = vunpack.c.h.b16 %v52
  %v247 = vunpack.c.l.b16 %v53
  %v248 = vunpack.c.l.b16 %v54
  %v249 = vunpack.c.h.b16 %v54
  %v250 = vunpack.c.l.b16 %v55
  %v251 = vunpack.c.h.b16 %v55
  %v252 = vunpack.c.l.b16 %v56
  %v253 = vunpack.c.l.b16 %v57
  %v254 = vunpack.c.h.b16 %v57
  %v255 = vunpack.c.l.b16 %v58
  %v256 = vunpack.c.h.b16 %v58
  %v257 = vunpack.c.l.b16 %v59
  %v258 = vunpack.c.l.b16 %v60
  %v259 = vunpack.c.h.b16 %v60
  %v260 = vunpack.c.l.b16 %v61
  %v261 = vunpack.c.h.b16 %v61
  %v262 = vunpack.c.l.b16 %v62
  %v263 = vpack.c.b16 %v188, %v183
  %v264 = vpack.c.b16 %v189, %v184
  %v265 = vpack.c.b16 %v190, %v185
  %v266 = vpack.c.b16 %v191, %v186
  %v267 = vpack.c.b16 %v192, %v187
  %v268 = vpack.c.b16 %v198, %v193
  %v269 = vpack.c.b16 %v199, %v194
  %v270 = vpack.c.b16 %v200, %v195
  %v271 = vpack.c.b16 %v201, %v196
  %v272 = vpack.c.b16 %v202, %v197
  %v273 = vpack.c.b16 %v208, %v203
  %v274 = vpack.c.b16 %v209, %v204
  %v275 = vpack.c.b16 %v210, %v205
  %v276 = vpack.c.b16 %v211, %v206
  %v277 = vpack.c.b16 %v212, %v207
  %v278 = vpack.c.b16 %v218, %v213
  %v279 = vpack.c.b16 %v219, %v214
  %v280 = vpack.c.b16 %v220, %v215
  %v281 = vpack.c.b16 %v221, %v216
  %v282 = vpack.c.b16 %v222, %v217
  %v283 = vpack.c.b16 %v228, %v223
  %v284 = vpack.c.b16 %v229, %v224
  %v285 = vpack.c.b16 %v230, %v225
  %v286 = vpack.c.b16 %v231, %v226
  %v287 = vpack.c.b16 %v232, %v227
  %v288 = vpack.c.b16 %v238, %v233
  %v289 = vpack.c.b16 %v239, %v234
  %v290 = vpack.c.b16 %v240, %v235
  %v291 = vpack.c.b16 %v241, %v236
  %v292 = vpack.c.b16 %v242, %v237
  %v293 = vpack.c.b16 %v248, %v243
  %v294 = vpack.c.b16 %v249, %v244
  %v295 = vpack.c.b16 %v250, %v245
  %v296 = vpack.c.b16 %v251, %v246
  %v297 = vpack.c.b16 %v252, %v247
  %v298 = vpack.c.b16 %v258, %v253
  %v299 = vpack.c.b16 %v259, %v254
  %v300 = vpack.c.b16 %v260, %v255
  %v301 = vpack.c.b16 %v261, %v256
  %v302 = vpack.c.b16 %v262, %v257
  %v407 = vunpack.c.l.b16 %v63
  %v408 = vunpack.c.l.b16 %v64
  %v409 = vunpack.c.l.b16 %v65
  %v410 = vunpack.c.l.b16 %v66
  %v411 = vunpack.c.l.b16 %v67
  %v412 = vunpack.c.l.b16 %v68
  %v413 = vunpack.c.l.b16 %v69
  %v414 = vunpack.c.l.b16 %v70
  %v415 = vunpack.c.l.b16 %v71
  %v416 = vunpack.c.l.b16 %v72
  %v417 = vunpack.c.l.b16 %v73
  %v418 = vunpack.c.l.b16 %v74
  %v419 = vunpack.c.l.b16 %v75
  %v420 = vunpack.c.l.b16 %v76
  %v421 = vunpack.c.l.b16 %v77
  %v422 = vunpack.c.l.b16 %v78
  %v423 = vunpack.c.l.b16 %v79
  %v424 = vunpack.c.l.b16 %v80
  %v425 = vunpack.c.l.b16 %v81
  %v426 = vunpack.c.l.b16 %v82
  %v427 = vunpack.c.l.b16 %v83
  %v428 = vunpack.c.l.b16 %v84
  %v429 = vunpack.c.l.b16 %v85
  %v430 = vunpack.c.l.b16 %v86
  %v431 = vunpack.c.l.b16 %v87
  %v432 = vunpack.c.l.b16 %v88
  %v433 = vunpack.c.l.b16 %v89
  %v434 = vunpack.c.l.b16 %v90
  %v435 = vunpack.c.l.b16 %v91
  %v436 = vunpack.c.l.b16 %v92
  %v437 = vunpack.c.l.b16 %v93
  %v438 = vunpack.c.l.b16 %v94
  %v439 = vunpack.c.l.b16 %v95
  %v440 = vunpack.c.l.b16 %v96
  %v441 = vunpack.c.l.b16 %v97
  %v442 = vunpack.c.l.b16 %v98
  %v443 = vunpack.c.l.b16 %v99
  %v444 = vunpack.c.l.b16 %v100
  %v445 = vunpack.c.l.b16 %v101
  %v446 = vunpack.c.l.b16 %v102
  %v447 = vunpack.c.l.b16 %v103
  %v448 = vunpack.c.l.b16 %v104
  %v449 = vunpack.c.l.b16 %v105
  %v450 = vunpack.c.l.b16 %v106
  %v451 = vunpack.c.l.b16 %v107
  %v452 = vunpack.c.l.b16 %v108
  %v453 = vunpack.c.l.b16 %v109
  %v454 = vunpack.c.l.b16 %v110
  %v455 = vunpack.c.l.b16 %v111
  %v456 = vunpack.c.l.b16 %v112
  %v457 = vunpack.c.l.b16 %v113
  %v458 = vunpack.c.l.b16 %v114
  %v459 = vunpack.c.l.b16 %v115
  %v460 = vunpack.c.l.b16 %v116
  %v461 = vunpack.c.l.b16 %v117
  %v462 = vunpack.c.l.b16 %v118
  %v463 = vunpack.c.l.b16 %v119
  %v464 = vunpack.c.l.b16 %v120
  %v465 = vunpack.c.l.b16 %v121
  %v466 = vunpack.c.l.b16 %v122
  %v467 = vunpack.c.l.b16 %v123
  %v468 = vunpack.c.l.b16 %v124
  %v469 = vunpack.c.l.b16 %v125
  %v470 = vunpack.c.l.b16 %v126
  %v471 = vunpack.c.l.b16 %v127
  %v472 = vunpack.c.l.b16 %v128
  %v473 = vunpack.c.l.b16 %v129
  %v474 = vunpack.c.l.b16 %v130
  %v475 = vunpack.c.l.b16 %v131
  %v476 = vunpack.c.l.b16 %v132
  %v477 = vunpack.c.l.b16 %v133
  %v478 = vunpack.c.l.b16 %v134
  %v479 = vpack.c.b16 %v408, %v407
  %v480 = vpack.c.b16 %v410, %v409
  %v481 = vpack.c.b16 %v412, %v411
  %v482 = vpack.c.b16 %v414, %v413
  %v483 = vpack.c.b16 %v416, %v415
  %v484 = vpack.c.b16 %v418, %v417
  %v485 = vpack.c.b16 %v420, %v419
  %v486 = vpack.c.b16 %v422, %v421
  %v487 = vpack.c.b16 %v424, %v423
  %v488 = vpack.c.b16 %v426, %v425
  %v489 = vpack.c.b16 %v428, %v427
  %v490 = vpack.c.b16 %v430, %v429
  %v491 = vpack.c.b16 %v432, %v431
  %v492 = vpack.c.b16 %v434, %v433
  %v493 = vpack.c.b16 %v436, %v435
  %v494 = vpack.c.b16 %v438, %v437
  %v495 = vpack.c.b16 %v440, %v439
  %v496 = vpack.c.b16 %v442, %v441
  %v497 = vpack.c.b16 %v444, %v443
  %v498 = vpack.c.b16 %v446, %v445
  %v499 = vpack.c.b16 %v448, %v447
  %v500 = vpack.c.b16 %v450, %v449
  %v501 = vpack.c.b16 %v452, %v451
  %v502 = vpack.c.b16 %v454, %v453
  %v503 = vpack.c.b16 %v456, %v455
  %v504 = vpack.c.b16 %v458, %v457
  %v505 = vpack.c.b16 %v460, %v459
  %v506 = vpack.c.b16 %v462, %v461
  %v507 = vpack.c.b16 %v464, %v463
  %v508 = vpack.c.b16 %v466, %v465
  %v509 = vpack.c.b16 %v468, %v467
  %v510 = vpack.c.b16 %v470, %v469
  %v511 = vpack.c.b16 %v472, %v471
  %v512 = vpack.c.b16 %v474, %v473
  %v513 = vpack.c.b16 %v476, %v475
  %v514 = vpack.c.b16 %v478, %v477
  %vm551 = vcmask 523264
  %v553 = vsel %vm551, %v267, 0
  %v556 = vsel %vm551, %v272, 0
  %v559 = vsel %vm551, %v277, 0
  %v562 = vsel %vm551, %v282, 0
  %v565 = vsel %vm551, %v287, 0
  %v568 = vsel %vm551, %v292, 0
  %v571 = vsel %vm551, %v297, 0
  %v574 = vsel %vm551, %v302, 0
  %576 = vmatprep.subr.bf16.mxu0 0
  %577 = vmatpush1.bf16.msra.mxu0 %v479
  %578 = vmatprep.subr.bf16.mxu0 0
  %579 = vmatpush1.bf16.msra.mxu0 %v480
  %580 = vmatprep.subr.bf16.mxu0 0
  %581 = vmatpush1.bf16.msra.mxu0 %v481
  %582 = vmatprep.subr.bf16.mxu0 0
  %583 = vmatpush1.bf16.msra.mxu0 %v482
  %584 = vmatprep.subr.bf16.mxu0 0
  %585 = vmatpush1.bf16.msra.mxu0 %v483
  %586 = vmatprep.subr.bf16.mxu0 0
  %587 = vmatpush1.bf16.msra.mxu0 %v484
  %588 = vmatprep.subr.bf16.mxu0 0
  %589 = vmatpush1.bf16.msra.mxu0 %v485
  %590 = vmatprep.subr.bf16.mxu0 0
  %591 = vmatpush1.bf16.msra.mxu0 %v486
  %592 = vmatprep.subr.bf16.mxu0 0
  %593 = vmatpush1.bf16.msra.mxu0 %v487
  %594 = vmatprep.subr.bf16.mxu0 0
  %595 = vmatpush1.bf16.msra.mxu0 %v488
  %596 = vmatprep.subr.bf16.mxu0 0
  %597 = vmatpush1.bf16.msra.mxu0 %v489
  %598 = vmatprep.subr.bf16.mxu0 0
  %599 = vmatpush1.bf16.msra.mxu0 %v490
  %600 = vmatprep.subr.bf16.mxu0 0
  %601 = vmatpush1.bf16.msra.mxu0 %v491
  %602 = vmatprep.subr.bf16.mxu0 0
  %603 = vmatpush1.bf16.msra.mxu0 %v492
  %604 = vmatprep.subr.bf16.mxu0 0
  %605 = vmatpush1.bf16.msra.mxu0 %v493
  %606 = vmatprep.subr.bf16.mxu0 0
  %607 = vmatpush1.bf16.msra.mxu0 %v494
  %608 = vmatprep.mubr.bf16.mxu0 %v264
  %609 = vmatmul.mubr.bf16.gmra.mrb[0].mxu0 %v263
  %v610 = vpop.f32.mrb[0].mxu0
  %v611 = vadd.f32 0.0, %v610
  %v612 = vpop.f32.mrb[0].mxu0
  %v613 = vpop.f32.mrb[0].mxu0
  %v614 = vadd.f32 0.0, %v613
  %v615 = vpop.f32.mrb[0].mxu0
  %616 = vmatprep.mubr.bf16.mxu0 %v269
  %617 = vmatmul.mubr.bf16.gmra.mrb[0].mxu0 %v268
  %v618 = vpop.f32.mrb[0].mxu0
  %v619 = vadd.f32 0.0, %v618
  %v620 = vpop.f32.mrb[0].mxu0
  %v621 = vpop.f32.mrb[0].mxu0
  %v622 = vadd.f32 0.0, %v621
  %v623 = vpop.f32.mrb[0].mxu0
  %624 = vmatprep.mubr.bf16.mxu0 %v274
  %625 = vmatmul.mubr.bf16.gmra.mrb[0].mxu0 %v273
  %v626 = vpop.f32.mrb[0].mxu0
  %v627 = vadd.f32 0.0, %v626
  %v628 = vpop.f32.mrb[0].mxu0
  %v629 = vpop.f32.mrb[0].mxu0
  %v630 = vadd.f32 0.0, %v629
  %v631 = vpop.f32.mrb[0].mxu0
  %632 = vmatprep.mubr.bf16.mxu0 %v279
  %633 = vmatmul.mubr.bf16.gmra.mrb[0].mxu0 %v278
  %v634 = vpop.f32.mrb[0].mxu0
  %v635 = vadd.f32 0.0, %v634
  %v636 = vpop.f32.mrb[0].mxu0
  %v637 = vpop.f32.mrb[0].mxu0
  %v638 = vadd.f32 0.0, %v637
  %v639 = vpop.f32.mrb[0].mxu0
  %640 = vmatprep.mubr.bf16.mxu0 %v284
  %641 = vmatmul.mubr.bf16.gmra.mrb[0].mxu0 %v283
  %v642 = vpop.f32.mrb[0].mxu0
  %v643 = vadd.f32 0.0, %v642
  %v644 = vpop.f32.mrb[0].mxu0
  %v645 = vpop.f32.mrb[0].mxu0
  %v646 = vadd.f32 0.0, %v645
  %v647 = vpop.f32.mrb[0].mxu0
  %648 = vmatprep.mubr.bf16.mxu0 %v289
  %649 = vmatmul.mubr.bf16.gmra.mrb[0].mxu0 %v288
  %v650 = vpop.f32.mrb[0].mxu0
  %v651 = vadd.f32 0.0, %v650
  %v652 = vpop.f32.mrb[0].mxu0
  %v653 = vpop.f32.mrb[0].mxu0
  %v654 = vadd.f32 0.0, %v653
  %v655 = vpop.f32.mrb[0].mxu0
  %656 = vmatprep.mubr.bf16.mxu0 %v294
  %657 = vmatmul.mubr.bf16.gmra.mrb[0].mxu0 %v293
  %v658 = vpop.f32.mrb[0].mxu0
  %v659 = vadd.f32 0.0, %v658
  %v660 = vpop.f32.mrb[0].mxu0
  %v661 = vpop.f32.mrb[0].mxu0
  %v662 = vadd.f32 0.0, %v661
  %v663 = vpop.f32.mrb[0].mxu0
  %664 = vmatprep.mubr.bf16.mxu0 %v299
  %665 = vmatmul.mubr.bf16.gmra.mrb[0].mxu0 %v298
  %v666 = vpop.f32.mrb[0].mxu0
  %v667 = vadd.f32 0.0, %v666
  %v668 = vpop.f32.mrb[0].mxu0
  %v669 = vpop.f32.mrb[0].mxu0
  %v670 = vadd.f32 0.0, %v669
  %v671 = vpop.f32.mrb[0].mxu0
  %672 = vdwg.mxu0
  %673 = vmatprep.subr.bf16.mxu0 0
  %674 = vmatpush1.bf16.msra.mxu0 %v495
  %675 = vmatprep.subr.bf16.mxu0 0
  %676 = vmatpush1.bf16.msra.mxu0 %v496
  %677 = vmatprep.subr.bf16.mxu0 0
  %678 = vmatpush1.bf16.msra.mxu0 %v497
  %679 = vmatprep.subr.bf16.mxu0 0
  %680 = vmatpush1.bf16.msra.mxu0 %v498
  %681 = vmatprep.subr.bf16.mxu0 0
  %682 = vmatpush1.bf16.msra.mxu0 %v499
  %683 = vmatprep.subr.bf16.mxu0 0
  %684 = vmatpush1.bf16.msra.mxu0 %v500
  %685 = vmatprep.subr.bf16.mxu0 0
  %686 = vmatpush1.bf16.msra.mxu0 %v501
  %687 = vmatprep.subr.bf16.mxu0 0
  %688 = vmatpush1.bf16.msra.mxu0 %v502
  %689 = vmatprep.subr.bf16.mxu0 0
  %690 = vmatpush1.bf16.msra.mxu0 %v503
  %691 = vmatprep.subr.bf16.mxu0 0
  %692 = vmatpush1.bf16.msra.mxu0 %v504
  %693 = vmatprep.subr.bf16.mxu0 0
  %694 = vmatpush1.bf16.msra.mxu0 %v505
  %695 = vmatprep.subr.bf16.mxu0 0
  %696 = vmatpush1.bf16.msra.mxu0 %v506
  %697 = vmatprep.subr.bf16.mxu0 0
  %698 = vmatpush1.bf16.msra.mxu0 %v507
  %699 = vmatprep.subr.bf16.mxu0 0
  %700 = vmatpush1.bf16.msra.mxu0 %v508
  %701 = vmatprep.subr.bf16.mxu0 0
  %702 = vmatpush1.bf16.msra.mxu0 %v509
  %703 = vmatprep.subr.bf16.mxu0 0
  %704 = vmatpush1.bf16.msra.mxu0 %v510
  %705 = vmatprep.mubr.bf16.mxu0 %v266
  %706 = vmatmul.mubr.bf16.gmra.mrb[0].mxu0 %v265
  %v707 = vpop.f32.mrb[0].mxu0
  %v708 = vadd.f32 %v611, %v707
  %v709 = vpop.f32.mrb[0].mxu0
  %v710 = vpop.f32.mrb[0].mxu0
  %v711 = vadd.f32 %v614, %v710
  %v712 = vpop.f32.mrb[0].mxu0
  %713 = vmatprep.mubr.bf16.mxu0 %v271
  %714 = vmatmul.mubr.bf16.gmra.mrb[0].mxu0 %v270
  %v715 = vpop.f32.mrb[0].mxu0
  %v716 = vadd.f32 %v619, %v715
  %v717 = vpop.f32.mrb[0].mxu0
  %v718 = vpop.f32.mrb[0].mxu0
  %v719 = vadd.f32 %v622, %v718
  %v720 = vpop.f32.mrb[0].mxu0
  %721 = vmatprep.mubr.bf16.mxu0 %v276
  %722 = vmatmul.mubr.bf16.gmra.mrb[0].mxu0 %v275
  %v723 = vpop.f32.mrb[0].mxu0
  %v724 = vadd.f32 %v627, %v723
  %v725 = vpop.f32.mrb[0].mxu0
  %v726 = vpop.f32.mrb[0].mxu0
  %v727 = vadd.f32 %v630, %v726
  %v728 = vpop.f32.mrb[0].mxu0
  %729 = vmatprep.mubr.bf16.mxu0 %v281
  %730 = vmatmul.mubr.bf16.gmra.mrb[0].mxu0 %v280
  %v731 = vpop.f32.mrb[0].mxu0
  %v732 = vadd.f32 %v635, %v731
  %v733 = vpop.f32.mrb[0].mxu0
  %v734 = vpop.f32.mrb[0].mxu0
  %v735 = vadd.f32 %v638, %v734
  %v736 = vpop.f32.mrb[0].mxu0
  %737 = vmatprep.mubr.bf16.mxu0 %v286
  %738 = vmatmul.mubr.bf16.gmra.mrb[0].mxu0 %v285
  %v739 = vpop.f32.mrb[0].mxu0
  %v740 = vadd.f32 %v643, %v739
  %v741 = vpop.f32.mrb[0].mxu0
  %v742 = vpop.f32.mrb[0].mxu0
  %v743 = vadd.f32 %v646, %v742
  %v744 = vpop.f32.mrb[0].mxu0
  %745 = vmatprep.mubr.bf16.mxu0 %v291
  %746 = vmatmul.mubr.bf16.gmra.mrb[0].mxu0 %v290
  %v747 = vpop.f32.mrb[0].mxu0
  %v748 = vadd.f32 %v651, %v747
  %v749 = vpop.f32.mrb[0].mxu0
  %v750 = vpop.f32.mrb[0].mxu0
  %v751 = vadd.f32 %v654, %v750
  %v752 = vpop.f32.mrb[0].mxu0
  %753 = vmatprep.mubr.bf16.mxu0 %v296
  %754 = vmatmul.mubr.bf16.gmra.mrb[0].mxu0 %v295
  %v755 = vpop.f32.mrb[0].mxu0
  %v756 = vadd.f32 %v659, %v755
  %v757 = vpop.f32.mrb[0].mxu0
  %v758 = vpop.f32.mrb[0].mxu0
  %v759 = vadd.f32 %v662, %v758
  %v760 = vpop.f32.mrb[0].mxu0
  %761 = vmatprep.mubr.bf16.mxu0 %v301
  %762 = vmatmul.mubr.bf16.gmra.mrb[0].mxu0 %v300
  %v763 = vpop.f32.mrb[0].mxu0
  %v764 = vadd.f32 %v667, %v763
  %v765 = vpop.f32.mrb[0].mxu0
  %v766 = vpop.f32.mrb[0].mxu0
  %v767 = vadd.f32 %v670, %v766
  %v768 = vpop.f32.mrb[0].mxu0
  %769 = vdwg.mxu0
  %770 = vmatprep.subr.bf16.mxu0 0
  %771 = vmatpush1.bf16.msra.mxu0 %v511
  %772 = vmatprep.subr.bf16.mxu0 0
  %773 = vmatpush1.bf16.msra.mxu0 %v512
  %774 = vmatprep.subr.bf16.mxu0 0
  %775 = vmatpush1.bf16.msra.mxu0 %v513
  %776 = vmatprep.subr.bf16.mxu0 0
  %777 = vmatpush1.bf16.msra.mxu0 %v514
  %778 = vmatprep.subr.bf16.mxu0 0
  %779 = vmatpush1.bf16.msra.mxu0 0
  %780 = vmatprep.subr.bf16.mxu0 0
  %781 = vmatpush1.bf16.msra.mxu0 0
  %782 = vmatprep.subr.bf16.mxu0 0
  %783 = vmatpush1.bf16.msra.mxu0 0
  %784 = vmatprep.subr.bf16.mxu0 0
  %785 = vmatpush1.bf16.msra.mxu0 0
  %786 = vmatprep.subr.bf16.mxu0 0
  %787 = vmatpush1.bf16.msra.mxu0 0
  %788 = vmatprep.subr.bf16.mxu0 0
  %789 = vmatpush1.bf16.msra.mxu0 0
  %790 = vmatprep.subr.bf16.mxu0 0
  %791 = vmatpush1.bf16.msra.mxu0 0
  %792 = vmatprep.subr.bf16.mxu0 0
  %793 = vmatpush1.bf16.msra.mxu0 0
  %794 = vmatprep.subr.bf16.mxu0 0
  %795 = vmatpush1.bf16.msra.mxu0 0
  %796 = vmatprep.subr.bf16.mxu0 0
  %797 = vmatpush1.bf16.msra.mxu0 0
  %798 = vmatprep.subr.bf16.mxu0 0
  %799 = vmatpush1.bf16.msra.mxu0 0
  %800 = vmatprep.subr.bf16.mxu0 0
  %801 = vmatpush1.bf16.msra.mxu0 0
  %802 = vmatprep.mubr.bf16.mxu0 0
  %803 = vmatmul.mubr.bf16.gmra.mrb[0].mxu0 %v553
  %v804 = vpop.f32.mrb[0].mxu0
  %v805 = vadd.f32 %v708, %v804
  %v806 = vpop.f32.mrb[0].mxu0
  %v807 = vpop.f32.mrb[0].mxu0
  %v808 = vadd.f32 %v711, %v807
  %v809 = vpop.f32.mrb[0].mxu0
  %810 = vmatprep.mubr.bf16.mxu0 0
  %811 = vmatmul.mubr.bf16.gmra.mrb[0].mxu0 %v556
  %v812 = vpop.f32.mrb[0].mxu0
  %v813 = vadd.f32 %v716, %v812
  %v814 = vpop.f32.mrb[0].mxu0
  %v815 = vpop.f32.mrb[0].mxu0
  %v816 = vadd.f32 %v719, %v815
  %v817 = vpop.f32.mrb[0].mxu0
  %818 = vmatprep.mubr.bf16.mxu0 0
  %819 = vmatmul.mubr.bf16.gmra.mrb[0].mxu0 %v559
  %v820 = vpop.f32.mrb[0].mxu0
  %v821 = vadd.f32 %v724, %v820
  %v822 = vpop.f32.mrb[0].mxu0
  %v823 = vpop.f32.mrb[0].mxu0
  %v824 = vadd.f32 %v727, %v823
  %v825 = vpop.f32.mrb[0].mxu0
  %826 = vmatprep.mubr.bf16.mxu0 0
  %827 = vmatmul.mubr.bf16.gmra.mrb[0].mxu0 %v562
  %v828 = vpop.f32.mrb[0].mxu0
  %v829 = vadd.f32 %v732, %v828
  %v830 = vpop.f32.mrb[0].mxu0
  %v831 = vpop.f32.mrb[0].mxu0
  %v832 = vadd.f32 %v735, %v831
  %v833 = vpop.f32.mrb[0].mxu0
  %834 = vmatprep.mubr.bf16.mxu0 0
  %835 = vmatmul.mubr.bf16.gmra.mrb[0].mxu0 %v565
  %v836 = vpop.f32.mrb[0].mxu0
  %v837 = vadd.f32 %v740, %v836
  %v838 = vpop.f32.mrb[0].mxu0
  %v839 = vpop.f32.mrb[0].mxu0
  %v840 = vadd.f32 %v743, %v839
  %v841 = vpop.f32.mrb[0].mxu0
  %842 = vmatprep.mubr.bf16.mxu0 0
  %843 = vmatmul.mubr.bf16.gmra.mrb[0].mxu0 %v568
  %v844 = vpop.f32.mrb[0].mxu0
  %v845 = vadd.f32 %v748, %v844
  %v846 = vpop.f32.mrb[0].mxu0
  %v847 = vpop.f32.mrb[0].mxu0
  %v848 = vadd.f32 %v751, %v847
  %v849 = vpop.f32.mrb[0].mxu0
  %850 = vmatprep.mubr.bf16.mxu0 0
  %851 = vmatmul.mubr.bf16.gmra.mrb[0].mxu0 %v571
  %v852 = vpop.f32.mrb[0].mxu0
  %v853 = vadd.f32 %v756, %v852
  %v854 = vpop.f32.mrb[0].mxu0
  %v855 = vpop.f32.mrb[0].mxu0
  %v856 = vadd.f32 %v759, %v855
  %v857 = vpop.f32.mrb[0].mxu0
  %858 = vmatprep.mubr.bf16.mxu0 0
  %859 = vmatmul.mubr.bf16.gmra.mrb[0].mxu0 %v574
  %v860 = vpop.f32.mrb[0].mxu0
  %v861 = vadd.f32 %v764, %v860
  %v862 = vpop.f32.mrb[0].mxu0
  %v863 = vpop.f32.mrb[0].mxu0
  %v864 = vadd.f32 %v767, %v863
  %v865 = vpop.f32.mrb[0].mxu0
  %866 = vdwg.mxu0
  %v867 = vpack.c.bf16 %v808, %v805
  %v868 = vpack.c.bf16 %v816, %v813
  %v869 = vpack.c.bf16 %v824, %v821
  %v870 = vpack.c.bf16 %v832, %v829
  %v871 = vpack.c.bf16 %v840, %v837
  %v872 = vpack.c.bf16 %v848, %v845
  %v873 = vpack.c.bf16 %v856, %v853
  %v874 = vpack.c.bf16 %v864, %v861
  %v883 = vunpack.c.l.b16 %v867
  %v884 = vunpack.c.h.b16 %v867
  %v885 = vunpack.c.l.b16 %v868
  %v886 = vunpack.c.h.b16 %v868
  %v887 = vunpack.c.l.b16 %v869
  %v888 = vunpack.c.h.b16 %v869
  %v889 = vunpack.c.l.b16 %v870
  %v890 = vunpack.c.h.b16 %v870
  %v891 = vunpack.c.l.b16 %v871
  %v892 = vunpack.c.h.b16 %v871
  %v893 = vunpack.c.l.b16 %v872
  %v894 = vunpack.c.h.b16 %v872
  %v895 = vunpack.c.l.b16 %v873
  %v896 = vunpack.c.h.b16 %v873
  %v897 = vunpack.c.l.b16 %v874
  %v898 = vunpack.c.h.b16 %v874
  %v899 = vpack.c.b16 %v883, %v883
  %v900 = vpack.c.b16 %v884, %v884
  %v901 = vpack.c.b16 %v885, %v885
  %v902 = vpack.c.b16 %v886, %v886
  %v903 = vpack.c.b16 %v887, %v887
  %v904 = vpack.c.b16 %v888, %v888
  %v905 = vpack.c.b16 %v889, %v889
  %v906 = vpack.c.b16 %v890, %v890
  %v907 = vpack.c.b16 %v891, %v891
  %v908 = vpack.c.b16 %v892, %v892
  %v909 = vpack.c.b16 %v893, %v893
  %v910 = vpack.c.b16 %v894, %v894
  %v911 = vpack.c.b16 %v895, %v895
  %v912 = vpack.c.b16 %v896, %v896
  %v913 = vpack.c.b16 %v897, %v897
  %v914 = vpack.c.b16 %v898, %v898
  %931 = vst [vmem:[%s2] sm:$0xf] %v899
  %932 = vst [vmem:[%s2 + $0x4] sm:$0xf] %v900
  %933 = vst [vmem:[%s2 + $0x8] sm:$0xf] %v901
  %934 = vst [vmem:[%s2 + $0xc] sm:$0xf] %v902
  %935 = vst [vmem:[%s2 + $0x10] sm:$0xf] %v903
  %936 = vst [vmem:[%s2 + $0x14] sm:$0xf] %v904
  %937 = vst [vmem:[%s2 + $0x18] sm:$0xf] %v905
  %938 = vst [vmem:[%s2 + $0x1c] sm:$0xf] %v906
  %939 = vst [vmem:[%s2 + $0x20] sm:$0xf] %v907
  %940 = vst [vmem:[%s2 + $0x24] sm:$0xf] %v908
  %941 = vst [vmem:[%s2 + $0x28] sm:$0xf] %v909
  %942 = vst [vmem:[%s2 + $0x2c] sm:$0xf] %v910
  %943 = vst [vmem:[%s2 + $0x30] sm:$0xf] %v911
  %944 = vst [vmem:[%s2 + $0x34] sm:$0xf] %v912
  %945 = vst [vmem:[%s2 + $0x38] sm:$0xf] %v913
  %946 = vst [vmem:[%s2 + $0x3c] sm:$0xf] %v914
  %v947 = vadd.f32 %v805, %v808
  %v948 = vadd.f32 %v947, %v813
  %v949 = vadd.f32 %v948, %v816
  %v950 = vadd.f32 %v949, %v821
  %v951 = vadd.f32 %v950, %v824
  %v952 = vadd.f32 %v951, %v829
  %v953 = vadd.f32 %v952, %v832
  %v954 = vadd.f32 %v953, %v837
  %v955 = vadd.f32 %v954, %v840
  %v956 = vadd.f32 %v955, %v845
  %v957 = vadd.f32 %v956, %v848
  %v958 = vadd.f32 %v957, %v853
  %v959 = vadd.f32 %v958, %v856
  %v960 = vadd.f32 %v959, %v861
  %v961 = vadd.f32 %v960, %v864
  %v962 = vrot.slane %v961, 4
  %v963 = vadd.f32 %v961, %v962
  %v964 = vrot.slane %v963, 2
  %v965 = vadd.f32 %v963, %v964
  %v966 = vrot.slane %v965, 1
  %v967 = vadd.f32 %v965, %v966
  %968 = vst [vmem:[%s3] sm:$0x1] %v967
  %v969 = vmul.f32 %v805, %v805
  %v970 = vmul.f32 %v808, %v808
  %v971 = vmul.f32 %v813, %v813
  %v972 = vmul.f32 %v816, %v816
  %v973 = vmul.f32 %v821, %v821
  %v974 = vmul.f32 %v824, %v824
  %v975 = vmul.f32 %v829, %v829
  %v976 = vmul.f32 %v832, %v832
  %v977 = vmul.f32 %v837, %v837
  %v978 = vmul.f32 %v840, %v840
  %v979 = vmul.f32 %v845, %v845
  %v980 = vmul.f32 %v848, %v848
  %v981 = vmul.f32 %v853, %v853
  %v982 = vmul.f32 %v856, %v856
  %v983 = vmul.f32 %v861, %v861
  %v984 = vmul.f32 %v864, %v864
  %v985 = vadd.f32 %v969, %v970
  %v986 = vadd.f32 %v985, %v971
  %v987 = vadd.f32 %v986, %v972
  %v988 = vadd.f32 %v987, %v973
  %v989 = vadd.f32 %v988, %v974
  %v990 = vadd.f32 %v989, %v975
  %v991 = vadd.f32 %v990, %v976
  %v992 = vadd.f32 %v991, %v977
  %v993 = vadd.f32 %v992, %v978
  %v994 = vadd.f32 %v993, %v979
  %v995 = vadd.f32 %v994, %v980
  %v996 = vadd.f32 %v995, %v981
  %v997 = vadd.f32 %v996, %v982
  %v998 = vadd.f32 %v997, %v983
  %v999 = vadd.f32 %v998, %v984
  %v1000 = vrot.slane %v999, 4
  %v1001 = vadd.f32 %v999, %v1000
  %v1002 = vrot.slane %v1001, 2
  %v1003 = vadd.f32 %v1001, %v1002
  %v1004 = vrot.slane %v1003, 1
  %v1005 = vadd.f32 %v1003, %v1004
  %1006 = vst [vmem:[%s4] sm:$0x1] %v1005
  // Predicated region
  $region10: #{simple_hrnet_forward.10} parent=0 // pred_check
    _
  $region11: #{simple_hrnet_forward.10} parent=0 // pred_check_branch
    %1008 = sbr.rel (0) target = $region13
  $region12: #{simple_hrnet_forward.10} parent=0 // pred_region
    _
  $region13: #{simple_hrnet_forward.10} parent=0 // pred_fallthru
    _
  // Predicated region
  $region14: #{simple_hrnet_forward.10} parent=0 // pred_check
    _
  $region15: #{simple_hrnet_forward.10} parent=0 // pred_check_branch
    %1010 = sbr.rel (0) target = $region17
  $region16: #{simple_hrnet_forward.10} parent=0 // pred_region
    _
  $region17: #{simple_hrnet_forward.10} parent=0 // pred_fallthru
    _
  // Predicated region
  $region18: #{simple_hrnet_forward.10} parent=0 // pred_check
    _
  $region19: #{simple_hrnet_forward.10} parent=0 // pred_check_branch
    %1012 = sbr.rel (0) target = $region21
  $region20: #{simple_hrnet_forward.10} parent=0 // pred_region
    _
  $region21: #{simple_hrnet_forward.10} parent=0 // pred_fallthru
    _
  // Predicated region
  $region22: #{simple_hrnet_forward.10} parent=0 // pred_check
    _
  $region23: #{simple_hrnet_forward.10} parent=0 // pred_check_branch
    %1014 = sbr.rel (0) target = $region25
  $region24: #{simple_hrnet_forward.10} parent=0 // pred_region
    _
  $region25: #{simple_hrnet_forward.10} parent=0 // pred_fallthru
    _
  // Predicated region
  $region26: #{simple_hrnet_forward.10} parent=0 // pred_check
    _
  $region27: #{simple_hrnet_forward.10} parent=0 // pred_check_branch
    %1016 = sbr.rel (0) target = $region29
  $region28: #{simple_hrnet_forward.10} parent=0 // pred_region
    _
  $region29: #{simple_hrnet_forward.10} parent=0 // pred_fallthru
    _
  // Predicated region
  $region30: #{simple_hrnet_forward.10} parent=0 // pred_check
    _
  $region31: #{simple_hrnet_forward.10} parent=0 // pred_check_branch
    %1018 = sbr.rel (0) target = $region33
  $region32: #{simple_hrnet_forward.10} parent=0 // pred_region
    _
  $region33: #{simple_hrnet_forward.10} parent=0 // pred_fallthru
    _

// kernel: simple_hrnet_forward.13
$region0: #{simple_hrnet_forward.13}
  #allocation0 [shape = 'u32[]', space=smem, size = 0x4, offset = 0x4, fixed_abs, tag = 'smem constant byte address 0x4 - core index']
  #allocation1 [shape = 'u32[144,128]{1,0:T(1,128)}', space=vmem, size = 0x12000, scoped, tag = 'internal scratch']
  %s0 = inlined_call_operand.vmem [shape: bf16[32,256], index: 0, kind: input, shape index: {}]
  %s1 = inlined_call_operand.vmem [shape: f32[1,256], index: 1, kind: input, shape index: {}]
  %s2 = inlined_call_operand.vmem [shape: f32[1,256], index: 2, kind: input, shape index: {}]
  %s3 = inlined_call_operand.vmem [shape: bf16[32,256], index: 3, kind: output, shape index: {}]
  %s4 = sld [smem:[#allocation0]]
  $region22: #{simple_hrnet_forward.13} parent=0
    _
  %s6 = ssub.s32 1, %s4
  %s7 = scalar_select 0, %s6, %s4
  // Predicated region
  $region2: #{simple_hrnet_forward.13} parent=0 // pred_check
    _
  $region3: #{simple_hrnet_forward.13} parent=0 // pred_check_branch
    %9 = sbr.rel (0) target = $region5
  $region4: #{simple_hrnet_forward.13} parent=0 // pred_region
    _
  $region5: #{simple_hrnet_forward.13} parent=0 // pred_fallthru
    _
  // Predicated region
  $region6: #{simple_hrnet_forward.13} parent=0 // pred_check
    _
  $region7: #{simple_hrnet_forward.13} parent=0 // pred_check_branch
    %11 = sbr.rel (0) target = $region9
  $region8: #{simple_hrnet_forward.13} parent=0 // pred_region
    _
  $region9: #{simple_hrnet_forward.13} parent=0 // pred_fallthru
    _
  // Predicated region
  $region10: #{simple_hrnet_forward.13} parent=0 // pred_check
    _
  $region11: #{simple_hrnet_forward.13} parent=0 // pred_check_branch
    %13 = sbr.rel (0) target = $region13
  $region12: #{simple_hrnet_forward.13} parent=0 // pred_region
    _
  $region13: #{simple_hrnet_forward.13} parent=0 // pred_fallthru
    _
  %v14 = vld [vmem:[%s0] sm:$0xff]
  %v15 = vld [vmem:[%s0 + $0x8] sm:$0xff]
  %v16 = vld [vmem:[%s0 + $0x10] sm:$0xff]
  %v17 = vld [vmem:[%s0 + $0x18] sm:$0xff]
  %v18 = vunpack.c.l.bf16 %v14
  %v19 = vunpack.c.h.bf16 %v14
  %v20 = vunpack.c.l.bf16 %v15
  %v21 = vunpack.c.h.bf16 %v15
  %v22 = vunpack.c.l.bf16 %v16
  %v23 = vunpack.c.h.bf16 %v16
  %v24 = vunpack.c.l.bf16 %v17
  %v25 = vunpack.c.h.bf16 %v17
  %v26 = vld [vmem:[%s1] sm:$0x3]
  %v28 = vlaneseq
  %v29 = vshrl.u32 %v28, 7
  %v30 = vsub.s32 0, %v29
  %v31 = vrot.slane %v26, %v30
  %v32 = vlaneseq
  %v33 = vshrl.u32 %v32, 7
  %v34 = vsub.s32 1, %v33
  %v35 = vrot.slane %v26, %v34
  %v38 = vmul.f32 %v18, %v31
  %v39 = vmul.f32 %v19, %v35
  %v40 = vmul.f32 %v20, %v31
  %v41 = vmul.f32 %v21, %v35
  %v42 = vmul.f32 %v22, %v31
  %v43 = vmul.f32 %v23, %v35
  %v44 = vmul.f32 %v24, %v31
  %v45 = vmul.f32 %v25, %v35
  %v46 = vld [vmem:[%s2] sm:$0x3]
  %v48 = vlaneseq
  %v49 = vshrl.u32 %v48, 7
  %v50 = vsub.s32 0, %v49
  %v51 = vrot.slane %v46, %v50
  %v52 = vlaneseq
  %v53 = vshrl.u32 %v52, 7
  %v54 = vsub.s32 1, %v53
  %v55 = vrot.slane %v46, %v54
  %v58 = vadd.f32 %v38, %v51
  %v59 = vadd.f32 %v39, %v55
  %v60 = vadd.f32 %v40, %v51
  %v61 = vadd.f32 %v41, %v55
  %v62 = vadd.f32 %v42, %v51
  %v63 = vadd.f32 %v43, %v55
  %v64 = vadd.f32 %v44, %v51
  %v65 = vadd.f32 %v45, %v55
  %v66 = vmax.f32 %v58, 0.0
  %v67 = vmax.f32 %v59, 0.0
  %v68 = vmax.f32 %v60, 0.0
  %v69 = vmax.f32 %v61, 0.0
  %v70 = vmax.f32 %v62, 0.0
  %v71 = vmax.f32 %v63, 0.0
  %v72 = vmax.f32 %v64, 0.0
  %v73 = vmax.f32 %v65, 0.0
  %v74 = vpack.c.bf16 %v68, %v66
  %v75 = vpack.c.bf16 %v69, %v67
  %v76 = vpack.c.bf16 %v72, %v70
  %v77 = vpack.c.bf16 %v73, %v71
  %v82 = vunpack.c.l.b16 %v74
  %v83 = vunpack.c.l.b16 %v75
  %v84 = vunpack.c.h.b16 %v74
  %v85 = vunpack.c.h.b16 %v75
  %v86 = vunpack.c.l.b16 %v76
  %v87 = vunpack.c.l.b16 %v77
  %v88 = vunpack.c.h.b16 %v76
  %v89 = vunpack.c.h.b16 %v77
  %v90 = vpack.c.b16 %v83, %v82
  %v91 = vpack.c.b16 %v85, %v84
  %v92 = vpack.c.b16 %v87, %v86
  %v93 = vpack.c.b16 %v89, %v88
  %98 = vst [vmem:[%s3] sm:$0xff] %v90
  %99 = vst [vmem:[%s3 + $0x8] sm:$0xff] %v91
  %100 = vst [vmem:[%s3 + $0x10] sm:$0xff] %v92
  %101 = vst [vmem:[%s3 + $0x18] sm:$0xff] %v93
  // Predicated region
  $region14: #{simple_hrnet_forward.13} parent=0 // pred_check
    _
  $region15: #{simple_hrnet_forward.13} parent=0 // pred_check_branch
    %103 = sbr.rel (0) target = $region17
  $region16: #{simple_hrnet_forward.13} parent=0 // pred_region
    _
  $region17: #{simple_hrnet_forward.13} parent=0 // pred_fallthru
    _
  // Predicated region
  $region18: #{simple_hrnet_forward.13} parent=0 // pred_check
    _
  $region19: #{simple_hrnet_forward.13} parent=0 // pred_check_branch
    %105 = sbr.rel (0) target = $region21
  $region20: #{simple_hrnet_forward.13} parent=0 // pred_region
    _
  $region21: #{simple_hrnet_forward.13} parent=0 // pred_fallthru
    _

// kernel: simple_hrnet_forward.12
$region0: #{simple_hrnet_forward.12}
  #allocation0 [shape = 'u32[]', space=smem, size = 0x4, offset = 0x4, fixed_abs, tag = 'smem constant byte address 0x4 - core index']
  #allocation1 [shape = 'u32[144,128]{1,0:T(1,128)}', space=vmem, size = 0x12000, scoped, tag = 'internal scratch']
  %s0 = inlined_call_operand.vmem [shape: bf16[32,1152], index: 0, kind: input, shape index: {}]
  %s1 = inlined_call_operand.vmem [shape: bf16[1152,256], index: 1, kind: input, shape index: {}]
  %s2 = inlined_call_operand.vmem [shape: bf16[32,256], index: 2, kind: output, shape index: {0}]
  %s3 = inlined_call_operand.vmem [shape: f32[1,1,256], index: 3, kind: output, shape index: {1}]
  %s4 = inlined_call_operand.vmem [shape: f32[1,1,256], index: 4, kind: output, shape index: {2}]
  %5 = xla_tuple %s2, %s3, %s4
  %s6 = sld [smem:[#allocation0]]
  $region34: #{simple_hrnet_forward.12} parent=0
    _
  %s8 = ssub.s32 1, %s6
  %s9 = scalar_select 0, %s8, %s6
  // Predicated region
  $region2: #{simple_hrnet_forward.12} parent=0 // pred_check
    _
  $region3: #{simple_hrnet_forward.12} parent=0 // pred_check_branch
    %11 = sbr.rel (0) target = $region5
  $region4: #{simple_hrnet_forward.12} parent=0 // pred_region
    _
  $region5: #{simple_hrnet_forward.12} parent=0 // pred_fallthru
    _
  // Predicated region
  $region6: #{simple_hrnet_forward.12} parent=0 // pred_check
    _
  $region7: #{simple_hrnet_forward.12} parent=0 // pred_check_branch
    %13 = sbr.rel (0) target = $region9
  $region8: #{simple_hrnet_forward.12} parent=0 // pred_region
    _
  $region9: #{simple_hrnet_forward.12} parent=0 // pred_fallthru
    _
  %v15 = vld [vmem:[%s0] sm:$0xff]
  %v16 = vld [vmem:[%s0 + $0x8] sm:$0xff]
  %v17 = vld [vmem:[%s0 + $0x10] sm:$0xff]
  %v18 = vld [vmem:[%s0 + $0x18] sm:$0xff]
  %v19 = vld [vmem:[%s0 + $0x20] sm:$0xf]
  %v20 = vld [vmem:[%s0 + $0x24] sm:$0xff]
  %v21 = vld [vmem:[%s0 + $0x2c] sm:$0xff]
  %v22 = vld [vmem:[%s0 + $0x34] sm:$0xff]
  %v23 = vld [vmem:[%s0 + $0x3c] sm:$0xff]
  %v24 = vld [vmem:[%s0 + $0x44] sm:$0xf]
  %v25 = vld [vmem:[%s0 + $0x48] sm:$0xff]
  %v26 = vld [vmem:[%s0 + $0x50] sm:$0xff]
  %v27 = vld [vmem:[%s0 + $0x58] sm:$0xff]
  %v28 = vld [vmem:[%s0 + $0x60] sm:$0xff]
  %v29 = vld [vmem:[%s0 + $0x68] sm:$0xf]
  %v30 = vld [vmem:[%s0 + $0x6c] sm:$0xff]
  %v31 = vld [vmem:[%s0 + $0x74] sm:$0xff]
  %v32 = vld [vmem:[%s0 + $0x7c] sm:$0xff]
  %v33 = vld [vmem:[%s0 + $0x84] sm:$0xff]
  %v34 = vld [vmem:[%s0 + $0x8c] sm:$0xf]
  %v35 = vld [vmem:[%s1] sm:$0xff]
  %v36 = vld [vmem:[%s1 + $0x8] sm:$0xff]
  %v37 = vld [vmem:[%s1 + $0x10] sm:$0xff]
  %v38 = vld [vmem:[%s1 + $0x18] sm:$0xff]
  %v39 = vld [vmem:[%s1 + $0x20] sm:$0xff]
  %v40 = vld [vmem:[%s1 + $0x28] sm:$0xff]
  %v41 = vld [vmem:[%s1 + $0x30] sm:$0xff]
  %v42 = vld [vmem:[%s1 + $0x38] sm:$0xff]
  %v43 = vld [vmem:[%s1 + $0x40] sm:$0xff]
  %v44 = vld [vmem:[%s1 + $0x48] sm:$0xff]
  %v45 = vld [vmem:[%s1 + $0x50] sm:$0xff]
  %v46 = vld [vmem:[%s1 + $0x58] sm:$0xff]
  %v47 = vld [vmem:[%s1 + $0x60] sm:$0xff]
  %v48 = vld [vmem:[%s1 + $0x68] sm:$0xff]
  %v49 = vld [vmem:[%s1 + $0x70] sm:$0xff]
  %v50 = vld [vmem:[%s1 + $0x78] sm:$0xff]
  %v51 = vld [vmem:[%s1 + $0x80] sm:$0xff]
  %v52 = vld [vmem:[%s1 + $0x88] sm:$0xff]
  %v53 = vld [vmem:[%s1 + $0x90] sm:$0xff]
  %v54 = vld [vmem:[%s1 + $0x98] sm:$0xff]
  %v55 = vld [vmem:[%s1 + $0xa0] sm:$0xff]
  %v56 = vld [vmem:[%s1 + $0xa8] sm:$0xff]
  %v57 = vld [vmem:[%s1 + $0xb0] sm:$0xff]
  %v58 = vld [vmem:[%s1 + $0xb8] sm:$0xff]
  %v59 = vld [vmem:[%s1 + $0xc0] sm:$0xff]
  %v60 = vld [vmem:[%s1 + $0xc8] sm:$0xff]
  %v61 = vld [vmem:[%s1 + $0xd0] sm:$0xff]
  %v62 = vld [vmem:[%s1 + $0xd8] sm:$0xff]
  %v63 = vld [vmem:[%s1 + $0xe0] sm:$0xff]
  %v64 = vld [vmem:[%s1 + $0xe8] sm:$0xff]
  %v65 = vld [vmem:[%s1 + $0xf0] sm:$0xff]
  %v66 = vld [vmem:[%s1 + $0xf8] sm:$0xff]
  %v67 = vld [vmem:[%s1 + $0x100] sm:$0xff]
  %v68 = vld [vmem:[%s1 + $0x108] sm:$0xff]
  %v69 = vld [vmem:[%s1 + $0x110] sm:$0xff]
  %v70 = vld [vmem:[%s1 + $0x118] sm:$0xff]
  %v71 = vld [vmem:[%s1 + $0x120] sm:$0xff]
  %v72 = vld [vmem:[%s1 + $0x128] sm:$0xff]
  %v73 = vld [vmem:[%s1 + $0x130] sm:$0xff]
  %v74 = vld [vmem:[%s1 + $0x138] sm:$0xff]
  %v75 = vld [vmem:[%s1 + $0x140] sm:$0xff]
  %v76 = vld [vmem:[%s1 + $0x148] sm:$0xff]
  %v77 = vld [vmem:[%s1 + $0x150] sm:$0xff]
  %v78 = vld [vmem:[%s1 + $0x158] sm:$0xff]
  %v79 = vld [vmem:[%s1 + $0x160] sm:$0xff]
  %v80 = vld [vmem:[%s1 + $0x168] sm:$0xff]
  %v81 = vld [vmem:[%s1 + $0x170] sm:$0xff]
  %v82 = vld [vmem:[%s1 + $0x178] sm:$0xff]
  %v83 = vld [vmem:[%s1 + $0x180] sm:$0xff]
  %v84 = vld [vmem:[%s1 + $0x188] sm:$0xff]
  %v85 = vld [vmem:[%s1 + $0x190] sm:$0xff]
  %v86 = vld [vmem:[%s1 + $0x198] sm:$0xff]
  %v87 = vld [vmem:[%s1 + $0x1a0] sm:$0xff]
  %v88 = vld [vmem:[%s1 + $0x1a8] sm:$0xff]
  %v89 = vld [vmem:[%s1 + $0x1b0] sm:$0xff]
  %v90 = vld [vmem:[%s1 + $0x1b8] sm:$0xff]
  %v91 = vld [vmem:[%s1 + $0x1c0] sm:$0xff]
  %v92 = vld [vmem:[%s1 + $0x1c8] sm:$0xff]
  %v93 = vld [vmem:[%s1 + $0x1d0] sm:$0xff]
  %v94 = vld [vmem:[%s1 + $0x1d8] sm:$0xff]
  %v95 = vld [vmem:[%s1 + $0x1e0] sm:$0xff]
  %v96 = vld [vmem:[%s1 + $0x1e8] sm:$0xff]
  %v97 = vld [vmem:[%s1 + $0x1f0] sm:$0xff]
  %v98 = vld [vmem:[%s1 + $0x1f8] sm:$0xff]
  %v99 = vld [vmem:[%s1 + $0x200] sm:$0xff]
  %v100 = vld [vmem:[%s1 + $0x208] sm:$0xff]
  %v101 = vld [vmem:[%s1 + $0x210] sm:$0xff]
  %v102 = vld [vmem:[%s1 + $0x218] sm:$0xff]
  %v103 = vld [vmem:[%s1 + $0x220] sm:$0xff]
  %v104 = vld [vmem:[%s1 + $0x228] sm:$0xff]
  %v105 = vld [vmem:[%s1 + $0x230] sm:$0xff]
  %v106 = vld [vmem:[%s1 + $0x238] sm:$0xff]
  %v107 = vld [vmem:[%s1 + $0x240] sm:$0xff]
  %v108 = vld [vmem:[%s1 + $0x248] sm:$0xff]
  %v109 = vld [vmem:[%s1 + $0x250] sm:$0xff]
  %v110 = vld [vmem:[%s1 + $0x258] sm:$0xff]
  %v111 = vld [vmem:[%s1 + $0x260] sm:$0xff]
  %v112 = vld [vmem:[%s1 + $0x268] sm:$0xff]
  %v113 = vld [vmem:[%s1 + $0x270] sm:$0xff]
  %v114 = vld [vmem:[%s1 + $0x278] sm:$0xff]
  %v115 = vld [vmem:[%s1 + $0x280] sm:$0xff]
  %v116 = vld [vmem:[%s1 + $0x288] sm:$0xff]
  %v117 = vld [vmem:[%s1 + $0x290] sm:$0xff]
  %v118 = vld [vmem:[%s1 + $0x298] sm:$0xff]
  %v119 = vld [vmem:[%s1 + $0x2a0] sm:$0xff]
  %v120 = vld [vmem:[%s1 + $0x2a8] sm:$0xff]
  %v121 = vld [vmem:[%s1 + $0x2b0] sm:$0xff]
  %v122 = vld [vmem:[%s1 + $0x2b8] sm:$0xff]
  %v123 = vld [vmem:[%s1 + $0x2c0] sm:$0xff]
  %v124 = vld [vmem:[%s1 + $0x2c8] sm:$0xff]
  %v125 = vld [vmem:[%s1 + $0x2d0] sm:$0xff]
  %v126 = vld [vmem:[%s1 + $0x2d8] sm:$0xff]
  %v127 = vld [vmem:[%s1 + $0x2e0] sm:$0xff]
  %v128 = vld [vmem:[%s1 + $0x2e8] sm:$0xff]
  %v129 = vld [vmem:[%s1 + $0x2f0] sm:$0xff]
  %v130 = vld [vmem:[%s1 + $0x2f8] sm:$0xff]
  %v131 = vld [vmem:[%s1 + $0x300] sm:$0xff]
  %v132 = vld [vmem:[%s1 + $0x308] sm:$0xff]
  %v133 = vld [vmem:[%s1 + $0x310] sm:$0xff]
  %v134 = vld [vmem:[%s1 + $0x318] sm:$0xff]
  %v135 = vld [vmem:[%s1 + $0x320] sm:$0xff]
  %v136 = vld [vmem:[%s1 + $0x328] sm:$0xff]
  %v137 = vld [vmem:[%s1 + $0x330] sm:$0xff]
  %v138 = vld [vmem:[%s1 + $0x338] sm:$0xff]
  %v139 = vld [vmem:[%s1 + $0x340] sm:$0xff]
  %v140 = vld [vmem:[%s1 + $0x348] sm:$0xff]
  %v141 = vld [vmem:[%s1 + $0x350] sm:$0xff]
  %v142 = vld [vmem:[%s1 + $0x358] sm:$0xff]
  %v143 = vld [vmem:[%s1 + $0x360] sm:$0xff]
  %v144 = vld [vmem:[%s1 + $0x368] sm:$0xff]
  %v145 = vld [vmem:[%s1 + $0x370] sm:$0xff]
  %v146 = vld [vmem:[%s1 + $0x378] sm:$0xff]
  %v147 = vld [vmem:[%s1 + $0x380] sm:$0xff]
  %v148 = vld [vmem:[%s1 + $0x388] sm:$0xff]
  %v149 = vld [vmem:[%s1 + $0x390] sm:$0xff]
  %v150 = vld [vmem:[%s1 + $0x398] sm:$0xff]
  %v151 = vld [vmem:[%s1 + $0x3a0] sm:$0xff]
  %v152 = vld [vmem:[%s1 + $0x3a8] sm:$0xff]
  %v153 = vld [vmem:[%s1 + $0x3b0] sm:$0xff]
  %v154 = vld [vmem:[%s1 + $0x3b8] sm:$0xff]
  %v155 = vld [vmem:[%s1 + $0x3c0] sm:$0xff]
  %v156 = vld [vmem:[%s1 + $0x3c8] sm:$0xff]
  %v157 = vld [vmem:[%s1 + $0x3d0] sm:$0xff]
  %v158 = vld [vmem:[%s1 + $0x3d8] sm:$0xff]
  %v159 = vld [vmem:[%s1 + $0x3e0] sm:$0xff]
  %v160 = vld [vmem:[%s1 + $0x3e8] sm:$0xff]
  %v161 = vld [vmem:[%s1 + $0x3f0] sm:$0xff]
  %v162 = vld [vmem:[%s1 + $0x3f8] sm:$0xff]
  %v163 = vld [vmem:[%s1 + $0x400] sm:$0xff]
  %v164 = vld [vmem:[%s1 + $0x408] sm:$0xff]
  %v165 = vld [vmem:[%s1 + $0x410] sm:$0xff]
  %v166 = vld [vmem:[%s1 + $0x418] sm:$0xff]
  %v167 = vld [vmem:[%s1 + $0x420] sm:$0xff]
  %v168 = vld [vmem:[%s1 + $0x428] sm:$0xff]
  %v169 = vld [vmem:[%s1 + $0x430] sm:$0xff]
  %v170 = vld [vmem:[%s1 + $0x438] sm:$0xff]
  %v171 = vld [vmem:[%s1 + $0x440] sm:$0xff]
  %v172 = vld [vmem:[%s1 + $0x448] sm:$0xff]
  %v173 = vld [vmem:[%s1 + $0x450] sm:$0xff]
  %v174 = vld [vmem:[%s1 + $0x458] sm:$0xff]
  %v175 = vld [vmem:[%s1 + $0x460] sm:$0xff]
  %v176 = vld [vmem:[%s1 + $0x468] sm:$0xff]
  %v177 = vld [vmem:[%s1 + $0x470] sm:$0xff]
  %v178 = vld [vmem:[%s1 + $0x478] sm:$0xff]
  %v199 = vunpack.c.l.b16 %v15
  %v200 = vunpack.c.h.b16 %v15
  %v201 = vunpack.c.l.b16 %v16
  %v202 = vunpack.c.h.b16 %v16
  %v203 = vunpack.c.l.b16 %v17
  %v204 = vunpack.c.h.b16 %v17
  %v205 = vunpack.c.l.b16 %v18
  %v206 = vunpack.c.h.b16 %v18
  %v207 = vunpack.c.l.b16 %v19
  %v208 = vunpack.c.l.b16 %v20
  %v209 = vunpack.c.h.b16 %v20
  %v210 = vunpack.c.l.b16 %v21
  %v211 = vunpack.c.h.b16 %v21
  %v212 = vunpack.c.l.b16 %v22
  %v213 = vunpack.c.h.b16 %v22
  %v214 = vunpack.c.l.b16 %v23
  %v215 = vunpack.c.h.b16 %v23
  %v216 = vunpack.c.l.b16 %v24
  %v217 = vunpack.c.l.b16 %v25
  %v218 = vunpack.c.h.b16 %v25
  %v219 = vunpack.c.l.b16 %v26
  %v220 = vunpack.c.h.b16 %v26
  %v221 = vunpack.c.l.b16 %v27
  %v222 = vunpack.c.h.b16 %v27
  %v223 = vunpack.c.l.b16 %v28
  %v224 = vunpack.c.h.b16 %v28
  %v225 = vunpack.c.l.b16 %v29
  %v226 = vunpack.c.l.b16 %v30
  %v227 = vunpack.c.h.b16 %v30
  %v228 = vunpack.c.l.b16 %v31
  %v229 = vunpack.c.h.b16 %v31
  %v230 = vunpack.c.l.b16 %v32
  %v231 = vunpack.c.h.b16 %v32
  %v232 = vunpack.c.l.b16 %v33
  %v233 = vunpack.c.h.b16 %v33
  %v234 = vunpack.c.l.b16 %v34
  %v235 = vpack.c.b16 %v208, %v199
  %v236 = vpack.c.b16 %v209, %v200
  %v237 = vpack.c.b16 %v210, %v201
  %v238 = vpack.c.b16 %v211, %v202
  %v239 = vpack.c.b16 %v212, %v203
  %v240 = vpack.c.b16 %v213, %v204
  %v241 = vpack.c.b16 %v214, %v205
  %v242 = vpack.c.b16 %v215, %v206
  %v243 = vpack.c.b16 %v216, %v207
  %v244 = vpack.c.b16 %v226, %v217
  %v245 = vpack.c.b16 %v227, %v218
  %v246 = vpack.c.b16 %v228, %v219
  %v247 = vpack.c.b16 %v229, %v220
  %v248 = vpack.c.b16 %v230, %v221
  %v249 = vpack.c.b16 %v231, %v222
  %v250 = vpack.c.b16 %v232, %v223
  %v251 = vpack.c.b16 %v233, %v224
  %v252 = vpack.c.b16 %v234, %v225
  %v415 = vunpack.c.l.b16 %v35
  %v416 = vunpack.c.h.b16 %v35
  %v417 = vunpack.c.l.b16 %v36
  %v418 = vunpack.c.h.b16 %v36
  %v419 = vunpack.c.l.b16 %v37
  %v420 = vunpack.c.h.b16 %v37
  %v421 = vunpack.c.l.b16 %v38
  %v422 = vunpack.c.h.b16 %v38
  %v423 = vunpack.c.l.b16 %v39
  %v424 = vunpack.c.h.b16 %v39
  %v425 = vunpack.c.l.b16 %v40
  %v426 = vunpack.c.h.b16 %v40
  %v427 = vunpack.c.l.b16 %v41
  %v428 = vunpack.c.h.b16 %v41
  %v429 = vunpack.c.l.b16 %v42
  %v430 = vunpack.c.h.b16 %v42
  %v431 = vunpack.c.l.b16 %v43
  %v432 = vunpack.c.h.b16 %v43
  %v433 = vunpack.c.l.b16 %v44
  %v434 = vunpack.c.h.b16 %v44
  %v435 = vunpack.c.l.b16 %v45
  %v436 = vunpack.c.h.b16 %v45
  %v437 = vunpack.c.l.b16 %v46
  %v438 = vunpack.c.h.b16 %v46
  %v439 = vunpack.c.l.b16 %v47
  %v440 = vunpack.c.h.b16 %v47
  %v441 = vunpack.c.l.b16 %v48
  %v442 = vunpack.c.h.b16 %v48
  %v443 = vunpack.c.l.b16 %v49
  %v444 = vunpack.c.h.b16 %v49
  %v445 = vunpack.c.l.b16 %v50
  %v446 = vunpack.c.h.b16 %v50
  %v447 = vunpack.c.l.b16 %v51
  %v448 = vunpack.c.h.b16 %v51
  %v449 = vunpack.c.l.b16 %v52
  %v450 = vunpack.c.h.b16 %v52
  %v451 = vunpack.c.l.b16 %v53
  %v452 = vunpack.c.h.b16 %v53
  %v453 = vunpack.c.l.b16 %v54
  %v454 = vunpack.c.h.b16 %v54
  %v455 = vunpack.c.l.b16 %v55
  %v456 = vunpack.c.h.b16 %v55
  %v457 = vunpack.c.l.b16 %v56
  %v458 = vunpack.c.h.b16 %v56
  %v459 = vunpack.c.l.b16 %v57
  %v460 = vunpack.c.h.b16 %v57
  %v461 = vunpack.c.l.b16 %v58
  %v462 = vunpack.c.h.b16 %v58
  %v463 = vunpack.c.l.b16 %v59
  %v464 = vunpack.c.h.b16 %v59
  %v465 = vunpack.c.l.b16 %v60
  %v466 = vunpack.c.h.b16 %v60
  %v467 = vunpack.c.l.b16 %v61
  %v468 = vunpack.c.h.b16 %v61
  %v469 = vunpack.c.l.b16 %v62
  %v470 = vunpack.c.h.b16 %v62
  %v471 = vunpack.c.l.b16 %v63
  %v472 = vunpack.c.h.b16 %v63
  %v473 = vunpack.c.l.b16 %v64
  %v474 = vunpack.c.h.b16 %v64
  %v475 = vunpack.c.l.b16 %v65
  %v476 = vunpack.c.h.b16 %v65
  %v477 = vunpack.c.l.b16 %v66
  %v478 = vunpack.c.h.b16 %v66
  %v479 = vunpack.c.l.b16 %v67
  %v480 = vunpack.c.h.b16 %v67
  %v481 = vunpack.c.l.b16 %v68
  %v482 = vunpack.c.h.b16 %v68
  %v483 = vunpack.c.l.b16 %v69
  %v484 = vunpack.c.h.b16 %v69
  %v485 = vunpack.c.l.b16 %v70
  %v486 = vunpack.c.h.b16 %v70
  %v487 = vunpack.c.l.b16 %v71
  %v488 = vunpack.c.h.b16 %v71
  %v489 = vunpack.c.l.b16 %v72
  %v490 = vunpack.c.h.b16 %v72
  %v491 = vunpack.c.l.b16 %v73
  %v492 = vunpack.c.h.b16 %v73
  %v493 = vunpack.c.l.b16 %v74
  %v494 = vunpack.c.h.b16 %v74
  %v495 = vunpack.c.l.b16 %v75
  %v496 = vunpack.c.h.b16 %v75
  %v497 = vunpack.c.l.b16 %v76
  %v498 = vunpack.c.h.b16 %v76
  %v499 = vunpack.c.l.b16 %v77
  %v500 = vunpack.c.h.b16 %v77
  %v501 = vunpack.c.l.b16 %v78
  %v502 = vunpack.c.h.b16 %v78
  %v503 = vunpack.c.l.b16 %v79
  %v504 = vunpack.c.h.b16 %v79
  %v505 = vunpack.c.l.b16 %v80
  %v506 = vunpack.c.h.b16 %v80
  %v507 = vunpack.c.l.b16 %v81
  %v508 = vunpack.c.h.b16 %v81
  %v509 = vunpack.c.l.b16 %v82
  %v510 = vunpack.c.h.b16 %v82
  %v511 = vunpack.c.l.b16 %v83
  %v512 = vunpack.c.h.b16 %v83
  %v513 = vunpack.c.l.b16 %v84
  %v514 = vunpack.c.h.b16 %v84
  %v515 = vunpack.c.l.b16 %v85
  %v516 = vunpack.c.h.b16 %v85
  %v517 = vunpack.c.l.b16 %v86
  %v518 = vunpack.c.h.b16 %v86
  %v519 = vunpack.c.l.b16 %v87
  %v520 = vunpack.c.h.b16 %v87
  %v521 = vunpack.c.l.b16 %v88
  %v522 = vunpack.c.h.b16 %v88
  %v523 = vunpack.c.l.b16 %v89
  %v524 = vunpack.c.h.b16 %v89
  %v525 = vunpack.c.l.b16 %v90
  %v526 = vunpack.c.h.b16 %v90
  %v527 = vunpack.c.l.b16 %v91
  %v528 = vunpack.c.h.b16 %v91
  %v529 = vunpack.c.l.b16 %v92
  %v530 = vunpack.c.h.b16 %v92
  %v531 = vunpack.c.l.b16 %v93
  %v532 = vunpack.c.h.b16 %v93
  %v533 = vunpack.c.l.b16 %v94
  %v534 = vunpack.c.h.b16 %v94
  %v535 = vunpack.c.l.b16 %v95
  %v536 = vunpack.c.h.b16 %v95
  %v537 = vunpack.c.l.b16 %v96
  %v538 = vunpack.c.h.b16 %v96
  %v539 = vunpack.c.l.b16 %v97
  %v540 = vunpack.c.h.b16 %v97
  %v541 = vunpack.c.l.b16 %v98
  %v542 = vunpack.c.h.b16 %v98
  %v543 = vunpack.c.l.b16 %v99
  %v544 = vunpack.c.h.b16 %v99
  %v545 = vunpack.c.l.b16 %v100
  %v546 = vunpack.c.h.b16 %v100
  %v547 = vunpack.c.l.b16 %v101
  %v548 = vunpack.c.h.b16 %v101
  %v549 = vunpack.c.l.b16 %v102
  %v550 = vunpack.c.h.b16 %v102
  %v551 = vunpack.c.l.b16 %v103
  %v552 = vunpack.c.h.b16 %v103
  %v553 = vunpack.c.l.b16 %v104
  %v554 = vunpack.c.h.b16 %v104
  %v555 = vunpack.c.l.b16 %v105
  %v556 = vunpack.c.h.b16 %v105
  %v557 = vunpack.c.l.b16 %v106
  %v558 = vunpack.c.h.b16 %v106
  %v559 = vunpack.c.l.b16 %v107
  %v560 = vunpack.c.h.b16 %v107
  %v561 = vunpack.c.l.b16 %v108
  %v562 = vunpack.c.h.b16 %v108
  %v563 = vunpack.c.l.b16 %v109
  %v564 = vunpack.c.h.b16 %v109
  %v565 = vunpack.c.l.b16 %v110
  %v566 = vunpack.c.h.b16 %v110
  %v567 = vunpack.c.l.b16 %v111
  %v568 = vunpack.c.h.b16 %v111
  %v569 = vunpack.c.l.b16 %v112
  %v570 = vunpack.c.h.b16 %v112
  %v571 = vunpack.c.l.b16 %v113
  %v572 = vunpack.c.h.b16 %v113
  %v573 = vunpack.c.l.b16 %v114
  %v574 = vunpack.c.h.b16 %v114
  %v575 = vunpack.c.l.b16 %v115
  %v576 = vunpack.c.h.b16 %v115
  %v577 = vunpack.c.l.b16 %v116
  %v578 = vunpack.c.h.b16 %v116
  %v579 = vunpack.c.l.b16 %v117
  %v580 = vunpack.c.h.b16 %v117
  %v581 = vunpack.c.l.b16 %v118
  %v582 = vunpack.c.h.b16 %v118
  %v583 = vunpack.c.l.b16 %v119
  %v584 = vunpack.c.h.b16 %v119
  %v585 = vunpack.c.l.b16 %v120
  %v586 = vunpack.c.h.b16 %v120
  %v587 = vunpack.c.l.b16 %v121
  %v588 = vunpack.c.h.b16 %v121
  %v589 = vunpack.c.l.b16 %v122
  %v590 = vunpack.c.h.b16 %v122
  %v591 = vunpack.c.l.b16 %v123
  %v592 = vunpack.c.h.b16 %v123
  %v593 = vunpack.c.l.b16 %v124
  %v594 = vunpack.c.h.b16 %v124
  %v595 = vunpack.c.l.b16 %v125
  %v596 = vunpack.c.h.b16 %v125
  %v597 = vunpack.c.l.b16 %v126
  %v598 = vunpack.c.h.b16 %v126
  %v599 = vunpack.c.l.b16 %v127
  %v600 = vunpack.c.h.b16 %v127
  %v601 = vunpack.c.l.b16 %v128
  %v602 = vunpack.c.h.b16 %v128
  %v603 = vunpack.c.l.b16 %v129
  %v604 = vunpack.c.h.b16 %v129
  %v605 = vunpack.c.l.b16 %v130
  %v606 = vunpack.c.h.b16 %v130
  %v607 = vunpack.c.l.b16 %v131
  %v608 = vunpack.c.h.b16 %v131
  %v609 = vunpack.c.l.b16 %v132
  %v610 = vunpack.c.h.b16 %v132
  %v611 = vunpack.c.l.b16 %v133
  %v612 = vunpack.c.h.b16 %v133
  %v613 = vunpack.c.l.b16 %v134
  %v614 = vunpack.c.h.b16 %v134
  %v615 = vunpack.c.l.b16 %v135
  %v616 = vunpack.c.h.b16 %v135
  %v617 = vunpack.c.l.b16 %v136
  %v618 = vunpack.c.h.b16 %v136
  %v619 = vunpack.c.l.b16 %v137
  %v620 = vunpack.c.h.b16 %v137
  %v621 = vunpack.c.l.b16 %v138
  %v622 = vunpack.c.h.b16 %v138
  %v623 = vunpack.c.l.b16 %v139
  %v624 = vunpack.c.h.b16 %v139
  %v625 = vunpack.c.l.b16 %v140
  %v626 = vunpack.c.h.b16 %v140
  %v627 = vunpack.c.l.b16 %v141
  %v628 = vunpack.c.h.b16 %v141
  %v629 = vunpack.c.l.b16 %v142
  %v630 = vunpack.c.h.b16 %v142
  %v631 = vunpack.c.l.b16 %v143
  %v632 = vunpack.c.h.b16 %v143
  %v633 = vunpack.c.l.b16 %v144
  %v634 = vunpack.c.h.b16 %v144
  %v635 = vunpack.c.l.b16 %v145
  %v636 = vunpack.c.h.b16 %v145
  %v637 = vunpack.c.l.b16 %v146
  %v638 = vunpack.c.h.b16 %v146
  %v639 = vunpack.c.l.b16 %v147
  %v640 = vunpack.c.h.b16 %v147
  %v641 = vunpack.c.l.b16 %v148
  %v642 = vunpack.c.h.b16 %v148
  %v643 = vunpack.c.l.b16 %v149
  %v644 = vunpack.c.h.b16 %v149
  %v645 = vunpack.c.l.b16 %v150
  %v646 = vunpack.c.h.b16 %v150
  %v647 = vunpack.c.l.b16 %v151
  %v648 = vunpack.c.h.b16 %v151
  %v649 = vunpack.c.l.b16 %v152
  %v650 = vunpack.c.h.b16 %v152
  %v651 = vunpack.c.l.b16 %v153
  %v652 = vunpack.c.h.b16 %v153
  %v653 = vunpack.c.l.b16 %v154
  %v654 = vunpack.c.h.b16 %v154
  %v655 = vunpack.c.l.b16 %v155
  %v656 = vunpack.c.h.b16 %v155
  %v657 = vunpack.c.l.b16 %v156
  %v658 = vunpack.c.h.b16 %v156
  %v659 = vunpack.c.l.b16 %v157
  %v660 = vunpack.c.h.b16 %v157
  %v661 = vunpack.c.l.b16 %v158
  %v662 = vunpack.c.h.b16 %v158
  %v663 = vunpack.c.l.b16 %v159
  %v664 = vunpack.c.h.b16 %v159
  %v665 = vunpack.c.l.b16 %v160
  %v666 = vunpack.c.h.b16 %v160
  %v667 = vunpack.c.l.b16 %v161
  %v668 = vunpack.c.h.b16 %v161
  %v669 = vunpack.c.l.b16 %v162
  %v670 = vunpack.c.h.b16 %v162
  %v671 = vunpack.c.l.b16 %v163
  %v672 = vunpack.c.h.b16 %v163
  %v673 = vunpack.c.l.b16 %v164
  %v674 = vunpack.c.h.b16 %v164
  %v675 = vunpack.c.l.b16 %v165
  %v676 = vunpack.c.h.b16 %v165
  %v677 = vunpack.c.l.b16 %v166
  %v678 = vunpack.c.h.b16 %v166
  %v679 = vunpack.c.l.b16 %v167
  %v680 = vunpack.c.h.b16 %v167
  %v681 = vunpack.c.l.b16 %v168
  %v682 = vunpack.c.h.b16 %v168
  %v683 = vunpack.c.l.b16 %v169
  %v684 = vunpack.c.h.b16 %v169
  %v685 = vunpack.c.l.b16 %v170
  %v686 = vunpack.c.h.b16 %v170
  %v687 = vunpack.c.l.b16 %v171
  %v688 = vunpack.c.h.b16 %v171
  %v689 = vunpack.c.l.b16 %v172
  %v690 = vunpack.c.h.b16 %v172
  %v691 = vunpack.c.l.b16 %v173
  %v692 = vunpack.c.h.b16 %v173
  %v693 = vunpack.c.l.b16 %v174
  %v694 = vunpack.c.h.b16 %v174
  %v695 = vunpack.c.l.b16 %v175
  %v696 = vunpack.c.h.b16 %v175
  %v697 = vunpack.c.l.b16 %v176
  %v698 = vunpack.c.h.b16 %v176
  %v699 = vunpack.c.l.b16 %v177
  %v700 = vunpack.c.h.b16 %v177
  %v701 = vunpack.c.l.b16 %v178
  %v702 = vunpack.c.h.b16 %v178
  %v703 = vpack.c.b16 %v417, %v415
  %v704 = vpack.c.b16 %v418, %v416
  %v705 = vpack.c.b16 %v421, %v419
  %v706 = vpack.c.b16 %v422, %v420
  %v707 = vpack.c.b16 %v425, %v423
  %v708 = vpack.c.b16 %v426, %v424
  %v709 = vpack.c.b16 %v429, %v427
  %v710 = vpack.c.b16 %v430, %v428
  %v711 = vpack.c.b16 %v433, %v431
  %v712 = vpack.c.b16 %v434, %v432
  %v713 = vpack.c.b16 %v437, %v435
  %v714 = vpack.c.b16 %v438, %v436
  %v715 = vpack.c.b16 %v441, %v439
  %v716 = vpack.c.b16 %v442, %v440
  %v717 = vpack.c.b16 %v445, %v443
  %v718 = vpack.c.b16 %v446, %v444
  %v719 = vpack.c.b16 %v449, %v447
  %v720 = vpack.c.b16 %v450, %v448
  %v721 = vpack.c.b16 %v453, %v451
  %v722 = vpack.c.b16 %v454, %v452
  %v723 = vpack.c.b16 %v457, %v455
  %v724 = vpack.c.b16 %v458, %v456
  %v725 = vpack.c.b16 %v461, %v459
  %v726 = vpack.c.b16 %v462, %v460
  %v727 = vpack.c.b16 %v465, %v463
  %v728 = vpack.c.b16 %v466, %v464
  %v729 = vpack.c.b16 %v469, %v467
  %v730 = vpack.c.b16 %v470, %v468
  %v731 = vpack.c.b16 %v473, %v471
  %v732 = vpack.c.b16 %v474, %v472
  %v733 = vpack.c.b16 %v477, %v475
  %v734 = vpack.c.b16 %v478, %v476
  %v735 = vpack.c.b16 %v481, %v479
  %v736 = vpack.c.b16 %v482, %v480
  %v737 = vpack.c.b16 %v485, %v483
  %v738 = vpack.c.b16 %v486, %v484
  %v739 = vpack.c.b16 %v489, %v487
  %v740 = vpack.c.b16 %v490, %v488
  %v741 = vpack.c.b16 %v493, %v491
  %v742 = vpack.c.b16 %v494, %v492
  %v743 = vpack.c.b16 %v497, %v495
  %v744 = vpack.c.b16 %v498, %v496
  %v745 = vpack.c.b16 %v501, %v499
  %v746 = vpack.c.b16 %v502, %v500
  %v747 = vpack.c.b16 %v505, %v503
  %v748 = vpack.c.b16 %v506, %v504
  %v749 = vpack.c.b16 %v509, %v507
  %v750 = vpack.c.b16 %v510, %v508
  %v751 = vpack.c.b16 %v513, %v511
  %v752 = vpack.c.b16 %v514, %v512
  %v753 = vpack.c.b16 %v517, %v515
  %v754 = vpack.c.b16 %v518, %v516
  %v755 = vpack.c.b16 %v521, %v519
  %v756 = vpack.c.b16 %v522, %v520
  %v757 = vpack.c.b16 %v525, %v523
  %v758 = vpack.c.b16 %v526, %v524
  %v759 = vpack.c.b16 %v529, %v527
  %v760 = vpack.c.b16 %v530, %v528
  %v761 = vpack.c.b16 %v533, %v531
  %v762 = vpack.c.b16 %v534, %v532
  %v763 = vpack.c.b16 %v537, %v535
  %v764 = vpack.c.b16 %v538, %v536
  %v765 = vpack.c.b16 %v541, %v539
  %v766 = vpack.c.b16 %v542, %v540
  %v767 = vpack.c.b16 %v545, %v543
  %v768 = vpack.c.b16 %v546, %v544
  %v769 = vpack.c.b16 %v549, %v547
  %v770 = vpack.c.b16 %v550, %v548
  %v771 = vpack.c.b16 %v553, %v551
  %v772 = vpack.c.b16 %v554, %v552
  %v773 = vpack.c.b16 %v557, %v555
  %v774 = vpack.c.b16 %v558, %v556
  %v775 = vpack.c.b16 %v561, %v559
  %v776 = vpack.c.b16 %v562, %v560
  %v777 = vpack.c.b16 %v565, %v563
  %v778 = vpack.c.b16 %v566, %v564
  %v779 = vpack.c.b16 %v569, %v567
  %v780 = vpack.c.b16 %v570, %v568
  %v781 = vpack.c.b16 %v573, %v571
  %v782 = vpack.c.b16 %v574, %v572
  %v783 = vpack.c.b16 %v577, %v575
  %v784 = vpack.c.b16 %v578, %v576
  %v785 = vpack.c.b16 %v581, %v579
  %v786 = vpack.c.b16 %v582, %v580
  %v787 = vpack.c.b16 %v585, %v583
  %v788 = vpack.c.b16 %v586, %v584
  %v789 = vpack.c.b16 %v589, %v587
  %v790 = vpack.c.b16 %v590, %v588
  %v791 = vpack.c.b16 %v593, %v591
  %v792 = vpack.c.b16 %v594, %v592
  %v793 = vpack.c.b16 %v597, %v595
  %v794 = vpack.c.b16 %v598, %v596
  %v795 = vpack.c.b16 %v601, %v599
  %v796 = vpack.c.b16 %v602, %v600
  %v797 = vpack.c.b16 %v605, %v603
  %v798 = vpack.c.b16 %v606, %v604
  %v799 = vpack.c.b16 %v609, %v607
  %v800 = vpack.c.b16 %v610, %v608
  %v801 = vpack.c.b16 %v613, %v611
  %v802 = vpack.c.b16 %v614, %v612
  %v803 = vpack.c.b16 %v617, %v615
  %v804 = vpack.c.b16 %v618, %v616
  %v805 = vpack.c.b16 %v621, %v619
  %v806 = vpack.c.b16 %v622, %v620
  %v807 = vpack.c.b16 %v625, %v623
  %v808 = vpack.c.b16 %v626, %v624
  %v809 = vpack.c.b16 %v629, %v627
  %v810 = vpack.c.b16 %v630, %v628
  %v811 = vpack.c.b16 %v633, %v631
  %v812 = vpack.c.b16 %v634, %v632
  %v813 = vpack.c.b16 %v637, %v635
  %v814 = vpack.c.b16 %v638, %v636
  %v815 = vpack.c.b16 %v641, %v639
  %v816 = vpack.c.b16 %v642, %v640
  %v817 = vpack.c.b16 %v645, %v643
  %v818 = vpack.c.b16 %v646, %v644
  %v819 = vpack.c.b16 %v649, %v647
  %v820 = vpack.c.b16 %v650, %v648
  %v821 = vpack.c.b16 %v653, %v651
  %v822 = vpack.c.b16 %v654, %v652
  %v823 = vpack.c.b16 %v657, %v655
  %v824 = vpack.c.b16 %v658, %v656
  %v825 = vpack.c.b16 %v661, %v659
  %v826 = vpack.c.b16 %v662, %v660
  %v827 = vpack.c.b16 %v665, %v663
  %v828 = vpack.c.b16 %v666, %v664
  %v829 = vpack.c.b16 %v669, %v667
  %v830 = vpack.c.b16 %v670, %v668
  %v831 = vpack.c.b16 %v673, %v671
  %v832 = vpack.c.b16 %v674, %v672
  %v833 = vpack.c.b16 %v677, %v675
  %v834 = vpack.c.b16 %v678, %v676
  %v835 = vpack.c.b16 %v681, %v679
  %v836 = vpack.c.b16 %v682, %v680
  %v837 = vpack.c.b16 %v685, %v683
  %v838 = vpack.c.b16 %v686, %v684
  %v839 = vpack.c.b16 %v689, %v687
  %v840 = vpack.c.b16 %v690, %v688
  %v841 = vpack.c.b16 %v693, %v691
  %v842 = vpack.c.b16 %v694, %v692
  %v843 = vpack.c.b16 %v697, %v695
  %v844 = vpack.c.b16 %v698, %v696
  %v845 = vpack.c.b16 %v701, %v699
  %v846 = vpack.c.b16 %v702, %v700
  %991 = vmatprep.subr.bf16.mxu0 %v704
  %992 = vmatpush1.bf16.msra.mxu0 %v703
  %993 = vmatprep.subr.bf16.mxu0 %v706
  %994 = vmatpush1.bf16.msra.mxu0 %v705
  %995 = vmatprep.subr.bf16.mxu0 %v708
  %996 = vmatpush1.bf16.msra.mxu0 %v707
  %997 = vmatprep.subr.bf16.mxu0 %v710
  %998 = vmatpush1.bf16.msra.mxu0 %v709
  %999 = vmatprep.subr.bf16.mxu0 %v712
  %1000 = vmatpush1.bf16.msra.mxu0 %v711
  %1001 = vmatprep.subr.bf16.mxu0 %v714
  %1002 = vmatpush1.bf16.msra.mxu0 %v713
  %1003 = vmatprep.subr.bf16.mxu0 %v716
  %1004 = vmatpush1.bf16.msra.mxu0 %v715
  %1005 = vmatprep.subr.bf16.mxu0 %v718
  %1006 = vmatpush1.bf16.msra.mxu0 %v717
  %1007 = vmatprep.subr.bf16.mxu0 %v720
  %1008 = vmatpush1.bf16.msra.mxu0 %v719
  %1009 = vmatprep.subr.bf16.mxu0 %v722
  %1010 = vmatpush1.bf16.msra.mxu0 %v721
  %1011 = vmatprep.subr.bf16.mxu0 %v724
  %1012 = vmatpush1.bf16.msra.mxu0 %v723
  %1013 = vmatprep.subr.bf16.mxu0 %v726
  %1014 = vmatpush1.bf16.msra.mxu0 %v725
  %1015 = vmatprep.subr.bf16.mxu0 %v728
  %1016 = vmatpush1.bf16.msra.mxu0 %v727
  %1017 = vmatprep.subr.bf16.mxu0 %v730
  %1018 = vmatpush1.bf16.msra.mxu0 %v729
  %1019 = vmatprep.subr.bf16.mxu0 %v732
  %1020 = vmatpush1.bf16.msra.mxu0 %v731
  %1021 = vmatprep.subr.bf16.mxu0 %v734
  %1022 = vmatpush1.bf16.msra.mxu0 %v733
  %1023 = vmatprep.mubr.bf16.mxu0 %v236
  %1024 = vmatmul.mubr.bf16.gmra.mrb[0].mxu0 %v235
  %v1025 = vpop.f32.mrb[0].mxu0
  %v1026 = vadd.f32 0.0, %v1025
  %v1027 = vpop.f32.mrb[0].mxu0
  %v1028 = vadd.f32 0.0, %v1027
  %v1029 = vpop.f32.mrb[0].mxu0
  %v1030 = vadd.f32 0.0, %v1029
  %v1031 = vpop.f32.mrb[0].mxu0
  %v1032 = vadd.f32 0.0, %v1031
  %1033 = vmatprep.mubr.bf16.mxu0 %v245
  %1034 = vmatmul.mubr.bf16.gmra.mrb[0].mxu0 %v244
  %v1035 = vpop.f32.mrb[0].mxu0
  %v1036 = vadd.f32 0.0, %v1035
  %v1037 = vpop.f32.mrb[0].mxu0
  %v1038 = vadd.f32 0.0, %v1037
  %v1039 = vpop.f32.mrb[0].mxu0
  %v1040 = vadd.f32 0.0, %v1039
  %v1041 = vpop.f32.mrb[0].mxu0
  %v1042 = vadd.f32 0.0, %v1041
  %1043 = vdwg.mxu0
  %1044 = vmatprep.subr.bf16.mxu0 %v736
  %1045 = vmatpush1.bf16.msra.mxu0 %v735
  %1046 = vmatprep.subr.bf16.mxu0 %v738
  %1047 = vmatpush1.bf16.msra.mxu0 %v737
  %1048 = vmatprep.subr.bf16.mxu0 %v740
  %1049 = vmatpush1.bf16.msra.mxu0 %v739
  %1050 = vmatprep.subr.bf16.mxu0 %v742
  %1051 = vmatpush1.bf16.msra.mxu0 %v741
  %1052 = vmatprep.subr.bf16.mxu0 %v744
  %1053 = vmatpush1.bf16.msra.mxu0 %v743
  %1054 = vmatprep.subr.bf16.mxu0 %v746
  %1055 = vmatpush1.bf16.msra.mxu0 %v745
  %1056 = vmatprep.subr.bf16.mxu0 %v748
  %1057 = vmatpush1.bf16.msra.mxu0 %v747
  %1058 = vmatprep.subr.bf16.mxu0 %v750
  %1059 = vmatpush1.bf16.msra.mxu0 %v749
  %1060 = vmatprep.subr.bf16.mxu0 %v752
  %1061 = vmatpush1.bf16.msra.mxu0 %v751
  %1062 = vmatprep.subr.bf16.mxu0 %v754
  %1063 = vmatpush1.bf16.msra.mxu0 %v753
  %1064 = vmatprep.subr.bf16.mxu0 %v756
  %1065 = vmatpush1.bf16.msra.mxu0 %v755
  %1066 = vmatprep.subr.bf16.mxu0 %v758
  %1067 = vmatpush1.bf16.msra.mxu0 %v757
  %1068 = vmatprep.subr.bf16.mxu0 %v760
  %1069 = vmatpush1.bf16.msra.mxu0 %v759
  %1070 = vmatprep.subr.bf16.mxu0 %v762
  %1071 = vmatpush1.bf16.msra.mxu0 %v761
  %1072 = vmatprep.subr.bf16.mxu0 %v764
  %1073 = vmatpush1.bf16.msra.mxu0 %v763
  %1074 = vmatprep.subr.bf16.mxu0 %v766
  %1075 = vmatpush1.bf16.msra.mxu0 %v765
  %1076 = vmatprep.mubr.bf16.mxu0 %v238
  %1077 = vmatmul.mubr.bf16.gmra.mrb[0].mxu0 %v237
  %v1078 = vpop.f32.mrb[0].mxu0
  %v1079 = vadd.f32 %v1026, %v1078
  %v1080 = vpop.f32.mrb[0].mxu0
  %v1081 = vadd.f32 %v1028, %v1080
  %v1082 = vpop.f32.mrb[0].mxu0
  %v1083 = vadd.f32 %v1030, %v1082
  %v1084 = vpop.f32.mrb[0].mxu0
  %v1085 = vadd.f32 %v1032, %v1084
  %1086 = vmatprep.mubr.bf16.mxu0 %v247
  %1087 = vmatmul.mubr.bf16.gmra.mrb[0].mxu0 %v246
  %v1088 = vpop.f32.mrb[0].mxu0
  %v1089 = vadd.f32 %v1036, %v1088
  %v1090 = vpop.f32.mrb[0].mxu0
  %v1091 = vadd.f32 %v1038, %v1090
  %v1092 = vpop.f32.mrb[0].mxu0
  %v1093 = vadd.f32 %v1040, %v1092
  %v1094 = vpop.f32.mrb[0].mxu0
  %v1095 = vadd.f32 %v1042, %v1094
  %1096 = vdwg.mxu0
  %1097 = vmatprep.subr.bf16.mxu0 %v768
  %1098 = vmatpush1.bf16.msra.mxu0 %v767
  %1099 = vmatprep.subr.bf16.mxu0 %v770
  %1100 = vmatpush1.bf16.msra.mxu0 %v769
  %1101 = vmatprep.subr.bf16.mxu0 %v772
  %1102 = vmatpush1.bf16.msra.mxu0 %v771
  %1103 = vmatprep.subr.bf16.mxu0 %v774
  %1104 = vmatpush1.bf16.msra.mxu0 %v773
  %1105 = vmatprep.subr.bf16.mxu0 %v776
  %1106 = vmatpush1.bf16.msra.mxu0 %v775
  %1107 = vmatprep.subr.bf16.mxu0 %v778
  %1108 = vmatpush1.bf16.msra.mxu0 %v777
  %1109 = vmatprep.subr.bf16.mxu0 %v780
  %1110 = vmatpush1.bf16.msra.mxu0 %v779
  %1111 = vmatprep.subr.bf16.mxu0 %v782
  %1112 = vmatpush1.bf16.msra.mxu0 %v781
  %1113 = vmatprep.subr.bf16.mxu0 %v784
  %1114 = vmatpush1.bf16.msra.mxu0 %v783
  %1115 = vmatprep.subr.bf16.mxu0 %v786
  %1116 = vmatpush1.bf16.msra.mxu0 %v785
  %1117 = vmatprep.subr.bf16.mxu0 %v788
  %1118 = vmatpush1.bf16.msra.mxu0 %v787
  %1119 = vmatprep.subr.bf16.mxu0 %v790
  %1120 = vmatpush1.bf16.msra.mxu0 %v789
  %1121 = vmatprep.subr.bf16.mxu0 %v792
  %1122 = vmatpush1.bf16.msra.mxu0 %v791
  %1123 = vmatprep.subr.bf16.mxu0 %v794
  %1124 = vmatpush1.bf16.msra.mxu0 %v793
  %1125 = vmatprep.subr.bf16.mxu0 %v796
  %1126 = vmatpush1.bf16.msra.mxu0 %v795
  %1127 = vmatprep.subr.bf16.mxu0 %v798
  %1128 = vmatpush1.bf16.msra.mxu0 %v797
  %1129 = vmatprep.mubr.bf16.mxu0 %v240
  %1130 = vmatmul.mubr.bf16.gmra.mrb[0].mxu0 %v239
  %v1131 = vpop.f32.mrb[0].mxu0
  %v1132 = vadd.f32 %v1079, %v1131
  %v1133 = vpop.f32.mrb[0].mxu0
  %v1134 = vadd.f32 %v1081, %v1133
  %v1135 = vpop.f32.mrb[0].mxu0
  %v1136 = vadd.f32 %v1083, %v1135
  %v1137 = vpop.f32.mrb[0].mxu0
  %v1138 = vadd.f32 %v1085, %v1137
  %1139 = vmatprep.mubr.bf16.mxu0 %v249
  %1140 = vmatmul.mubr.bf16.gmra.mrb[0].mxu0 %v248
  %v1141 = vpop.f32.mrb[0].mxu0
  %v1142 = vadd.f32 %v1089, %v1141
  %v1143 = vpop.f32.mrb[0].mxu0
  %v1144 = vadd.f32 %v1091, %v1143
  %v1145 = vpop.f32.mrb[0].mxu0
  %v1146 = vadd.f32 %v1093, %v1145
  %v1147 = vpop.f32.mrb[0].mxu0
  %v1148 = vadd.f32 %v1095, %v1147
  %1149 = vdwg.mxu0
  %1150 = vmatprep.subr.bf16.mxu0 %v800
  %1151 = vmatpush1.bf16.msra.mxu0 %v799
  %1152 = vmatprep.subr.bf16.mxu0 %v802
  %1153 = vmatpush1.bf16.msra.mxu0 %v801
  %1154 = vmatprep.subr.bf16.mxu0 %v804
  %1155 = vmatpush1.bf16.msra.mxu0 %v803
  %1156 = vmatprep.subr.bf16.mxu0 %v806
  %1157 = vmatpush1.bf16.msra.mxu0 %v805
  %1158 = vmatprep.subr.bf16.mxu0 %v808
  %1159 = vmatpush1.bf16.msra.mxu0 %v807
  %1160 = vmatprep.subr.bf16.mxu0 %v810
  %1161 = vmatpush1.bf16.msra.mxu0 %v809
  %1162 = vmatprep.subr.bf16.mxu0 %v812
  %1163 = vmatpush1.bf16.msra.mxu0 %v811
  %1164 = vmatprep.subr.bf16.mxu0 %v814
  %1165 = vmatpush1.bf16.msra.mxu0 %v813
  %1166 = vmatprep.subr.bf16.mxu0 %v816
  %1167 = vmatpush1.bf16.msra.mxu0 %v815
  %1168 = vmatprep.subr.bf16.mxu0 %v818
  %1169 = vmatpush1.bf16.msra.mxu0 %v817
  %1170 = vmatprep.subr.bf16.mxu0 %v820
  %1171 = vmatpush1.bf16.msra.mxu0 %v819
  %1172 = vmatprep.subr.bf16.mxu0 %v822
  %1173 = vmatpush1.bf16.msra.mxu0 %v821
  %1174 = vmatprep.subr.bf16.mxu0 %v824
  %1175 = vmatpush1.bf16.msra.mxu0 %v823
  %1176 = vmatprep.subr.bf16.mxu0 %v826
  %1177 = vmatpush1.bf16.msra.mxu0 %v825
  %1178 = vmatprep.subr.bf16.mxu0 %v828
  %1179 = vmatpush1.bf16.msra.mxu0 %v827
  %1180 = vmatprep.subr.bf16.mxu0 %v830
  %1181 = vmatpush1.bf16.msra.mxu0 %v829
  %1182 = vmatprep.mubr.bf16.mxu0 %v242
  %1183 = vmatmul.mubr.bf16.gmra.mrb[0].mxu0 %v241
  %v1184 = vpop.f32.mrb[0].mxu0
  %v1185 = vadd.f32 %v1132, %v1184
  %v1186 = vpop.f32.mrb[0].mxu0
  %v1187 = vadd.f32 %v1134, %v1186
  %v1188 = vpop.f32.mrb[0].mxu0
  %v1189 = vadd.f32 %v1136, %v1188
  %v1190 = vpop.f32.mrb[0].mxu0
  %v1191 = vadd.f32 %v1138, %v1190
  %1192 = vmatprep.mubr.bf16.mxu0 %v251
  %1193 = vmatmul.mubr.bf16.gmra.mrb[0].mxu0 %v250
  %v1194 = vpop.f32.mrb[0].mxu0
  %v1195 = vadd.f32 %v1142, %v1194
  %v1196 = vpop.f32.mrb[0].mxu0
  %v1197 = vadd.f32 %v1144, %v1196
  %v1198 = vpop.f32.mrb[0].mxu0
  %v1199 = vadd.f32 %v1146, %v1198
  %v1200 = vpop.f32.mrb[0].mxu0
  %v1201 = vadd.f32 %v1148, %v1200
  %1202 = vdwg.mxu0
  %1203 = vmatprep.subr.bf16.mxu0 %v832
  %1204 = vmatpush1.bf16.msra.mxu0 %v831
  %1205 = vmatprep.subr.bf16.mxu0 %v834
  %1206 = vmatpush1.bf16.msra.mxu0 %v833
  %1207 = vmatprep.subr.bf16.mxu0 %v836
  %1208 = vmatpush1.bf16.msra.mxu0 %v835
  %1209 = vmatprep.subr.bf16.mxu0 %v838
  %1210 = vmatpush1.bf16.msra.mxu0 %v837
  %1211 = vmatprep.subr.bf16.mxu0 %v840
  %1212 = vmatpush1.bf16.msra.mxu0 %v839
  %1213 = vmatprep.subr.bf16.mxu0 %v842
  %1214 = vmatpush1.bf16.msra.mxu0 %v841
  %1215 = vmatprep.subr.bf16.mxu0 %v844
  %1216 = vmatpush1.bf16.msra.mxu0 %v843
  %1217 = vmatprep.subr.bf16.mxu0 %v846
  %1218 = vmatpush1.bf16.msra.mxu0 %v845
  %1219 = vmatprep.subr.bf16.mxu0 0
  %1220 = vmatpush1.bf16.msra.mxu0 0
  %1221 = vmatprep.subr.bf16.mxu0 0
  %1222 = vmatpush1.bf16.msra.mxu0 0
  %1223 = vmatprep.subr.bf16.mxu0 0
  %1224 = vmatpush1.bf16.msra.mxu0 0
  %1225 = vmatprep.subr.bf16.mxu0 0
  %1226 = vmatpush1.bf16.msra.mxu0 0
  %1227 = vmatprep.subr.bf16.mxu0 0
  %1228 = vmatpush1.bf16.msra.mxu0 0
  %1229 = vmatprep.subr.bf16.mxu0 0
  %1230 = vmatpush1.bf16.msra.mxu0 0
  %1231 = vmatprep.subr.bf16.mxu0 0
  %1232 = vmatpush1.bf16.msra.mxu0 0
  %1233 = vmatprep.subr.bf16.mxu0 0
  %1234 = vmatpush1.bf16.msra.mxu0 0
  %1235 = vmatprep.mubr.bf16.mxu0 0
  %1236 = vmatmul.mubr.bf16.gmra.mrb[0].mxu0 %v243
  %v1237 = vpop.f32.mrb[0].mxu0
  %v1238 = vadd.f32 %v1185, %v1237
  %v1239 = vpop.f32.mrb[0].mxu0
  %v1240 = vadd.f32 %v1187, %v1239
  %v1241 = vpop.f32.mrb[0].mxu0
  %v1242 = vadd.f32 %v1189, %v1241
  %v1243 = vpop.f32.mrb[0].mxu0
  %v1244 = vadd.f32 %v1191, %v1243
  %1245 = vmatprep.mubr.bf16.mxu0 0
  %1246 = vmatmul.mubr.bf16.gmra.mrb[0].mxu0 %v252
  %v1247 = vpop.f32.mrb[0].mxu0
  %v1248 = vadd.f32 %v1195, %v1247
  %v1249 = vpop.f32.mrb[0].mxu0
  %v1250 = vadd.f32 %v1197, %v1249
  %v1251 = vpop.f32.mrb[0].mxu0
  %v1252 = vadd.f32 %v1199, %v1251
  %v1253 = vpop.f32.mrb[0].mxu0
  %v1254 = vadd.f32 %v1201, %v1253
  %1255 = vdwg.mxu0
  %v1256 = vpack.c.bf16 %v1242, %v1238
  %v1257 = vpack.c.bf16 %v1244, %v1240
  %v1258 = vpack.c.bf16 %v1252, %v1248
  %v1259 = vpack.c.bf16 %v1254, %v1250
  %v1264 = vunpack.c.l.b16 %v1256
  %v1265 = vunpack.c.l.b16 %v1257
  %v1266 = vunpack.c.h.b16 %v1256
  %v1267 = vunpack.c.h.b16 %v1257
  %v1268 = vunpack.c.l.b16 %v1258
  %v1269 = vunpack.c.l.b16 %v1259
  %v1270 = vunpack.c.h.b16 %v1258
  %v1271 = vunpack.c.h.b16 %v1259
  %v1272 = vpack.c.b16 %v1265, %v1264
  %v1273 = vpack.c.b16 %v1267, %v1266
  %v1274 = vpack.c.b16 %v1269, %v1268
  %v1275 = vpack.c.b16 %v1271, %v1270
  %1280 = vst [vmem:[%s2] sm:$0xff] %v1272
  %1281 = vst [vmem:[%s2 + $0x8] sm:$0xff] %v1273
  %1282 = vst [vmem:[%s2 + $0x10] sm:$0xff] %v1274
  %1283 = vst [vmem:[%s2 + $0x18] sm:$0xff] %v1275
  %v1284 = vadd.f32 %v1238, %v1242
  %v1285 = vadd.f32 %v1284, %v1248
  %v1286 = vadd.f32 %v1285, %v1252
  %v1287 = vrot.slane %v1286, 4
  %v1288 = vadd.f32 %v1286, %v1287
  %v1289 = vrot.slane %v1288, 2
  %v1290 = vadd.f32 %v1288, %v1289
  %v1291 = vrot.slane %v1290, 1
  %v1292 = vadd.f32 %v1290, %v1291
  %v1293 = vadd.f32 %v1240, %v1244
  %v1294 = vadd.f32 %v1293, %v1250
  %v1295 = vadd.f32 %v1294, %v1254
  %v1296 = vrot.slane %v1295, 4
  %v1297 = vadd.f32 %v1295, %v1296
  %v1298 = vrot.slane %v1297, 2
  %v1299 = vadd.f32 %v1297, %v1298
  %v1300 = vrot.slane %v1299, 1
  %v1301 = vadd.f32 %v1299, %v1300
  %v1304 = vcombine.low %v1292, %v1301
  %v1306 = vunpack.c.l.s4 1966171168
  %v1307 = vunpack.c.0.s8 %v1306
  %v1308 = vlaneseq
  %v1309 = vshrl.u32 %v1308, 7
  %v1310 = vsub.s32 %v1307, %v1309
  %v1311 = vrot.slane %v1304, %v1310
  %v1313 = vunpack.c.l.s4 1966171168
  %v1314 = vunpack.c.0.s8 %v1313
  %v1315 = vlaneseq
  %v1316 = vshrl.u32 %v1315, 7
  %v1317 = vsub.s32 %v1314, %v1316
  %v1318 = vrot.slane %v1311, %v1317
  %v1320 = vlaneseq
  %vm1321 = vcmp.ge.s32.totalorder %v1320, 0
  %vm1322 = vcmp.lt.s32.totalorder %v1320, 256
  %vm1323 = vmand %vm1321, %vm1322
  %1324 = vst.msk [vmem:[%s3] sm:$0x3] %vm1323, %v1318
  %v1325 = vmul.f32 %v1238, %v1238
  %v1326 = vmul.f32 %v1240, %v1240
  %v1327 = vmul.f32 %v1242, %v1242
  %v1328 = vmul.f32 %v1244, %v1244
  %v1329 = vmul.f32 %v1248, %v1248
  %v1330 = vmul.f32 %v1250, %v1250
  %v1331 = vmul.f32 %v1252, %v1252
  %v1332 = vmul.f32 %v1254, %v1254
  %v1333 = vadd.f32 %v1325, %v1327
  %v1334 = vadd.f32 %v1333, %v1329
  %v1335 = vadd.f32 %v1334, %v1331
  %v1336 = vrot.slane %v1335, 4
  %v1337 = vadd.f32 %v1335, %v1336
  %v1338 = vrot.slane %v1337, 2
  %v1339 = vadd.f32 %v1337, %v1338
  %v1340 = vrot.slane %v1339, 1
  %v1341 = vadd.f32 %v1339, %v1340
  %v1342 = vadd.f32 %v1326, %v1328
  %v1343 = vadd.f32 %v1342, %v1330
  %v1344 = vadd.f32 %v1343, %v1332
  %v1345 = vrot.slane %v1344, 4
  %v1346 = vadd.f32 %v1344, %v1345
  %v1347 = vrot.slane %v1346, 2
  %v1348 = vadd.f32 %v1346, %v1347
  %v1349 = vrot.slane %v1348, 1
  %v1350 = vadd.f32 %v1348, %v1349
  %v1353 = vcombine.low %v1341, %v1350
  %v1355 = vunpack.c.l.s4 1966171168
  %v1356 = vunpack.c.0.s8 %v1355
  %v1357 = vlaneseq
  %v1358 = vshrl.u32 %v1357, 7
  %v1359 = vsub.s32 %v1356, %v1358
  %v1360 = vrot.slane %v1353, %v1359
  %v1362 = vunpack.c.l.s4 1966171168
  %v1363 = vunpack.c.0.s8 %v1362
  %v1364 = vlaneseq
  %v1365 = vshrl.u32 %v1364, 7
  %v1366 = vsub.s32 %v1363, %v1365
  %v1367 = vrot.slane %v1360, %v1366
  %1369 = vst.msk [vmem:[%s4] sm:$0x3] %vm1323, %v1367
  // Predicated region
  $region10: #{simple_hrnet_forward.12} parent=0 // pred_check
    _
  $region11: #{simple_hrnet_forward.12} parent=0 // pred_check_branch
    %1371 = sbr.rel (0) target = $region13
  $region12: #{simple_hrnet_forward.12} parent=0 // pred_region
    _
  $region13: #{simple_hrnet_forward.12} parent=0 // pred_fallthru
    _
  // Predicated region
  $region14: #{simple_hrnet_forward.12} parent=0 // pred_check
    _
  $region15: #{simple_hrnet_forward.12} parent=0 // pred_check_branch
    %1373 = sbr.rel (0) target = $region17
  $region16: #{simple_hrnet_forward.12} parent=0 // pred_region
    _
  $region17: #{simple_hrnet_forward.12} parent=0 // pred_fallthru
    _
  // Predicated region
  $region18: #{simple_hrnet_forward.12} parent=0 // pred_check
    _
  $region19: #{simple_hrnet_forward.12} parent=0 // pred_check_branch
    %1375 = sbr.rel (0) target = $region21
  $region20: #{simple_hrnet_forward.12} parent=0 // pred_region
    _
  $region21: #{simple_hrnet_forward.12} parent=0 // pred_fallthru
    _
  // Predicated region
  $region22: #{simple_hrnet_forward.12} parent=0 // pred_check
    _
  $region23: #{simple_hrnet_forward.12} parent=0 // pred_check_branch
    %1377 = sbr.rel (0) target = $region25
  $region24: #{simple_hrnet_forward.12} parent=0 // pred_region
    _
  $region25: #{simple_hrnet_forward.12} parent=0 // pred_fallthru
    _
  // Predicated region
  $region26: #{simple_hrnet_forward.12} parent=0 // pred_check
    _
  $region27: #{simple_hrnet_forward.12} parent=0 // pred_check_branch
    %1379 = sbr.rel (0) target = $region29
  $region28: #{simple_hrnet_forward.12} parent=0 // pred_region
    _
  $region29: #{simple_hrnet_forward.12} parent=0 // pred_fallthru
    _
  // Predicated region
  $region30: #{simple_hrnet_forward.12} parent=0 // pred_check
    _
  $region31: #{simple_hrnet_forward.12} parent=0 // pred_check_branch
    %1381 = sbr.rel (0) target = $region33
  $region32: #{simple_hrnet_forward.12} parent=0 // pred_region
    _
  $region33: #{simple_hrnet_forward.12} parent=0 // pred_fallthru
    _

// kernel: simple_hrnet_forward.15
$region0: #{simple_hrnet_forward.15}
  #allocation0 [shape = 'u32[]', space=smem, size = 0x4, offset = 0x4, fixed_abs, tag = 'smem constant byte address 0x4 - core index']
  #allocation1 [shape = 'u32[144,128]{1,0:T(1,128)}', space=vmem, size = 0x12000, scoped, tag = 'internal scratch']
  %s0 = inlined_call_operand.vmem [shape: bf16[16,512], index: 0, kind: input, shape index: {}]
  %s1 = inlined_call_operand.vmem [shape: f32[1,512], index: 1, kind: input, shape index: {}]
  %s2 = inlined_call_operand.vmem [shape: f32[1,512], index: 2, kind: input, shape index: {}]
  %s3 = inlined_call_operand.vmem [shape: bf16[16,512], index: 3, kind: output, shape index: {}]
  %s4 = sld [smem:[#allocation0]]
  $region22: #{simple_hrnet_forward.15} parent=0
    _
  %s6 = ssub.s32 1, %s4
  %s7 = scalar_select 0, %s6, %s4
  // Predicated region
  $region2: #{simple_hrnet_forward.15} parent=0 // pred_check
    _
  $region3: #{simple_hrnet_forward.15} parent=0 // pred_check_branch
    %9 = sbr.rel (0) target = $region5
  $region4: #{simple_hrnet_forward.15} parent=0 // pred_region
    _
  $region5: #{simple_hrnet_forward.15} parent=0 // pred_fallthru
    _
  // Predicated region
  $region6: #{simple_hrnet_forward.15} parent=0 // pred_check
    _
  $region7: #{simple_hrnet_forward.15} parent=0 // pred_check_branch
    %11 = sbr.rel (0) target = $region9
  $region8: #{simple_hrnet_forward.15} parent=0 // pred_region
    _
  $region9: #{simple_hrnet_forward.15} parent=0 // pred_fallthru
    _
  // Predicated region
  $region10: #{simple_hrnet_forward.15} parent=0 // pred_check
    _
  $region11: #{simple_hrnet_forward.15} parent=0 // pred_check_branch
    %13 = sbr.rel (0) target = $region13
  $region12: #{simple_hrnet_forward.15} parent=0 // pred_region
    _
  $region13: #{simple_hrnet_forward.15} parent=0 // pred_fallthru
    _
  %v14 = vld [vmem:[%s0] sm:$0xff]
  %v15 = vld [vmem:[%s0 + $0x8] sm:$0xff]
  %v16 = vld [vmem:[%s0 + $0x10] sm:$0xff]
  %v17 = vld [vmem:[%s0 + $0x18] sm:$0xff]
  %v18 = vunpack.c.l.bf16 %v14
  %v19 = vunpack.c.h.bf16 %v14
  %v20 = vunpack.c.l.bf16 %v15
  %v21 = vunpack.c.h.bf16 %v15
  %v22 = vunpack.c.l.bf16 %v16
  %v23 = vunpack.c.h.bf16 %v16
  %v24 = vunpack.c.l.bf16 %v17
  %v25 = vunpack.c.h.bf16 %v17
  %v26 = vld [vmem:[%s1] sm:$0xf]
  %v28 = vlaneseq
  %v29 = vshrl.u32 %v28, 7
  %v30 = vsub.s32 0, %v29
  %v31 = vrot.slane %v26, %v30
  %v32 = vlaneseq
  %v33 = vshrl.u32 %v32, 7
  %v34 = vsub.s32 1, %v33
  %v35 = vrot.slane %v26, %v34
  %v36 = vlaneseq
  %v37 = vshrl.u32 %v36, 7
  %v38 = vsub.s32 2, %v37
  %v39 = vrot.slane %v26, %v38
  %v40 = vlaneseq
  %v41 = vshrl.u32 %v40, 7
  %v42 = vsub.s32 3, %v41
  %v43 = vrot.slane %v26, %v42
  %v48 = vmul.f32 %v18, %v31
  %v49 = vmul.f32 %v19, %v35
  %v50 = vmul.f32 %v20, %v39
  %v51 = vmul.f32 %v21, %v43
  %v52 = vmul.f32 %v22, %v31
  %v53 = vmul.f32 %v23, %v35
  %v54 = vmul.f32 %v24, %v39
  %v55 = vmul.f32 %v25, %v43
  %v56 = vld [vmem:[%s2] sm:$0xf]
  %v58 = vlaneseq
  %v59 = vshrl.u32 %v58, 7
  %v60 = vsub.s32 0, %v59
  %v61 = vrot.slane %v56, %v60
  %v62 = vlaneseq
  %v63 = vshrl.u32 %v62, 7
  %v64 = vsub.s32 1, %v63
  %v65 = vrot.slane %v56, %v64
  %v66 = vlaneseq
  %v67 = vshrl.u32 %v66, 7
  %v68 = vsub.s32 2, %v67
  %v69 = vrot.slane %v56, %v68
  %v70 = vlaneseq
  %v71 = vshrl.u32 %v70, 7
  %v72 = vsub.s32 3, %v71
  %v73 = vrot.slane %v56, %v72
  %v78 = vadd.f32 %v48, %v61
  %v79 = vadd.f32 %v49, %v65
  %v80 = vadd.f32 %v50, %v69
  %v81 = vadd.f32 %v51, %v73
  %v82 = vadd.f32 %v52, %v61
  %v83 = vadd.f32 %v53, %v65
  %v84 = vadd.f32 %v54, %v69
  %v85 = vadd.f32 %v55, %v73
  %v86 = vmax.f32 %v78, 0.0
  %v87 = vmax.f32 %v79, 0.0
  %v88 = vmax.f32 %v80, 0.0
  %v89 = vmax.f32 %v81, 0.0
  %v90 = vmax.f32 %v82, 0.0
  %v91 = vmax.f32 %v83, 0.0
  %v92 = vmax.f32 %v84, 0.0
  %v93 = vmax.f32 %v85, 0.0
  %v94 = vpack.c.bf16 %v90, %v86
  %v95 = vpack.c.bf16 %v91, %v87
  %v96 = vpack.c.bf16 %v92, %v88
  %v97 = vpack.c.bf16 %v93, %v89
  %v102 = vunpack.c.l.b16 %v94
  %v103 = vunpack.c.l.b16 %v95
  %v104 = vunpack.c.l.b16 %v96
  %v105 = vunpack.c.l.b16 %v97
  %v106 = vunpack.c.h.b16 %v94
  %v107 = vunpack.c.h.b16 %v95
  %v108 = vunpack.c.h.b16 %v96
  %v109 = vunpack.c.h.b16 %v97
  %v110 = vpack.c.b16 %v103, %v102
  %v111 = vpack.c.b16 %v105, %v104
  %v112 = vpack.c.b16 %v107, %v106
  %v113 = vpack.c.b16 %v109, %v108
  %118 = vst [vmem:[%s3] sm:$0xff] %v110
  %119 = vst [vmem:[%s3 + $0x8] sm:$0xff] %v111
  %120 = vst [vmem:[%s3 + $0x10] sm:$0xff] %v112
  %121 = vst [vmem:[%s3 + $0x18] sm:$0xff] %v113
  // Predicated region
  $region14: #{simple_hrnet_forward.15} parent=0 // pred_check
    _
  $region15: #{simple_hrnet_forward.15} parent=0 // pred_check_branch
    %123 = sbr.rel (0) target = $region17
  $region16: #{simple_hrnet_forward.15} parent=0 // pred_region
    _
  $region17: #{simple_hrnet_forward.15} parent=0 // pred_fallthru
    _
  // Predicated region
  $region18: #{simple_hrnet_forward.15} parent=0 // pred_check
    _
  $region19: #{simple_hrnet_forward.15} parent=0 // pred_check_branch
    %125 = sbr.rel (0) target = $region21
  $region20: #{simple_hrnet_forward.15} parent=0 // pred_region
    _
  $region21: #{simple_hrnet_forward.15} parent=0 // pred_fallthru
    _

// kernel: simple_hrnet_forward.14
$region0: #{simple_hrnet_forward.14}
  #allocation0 [shape = 'u32[]', space=smem, size = 0x4, offset = 0x4, fixed_abs, tag = 'smem constant byte address 0x4 - core index']
  #allocation1 [shape = 'u32[144,128]{1,0:T(1,128)}', space=vmem, size = 0x12000, scoped, tag = 'internal scratch']
  %s0 = inlined_call_operand.vmem [shape: bf16[16,2304], index: 0, kind: input, shape index: {}]
  %s1 = inlined_call_operand.vmem [shape: bf16[2304,512], index: 1, kind: input, shape index: {}]
  %s2 = inlined_call_operand.vmem [shape: bf16[16,512], index: 2, kind: output, shape index: {0}]
  %s3 = inlined_call_operand.vmem [shape: f32[1,1,512], index: 3, kind: output, shape index: {1}]
  %s4 = inlined_call_operand.vmem [shape: f32[1,1,512], index: 4, kind: output, shape index: {2}]
  %5 = xla_tuple %s2, %s3, %s4
  %s6 = sld [smem:[#allocation0]]
  $region34: #{simple_hrnet_forward.14} parent=0
    _
  %s8 = ssub.s32 1, %s6
  %s9 = scalar_select 0, %s8, %s6
  // Predicated region
  $region2: #{simple_hrnet_forward.14} parent=0 // pred_check
    _
  $region3: #{simple_hrnet_forward.14} parent=0 // pred_check_branch
    %11 = sbr.rel (0) target = $region5
  $region4: #{simple_hrnet_forward.14} parent=0 // pred_region
    _
  $region5: #{simple_hrnet_forward.14} parent=0 // pred_fallthru
    _
  // Predicated region
  $region6: #{simple_hrnet_forward.14} parent=0 // pred_check
    _
  $region7: #{simple_hrnet_forward.14} parent=0 // pred_check_branch
    %13 = sbr.rel (0) target = $region9
  $region8: #{simple_hrnet_forward.14} parent=0 // pred_region
    _
  $region9: #{simple_hrnet_forward.14} parent=0 // pred_fallthru
    _
  %v14 = vld [vmem:[%s0] sm:$0xff]
  %v15 = vld [vmem:[%s0 + $0x8] sm:$0xff]
  %v16 = vld [vmem:[%s0 + $0x10] sm:$0xff]
  %v17 = vld [vmem:[%s0 + $0x18] sm:$0xff]
  %v18 = vld [vmem:[%s0 + $0x20] sm:$0xff]
  %v19 = vld [vmem:[%s0 + $0x28] sm:$0xff]
  %v20 = vld [vmem:[%s0 + $0x30] sm:$0xff]
  %v21 = vld [vmem:[%s0 + $0x38] sm:$0xff]
  %v22 = vld [vmem:[%s0 + $0x40] sm:$0xff]
  %v23 = vld [vmem:[%s0 + $0x48] sm:$0xff]
  %v24 = vld [vmem:[%s0 + $0x50] sm:$0xff]
  %v25 = vld [vmem:[%s0 + $0x58] sm:$0xff]
  %v26 = vld [vmem:[%s0 + $0x60] sm:$0xff]
  %v27 = vld [vmem:[%s0 + $0x68] sm:$0xff]
  %v28 = vld [vmem:[%s0 + $0x70] sm:$0xff]
  %v29 = vld [vmem:[%s0 + $0x78] sm:$0xff]
  %v30 = vld [vmem:[%s0 + $0x80] sm:$0xff]
  %v31 = vld [vmem:[%s0 + $0x88] sm:$0xff]
  %v32 = vld [vmem:[%s1] sm:$0xff]
  %v33 = vld [vmem:[%s1 + $0x8] sm:$0xff]
  %v34 = vld [vmem:[%s1 + $0x10] sm:$0xff]
  %v35 = vld [vmem:[%s1 + $0x18] sm:$0xff]
  %v36 = vld [vmem:[%s1 + $0x20] sm:$0xff]
  %v37 = vld [vmem:[%s1 + $0x28] sm:$0xff]
  %v38 = vld [vmem:[%s1 + $0x30] sm:$0xff]
  %v39 = vld [vmem:[%s1 + $0x38] sm:$0xff]
  %v40 = vld [vmem:[%s1 + $0x40] sm:$0xff]
  %v41 = vld [vmem:[%s1 + $0x48] sm:$0xff]
  %v42 = vld [vmem:[%s1 + $0x50] sm:$0xff]
  %v43 = vld [vmem:[%s1 + $0x58] sm:$0xff]
  %v44 = vld [vmem:[%s1 + $0x60] sm:$0xff]
  %v45 = vld [vmem:[%s1 + $0x68] sm:$0xff]
  %v46 = vld [vmem:[%s1 + $0x70] sm:$0xff]
  %v47 = vld [vmem:[%s1 + $0x78] sm:$0xff]
  %v48 = vld [vmem:[%s1 + $0x80] sm:$0xff]
  %v49 = vld [vmem:[%s1 + $0x88] sm:$0xff]
  %v50 = vld [vmem:[%s1 + $0x90] sm:$0xff]
  %v51 = vld [vmem:[%s1 + $0x98] sm:$0xff]
  %v52 = vld [vmem:[%s1 + $0xa0] sm:$0xff]
  %v53 = vld [vmem:[%s1 + $0xa8] sm:$0xff]
  %v54 = vld [vmem:[%s1 + $0xb0] sm:$0xff]
  %v55 = vld [vmem:[%s1 + $0xb8] sm:$0xff]
  %v56 = vld [vmem:[%s1 + $0xc0] sm:$0xff]
  %v57 = vld [vmem:[%s1 + $0xc8] sm:$0xff]
  %v58 = vld [vmem:[%s1 + $0xd0] sm:$0xff]
  %v59 = vld [vmem:[%s1 + $0xd8] sm:$0xff]
  %v60 = vld [vmem:[%s1 + $0xe0] sm:$0xff]
  %v61 = vld [vmem:[%s1 + $0xe8] sm:$0xff]
  %v62 = vld [vmem:[%s1 + $0xf0] sm:$0xff]
  %v63 = vld [vmem:[%s1 + $0xf8] sm:$0xff]
  %v64 = vld [vmem:[%s1 + $0x100] sm:$0xff]
  %v65 = vld [vmem:[%s1 + $0x108] sm:$0xff]
  %v66 = vld [vmem:[%s1 + $0x110] sm:$0xff]
  %v67 = vld [vmem:[%s1 + $0x118] sm:$0xff]
  %v68 = vld [vmem:[%s1 + $0x120] sm:$0xff]
  %v69 = vld [vmem:[%s1 + $0x128] sm:$0xff]
  %v70 = vld [vmem:[%s1 + $0x130] sm:$0xff]
  %v71 = vld [vmem:[%s1 + $0x138] sm:$0xff]
  %v72 = vld [vmem:[%s1 + $0x140] sm:$0xff]
  %v73 = vld [vmem:[%s1 + $0x148] sm:$0xff]
  %v74 = vld [vmem:[%s1 + $0x150] sm:$0xff]
  %v75 = vld [vmem:[%s1 + $0x158] sm:$0xff]
  %v76 = vld [vmem:[%s1 + $0x160] sm:$0xff]
  %v77 = vld [vmem:[%s1 + $0x168] sm:$0xff]
  %v78 = vld [vmem:[%s1 + $0x170] sm:$0xff]
  %v79 = vld [vmem:[%s1 + $0x178] sm:$0xff]
  %v80 = vld [vmem:[%s1 + $0x180] sm:$0xff]
  %v81 = vld [vmem:[%s1 + $0x188] sm:$0xff]
  %v82 = vld [vmem:[%s1 + $0x190] sm:$0xff]
  %v83 = vld [vmem:[%s1 + $0x198] sm:$0xff]
  %v84 = vld [vmem:[%s1 + $0x1a0] sm:$0xff]
  %v85 = vld [vmem:[%s1 + $0x1a8] sm:$0xff]
  %v86 = vld [vmem:[%s1 + $0x1b0] sm:$0xff]
  %v87 = vld [vmem:[%s1 + $0x1b8] sm:$0xff]
  %v88 = vld [vmem:[%s1 + $0x1c0] sm:$0xff]
  %v89 = vld [vmem:[%s1 + $0x1c8] sm:$0xff]
  %v90 = vld [vmem:[%s1 + $0x1d0] sm:$0xff]
  %v91 = vld [vmem:[%s1 + $0x1d8] sm:$0xff]
  %v92 = vld [vmem:[%s1 + $0x1e0] sm:$0xff]
  %v93 = vld [vmem:[%s1 + $0x1e8] sm:$0xff]
  %v94 = vld [vmem:[%s1 + $0x1f0] sm:$0xff]
  %v95 = vld [vmem:[%s1 + $0x1f8] sm:$0xff]
  %v96 = vld [vmem:[%s1 + $0x200] sm:$0xff]
  %v97 = vld [vmem:[%s1 + $0x208] sm:$0xff]
  %v98 = vld [vmem:[%s1 + $0x210] sm:$0xff]
  %v99 = vld [vmem:[%s1 + $0x218] sm:$0xff]
  %v100 = vld [vmem:[%s1 + $0x220] sm:$0xff]
  %v101 = vld [vmem:[%s1 + $0x228] sm:$0xff]
  %v102 = vld [vmem:[%s1 + $0x230] sm:$0xff]
  %v103 = vld [vmem:[%s1 + $0x238] sm:$0xff]
  %v104 = vld [vmem:[%s1 + $0x240] sm:$0xff]
  %v105 = vld [vmem:[%s1 + $0x248] sm:$0xff]
  %v106 = vld [vmem:[%s1 + $0x250] sm:$0xff]
  %v107 = vld [vmem:[%s1 + $0x258] sm:$0xff]
  %v108 = vld [vmem:[%s1 + $0x260] sm:$0xff]
  %v109 = vld [vmem:[%s1 + $0x268] sm:$0xff]
  %v110 = vld [vmem:[%s1 + $0x270] sm:$0xff]
  %v111 = vld [vmem:[%s1 + $0x278] sm:$0xff]
  %v112 = vld [vmem:[%s1 + $0x280] sm:$0xff]
  %v113 = vld [vmem:[%s1 + $0x288] sm:$0xff]
  %v114 = vld [vmem:[%s1 + $0x290] sm:$0xff]
  %v115 = vld [vmem:[%s1 + $0x298] sm:$0xff]
  %v116 = vld [vmem:[%s1 + $0x2a0] sm:$0xff]
  %v117 = vld [vmem:[%s1 + $0x2a8] sm:$0xff]
  %v118 = vld [vmem:[%s1 + $0x2b0] sm:$0xff]
  %v119 = vld [vmem:[%s1 + $0x2b8] sm:$0xff]
  %v120 = vld [vmem:[%s1 + $0x2c0] sm:$0xff]
  %v121 = vld [vmem:[%s1 + $0x2c8] sm:$0xff]
  %v122 = vld [vmem:[%s1 + $0x2d0] sm:$0xff]
  %v123 = vld [vmem:[%s1 + $0x2d8] sm:$0xff]
  %v124 = vld [vmem:[%s1 + $0x2e0] sm:$0xff]
  %v125 = vld [vmem:[%s1 + $0x2e8] sm:$0xff]
  %v126 = vld [vmem:[%s1 + $0x2f0] sm:$0xff]
  %v127 = vld [vmem:[%s1 + $0x2f8] sm:$0xff]
  %v128 = vld [vmem:[%s1 + $0x300] sm:$0xff]
  %v129 = vld [vmem:[%s1 + $0x308] sm:$0xff]
  %v130 = vld [vmem:[%s1 + $0x310] sm:$0xff]
  %v131 = vld [vmem:[%s1 + $0x318] sm:$0xff]
  %v132 = vld [vmem:[%s1 + $0x320] sm:$0xff]
  %v133 = vld [vmem:[%s1 + $0x328] sm:$0xff]
  %v134 = vld [vmem:[%s1 + $0x330] sm:$0xff]
  %v135 = vld [vmem:[%s1 + $0x338] sm:$0xff]
  %v136 = vld [vmem:[%s1 + $0x340] sm:$0xff]
  %v137 = vld [vmem:[%s1 + $0x348] sm:$0xff]
  %v138 = vld [vmem:[%s1 + $0x350] sm:$0xff]
  %v139 = vld [vmem:[%s1 + $0x358] sm:$0xff]
  %v140 = vld [vmem:[%s1 + $0x360] sm:$0xff]
  %v141 = vld [vmem:[%s1 + $0x368] sm:$0xff]
  %v142 = vld [vmem:[%s1 + $0x370] sm:$0xff]
  %v143 = vld [vmem:[%s1 + $0x378] sm:$0xff]
  %v144 = vld [vmem:[%s1 + $0x380] sm:$0xff]
  %v145 = vld [vmem:[%s1 + $0x388] sm:$0xff]
  %v146 = vld [vmem:[%s1 + $0x390] sm:$0xff]
  %v147 = vld [vmem:[%s1 + $0x398] sm:$0xff]
  %v148 = vld [vmem:[%s1 + $0x3a0] sm:$0xff]
  %v149 = vld [vmem:[%s1 + $0x3a8] sm:$0xff]
  %v150 = vld [vmem:[%s1 + $0x3b0] sm:$0xff]
  %v151 = vld [vmem:[%s1 + $0x3b8] sm:$0xff]
  %v152 = vld [vmem:[%s1 + $0x3c0] sm:$0xff]
  %v153 = vld [vmem:[%s1 + $0x3c8] sm:$0xff]
  %v154 = vld [vmem:[%s1 + $0x3d0] sm:$0xff]
  %v155 = vld [vmem:[%s1 + $0x3d8] sm:$0xff]
  %v156 = vld [vmem:[%s1 + $0x3e0] sm:$0xff]
  %v157 = vld [vmem:[%s1 + $0x3e8] sm:$0xff]
  %v158 = vld [vmem:[%s1 + $0x3f0] sm:$0xff]
  %v159 = vld [vmem:[%s1 + $0x3f8] sm:$0xff]
  %v160 = vld [vmem:[%s1 + $0x400] sm:$0xff]
  %v161 = vld [vmem:[%s1 + $0x408] sm:$0xff]
  %v162 = vld [vmem:[%s1 + $0x410] sm:$0xff]
  %v163 = vld [vmem:[%s1 + $0x418] sm:$0xff]
  %v164 = vld [vmem:[%s1 + $0x420] sm:$0xff]
  %v165 = vld [vmem:[%s1 + $0x428] sm:$0xff]
  %v166 = vld [vmem:[%s1 + $0x430] sm:$0xff]
  %v167 = vld [vmem:[%s1 + $0x438] sm:$0xff]
  %v168 = vld [vmem:[%s1 + $0x440] sm:$0xff]
  %v169 = vld [vmem:[%s1 + $0x448] sm:$0xff]
  %v170 = vld [vmem:[%s1 + $0x450] sm:$0xff]
  %v171 = vld [vmem:[%s1 + $0x458] sm:$0xff]
  %v172 = vld [vmem:[%s1 + $0x460] sm:$0xff]
  %v173 = vld [vmem:[%s1 + $0x468] sm:$0xff]
  %v174 = vld [vmem:[%s1 + $0x470] sm:$0xff]
  %v175 = vld [vmem:[%s1 + $0x478] sm:$0xff]
  %v176 = vld [vmem:[%s1 + $0x480] sm:$0xff]
  %v177 = vld [vmem:[%s1 + $0x488] sm:$0xff]
  %v178 = vld [vmem:[%s1 + $0x490] sm:$0xff]
  %v179 = vld [vmem:[%s1 + $0x498] sm:$0xff]
  %v180 = vld [vmem:[%s1 + $0x4a0] sm:$0xff]
  %v181 = vld [vmem:[%s1 + $0x4a8] sm:$0xff]
  %v182 = vld [vmem:[%s1 + $0x4b0] sm:$0xff]
  %v183 = vld [vmem:[%s1 + $0x4b8] sm:$0xff]
  %v184 = vld [vmem:[%s1 + $0x4c0] sm:$0xff]
  %v185 = vld [vmem:[%s1 + $0x4c8] sm:$0xff]
  %v186 = vld [vmem:[%s1 + $0x4d0] sm:$0xff]
  %v187 = vld [vmem:[%s1 + $0x4d8] sm:$0xff]
  %v188 = vld [vmem:[%s1 + $0x4e0] sm:$0xff]
  %v189 = vld [vmem:[%s1 + $0x4e8] sm:$0xff]
  %v190 = vld [vmem:[%s1 + $0x4f0] sm:$0xff]
  %v191 = vld [vmem:[%s1 + $0x4f8] sm:$0xff]
  %v192 = vld [vmem:[%s1 + $0x500] sm:$0xff]
  %v193 = vld [vmem:[%s1 + $0x508] sm:$0xff]
  %v194 = vld [vmem:[%s1 + $0x510] sm:$0xff]
  %v195 = vld [vmem:[%s1 + $0x518] sm:$0xff]
  %v196 = vld [vmem:[%s1 + $0x520] sm:$0xff]
  %v197 = vld [vmem:[%s1 + $0x528] sm:$0xff]
  %v198 = vld [vmem:[%s1 + $0x530] sm:$0xff]
  %v199 = vld [vmem:[%s1 + $0x538] sm:$0xff]
  %v200 = vld [vmem:[%s1 + $0x540] sm:$0xff]
  %v201 = vld [vmem:[%s1 + $0x548] sm:$0xff]
  %v202 = vld [vmem:[%s1 + $0x550] sm:$0xff]
  %v203 = vld [vmem:[%s1 + $0x558] sm:$0xff]
  %v204 = vld [vmem:[%s1 + $0x560] sm:$0xff]
  %v205 = vld [vmem:[%s1 + $0x568] sm:$0xff]
  %v206 = vld [vmem:[%s1 + $0x570] sm:$0xff]
  %v207 = vld [vmem:[%s1 + $0x578] sm:$0xff]
  %v208 = vld [vmem:[%s1 + $0x580] sm:$0xff]
  %v209 = vld [vmem:[%s1 + $0x588] sm:$0xff]
  %v210 = vld [vmem:[%s1 + $0x590] sm:$0xff]
  %v211 = vld [vmem:[%s1 + $0x598] sm:$0xff]
  %v212 = vld [vmem:[%s1 + $0x5a0] sm:$0xff]
  %v213 = vld [vmem:[%s1 + $0x5a8] sm:$0xff]
  %v214 = vld [vmem:[%s1 + $0x5b0] sm:$0xff]
  %v215 = vld [vmem:[%s1 + $0x5b8] sm:$0xff]
  %v216 = vld [vmem:[%s1 + $0x5c0] sm:$0xff]
  %v217 = vld [vmem:[%s1 + $0x5c8] sm:$0xff]
  %v218 = vld [vmem:[%s1 + $0x5d0] sm:$0xff]
  %v219 = vld [vmem:[%s1 + $0x5d8] sm:$0xff]
  %v220 = vld [vmem:[%s1 + $0x5e0] sm:$0xff]
  %v221 = vld [vmem:[%s1 + $0x5e8] sm:$0xff]
  %v222 = vld [vmem:[%s1 + $0x5f0] sm:$0xff]
  %v223 = vld [vmem:[%s1 + $0x5f8] sm:$0xff]
  %v224 = vld [vmem:[%s1 + $0x600] sm:$0xff]
  %v225 = vld [vmem:[%s1 + $0x608] sm:$0xff]
  %v226 = vld [vmem:[%s1 + $0x610] sm:$0xff]
  %v227 = vld [vmem:[%s1 + $0x618] sm:$0xff]
  %v228 = vld [vmem:[%s1 + $0x620] sm:$0xff]
  %v229 = vld [vmem:[%s1 + $0x628] sm:$0xff]
  %v230 = vld [vmem:[%s1 + $0x630] sm:$0xff]
  %v231 = vld [vmem:[%s1 + $0x638] sm:$0xff]
  %v232 = vld [vmem:[%s1 + $0x640] sm:$0xff]
  %v233 = vld [vmem:[%s1 + $0x648] sm:$0xff]
  %v234 = vld [vmem:[%s1 + $0x650] sm:$0xff]
  %v235 = vld [vmem:[%s1 + $0x658] sm:$0xff]
  %v236 = vld [vmem:[%s1 + $0x660] sm:$0xff]
  %v237 = vld [vmem:[%s1 + $0x668] sm:$0xff]
  %v238 = vld [vmem:[%s1 + $0x670] sm:$0xff]
  %v239 = vld [vmem:[%s1 + $0x678] sm:$0xff]
  %v240 = vld [vmem:[%s1 + $0x680] sm:$0xff]
  %v241 = vld [vmem:[%s1 + $0x688] sm:$0xff]
  %v242 = vld [vmem:[%s1 + $0x690] sm:$0xff]
  %v243 = vld [vmem:[%s1 + $0x698] sm:$0xff]
  %v244 = vld [vmem:[%s1 + $0x6a0] sm:$0xff]
  %v245 = vld [vmem:[%s1 + $0x6a8] sm:$0xff]
  %v246 = vld [vmem:[%s1 + $0x6b0] sm:$0xff]
  %v247 = vld [vmem:[%s1 + $0x6b8] sm:$0xff]
  %v248 = vld [vmem:[%s1 + $0x6c0] sm:$0xff]
  %v249 = vld [vmem:[%s1 + $0x6c8] sm:$0xff]
  %v250 = vld [vmem:[%s1 + $0x6d0] sm:$0xff]
  %v251 = vld [vmem:[%s1 + $0x6d8] sm:$0xff]
  %v252 = vld [vmem:[%s1 + $0x6e0] sm:$0xff]
  %v253 = vld [vmem:[%s1 + $0x6e8] sm:$0xff]
  %v254 = vld [vmem:[%s1 + $0x6f0] sm:$0xff]
  %v255 = vld [vmem:[%s1 + $0x6f8] sm:$0xff]
  %v256 = vld [vmem:[%s1 + $0x700] sm:$0xff]
  %v257 = vld [vmem:[%s1 + $0x708] sm:$0xff]
  %v258 = vld [vmem:[%s1 + $0x710] sm:$0xff]
  %v259 = vld [vmem:[%s1 + $0x718] sm:$0xff]
  %v260 = vld [vmem:[%s1 + $0x720] sm:$0xff]
  %v261 = vld [vmem:[%s1 + $0x728] sm:$0xff]
  %v262 = vld [vmem:[%s1 + $0x730] sm:$0xff]
  %v263 = vld [vmem:[%s1 + $0x738] sm:$0xff]
  %v264 = vld [vmem:[%s1 + $0x740] sm:$0xff]
  %v265 = vld [vmem:[%s1 + $0x748] sm:$0xff]
  %v266 = vld [vmem:[%s1 + $0x750] sm:$0xff]
  %v267 = vld [vmem:[%s1 + $0x758] sm:$0xff]
  %v268 = vld [vmem:[%s1 + $0x760] sm:$0xff]
  %v269 = vld [vmem:[%s1 + $0x768] sm:$0xff]
  %v270 = vld [vmem:[%s1 + $0x770] sm:$0xff]
  %v271 = vld [vmem:[%s1 + $0x778] sm:$0xff]
  %v272 = vld [vmem:[%s1 + $0x780] sm:$0xff]
  %v273 = vld [vmem:[%s1 + $0x788] sm:$0xff]
  %v274 = vld [vmem:[%s1 + $0x790] sm:$0xff]
  %v275 = vld [vmem:[%s1 + $0x798] sm:$0xff]
  %v276 = vld [vmem:[%s1 + $0x7a0] sm:$0xff]
  %v277 = vld [vmem:[%s1 + $0x7a8] sm:$0xff]
  %v278 = vld [vmem:[%s1 + $0x7b0] sm:$0xff]
  %v279 = vld [vmem:[%s1 + $0x7b8] sm:$0xff]
  %v280 = vld [vmem:[%s1 + $0x7c0] sm:$0xff]
  %v281 = vld [vmem:[%s1 + $0x7c8] sm:$0xff]
  %v282 = vld [vmem:[%s1 + $0x7d0] sm:$0xff]
  %v283 = vld [vmem:[%s1 + $0x7d8] sm:$0xff]
  %v284 = vld [vmem:[%s1 + $0x7e0] sm:$0xff]
  %v285 = vld [vmem:[%s1 + $0x7e8] sm:$0xff]
  %v286 = vld [vmem:[%s1 + $0x7f0] sm:$0xff]
  %v287 = vld [vmem:[%s1 + $0x7f8] sm:$0xff]
  %v288 = vld [vmem:[%s1 + $0x800] sm:$0xff]
  %v289 = vld [vmem:[%s1 + $0x808] sm:$0xff]
  %v290 = vld [vmem:[%s1 + $0x810] sm:$0xff]
  %v291 = vld [vmem:[%s1 + $0x818] sm:$0xff]
  %v292 = vld [vmem:[%s1 + $0x820] sm:$0xff]
  %v293 = vld [vmem:[%s1 + $0x828] sm:$0xff]
  %v294 = vld [vmem:[%s1 + $0x830] sm:$0xff]
  %v295 = vld [vmem:[%s1 + $0x838] sm:$0xff]
  %v296 = vld [vmem:[%s1 + $0x840] sm:$0xff]
  %v297 = vld [vmem:[%s1 + $0x848] sm:$0xff]
  %v298 = vld [vmem:[%s1 + $0x850] sm:$0xff]
  %v299 = vld [vmem:[%s1 + $0x858] sm:$0xff]
  %v300 = vld [vmem:[%s1 + $0x860] sm:$0xff]
  %v301 = vld [vmem:[%s1 + $0x868] sm:$0xff]
  %v302 = vld [vmem:[%s1 + $0x870] sm:$0xff]
  %v303 = vld [vmem:[%s1 + $0x878] sm:$0xff]
  %v304 = vld [vmem:[%s1 + $0x880] sm:$0xff]
  %v305 = vld [vmem:[%s1 + $0x888] sm:$0xff]
  %v306 = vld [vmem:[%s1 + $0x890] sm:$0xff]
  %v307 = vld [vmem:[%s1 + $0x898] sm:$0xff]
  %v308 = vld [vmem:[%s1 + $0x8a0] sm:$0xff]
  %v309 = vld [vmem:[%s1 + $0x8a8] sm:$0xff]
  %v310 = vld [vmem:[%s1 + $0x8b0] sm:$0xff]
  %v311 = vld [vmem:[%s1 + $0x8b8] sm:$0xff]
  %v312 = vld [vmem:[%s1 + $0x8c0] sm:$0xff]
  %v313 = vld [vmem:[%s1 + $0x8c8] sm:$0xff]
  %v314 = vld [vmem:[%s1 + $0x8d0] sm:$0xff]
  %v315 = vld [vmem:[%s1 + $0x8d8] sm:$0xff]
  %v316 = vld [vmem:[%s1 + $0x8e0] sm:$0xff]
  %v317 = vld [vmem:[%s1 + $0x8e8] sm:$0xff]
  %v318 = vld [vmem:[%s1 + $0x8f0] sm:$0xff]
  %v319 = vld [vmem:[%s1 + $0x8f8] sm:$0xff]
  %v320 = vld [vmem:[%s1 + $0x900] sm:$0xff]
  %v321 = vld [vmem:[%s1 + $0x908] sm:$0xff]
  %v322 = vld [vmem:[%s1 + $0x910] sm:$0xff]
  %v323 = vld [vmem:[%s1 + $0x918] sm:$0xff]
  %v324 = vld [vmem:[%s1 + $0x920] sm:$0xff]
  %v325 = vld [vmem:[%s1 + $0x928] sm:$0xff]
  %v326 = vld [vmem:[%s1 + $0x930] sm:$0xff]
  %v327 = vld [vmem:[%s1 + $0x938] sm:$0xff]
  %v328 = vld [vmem:[%s1 + $0x940] sm:$0xff]
  %v329 = vld [vmem:[%s1 + $0x948] sm:$0xff]
  %v330 = vld [vmem:[%s1 + $0x950] sm:$0xff]
  %v331 = vld [vmem:[%s1 + $0x958] sm:$0xff]
  %v332 = vld [vmem:[%s1 + $0x960] sm:$0xff]
  %v333 = vld [vmem:[%s1 + $0x968] sm:$0xff]
  %v334 = vld [vmem:[%s1 + $0x970] sm:$0xff]
  %v335 = vld [vmem:[%s1 + $0x978] sm:$0xff]
  %v336 = vld [vmem:[%s1 + $0x980] sm:$0xff]
  %v337 = vld [vmem:[%s1 + $0x988] sm:$0xff]
  %v338 = vld [vmem:[%s1 + $0x990] sm:$0xff]
  %v339 = vld [vmem:[%s1 + $0x998] sm:$0xff]
  %v340 = vld [vmem:[%s1 + $0x9a0] sm:$0xff]
  %v341 = vld [vmem:[%s1 + $0x9a8] sm:$0xff]
  %v342 = vld [vmem:[%s1 + $0x9b0] sm:$0xff]
  %v343 = vld [vmem:[%s1 + $0x9b8] sm:$0xff]
  %v344 = vld [vmem:[%s1 + $0x9c0] sm:$0xff]
  %v345 = vld [vmem:[%s1 + $0x9c8] sm:$0xff]
  %v346 = vld [vmem:[%s1 + $0x9d0] sm:$0xff]
  %v347 = vld [vmem:[%s1 + $0x9d8] sm:$0xff]
  %v348 = vld [vmem:[%s1 + $0x9e0] sm:$0xff]
  %v349 = vld [vmem:[%s1 + $0x9e8] sm:$0xff]
  %v350 = vld [vmem:[%s1 + $0x9f0] sm:$0xff]
  %v351 = vld [vmem:[%s1 + $0x9f8] sm:$0xff]
  %v352 = vld [vmem:[%s1 + $0xa00] sm:$0xff]
  %v353 = vld [vmem:[%s1 + $0xa08] sm:$0xff]
  %v354 = vld [vmem:[%s1 + $0xa10] sm:$0xff]
  %v355 = vld [vmem:[%s1 + $0xa18] sm:$0xff]
  %v356 = vld [vmem:[%s1 + $0xa20] sm:$0xff]
  %v357 = vld [vmem:[%s1 + $0xa28] sm:$0xff]
  %v358 = vld [vmem:[%s1 + $0xa30] sm:$0xff]
  %v359 = vld [vmem:[%s1 + $0xa38] sm:$0xff]
  %v360 = vld [vmem:[%s1 + $0xa40] sm:$0xff]
  %v361 = vld [vmem:[%s1 + $0xa48] sm:$0xff]
  %v362 = vld [vmem:[%s1 + $0xa50] sm:$0xff]
  %v363 = vld [vmem:[%s1 + $0xa58] sm:$0xff]
  %v364 = vld [vmem:[%s1 + $0xa60] sm:$0xff]
  %v365 = vld [vmem:[%s1 + $0xa68] sm:$0xff]
  %v366 = vld [vmem:[%s1 + $0xa70] sm:$0xff]
  %v367 = vld [vmem:[%s1 + $0xa78] sm:$0xff]
  %v368 = vld [vmem:[%s1 + $0xa80] sm:$0xff]
  %v369 = vld [vmem:[%s1 + $0xa88] sm:$0xff]
  %v370 = vld [vmem:[%s1 + $0xa90] sm:$0xff]
  %v371 = vld [vmem:[%s1 + $0xa98] sm:$0xff]
  %v372 = vld [vmem:[%s1 + $0xaa0] sm:$0xff]
  %v373 = vld [vmem:[%s1 + $0xaa8] sm:$0xff]
  %v374 = vld [vmem:[%s1 + $0xab0] sm:$0xff]
  %v375 = vld [vmem:[%s1 + $0xab8] sm:$0xff]
  %v376 = vld [vmem:[%s1 + $0xac0] sm:$0xff]
  %v377 = vld [vmem:[%s1 + $0xac8] sm:$0xff]
  %v378 = vld [vmem:[%s1 + $0xad0] sm:$0xff]
  %v379 = vld [vmem:[%s1 + $0xad8] sm:$0xff]
  %v380 = vld [vmem:[%s1 + $0xae0] sm:$0xff]
  %v381 = vld [vmem:[%s1 + $0xae8] sm:$0xff]
  %v382 = vld [vmem:[%s1 + $0xaf0] sm:$0xff]
  %v383 = vld [vmem:[%s1 + $0xaf8] sm:$0xff]
  %v384 = vld [vmem:[%s1 + $0xb00] sm:$0xff]
  %v385 = vld [vmem:[%s1 + $0xb08] sm:$0xff]
  %v386 = vld [vmem:[%s1 + $0xb10] sm:$0xff]
  %v387 = vld [vmem:[%s1 + $0xb18] sm:$0xff]
  %v388 = vld [vmem:[%s1 + $0xb20] sm:$0xff]
  %v389 = vld [vmem:[%s1 + $0xb28] sm:$0xff]
  %v390 = vld [vmem:[%s1 + $0xb30] sm:$0xff]
  %v391 = vld [vmem:[%s1 + $0xb38] sm:$0xff]
  %v392 = vld [vmem:[%s1 + $0xb40] sm:$0xff]
  %v393 = vld [vmem:[%s1 + $0xb48] sm:$0xff]
  %v394 = vld [vmem:[%s1 + $0xb50] sm:$0xff]
  %v395 = vld [vmem:[%s1 + $0xb58] sm:$0xff]
  %v396 = vld [vmem:[%s1 + $0xb60] sm:$0xff]
  %v397 = vld [vmem:[%s1 + $0xb68] sm:$0xff]
  %v398 = vld [vmem:[%s1 + $0xb70] sm:$0xff]
  %v399 = vld [vmem:[%s1 + $0xb78] sm:$0xff]
  %v400 = vld [vmem:[%s1 + $0xb80] sm:$0xff]
  %v401 = vld [vmem:[%s1 + $0xb88] sm:$0xff]
  %v402 = vld [vmem:[%s1 + $0xb90] sm:$0xff]
  %v403 = vld [vmem:[%s1 + $0xb98] sm:$0xff]
  %v404 = vld [vmem:[%s1 + $0xba0] sm:$0xff]
  %v405 = vld [vmem:[%s1 + $0xba8] sm:$0xff]
  %v406 = vld [vmem:[%s1 + $0xbb0] sm:$0xff]
  %v407 = vld [vmem:[%s1 + $0xbb8] sm:$0xff]
  %v408 = vld [vmem:[%s1 + $0xbc0] sm:$0xff]
  %v409 = vld [vmem:[%s1 + $0xbc8] sm:$0xff]
  %v410 = vld [vmem:[%s1 + $0xbd0] sm:$0xff]
  %v411 = vld [vmem:[%s1 + $0xbd8] sm:$0xff]
  %v412 = vld [vmem:[%s1 + $0xbe0] sm:$0xff]
  %v413 = vld [vmem:[%s1 + $0xbe8] sm:$0xff]
  %v414 = vld [vmem:[%s1 + $0xbf0] sm:$0xff]
  %v415 = vld [vmem:[%s1 + $0xbf8] sm:$0xff]
  %v416 = vld [vmem:[%s1 + $0xc00] sm:$0xff]
  %v417 = vld [vmem:[%s1 + $0xc08] sm:$0xff]
  %v418 = vld [vmem:[%s1 + $0xc10] sm:$0xff]
  %v419 = vld [vmem:[%s1 + $0xc18] sm:$0xff]
  %v420 = vld [vmem:[%s1 + $0xc20] sm:$0xff]
  %v421 = vld [vmem:[%s1 + $0xc28] sm:$0xff]
  %v422 = vld [vmem:[%s1 + $0xc30] sm:$0xff]
  %v423 = vld [vmem:[%s1 + $0xc38] sm:$0xff]
  %v424 = vld [vmem:[%s1 + $0xc40] sm:$0xff]
  %v425 = vld [vmem:[%s1 + $0xc48] sm:$0xff]
  %v426 = vld [vmem:[%s1 + $0xc50] sm:$0xff]
  %v427 = vld [vmem:[%s1 + $0xc58] sm:$0xff]
  %v428 = vld [vmem:[%s1 + $0xc60] sm:$0xff]
  %v429 = vld [vmem:[%s1 + $0xc68] sm:$0xff]
  %v430 = vld [vmem:[%s1 + $0xc70] sm:$0xff]
  %v431 = vld [vmem:[%s1 + $0xc78] sm:$0xff]
  %v432 = vld [vmem:[%s1 + $0xc80] sm:$0xff]
  %v433 = vld [vmem:[%s1 + $0xc88] sm:$0xff]
  %v434 = vld [vmem:[%s1 + $0xc90] sm:$0xff]
  %v435 = vld [vmem:[%s1 + $0xc98] sm:$0xff]
  %v436 = vld [vmem:[%s1 + $0xca0] sm:$0xff]
  %v437 = vld [vmem:[%s1 + $0xca8] sm:$0xff]
  %v438 = vld [vmem:[%s1 + $0xcb0] sm:$0xff]
  %v439 = vld [vmem:[%s1 + $0xcb8] sm:$0xff]
  %v440 = vld [vmem:[%s1 + $0xcc0] sm:$0xff]
  %v441 = vld [vmem:[%s1 + $0xcc8] sm:$0xff]
  %v442 = vld [vmem:[%s1 + $0xcd0] sm:$0xff]
  %v443 = vld [vmem:[%s1 + $0xcd8] sm:$0xff]
  %v444 = vld [vmem:[%s1 + $0xce0] sm:$0xff]
  %v445 = vld [vmem:[%s1 + $0xce8] sm:$0xff]
  %v446 = vld [vmem:[%s1 + $0xcf0] sm:$0xff]
  %v447 = vld [vmem:[%s1 + $0xcf8] sm:$0xff]
  %v448 = vld [vmem:[%s1 + $0xd00] sm:$0xff]
  %v449 = vld [vmem:[%s1 + $0xd08] sm:$0xff]
  %v450 = vld [vmem:[%s1 + $0xd10] sm:$0xff]
  %v451 = vld [vmem:[%s1 + $0xd18] sm:$0xff]
  %v452 = vld [vmem:[%s1 + $0xd20] sm:$0xff]
  %v453 = vld [vmem:[%s1 + $0xd28] sm:$0xff]
  %v454 = vld [vmem:[%s1 + $0xd30] sm:$0xff]
  %v455 = vld [vmem:[%s1 + $0xd38] sm:$0xff]
  %v456 = vld [vmem:[%s1 + $0xd40] sm:$0xff]
  %v457 = vld [vmem:[%s1 + $0xd48] sm:$0xff]
  %v458 = vld [vmem:[%s1 + $0xd50] sm:$0xff]
  %v459 = vld [vmem:[%s1 + $0xd58] sm:$0xff]
  %v460 = vld [vmem:[%s1 + $0xd60] sm:$0xff]
  %v461 = vld [vmem:[%s1 + $0xd68] sm:$0xff]
  %v462 = vld [vmem:[%s1 + $0xd70] sm:$0xff]
  %v463 = vld [vmem:[%s1 + $0xd78] sm:$0xff]
  %v464 = vld [vmem:[%s1 + $0xd80] sm:$0xff]
  %v465 = vld [vmem:[%s1 + $0xd88] sm:$0xff]
  %v466 = vld [vmem:[%s1 + $0xd90] sm:$0xff]
  %v467 = vld [vmem:[%s1 + $0xd98] sm:$0xff]
  %v468 = vld [vmem:[%s1 + $0xda0] sm:$0xff]
  %v469 = vld [vmem:[%s1 + $0xda8] sm:$0xff]
  %v470 = vld [vmem:[%s1 + $0xdb0] sm:$0xff]
  %v471 = vld [vmem:[%s1 + $0xdb8] sm:$0xff]
  %v472 = vld [vmem:[%s1 + $0xdc0] sm:$0xff]
  %v473 = vld [vmem:[%s1 + $0xdc8] sm:$0xff]
  %v474 = vld [vmem:[%s1 + $0xdd0] sm:$0xff]
  %v475 = vld [vmem:[%s1 + $0xdd8] sm:$0xff]
  %v476 = vld [vmem:[%s1 + $0xde0] sm:$0xff]
  %v477 = vld [vmem:[%s1 + $0xde8] sm:$0xff]
  %v478 = vld [vmem:[%s1 + $0xdf0] sm:$0xff]
  %v479 = vld [vmem:[%s1 + $0xdf8] sm:$0xff]
  %v480 = vld [vmem:[%s1 + $0xe00] sm:$0xff]
  %v481 = vld [vmem:[%s1 + $0xe08] sm:$0xff]
  %v482 = vld [vmem:[%s1 + $0xe10] sm:$0xff]
  %v483 = vld [vmem:[%s1 + $0xe18] sm:$0xff]
  %v484 = vld [vmem:[%s1 + $0xe20] sm:$0xff]
  %v485 = vld [vmem:[%s1 + $0xe28] sm:$0xff]
  %v486 = vld [vmem:[%s1 + $0xe30] sm:$0xff]
  %v487 = vld [vmem:[%s1 + $0xe38] sm:$0xff]
  %v488 = vld [vmem:[%s1 + $0xe40] sm:$0xff]
  %v489 = vld [vmem:[%s1 + $0xe48] sm:$0xff]
  %v490 = vld [vmem:[%s1 + $0xe50] sm:$0xff]
  %v491 = vld [vmem:[%s1 + $0xe58] sm:$0xff]
  %v492 = vld [vmem:[%s1 + $0xe60] sm:$0xff]
  %v493 = vld [vmem:[%s1 + $0xe68] sm:$0xff]
  %v494 = vld [vmem:[%s1 + $0xe70] sm:$0xff]
  %v495 = vld [vmem:[%s1 + $0xe78] sm:$0xff]
  %v496 = vld [vmem:[%s1 + $0xe80] sm:$0xff]
  %v497 = vld [vmem:[%s1 + $0xe88] sm:$0xff]
  %v498 = vld [vmem:[%s1 + $0xe90] sm:$0xff]
  %v499 = vld [vmem:[%s1 + $0xe98] sm:$0xff]
  %v500 = vld [vmem:[%s1 + $0xea0] sm:$0xff]
  %v501 = vld [vmem:[%s1 + $0xea8] sm:$0xff]
  %v502 = vld [vmem:[%s1 + $0xeb0] sm:$0xff]
  %v503 = vld [vmem:[%s1 + $0xeb8] sm:$0xff]
  %v504 = vld [vmem:[%s1 + $0xec0] sm:$0xff]
  %v505 = vld [vmem:[%s1 + $0xec8] sm:$0xff]
  %v506 = vld [vmem:[%s1 + $0xed0] sm:$0xff]
  %v507 = vld [vmem:[%s1 + $0xed8] sm:$0xff]
  %v508 = vld [vmem:[%s1 + $0xee0] sm:$0xff]
  %v509 = vld [vmem:[%s1 + $0xee8] sm:$0xff]
  %v510 = vld [vmem:[%s1 + $0xef0] sm:$0xff]
  %v511 = vld [vmem:[%s1 + $0xef8] sm:$0xff]
  %v512 = vld [vmem:[%s1 + $0xf00] sm:$0xff]
  %v513 = vld [vmem:[%s1 + $0xf08] sm:$0xff]
  %v514 = vld [vmem:[%s1 + $0xf10] sm:$0xff]
  %v515 = vld [vmem:[%s1 + $0xf18] sm:$0xff]
  %v516 = vld [vmem:[%s1 + $0xf20] sm:$0xff]
  %v517 = vld [vmem:[%s1 + $0xf28] sm:$0xff]
  %v518 = vld [vmem:[%s1 + $0xf30] sm:$0xff]
  %v519 = vld [vmem:[%s1 + $0xf38] sm:$0xff]
  %v520 = vld [vmem:[%s1 + $0xf40] sm:$0xff]
  %v521 = vld [vmem:[%s1 + $0xf48] sm:$0xff]
  %v522 = vld [vmem:[%s1 + $0xf50] sm:$0xff]
  %v523 = vld [vmem:[%s1 + $0xf58] sm:$0xff]
  %v524 = vld [vmem:[%s1 + $0xf60] sm:$0xff]
  %v525 = vld [vmem:[%s1 + $0xf68] sm:$0xff]
  %v526 = vld [vmem:[%s1 + $0xf70] sm:$0xff]
  %v527 = vld [vmem:[%s1 + $0xf78] sm:$0xff]
  %v528 = vld [vmem:[%s1 + $0xf80] sm:$0xff]
  %v529 = vld [vmem:[%s1 + $0xf88] sm:$0xff]
  %v530 = vld [vmem:[%s1 + $0xf90] sm:$0xff]
  %v531 = vld [vmem:[%s1 + $0xf98] sm:$0xff]
  %v532 = vld [vmem:[%s1 + $0xfa0] sm:$0xff]
  %v533 = vld [vmem:[%s1 + $0xfa8] sm:$0xff]
  %v534 = vld [vmem:[%s1 + $0xfb0] sm:$0xff]
  %v535 = vld [vmem:[%s1 + $0xfb8] sm:$0xff]
  %v536 = vld [vmem:[%s1 + $0xfc0] sm:$0xff]
  %v537 = vld [vmem:[%s1 + $0xfc8] sm:$0xff]
  %v538 = vld [vmem:[%s1 + $0xfd0] sm:$0xff]
  %v539 = vld [vmem:[%s1 + $0xfd8] sm:$0xff]
  %v540 = vld [vmem:[%s1 + $0xfe0] sm:$0xff]
  %v541 = vld [vmem:[%s1 + $0xfe8] sm:$0xff]
  %v542 = vld [vmem:[%s1 + $0xff0] sm:$0xff]
  %v543 = vld [vmem:[%s1 + $0xff8] sm:$0xff]
  %v544 = vld [vmem:[%s1 + $0x1000] sm:$0xff]
  %v545 = vld [vmem:[%s1 + $0x1008] sm:$0xff]
  %v546 = vld [vmem:[%s1 + $0x1010] sm:$0xff]
  %v547 = vld [vmem:[%s1 + $0x1018] sm:$0xff]
  %v548 = vld [vmem:[%s1 + $0x1020] sm:$0xff]
  %v549 = vld [vmem:[%s1 + $0x1028] sm:$0xff]
  %v550 = vld [vmem:[%s1 + $0x1030] sm:$0xff]
  %v551 = vld [vmem:[%s1 + $0x1038] sm:$0xff]
  %v552 = vld [vmem:[%s1 + $0x1040] sm:$0xff]
  %v553 = vld [vmem:[%s1 + $0x1048] sm:$0xff]
  %v554 = vld [vmem:[%s1 + $0x1050] sm:$0xff]
  %v555 = vld [vmem:[%s1 + $0x1058] sm:$0xff]
  %v556 = vld [vmem:[%s1 + $0x1060] sm:$0xff]
  %v557 = vld [vmem:[%s1 + $0x1068] sm:$0xff]
  %v558 = vld [vmem:[%s1 + $0x1070] sm:$0xff]
  %v559 = vld [vmem:[%s1 + $0x1078] sm:$0xff]
  %v560 = vld [vmem:[%s1 + $0x1080] sm:$0xff]
  %v561 = vld [vmem:[%s1 + $0x1088] sm:$0xff]
  %v562 = vld [vmem:[%s1 + $0x1090] sm:$0xff]
  %v563 = vld [vmem:[%s1 + $0x1098] sm:$0xff]
  %v564 = vld [vmem:[%s1 + $0x10a0] sm:$0xff]
  %v565 = vld [vmem:[%s1 + $0x10a8] sm:$0xff]
  %v566 = vld [vmem:[%s1 + $0x10b0] sm:$0xff]
  %v567 = vld [vmem:[%s1 + $0x10b8] sm:$0xff]
  %v568 = vld [vmem:[%s1 + $0x10c0] sm:$0xff]
  %v569 = vld [vmem:[%s1 + $0x10c8] sm:$0xff]
  %v570 = vld [vmem:[%s1 + $0x10d0] sm:$0xff]
  %v571 = vld [vmem:[%s1 + $0x10d8] sm:$0xff]
  %v572 = vld [vmem:[%s1 + $0x10e0] sm:$0xff]
  %v573 = vld [vmem:[%s1 + $0x10e8] sm:$0xff]
  %v574 = vld [vmem:[%s1 + $0x10f0] sm:$0xff]
  %v575 = vld [vmem:[%s1 + $0x10f8] sm:$0xff]
  %v576 = vld [vmem:[%s1 + $0x1100] sm:$0xff]
  %v577 = vld [vmem:[%s1 + $0x1108] sm:$0xff]
  %v578 = vld [vmem:[%s1 + $0x1110] sm:$0xff]
  %v579 = vld [vmem:[%s1 + $0x1118] sm:$0xff]
  %v580 = vld [vmem:[%s1 + $0x1120] sm:$0xff]
  %v581 = vld [vmem:[%s1 + $0x1128] sm:$0xff]
  %v582 = vld [vmem:[%s1 + $0x1130] sm:$0xff]
  %v583 = vld [vmem:[%s1 + $0x1138] sm:$0xff]
  %v584 = vld [vmem:[%s1 + $0x1140] sm:$0xff]
  %v585 = vld [vmem:[%s1 + $0x1148] sm:$0xff]
  %v586 = vld [vmem:[%s1 + $0x1150] sm:$0xff]
  %v587 = vld [vmem:[%s1 + $0x1158] sm:$0xff]
  %v588 = vld [vmem:[%s1 + $0x1160] sm:$0xff]
  %v589 = vld [vmem:[%s1 + $0x1168] sm:$0xff]
  %v590 = vld [vmem:[%s1 + $0x1170] sm:$0xff]
  %v591 = vld [vmem:[%s1 + $0x1178] sm:$0xff]
  %v592 = vld [vmem:[%s1 + $0x1180] sm:$0xff]
  %v593 = vld [vmem:[%s1 + $0x1188] sm:$0xff]
  %v594 = vld [vmem:[%s1 + $0x1190] sm:$0xff]
  %v595 = vld [vmem:[%s1 + $0x1198] sm:$0xff]
  %v596 = vld [vmem:[%s1 + $0x11a0] sm:$0xff]
  %v597 = vld [vmem:[%s1 + $0x11a8] sm:$0xff]
  %v598 = vld [vmem:[%s1 + $0x11b0] sm:$0xff]
  %v599 = vld [vmem:[%s1 + $0x11b8] sm:$0xff]
  %v600 = vld [vmem:[%s1 + $0x11c0] sm:$0xff]
  %v601 = vld [vmem:[%s1 + $0x11c8] sm:$0xff]
  %v602 = vld [vmem:[%s1 + $0x11d0] sm:$0xff]
  %v603 = vld [vmem:[%s1 + $0x11d8] sm:$0xff]
  %v604 = vld [vmem:[%s1 + $0x11e0] sm:$0xff]
  %v605 = vld [vmem:[%s1 + $0x11e8] sm:$0xff]
  %v606 = vld [vmem:[%s1 + $0x11f0] sm:$0xff]
  %v607 = vld [vmem:[%s1 + $0x11f8] sm:$0xff]
  %v626 = vunpack.c.l.b16 %v14
  %v627 = vunpack.c.h.b16 %v14
  %v628 = vunpack.c.l.b16 %v15
  %v629 = vunpack.c.h.b16 %v15
  %v630 = vunpack.c.l.b16 %v16
  %v631 = vunpack.c.h.b16 %v16
  %v632 = vunpack.c.l.b16 %v17
  %v633 = vunpack.c.h.b16 %v17
  %v634 = vunpack.c.l.b16 %v18
  %v635 = vunpack.c.h.b16 %v18
  %v636 = vunpack.c.l.b16 %v19
  %v637 = vunpack.c.h.b16 %v19
  %v638 = vunpack.c.l.b16 %v20
  %v639 = vunpack.c.h.b16 %v20
  %v640 = vunpack.c.l.b16 %v21
  %v641 = vunpack.c.h.b16 %v21
  %v642 = vunpack.c.l.b16 %v22
  %v643 = vunpack.c.h.b16 %v22
  %v644 = vunpack.c.l.b16 %v23
  %v645 = vunpack.c.h.b16 %v23
  %v646 = vunpack.c.l.b16 %v24
  %v647 = vunpack.c.h.b16 %v24
  %v648 = vunpack.c.l.b16 %v25
  %v649 = vunpack.c.h.b16 %v25
  %v650 = vunpack.c.l.b16 %v26
  %v651 = vunpack.c.h.b16 %v26
  %v652 = vunpack.c.l.b16 %v27
  %v653 = vunpack.c.h.b16 %v27
  %v654 = vunpack.c.l.b16 %v28
  %v655 = vunpack.c.h.b16 %v28
  %v656 = vunpack.c.l.b16 %v29
  %v657 = vunpack.c.h.b16 %v29
  %v658 = vunpack.c.l.b16 %v30
  %v659 = vunpack.c.h.b16 %v30
  %v660 = vunpack.c.l.b16 %v31
  %v661 = vunpack.c.h.b16 %v31
  %v662 = vpack.c.b16 %v644, %v626
  %v663 = vpack.c.b16 %v645, %v627
  %v664 = vpack.c.b16 %v646, %v628
  %v665 = vpack.c.b16 %v647, %v629
  %v666 = vpack.c.b16 %v648, %v630
  %v667 = vpack.c.b16 %v649, %v631
  %v668 = vpack.c.b16 %v650, %v632
  %v669 = vpack.c.b16 %v651, %v633
  %v670 = vpack.c.b16 %v652, %v634
  %v671 = vpack.c.b16 %v653, %v635
  %v672 = vpack.c.b16 %v654, %v636
  %v673 = vpack.c.b16 %v655, %v637
  %v674 = vpack.c.b16 %v656, %v638
  %v675 = vpack.c.b16 %v657, %v639
  %v676 = vpack.c.b16 %v658, %v640
  %v677 = vpack.c.b16 %v659, %v641
  %v678 = vpack.c.b16 %v660, %v642
  %v679 = vpack.c.b16 %v661, %v643
  %v1274 = vunpack.c.l.b16 %v32
  %v1275 = vunpack.c.h.b16 %v32
  %v1276 = vunpack.c.l.b16 %v33
  %v1277 = vunpack.c.h.b16 %v33
  %v1278 = vunpack.c.l.b16 %v34
  %v1279 = vunpack.c.h.b16 %v34
  %v1280 = vunpack.c.l.b16 %v35
  %v1281 = vunpack.c.h.b16 %v35
  %v1282 = vunpack.c.l.b16 %v36
  %v1283 = vunpack.c.h.b16 %v36
  %v1284 = vunpack.c.l.b16 %v37
  %v1285 = vunpack.c.h.b16 %v37
  %v1286 = vunpack.c.l.b16 %v38
  %v1287 = vunpack.c.h.b16 %v38
  %v1288 = vunpack.c.l.b16 %v39
  %v1289 = vunpack.c.h.b16 %v39
  %v1290 = vunpack.c.l.b16 %v40
  %v1291 = vunpack.c.h.b16 %v40
  %v1292 = vunpack.c.l.b16 %v41
  %v1293 = vunpack.c.h.b16 %v41
  %v1294 = vunpack.c.l.b16 %v42
  %v1295 = vunpack.c.h.b16 %v42
  %v1296 = vunpack.c.l.b16 %v43
  %v1297 = vunpack.c.h.b16 %v43
  %v1298 = vunpack.c.l.b16 %v44
  %v1299 = vunpack.c.h.b16 %v44
  %v1300 = vunpack.c.l.b16 %v45
  %v1301 = vunpack.c.h.b16 %v45
  %v1302 = vunpack.c.l.b16 %v46
  %v1303 = vunpack.c.h.b16 %v46
  %v1304 = vunpack.c.l.b16 %v47
  %v1305 = vunpack.c.h.b16 %v47
  %v1306 = vunpack.c.l.b16 %v48
  %v1307 = vunpack.c.h.b16 %v48
  %v1308 = vunpack.c.l.b16 %v49
  %v1309 = vunpack.c.h.b16 %v49
  %v1310 = vunpack.c.l.b16 %v50
  %v1311 = vunpack.c.h.b16 %v50
  %v1312 = vunpack.c.l.b16 %v51
  %v1313 = vunpack.c.h.b16 %v51
  %v1314 = vunpack.c.l.b16 %v52
  %v1315 = vunpack.c.h.b16 %v52
  %v1316 = vunpack.c.l.b16 %v53
  %v1317 = vunpack.c.h.b16 %v53
  %v1318 = vunpack.c.l.b16 %v54
  %v1319 = vunpack.c.h.b16 %v54
  %v1320 = vunpack.c.l.b16 %v55
  %v1321 = vunpack.c.h.b16 %v55
  %v1322 = vunpack.c.l.b16 %v56
  %v1323 = vunpack.c.h.b16 %v56
  %v1324 = vunpack.c.l.b16 %v57
  %v1325 = vunpack.c.h.b16 %v57
  %v1326 = vunpack.c.l.b16 %v58
  %v1327 = vunpack.c.h.b16 %v58
  %v1328 = vunpack.c.l.b16 %v59
  %v1329 = vunpack.c.h.b16 %v59
  %v1330 = vunpack.c.l.b16 %v60
  %v1331 = vunpack.c.h.b16 %v60
  %v1332 = vunpack.c.l.b16 %v61
  %v1333 = vunpack.c.h.b16 %v61
  %v1334 = vunpack.c.l.b16 %v62
  %v1335 = vunpack.c.h.b16 %v62
  %v1336 = vunpack.c.l.b16 %v63
  %v1337 = vunpack.c.h.b16 %v63
  %v1338 = vunpack.c.l.b16 %v64
  %v1339 = vunpack.c.h.b16 %v64
  %v1340 = vunpack.c.l.b16 %v65
  %v1341 = vunpack.c.h.b16 %v65
  %v1342 = vunpack.c.l.b16 %v66
  %v1343 = vunpack.c.h.b16 %v66
  %v1344 = vunpack.c.l.b16 %v67
  %v1345 = vunpack.c.h.b16 %v67
  %v1346 = vunpack.c.l.b16 %v68
  %v1347 = vunpack.c.h.b16 %v68
  %v1348 = vunpack.c.l.b16 %v69
  %v1349 = vunpack.c.h.b16 %v69
  %v1350 = vunpack.c.l.b16 %v70
  %v1351 = vunpack.c.h.b16 %v70
  %v1352 = vunpack.c.l.b16 %v71
  %v1353 = vunpack.c.h.b16 %v71
  %v1354 = vunpack.c.l.b16 %v72
  %v1355 = vunpack.c.h.b16 %v72
  %v1356 = vunpack.c.l.b16 %v73
  %v1357 = vunpack.c.h.b16 %v73
  %v1358 = vunpack.c.l.b16 %v74
  %v1359 = vunpack.c.h.b16 %v74
  %v1360 = vunpack.c.l.b16 %v75
  %v1361 = vunpack.c.h.b16 %v75
  %v1362 = vunpack.c.l.b16 %v76
  %v1363 = vunpack.c.h.b16 %v76
  %v1364 = vunpack.c.l.b16 %v77
  %v1365 = vunpack.c.h.b16 %v77
  %v1366 = vunpack.c.l.b16 %v78
  %v1367 = vunpack.c.h.b16 %v78
  %v1368 = vunpack.c.l.b16 %v79
  %v1369 = vunpack.c.h.b16 %v79
  %v1370 = vunpack.c.l.b16 %v80
  %v1371 = vunpack.c.h.b16 %v80
  %v1372 = vunpack.c.l.b16 %v81
  %v1373 = vunpack.c.h.b16 %v81
  %v1374 = vunpack.c.l.b16 %v82
  %v1375 = vunpack.c.h.b16 %v82
  %v1376 = vunpack.c.l.b16 %v83
  %v1377 = vunpack.c.h.b16 %v83
  %v1378 = vunpack.c.l.b16 %v84
  %v1379 = vunpack.c.h.b16 %v84
  %v1380 = vunpack.c.l.b16 %v85
  %v1381 = vunpack.c.h.b16 %v85
  %v1382 = vunpack.c.l.b16 %v86
  %v1383 = vunpack.c.h.b16 %v86
  %v1384 = vunpack.c.l.b16 %v87
  %v1385 = vunpack.c.h.b16 %v87
  %v1386 = vunpack.c.l.b16 %v88
  %v1387 = vunpack.c.h.b16 %v88
  %v1388 = vunpack.c.l.b16 %v89
  %v1389 = vunpack.c.h.b16 %v89
  %v1390 = vunpack.c.l.b16 %v90
  %v1391 = vunpack.c.h.b16 %v90
  %v1392 = vunpack.c.l.b16 %v91
  %v1393 = vunpack.c.h.b16 %v91
  %v1394 = vunpack.c.l.b16 %v92
  %v1395 = vunpack.c.h.b16 %v92
  %v1396 = vunpack.c.l.b16 %v93
  %v1397 = vunpack.c.h.b16 %v93
  %v1398 = vunpack.c.l.b16 %v94
  %v1399 = vunpack.c.h.b16 %v94
  %v1400 = vunpack.c.l.b16 %v95
  %v1401 = vunpack.c.h.b16 %v95
  %v1402 = vunpack.c.l.b16 %v96
  %v1403 = vunpack.c.h.b16 %v96
  %v1404 = vunpack.c.l.b16 %v97
  %v1405 = vunpack.c.h.b16 %v97
  %v1406 = vunpack.c.l.b16 %v98
  %v1407 = vunpack.c.h.b16 %v98
  %v1408 = vunpack.c.l.b16 %v99
  %v1409 = vunpack.c.h.b16 %v99
  %v1410 = vunpack.c.l.b16 %v100
  %v1411 = vunpack.c.h.b16 %v100
  %v1412 = vunpack.c.l.b16 %v101
  %v1413 = vunpack.c.h.b16 %v101
  %v1414 = vunpack.c.l.b16 %v102
  %v1415 = vunpack.c.h.b16 %v102
  %v1416 = vunpack.c.l.b16 %v103
  %v1417 = vunpack.c.h.b16 %v103
  %v1418 = vunpack.c.l.b16 %v104
  %v1419 = vunpack.c.h.b16 %v104
  %v1420 = vunpack.c.l.b16 %v105
  %v1421 = vunpack.c.h.b16 %v105
  %v1422 = vunpack.c.l.b16 %v106
  %v1423 = vunpack.c.h.b16 %v106
  %v1424 = vunpack.c.l.b16 %v107
  %v1425 = vunpack.c.h.b16 %v107
  %v1426 = vunpack.c.l.b16 %v108
  %v1427 = vunpack.c.h.b16 %v108
  %v1428 = vunpack.c.l.b16 %v109
  %v1429 = vunpack.c.h.b16 %v109
  %v1430 = vunpack.c.l.b16 %v110
  %v1431 = vunpack.c.h.b16 %v110
  %v1432 = vunpack.c.l.b16 %v111
  %v1433 = vunpack.c.h.b16 %v111
  %v1434 = vunpack.c.l.b16 %v112
  %v1435 = vunpack.c.h.b16 %v112
  %v1436 = vunpack.c.l.b16 %v113
  %v1437 = vunpack.c.h.b16 %v113
  %v1438 = vunpack.c.l.b16 %v114
  %v1439 = vunpack.c.h.b16 %v114
  %v1440 = vunpack.c.l.b16 %v115
  %v1441 = vunpack.c.h.b16 %v115
  %v1442 = vunpack.c.l.b16 %v116
  %v1443 = vunpack.c.h.b16 %v116
  %v1444 = vunpack.c.l.b16 %v117
  %v1445 = vunpack.c.h.b16 %v117
  %v1446 = vunpack.c.l.b16 %v118
  %v1447 = vunpack.c.h.b16 %v118
  %v1448 = vunpack.c.l.b16 %v119
  %v1449 = vunpack.c.h.b16 %v119
  %v1450 = vunpack.c.l.b16 %v120
  %v1451 = vunpack.c.h.b16 %v120
  %v1452 = vunpack.c.l.b16 %v121
  %v1453 = vunpack.c.h.b16 %v121
  %v1454 = vunpack.c.l.b16 %v122
  %v1455 = vunpack.c.h.b16 %v122
  %v1456 = vunpack.c.l.b16 %v123
  %v1457 = vunpack.c.h.b16 %v123
  %v1458 = vunpack.c.l.b16 %v124
  %v1459 = vunpack.c.h.b16 %v124
  %v1460 = vunpack.c.l.b16 %v125
  %v1461 = vunpack.c.h.b16 %v125
  %v1462 = vunpack.c.l.b16 %v126
  %v1463 = vunpack.c.h.b16 %v126
  %v1464 = vunpack.c.l.b16 %v127
  %v1465 = vunpack.c.h.b16 %v127
  %v1466 = vunpack.c.l.b16 %v128
  %v1467 = vunpack.c.h.b16 %v128
  %v1468 = vunpack.c.l.b16 %v129
  %v1469 = vunpack.c.h.b16 %v129
  %v1470 = vunpack.c.l.b16 %v130
  %v1471 = vunpack.c.h.b16 %v130
  %v1472 = vunpack.c.l.b16 %v131
  %v1473 = vunpack.c.h.b16 %v131
  %v1474 = vunpack.c.l.b16 %v132
  %v1475 = vunpack.c.h.b16 %v132
  %v1476 = vunpack.c.l.b16 %v133
  %v1477 = vunpack.c.h.b16 %v133
  %v1478 = vunpack.c.l.b16 %v134
  %v1479 = vunpack.c.h.b16 %v134
  %v1480 = vunpack.c.l.b16 %v135
  %v1481 = vunpack.c.h.b16 %v135
  %v1482 = vunpack.c.l.b16 %v136
  %v1483 = vunpack.c.h.b16 %v136
  %v1484 = vunpack.c.l.b16 %v137
  %v1485 = vunpack.c.h.b16 %v137
  %v1486 = vunpack.c.l.b16 %v138
  %v1487 = vunpack.c.h.b16 %v138
  %v1488 = vunpack.c.l.b16 %v139
  %v1489 = vunpack.c.h.b16 %v139
  %v1490 = vunpack.c.l.b16 %v140
  %v1491 = vunpack.c.h.b16 %v140
  %v1492 = vunpack.c.l.b16 %v141
  %v1493 = vunpack.c.h.b16 %v141
  %v1494 = vunpack.c.l.b16 %v142
  %v1495 = vunpack.c.h.b16 %v142
  %v1496 = vunpack.c.l.b16 %v143
  %v1497 = vunpack.c.h.b16 %v143
  %v1498 = vunpack.c.l.b16 %v144
  %v1499 = vunpack.c.h.b16 %v144
  %v1500 = vunpack.c.l.b16 %v145
  %v1501 = vunpack.c.h.b16 %v145
  %v1502 = vunpack.c.l.b16 %v146
  %v1503 = vunpack.c.h.b16 %v146
  %v1504 = vunpack.c.l.b16 %v147
  %v1505 = vunpack.c.h.b16 %v147
  %v1506 = vunpack.c.l.b16 %v148
  %v1507 = vunpack.c.h.b16 %v148
  %v1508 = vunpack.c.l.b16 %v149
  %v1509 = vunpack.c.h.b16 %v149
  %v1510 = vunpack.c.l.b16 %v150
  %v1511 = vunpack.c.h.b16 %v150
  %v1512 = vunpack.c.l.b16 %v151
  %v1513 = vunpack.c.h.b16 %v151
  %v1514 = vunpack.c.l.b16 %v152
  %v1515 = vunpack.c.h.b16 %v152
  %v1516 = vunpack.c.l.b16 %v153
  %v1517 = vunpack.c.h.b16 %v153
  %v1518 = vunpack.c.l.b16 %v154
  %v1519 = vunpack.c.h.b16 %v154
  %v1520 = vunpack.c.l.b16 %v155
  %v1521 = vunpack.c.h.b16 %v155
  %v1522 = vunpack.c.l.b16 %v156
  %v1523 = vunpack.c.h.b16 %v156
  %v1524 = vunpack.c.l.b16 %v157
  %v1525 = vunpack.c.h.b16 %v157
  %v1526 = vunpack.c.l.b16 %v158
  %v1527 = vunpack.c.h.b16 %v158
  %v1528 = vunpack.c.l.b16 %v159
  %v1529 = vunpack.c.h.b16 %v159
  %v1530 = vunpack.c.l.b16 %v160
  %v1531 = vunpack.c.h.b16 %v160
  %v1532 = vunpack.c.l.b16 %v161
  %v1533 = vunpack.c.h.b16 %v161
  %v1534 = vunpack.c.l.b16 %v162
  %v1535 = vunpack.c.h.b16 %v162
  %v1536 = vunpack.c.l.b16 %v163
  %v1537 = vunpack.c.h.b16 %v163
  %v1538 = vunpack.c.l.b16 %v164
  %v1539 = vunpack.c.h.b16 %v164
  %v1540 = vunpack.c.l.b16 %v165
  %v1541 = vunpack.c.h.b16 %v165
  %v1542 = vunpack.c.l.b16 %v166
  %v1543 = vunpack.c.h.b16 %v166
  %v1544 = vunpack.c.l.b16 %v167
  %v1545 = vunpack.c.h.b16 %v167
  %v1546 = vunpack.c.l.b16 %v168
  %v1547 = vunpack.c.h.b16 %v168
  %v1548 = vunpack.c.l.b16 %v169
  %v1549 = vunpack.c.h.b16 %v169
  %v1550 = vunpack.c.l.b16 %v170
  %v1551 = vunpack.c.h.b16 %v170
  %v1552 = vunpack.c.l.b16 %v171
  %v1553 = vunpack.c.h.b16 %v171
  %v1554 = vunpack.c.l.b16 %v172
  %v1555 = vunpack.c.h.b16 %v172
  %v1556 = vunpack.c.l.b16 %v173
  %v1557 = vunpack.c.h.b16 %v173
  %v1558 = vunpack.c.l.b16 %v174
  %v1559 = vunpack.c.h.b16 %v174
  %v1560 = vunpack.c.l.b16 %v175
  %v1561 = vunpack.c.h.b16 %v175
  %v1562 = vunpack.c.l.b16 %v176
  %v1563 = vunpack.c.h.b16 %v176
  %v1564 = vunpack.c.l.b16 %v177
  %v1565 = vunpack.c.h.b16 %v177
  %v1566 = vunpack.c.l.b16 %v178
  %v1567 = vunpack.c.h.b16 %v178
  %v1568 = vunpack.c.l.b16 %v179
  %v1569 = vunpack.c.h.b16 %v179
  %v1570 = vunpack.c.l.b16 %v180
  %v1571 = vunpack.c.h.b16 %v180
  %v1572 = vunpack.c.l.b16 %v181
  %v1573 = vunpack.c.h.b16 %v181
  %v1574 = vunpack.c.l.b16 %v182
  %v1575 = vunpack.c.h.b16 %v182
  %v1576 = vunpack.c.l.b16 %v183
  %v1577 = vunpack.c.h.b16 %v183
  %v1578 = vunpack.c.l.b16 %v184
  %v1579 = vunpack.c.h.b16 %v184
  %v1580 = vunpack.c.l.b16 %v185
  %v1581 = vunpack.c.h.b16 %v185
  %v1582 = vunpack.c.l.b16 %v186
  %v1583 = vunpack.c.h.b16 %v186
  %v1584 = vunpack.c.l.b16 %v187
  %v1585 = vunpack.c.h.b16 %v187
  %v1586 = vunpack.c.l.b16 %v188
  %v1587 = vunpack.c.h.b16 %v188
  %v1588 = vunpack.c.l.b16 %v189
  %v1589 = vunpack.c.h.b16 %v189
  %v1590 = vunpack.c.l.b16 %v190
  %v1591 = vunpack.c.h.b16 %v190
  %v1592 = vunpack.c.l.b16 %v191
  %v1593 = vunpack.c.h.b16 %v191
  %v1594 = vunpack.c.l.b16 %v192
  %v1595 = vunpack.c.h.b16 %v192
  %v1596 = vunpack.c.l.b16 %v193
  %v1597 = vunpack.c.h.b16 %v193
  %v1598 = vunpack.c.l.b16 %v194
  %v1599 = vunpack.c.h.b16 %v194
  %v1600 = vunpack.c.l.b16 %v195
  %v1601 = vunpack.c.h.b16 %v195
  %v1602 = vunpack.c.l.b16 %v196
  %v1603 = vunpack.c.h.b16 %v196
  %v1604 = vunpack.c.l.b16 %v197
  %v1605 = vunpack.c.h.b16 %v197
  %v1606 = vunpack.c.l.b16 %v198
  %v1607 = vunpack.c.h.b16 %v198
  %v1608 = vunpack.c.l.b16 %v199
  %v1609 = vunpack.c.h.b16 %v199
  %v1610 = vunpack.c.l.b16 %v200
  %v1611 = vunpack.c.h.b16 %v200
  %v1612 = vunpack.c.l.b16 %v201
  %v1613 = vunpack.c.h.b16 %v201
  %v1614 = vunpack.c.l.b16 %v202
  %v1615 = vunpack.c.h.b16 %v202
  %v1616 = vunpack.c.l.b16 %v203
  %v1617 = vunpack.c.h.b16 %v203
  %v1618 = vunpack.c.l.b16 %v204
  %v1619 = vunpack.c.h.b16 %v204
  %v1620 = vunpack.c.l.b16 %v205
  %v1621 = vunpack.c.h.b16 %v205
  %v1622 = vunpack.c.l.b16 %v206
  %v1623 = vunpack.c.h.b16 %v206
  %v1624 = vunpack.c.l.b16 %v207
  %v1625 = vunpack.c.h.b16 %v207
  %v1626 = vunpack.c.l.b16 %v208
  %v1627 = vunpack.c.h.b16 %v208
  %v1628 = vunpack.c.l.b16 %v209
  %v1629 = vunpack.c.h.b16 %v209
  %v1630 = vunpack.c.l.b16 %v210
  %v1631 = vunpack.c.h.b16 %v210
  %v1632 = vunpack.c.l.b16 %v211
  %v1633 = vunpack.c.h.b16 %v211
  %v1634 = vunpack.c.l.b16 %v212
  %v1635 = vunpack.c.h.b16 %v212
  %v1636 = vunpack.c.l.b16 %v213
  %v1637 = vunpack.c.h.b16 %v213
  %v1638 = vunpack.c.l.b16 %v214
  %v1639 = vunpack.c.h.b16 %v214
  %v1640 = vunpack.c.l.b16 %v215
  %v1641 = vunpack.c.h.b16 %v215
  %v1642 = vunpack.c.l.b16 %v216
  %v1643 = vunpack.c.h.b16 %v216
  %v1644 = vunpack.c.l.b16 %v217
  %v1645 = vunpack.c.h.b16 %v217
  %v1646 = vunpack.c.l.b16 %v218
  %v1647 = vunpack.c.h.b16 %v218
  %v1648 = vunpack.c.l.b16 %v219
  %v1649 = vunpack.c.h.b16 %v219
  %v1650 = vunpack.c.l.b16 %v220
  %v1651 = vunpack.c.h.b16 %v220
  %v1652 = vunpack.c.l.b16 %v221
  %v1653 = vunpack.c.h.b16 %v221
  %v1654 = vunpack.c.l.b16 %v222
  %v1655 = vunpack.c.h.b16 %v222
  %v1656 = vunpack.c.l.b16 %v223
  %v1657 = vunpack.c.h.b16 %v223
  %v1658 = vunpack.c.l.b16 %v224
  %v1659 = vunpack.c.h.b16 %v224
  %v1660 = vunpack.c.l.b16 %v225
  %v1661 = vunpack.c.h.b16 %v225
  %v1662 = vunpack.c.l.b16 %v226
  %v1663 = vunpack.c.h.b16 %v226
  %v1664 = vunpack.c.l.b16 %v227
  %v1665 = vunpack.c.h.b16 %v227
  %v1666 = vunpack.c.l.b16 %v228
  %v1667 = vunpack.c.h.b16 %v228
  %v1668 = vunpack.c.l.b16 %v229
  %v1669 = vunpack.c.h.b16 %v229
  %v1670 = vunpack.c.l.b16 %v230
  %v1671 = vunpack.c.h.b16 %v230
  %v1672 = vunpack.c.l.b16 %v231
  %v1673 = vunpack.c.h.b16 %v231
  %v1674 = vunpack.c.l.b16 %v232
  %v1675 = vunpack.c.h.b16 %v232
  %v1676 = vunpack.c.l.b16 %v233
  %v1677 = vunpack.c.h.b16 %v233
  %v1678 = vunpack.c.l.b16 %v234
  %v1679 = vunpack.c.h.b16 %v234
  %v1680 = vunpack.c.l.b16 %v235
  %v1681 = vunpack.c.h.b16 %v235
  %v1682 = vunpack.c.l.b16 %v236
  %v1683 = vunpack.c.h.b16 %v236
  %v1684 = vunpack.c.l.b16 %v237
  %v1685 = vunpack.c.h.b16 %v237
  %v1686 = vunpack.c.l.b16 %v238
  %v1687 = vunpack.c.h.b16 %v238
  %v1688 = vunpack.c.l.b16 %v239
  %v1689 = vunpack.c.h.b16 %v239
  %v1690 = vunpack.c.l.b16 %v240
  %v1691 = vunpack.c.h.b16 %v240
  %v1692 = vunpack.c.l.b16 %v241
  %v1693 = vunpack.c.h.b16 %v241
  %v1694 = vunpack.c.l.b16 %v242
  %v1695 = vunpack.c.h.b16 %v242
  %v1696 = vunpack.c.l.b16 %v243
  %v1697 = vunpack.c.h.b16 %v243
  %v1698 = vunpack.c.l.b16 %v244
  %v1699 = vunpack.c.h.b16 %v244
  %v1700 = vunpack.c.l.b16 %v245
  %v1701 = vunpack.c.h.b16 %v245
  %v1702 = vunpack.c.l.b16 %v246
  %v1703 = vunpack.c.h.b16 %v246
  %v1704 = vunpack.c.l.b16 %v247
  %v1705 = vunpack.c.h.b16 %v247
  %v1706 = vunpack.c.l.b16 %v248
  %v1707 = vunpack.c.h.b16 %v248
  %v1708 = vunpack.c.l.b16 %v249
  %v1709 = vunpack.c.h.b16 %v249
  %v1710 = vunpack.c.l.b16 %v250
  %v1711 = vunpack.c.h.b16 %v250
  %v1712 = vunpack.c.l.b16 %v251
  %v1713 = vunpack.c.h.b16 %v251
  %v1714 = vunpack.c.l.b16 %v252
  %v1715 = vunpack.c.h.b16 %v252
  %v1716 = vunpack.c.l.b16 %v253
  %v1717 = vunpack.c.h.b16 %v253
  %v1718 = vunpack.c.l.b16 %v254
  %v1719 = vunpack.c.h.b16 %v254
  %v1720 = vunpack.c.l.b16 %v255
  %v1721 = vunpack.c.h.b16 %v255
  %v1722 = vunpack.c.l.b16 %v256
  %v1723 = vunpack.c.h.b16 %v256
  %v1724 = vunpack.c.l.b16 %v257
  %v1725 = vunpack.c.h.b16 %v257
  %v1726 = vunpack.c.l.b16 %v258
  %v1727 = vunpack.c.h.b16 %v258
  %v1728 = vunpack.c.l.b16 %v259
  %v1729 = vunpack.c.h.b16 %v259
  %v1730 = vunpack.c.l.b16 %v260
  %v1731 = vunpack.c.h.b16 %v260
  %v1732 = vunpack.c.l.b16 %v261
  %v1733 = vunpack.c.h.b16 %v261
  %v1734 = vunpack.c.l.b16 %v262
  %v1735 = vunpack.c.h.b16 %v262
  %v1736 = vunpack.c.l.b16 %v263
  %v1737 = vunpack.c.h.b16 %v263
  %v1738 = vunpack.c.l.b16 %v264
  %v1739 = vunpack.c.h.b16 %v264
  %v1740 = vunpack.c.l.b16 %v265
  %v1741 = vunpack.c.h.b16 %v265
  %v1742 = vunpack.c.l.b16 %v266
  %v1743 = vunpack.c.h.b16 %v266
  %v1744 = vunpack.c.l.b16 %v267
  %v1745 = vunpack.c.h.b16 %v267
  %v1746 = vunpack.c.l.b16 %v268
  %v1747 = vunpack.c.h.b16 %v268
  %v1748 = vunpack.c.l.b16 %v269
  %v1749 = vunpack.c.h.b16 %v269
  %v1750 = vunpack.c.l.b16 %v270
  %v1751 = vunpack.c.h.b16 %v270
  %v1752 = vunpack.c.l.b16 %v271
  %v1753 = vunpack.c.h.b16 %v271
  %v1754 = vunpack.c.l.b16 %v272
  %v1755 = vunpack.c.h.b16 %v272
  %v1756 = vunpack.c.l.b16 %v273
  %v1757 = vunpack.c.h.b16 %v273
  %v1758 = vunpack.c.l.b16 %v274
  %v1759 = vunpack.c.h.b16 %v274
  %v1760 = vunpack.c.l.b16 %v275
  %v1761 = vunpack.c.h.b16 %v275
  %v1762 = vunpack.c.l.b16 %v276
  %v1763 = vunpack.c.h.b16 %v276
  %v1764 = vunpack.c.l.b16 %v277
  %v1765 = vunpack.c.h.b16 %v277
  %v1766 = vunpack.c.l.b16 %v278
  %v1767 = vunpack.c.h.b16 %v278
  %v1768 = vunpack.c.l.b16 %v279
  %v1769 = vunpack.c.h.b16 %v279
  %v1770 = vunpack.c.l.b16 %v280
  %v1771 = vunpack.c.h.b16 %v280
  %v1772 = vunpack.c.l.b16 %v281
  %v1773 = vunpack.c.h.b16 %v281
  %v1774 = vunpack.c.l.b16 %v282
  %v1775 = vunpack.c.h.b16 %v282
  %v1776 = vunpack.c.l.b16 %v283
  %v1777 = vunpack.c.h.b16 %v283
  %v1778 = vunpack.c.l.b16 %v284
  %v1779 = vunpack.c.h.b16 %v284
  %v1780 = vunpack.c.l.b16 %v285
  %v1781 = vunpack.c.h.b16 %v285
  %v1782 = vunpack.c.l.b16 %v286
  %v1783 = vunpack.c.h.b16 %v286
  %v1784 = vunpack.c.l.b16 %v287
  %v1785 = vunpack.c.h.b16 %v287
  %v1786 = vunpack.c.l.b16 %v288
  %v1787 = vunpack.c.h.b16 %v288
  %v1788 = vunpack.c.l.b16 %v289
  %v1789 = vunpack.c.h.b16 %v289
  %v1790 = vunpack.c.l.b16 %v290
  %v1791 = vunpack.c.h.b16 %v290
  %v1792 = vunpack.c.l.b16 %v291
  %v1793 = vunpack.c.h.b16 %v291
  %v1794 = vunpack.c.l.b16 %v292
  %v1795 = vunpack.c.h.b16 %v292
  %v1796 = vunpack.c.l.b16 %v293
  %v1797 = vunpack.c.h.b16 %v293
  %v1798 = vunpack.c.l.b16 %v294
  %v1799 = vunpack.c.h.b16 %v294
  %v1800 = vunpack.c.l.b16 %v295
  %v1801 = vunpack.c.h.b16 %v295
  %v1802 = vunpack.c.l.b16 %v296
  %v1803 = vunpack.c.h.b16 %v296
  %v1804 = vunpack.c.l.b16 %v297
  %v1805 = vunpack.c.h.b16 %v297
  %v1806 = vunpack.c.l.b16 %v298
  %v1807 = vunpack.c.h.b16 %v298
  %v1808 = vunpack.c.l.b16 %v299
  %v1809 = vunpack.c.h.b16 %v299
  %v1810 = vunpack.c.l.b16 %v300
  %v1811 = vunpack.c.h.b16 %v300
  %v1812 = vunpack.c.l.b16 %v301
  %v1813 = vunpack.c.h.b16 %v301
  %v1814 = vunpack.c.l.b16 %v302
  %v1815 = vunpack.c.h.b16 %v302
  %v1816 = vunpack.c.l.b16 %v303
  %v1817 = vunpack.c.h.b16 %v303
  %v1818 = vunpack.c.l.b16 %v304
  %v1819 = vunpack.c.h.b16 %v304
  %v1820 = vunpack.c.l.b16 %v305
  %v1821 = vunpack.c.h.b16 %v305
  %v1822 = vunpack.c.l.b16 %v306
  %v1823 = vunpack.c.h.b16 %v306
  %v1824 = vunpack.c.l.b16 %v307
  %v1825 = vunpack.c.h.b16 %v307
  %v1826 = vunpack.c.l.b16 %v308
  %v1827 = vunpack.c.h.b16 %v308
  %v1828 = vunpack.c.l.b16 %v309
  %v1829 = vunpack.c.h.b16 %v309
  %v1830 = vunpack.c.l.b16 %v310
  %v1831 = vunpack.c.h.b16 %v310
  %v1832 = vunpack.c.l.b16 %v311
  %v1833 = vunpack.c.h.b16 %v311
  %v1834 = vunpack.c.l.b16 %v312
  %v1835 = vunpack.c.h.b16 %v312
  %v1836 = vunpack.c.l.b16 %v313
  %v1837 = vunpack.c.h.b16 %v313
  %v1838 = vunpack.c.l.b16 %v314
  %v1839 = vunpack.c.h.b16 %v314
  %v1840 = vunpack.c.l.b16 %v315
  %v1841 = vunpack.c.h.b16 %v315
  %v1842 = vunpack.c.l.b16 %v316
  %v1843 = vunpack.c.h.b16 %v316
  %v1844 = vunpack.c.l.b16 %v317
  %v1845 = vunpack.c.h.b16 %v317
  %v1846 = vunpack.c.l.b16 %v318
  %v1847 = vunpack.c.h.b16 %v318
  %v1848 = vunpack.c.l.b16 %v319
  %v1849 = vunpack.c.h.b16 %v319
  %v1850 = vunpack.c.l.b16 %v320
  %v1851 = vunpack.c.h.b16 %v320
  %v1852 = vunpack.c.l.b16 %v321
  %v1853 = vunpack.c.h.b16 %v321
  %v1854 = vunpack.c.l.b16 %v322
  %v1855 = vunpack.c.h.b16 %v322
  %v1856 = vunpack.c.l.b16 %v323
  %v1857 = vunpack.c.h.b16 %v323
  %v1858 = vunpack.c.l.b16 %v324
  %v1859 = vunpack.c.h.b16 %v324
  %v1860 = vunpack.c.l.b16 %v325
  %v1861 = vunpack.c.h.b16 %v325
  %v1862 = vunpack.c.l.b16 %v326
  %v1863 = vunpack.c.h.b16 %v326
  %v1864 = vunpack.c.l.b16 %v327
  %v1865 = vunpack.c.h.b16 %v327
  %v1866 = vunpack.c.l.b16 %v328
  %v1867 = vunpack.c.h.b16 %v328
  %v1868 = vunpack.c.l.b16 %v329
  %v1869 = vunpack.c.h.b16 %v329
  %v1870 = vunpack.c.l.b16 %v330
  %v1871 = vunpack.c.h.b16 %v330
  %v1872 = vunpack.c.l.b16 %v331
  %v1873 = vunpack.c.h.b16 %v331
  %v1874 = vunpack.c.l.b16 %v332
  %v1875 = vunpack.c.h.b16 %v332
  %v1876 = vunpack.c.l.b16 %v333
  %v1877 = vunpack.c.h.b16 %v333
  %v1878 = vunpack.c.l.b16 %v334
  %v1879 = vunpack.c.h.b16 %v334
  %v1880 = vunpack.c.l.b16 %v335
  %v1881 = vunpack.c.h.b16 %v335
  %v1882 = vunpack.c.l.b16 %v336
  %v1883 = vunpack.c.h.b16 %v336
  %v1884 = vunpack.c.l.b16 %v337
  %v1885 = vunpack.c.h.b16 %v337
  %v1886 = vunpack.c.l.b16 %v338
  %v1887 = vunpack.c.h.b16 %v338
  %v1888 = vunpack.c.l.b16 %v339
  %v1889 = vunpack.c.h.b16 %v339
  %v1890 = vunpack.c.l.b16 %v340
  %v1891 = vunpack.c.h.b16 %v340
  %v1892 = vunpack.c.l.b16 %v341
  %v1893 = vunpack.c.h.b16 %v341
  %v1894 = vunpack.c.l.b16 %v342
  %v1895 = vunpack.c.h.b16 %v342
  %v1896 = vunpack.c.l.b16 %v343
  %v1897 = vunpack.c.h.b16 %v343
  %v1898 = vunpack.c.l.b16 %v344
  %v1899 = vunpack.c.h.b16 %v344
  %v1900 = vunpack.c.l.b16 %v345
  %v1901 = vunpack.c.h.b16 %v345
  %v1902 = vunpack.c.l.b16 %v346
  %v1903 = vunpack.c.h.b16 %v346
  %v1904 = vunpack.c.l.b16 %v347
  %v1905 = vunpack.c.h.b16 %v347
  %v1906 = vunpack.c.l.b16 %v348
  %v1907 = vunpack.c.h.b16 %v348
  %v1908 = vunpack.c.l.b16 %v349
  %v1909 = vunpack.c.h.b16 %v349
  %v1910 = vunpack.c.l.b16 %v350
  %v1911 = vunpack.c.h.b16 %v350
  %v1912 = vunpack.c.l.b16 %v351
  %v1913 = vunpack.c.h.b16 %v351
  %v1914 = vunpack.c.l.b16 %v352
  %v1915 = vunpack.c.h.b16 %v352
  %v1916 = vunpack.c.l.b16 %v353
  %v1917 = vunpack.c.h.b16 %v353
  %v1918 = vunpack.c.l.b16 %v354
  %v1919 = vunpack.c.h.b16 %v354
  %v1920 = vunpack.c.l.b16 %v355
  %v1921 = vunpack.c.h.b16 %v355
  %v1922 = vunpack.c.l.b16 %v356
  %v1923 = vunpack.c.h.b16 %v356
  %v1924 = vunpack.c.l.b16 %v357
  %v1925 = vunpack.c.h.b16 %v357
  %v1926 = vunpack.c.l.b16 %v358
  %v1927 = vunpack.c.h.b16 %v358
  %v1928 = vunpack.c.l.b16 %v359
  %v1929 = vunpack.c.h.b16 %v359
  %v1930 = vunpack.c.l.b16 %v360
  %v1931 = vunpack.c.h.b16 %v360
  %v1932 = vunpack.c.l.b16 %v361
  %v1933 = vunpack.c.h.b16 %v361
  %v1934 = vunpack.c.l.b16 %v362
  %v1935 = vunpack.c.h.b16 %v362
  %v1936 = vunpack.c.l.b16 %v363
  %v1937 = vunpack.c.h.b16 %v363
  %v1938 = vunpack.c.l.b16 %v364
  %v1939 = vunpack.c.h.b16 %v364
  %v1940 = vunpack.c.l.b16 %v365
  %v1941 = vunpack.c.h.b16 %v365
  %v1942 = vunpack.c.l.b16 %v366
  %v1943 = vunpack.c.h.b16 %v366
  %v1944 = vunpack.c.l.b16 %v367
  %v1945 = vunpack.c.h.b16 %v367
  %v1946 = vunpack.c.l.b16 %v368
  %v1947 = vunpack.c.h.b16 %v368
  %v1948 = vunpack.c.l.b16 %v369
  %v1949 = vunpack.c.h.b16 %v369
  %v1950 = vunpack.c.l.b16 %v370
  %v1951 = vunpack.c.h.b16 %v370
  %v1952 = vunpack.c.l.b16 %v371
  %v1953 = vunpack.c.h.b16 %v371
  %v1954 = vunpack.c.l.b16 %v372
  %v1955 = vunpack.c.h.b16 %v372
  %v1956 = vunpack.c.l.b16 %v373
  %v1957 = vunpack.c.h.b16 %v373
  %v1958 = vunpack.c.l.b16 %v374
  %v1959 = vunpack.c.h.b16 %v374
  %v1960 = vunpack.c.l.b16 %v375
  %v1961 = vunpack.c.h.b16 %v375
  %v1962 = vunpack.c.l.b16 %v376
  %v1963 = vunpack.c.h.b16 %v376
  %v1964 = vunpack.c.l.b16 %v377
  %v1965 = vunpack.c.h.b16 %v377
  %v1966 = vunpack.c.l.b16 %v378
  %v1967 = vunpack.c.h.b16 %v378
  %v1968 = vunpack.c.l.b16 %v379
  %v1969 = vunpack.c.h.b16 %v379
  %v1970 = vunpack.c.l.b16 %v380
  %v1971 = vunpack.c.h.b16 %v380
  %v1972 = vunpack.c.l.b16 %v381
  %v1973 = vunpack.c.h.b16 %v381
  %v1974 = vunpack.c.l.b16 %v382
  %v1975 = vunpack.c.h.b16 %v382
  %v1976 = vunpack.c.l.b16 %v383
  %v1977 = vunpack.c.h.b16 %v383
  %v1978 = vunpack.c.l.b16 %v384
  %v1979 = vunpack.c.h.b16 %v384
  %v1980 = vunpack.c.l.b16 %v385
  %v1981 = vunpack.c.h.b16 %v385
  %v1982 = vunpack.c.l.b16 %v386
  %v1983 = vunpack.c.h.b16 %v386
  %v1984 = vunpack.c.l.b16 %v387
  %v1985 = vunpack.c.h.b16 %v387
  %v1986 = vunpack.c.l.b16 %v388
  %v1987 = vunpack.c.h.b16 %v388
  %v1988 = vunpack.c.l.b16 %v389
  %v1989 = vunpack.c.h.b16 %v389
  %v1990 = vunpack.c.l.b16 %v390
  %v1991 = vunpack.c.h.b16 %v390
  %v1992 = vunpack.c.l.b16 %v391
  %v1993 = vunpack.c.h.b16 %v391
  %v1994 = vunpack.c.l.b16 %v392
  %v1995 = vunpack.c.h.b16 %v392
  %v1996 = vunpack.c.l.b16 %v393
  %v1997 = vunpack.c.h.b16 %v393
  %v1998 = vunpack.c.l.b16 %v394
  %v1999 = vunpack.c.h.b16 %v394
  %v2000 = vunpack.c.l.b16 %v395
  %v2001 = vunpack.c.h.b16 %v395
  %v2002 = vunpack.c.l.b16 %v396
  %v2003 = vunpack.c.h.b16 %v396
  %v2004 = vunpack.c.l.b16 %v397
  %v2005 = vunpack.c.h.b16 %v397
  %v2006 = vunpack.c.l.b16 %v398
  %v2007 = vunpack.c.h.b16 %v398
  %v2008 = vunpack.c.l.b16 %v399
  %v2009 = vunpack.c.h.b16 %v399
  %v2010 = vunpack.c.l.b16 %v400
  %v2011 = vunpack.c.h.b16 %v400
  %v2012 = vunpack.c.l.b16 %v401
  %v2013 = vunpack.c.h.b16 %v401
  %v2014 = vunpack.c.l.b16 %v402
  %v2015 = vunpack.c.h.b16 %v402
  %v2016 = vunpack.c.l.b16 %v403
  %v2017 = vunpack.c.h.b16 %v403
  %v2018 = vunpack.c.l.b16 %v404
  %v2019 = vunpack.c.h.b16 %v404
  %v2020 = vunpack.c.l.b16 %v405
  %v2021 = vunpack.c.h.b16 %v405
  %v2022 = vunpack.c.l.b16 %v406
  %v2023 = vunpack.c.h.b16 %v406
  %v2024 = vunpack.c.l.b16 %v407
  %v2025 = vunpack.c.h.b16 %v407
  %v2026 = vunpack.c.l.b16 %v408
  %v2027 = vunpack.c.h.b16 %v408
  %v2028 = vunpack.c.l.b16 %v409
  %v2029 = vunpack.c.h.b16 %v409
  %v2030 = vunpack.c.l.b16 %v410
  %v2031 = vunpack.c.h.b16 %v410
  %v2032 = vunpack.c.l.b16 %v411
  %v2033 = vunpack.c.h.b16 %v411
  %v2034 = vunpack.c.l.b16 %v412
  %v2035 = vunpack.c.h.b16 %v412
  %v2036 = vunpack.c.l.b16 %v413
  %v2037 = vunpack.c.h.b16 %v413
  %v2038 = vunpack.c.l.b16 %v414
  %v2039 = vunpack.c.h.b16 %v414
  %v2040 = vunpack.c.l.b16 %v415
  %v2041 = vunpack.c.h.b16 %v415
  %v2042 = vunpack.c.l.b16 %v416
  %v2043 = vunpack.c.h.b16 %v416
  %v2044 = vunpack.c.l.b16 %v417
  %v2045 = vunpack.c.h.b16 %v417
  %v2046 = vunpack.c.l.b16 %v418
  %v2047 = vunpack.c.h.b16 %v418
  %v2048 = vunpack.c.l.b16 %v419
  %v2049 = vunpack.c.h.b16 %v419
  %v2050 = vunpack.c.l.b16 %v420
  %v2051 = vunpack.c.h.b16 %v420
  %v2052 = vunpack.c.l.b16 %v421
  %v2053 = vunpack.c.h.b16 %v421
  %v2054 = vunpack.c.l.b16 %v422
  %v2055 = vunpack.c.h.b16 %v422
  %v2056 = vunpack.c.l.b16 %v423
  %v2057 = vunpack.c.h.b16 %v423
  %v2058 = vunpack.c.l.b16 %v424
  %v2059 = vunpack.c.h.b16 %v424
  %v2060 = vunpack.c.l.b16 %v425
  %v2061 = vunpack.c.h.b16 %v425
  %v2062 = vunpack.c.l.b16 %v426
  %v2063 = vunpack.c.h.b16 %v426
  %v2064 = vunpack.c.l.b16 %v427
  %v2065 = vunpack.c.h.b16 %v427
  %v2066 = vunpack.c.l.b16 %v428
  %v2067 = vunpack.c.h.b16 %v428
  %v2068 = vunpack.c.l.b16 %v429
  %v2069 = vunpack.c.h.b16 %v429
  %v2070 = vunpack.c.l.b16 %v430
  %v2071 = vunpack.c.h.b16 %v430
  %v2072 = vunpack.c.l.b16 %v431
  %v2073 = vunpack.c.h.b16 %v431
  %v2074 = vunpack.c.l.b16 %v432
  %v2075 = vunpack.c.h.b16 %v432
  %v2076 = vunpack.c.l.b16 %v433
  %v2077 = vunpack.c.h.b16 %v433
  %v2078 = vunpack.c.l.b16 %v434
  %v2079 = vunpack.c.h.b16 %v434
  %v2080 = vunpack.c.l.b16 %v435
  %v2081 = vunpack.c.h.b16 %v435
  %v2082 = vunpack.c.l.b16 %v436
  %v2083 = vunpack.c.h.b16 %v436
  %v2084 = vunpack.c.l.b16 %v437
  %v2085 = vunpack.c.h.b16 %v437
  %v2086 = vunpack.c.l.b16 %v438
  %v2087 = vunpack.c.h.b16 %v438
  %v2088 = vunpack.c.l.b16 %v439
  %v2089 = vunpack.c.h.b16 %v439
  %v2090 = vunpack.c.l.b16 %v440
  %v2091 = vunpack.c.h.b16 %v440
  %v2092 = vunpack.c.l.b16 %v441
  %v2093 = vunpack.c.h.b16 %v441
  %v2094 = vunpack.c.l.b16 %v442
  %v2095 = vunpack.c.h.b16 %v442
  %v2096 = vunpack.c.l.b16 %v443
  %v2097 = vunpack.c.h.b16 %v443
  %v2098 = vunpack.c.l.b16 %v444
  %v2099 = vunpack.c.h.b16 %v444
  %v2100 = vunpack.c.l.b16 %v445
  %v2101 = vunpack.c.h.b16 %v445
  %v2102 = vunpack.c.l.b16 %v446
  %v2103 = vunpack.c.h.b16 %v446
  %v2104 = vunpack.c.l.b16 %v447
  %v2105 = vunpack.c.h.b16 %v447
  %v2106 = vunpack.c.l.b16 %v448
  %v2107 = vunpack.c.h.b16 %v448
  %v2108 = vunpack.c.l.b16 %v449
  %v2109 = vunpack.c.h.b16 %v449
  %v2110 = vunpack.c.l.b16 %v450
  %v2111 = vunpack.c.h.b16 %v450
  %v2112 = vunpack.c.l.b16 %v451
  %v2113 = vunpack.c.h.b16 %v451
  %v2114 = vunpack.c.l.b16 %v452
  %v2115 = vunpack.c.h.b16 %v452
  %v2116 = vunpack.c.l.b16 %v453
  %v2117 = vunpack.c.h.b16 %v453
  %v2118 = vunpack.c.l.b16 %v454
  %v2119 = vunpack.c.h.b16 %v454
  %v2120 = vunpack.c.l.b16 %v455
  %v2121 = vunpack.c.h.b16 %v455
  %v2122 = vunpack.c.l.b16 %v456
  %v2123 = vunpack.c.h.b16 %v456
  %v2124 = vunpack.c.l.b16 %v457
  %v2125 = vunpack.c.h.b16 %v457
  %v2126 = vunpack.c.l.b16 %v458
  %v2127 = vunpack.c.h.b16 %v458
  %v2128 = vunpack.c.l.b16 %v459
  %v2129 = vunpack.c.h.b16 %v459
  %v2130 = vunpack.c.l.b16 %v460
  %v2131 = vunpack.c.h.b16 %v460
  %v2132 = vunpack.c.l.b16 %v461
  %v2133 = vunpack.c.h.b16 %v461
  %v2134 = vunpack.c.l.b16 %v462
  %v2135 = vunpack.c.h.b16 %v462
  %v2136 = vunpack.c.l.b16 %v463
  %v2137 = vunpack.c.h.b16 %v463
  %v2138 = vunpack.c.l.b16 %v464
  %v2139 = vunpack.c.h.b16 %v464
  %v2140 = vunpack.c.l.b16 %v465
  %v2141 = vunpack.c.h.b16 %v465
  %v2142 = vunpack.c.l.b16 %v466
  %v2143 = vunpack.c.h.b16 %v466
  %v2144 = vunpack.c.l.b16 %v467
  %v2145 = vunpack.c.h.b16 %v467
  %v2146 = vunpack.c.l.b16 %v468
  %v2147 = vunpack.c.h.b16 %v468
  %v2148 = vunpack.c.l.b16 %v469
  %v2149 = vunpack.c.h.b16 %v469
  %v2150 = vunpack.c.l.b16 %v470
  %v2151 = vunpack.c.h.b16 %v470
  %v2152 = vunpack.c.l.b16 %v471
  %v2153 = vunpack.c.h.b16 %v471
  %v2154 = vunpack.c.l.b16 %v472
  %v2155 = vunpack.c.h.b16 %v472
  %v2156 = vunpack.c.l.b16 %v473
  %v2157 = vunpack.c.h.b16 %v473
  %v2158 = vunpack.c.l.b16 %v474
  %v2159 = vunpack.c.h.b16 %v474
  %v2160 = vunpack.c.l.b16 %v475
  %v2161 = vunpack.c.h.b16 %v475
  %v2162 = vunpack.c.l.b16 %v476
  %v2163 = vunpack.c.h.b16 %v476
  %v2164 = vunpack.c.l.b16 %v477
  %v2165 = vunpack.c.h.b16 %v477
  %v2166 = vunpack.c.l.b16 %v478
  %v2167 = vunpack.c.h.b16 %v478
  %v2168 = vunpack.c.l.b16 %v479
  %v2169 = vunpack.c.h.b16 %v479
  %v2170 = vunpack.c.l.b16 %v480
  %v2171 = vunpack.c.h.b16 %v480
  %v2172 = vunpack.c.l.b16 %v481
  %v2173 = vunpack.c.h.b16 %v481
  %v2174 = vunpack.c.l.b16 %v482
  %v2175 = vunpack.c.h.b16 %v482
  %v2176 = vunpack.c.l.b16 %v483
  %v2177 = vunpack.c.h.b16 %v483
  %v2178 = vunpack.c.l.b16 %v484
  %v2179 = vunpack.c.h.b16 %v484
  %v2180 = vunpack.c.l.b16 %v485
  %v2181 = vunpack.c.h.b16 %v485
  %v2182 = vunpack.c.l.b16 %v486
  %v2183 = vunpack.c.h.b16 %v486
  %v2184 = vunpack.c.l.b16 %v487
  %v2185 = vunpack.c.h.b16 %v487
  %v2186 = vunpack.c.l.b16 %v488
  %v2187 = vunpack.c.h.b16 %v488
  %v2188 = vunpack.c.l.b16 %v489
  %v2189 = vunpack.c.h.b16 %v489
  %v2190 = vunpack.c.l.b16 %v490
  %v2191 = vunpack.c.h.b16 %v490
  %v2192 = vunpack.c.l.b16 %v491
  %v2193 = vunpack.c.h.b16 %v491
  %v2194 = vunpack.c.l.b16 %v492
  %v2195 = vunpack.c.h.b16 %v492
  %v2196 = vunpack.c.l.b16 %v493
  %v2197 = vunpack.c.h.b16 %v493
  %v2198 = vunpack.c.l.b16 %v494
  %v2199 = vunpack.c.h.b16 %v494
  %v2200 = vunpack.c.l.b16 %v495
  %v2201 = vunpack.c.h.b16 %v495
  %v2202 = vunpack.c.l.b16 %v496
  %v2203 = vunpack.c.h.b16 %v496
  %v2204 = vunpack.c.l.b16 %v497
  %v2205 = vunpack.c.h.b16 %v497
  %v2206 = vunpack.c.l.b16 %v498
  %v2207 = vunpack.c.h.b16 %v498
  %v2208 = vunpack.c.l.b16 %v499
  %v2209 = vunpack.c.h.b16 %v499
  %v2210 = vunpack.c.l.b16 %v500
  %v2211 = vunpack.c.h.b16 %v500
  %v2212 = vunpack.c.l.b16 %v501
  %v2213 = vunpack.c.h.b16 %v501
  %v2214 = vunpack.c.l.b16 %v502
  %v2215 = vunpack.c.h.b16 %v502
  %v2216 = vunpack.c.l.b16 %v503
  %v2217 = vunpack.c.h.b16 %v503
  %v2218 = vunpack.c.l.b16 %v504
  %v2219 = vunpack.c.h.b16 %v504
  %v2220 = vunpack.c.l.b16 %v505
  %v2221 = vunpack.c.h.b16 %v505
  %v2222 = vunpack.c.l.b16 %v506
  %v2223 = vunpack.c.h.b16 %v506
  %v2224 = vunpack.c.l.b16 %v507
  %v2225 = vunpack.c.h.b16 %v507
  %v2226 = vunpack.c.l.b16 %v508
  %v2227 = vunpack.c.h.b16 %v508
  %v2228 = vunpack.c.l.b16 %v509
  %v2229 = vunpack.c.h.b16 %v509
  %v2230 = vunpack.c.l.b16 %v510
  %v2231 = vunpack.c.h.b16 %v510
  %v2232 = vunpack.c.l.b16 %v511
  %v2233 = vunpack.c.h.b16 %v511
  %v2234 = vunpack.c.l.b16 %v512
  %v2235 = vunpack.c.h.b16 %v512
  %v2236 = vunpack.c.l.b16 %v513
  %v2237 = vunpack.c.h.b16 %v513
  %v2238 = vunpack.c.l.b16 %v514
  %v2239 = vunpack.c.h.b16 %v514
  %v2240 = vunpack.c.l.b16 %v515
  %v2241 = vunpack.c.h.b16 %v515
  %v2242 = vunpack.c.l.b16 %v516
  %v2243 = vunpack.c.h.b16 %v516
  %v2244 = vunpack.c.l.b16 %v517
  %v2245 = vunpack.c.h.b16 %v517
  %v2246 = vunpack.c.l.b16 %v518
  %v2247 = vunpack.c.h.b16 %v518
  %v2248 = vunpack.c.l.b16 %v519
  %v2249 = vunpack.c.h.b16 %v519
  %v2250 = vunpack.c.l.b16 %v520
  %v2251 = vunpack.c.h.b16 %v520
  %v2252 = vunpack.c.l.b16 %v521
  %v2253 = vunpack.c.h.b16 %v521
  %v2254 = vunpack.c.l.b16 %v522
  %v2255 = vunpack.c.h.b16 %v522
  %v2256 = vunpack.c.l.b16 %v523
  %v2257 = vunpack.c.h.b16 %v523
  %v2258 = vunpack.c.l.b16 %v524
  %v2259 = vunpack.c.h.b16 %v524
  %v2260 = vunpack.c.l.b16 %v525
  %v2261 = vunpack.c.h.b16 %v525
  %v2262 = vunpack.c.l.b16 %v526
  %v2263 = vunpack.c.h.b16 %v526
  %v2264 = vunpack.c.l.b16 %v527
  %v2265 = vunpack.c.h.b16 %v527
  %v2266 = vunpack.c.l.b16 %v528
  %v2267 = vunpack.c.h.b16 %v528
  %v2268 = vunpack.c.l.b16 %v529
  %v2269 = vunpack.c.h.b16 %v529
  %v2270 = vunpack.c.l.b16 %v530
  %v2271 = vunpack.c.h.b16 %v530
  %v2272 = vunpack.c.l.b16 %v531
  %v2273 = vunpack.c.h.b16 %v531
  %v2274 = vunpack.c.l.b16 %v532
  %v2275 = vunpack.c.h.b16 %v532
  %v2276 = vunpack.c.l.b16 %v533
  %v2277 = vunpack.c.h.b16 %v533
  %v2278 = vunpack.c.l.b16 %v534
  %v2279 = vunpack.c.h.b16 %v534
  %v2280 = vunpack.c.l.b16 %v535
  %v2281 = vunpack.c.h.b16 %v535
  %v2282 = vunpack.c.l.b16 %v536
  %v2283 = vunpack.c.h.b16 %v536
  %v2284 = vunpack.c.l.b16 %v537
  %v2285 = vunpack.c.h.b16 %v537
  %v2286 = vunpack.c.l.b16 %v538
  %v2287 = vunpack.c.h.b16 %v538
  %v2288 = vunpack.c.l.b16 %v539
  %v2289 = vunpack.c.h.b16 %v539
  %v2290 = vunpack.c.l.b16 %v540
  %v2291 = vunpack.c.h.b16 %v540
  %v2292 = vunpack.c.l.b16 %v541
  %v2293 = vunpack.c.h.b16 %v541
  %v2294 = vunpack.c.l.b16 %v542
  %v2295 = vunpack.c.h.b16 %v542
  %v2296 = vunpack.c.l.b16 %v543
  %v2297 = vunpack.c.h.b16 %v543
  %v2298 = vunpack.c.l.b16 %v544
  %v2299 = vunpack.c.h.b16 %v544
  %v2300 = vunpack.c.l.b16 %v545
  %v2301 = vunpack.c.h.b16 %v545
  %v2302 = vunpack.c.l.b16 %v546
  %v2303 = vunpack.c.h.b16 %v546
  %v2304 = vunpack.c.l.b16 %v547
  %v2305 = vunpack.c.h.b16 %v547
  %v2306 = vunpack.c.l.b16 %v548
  %v2307 = vunpack.c.h.b16 %v548
  %v2308 = vunpack.c.l.b16 %v549
  %v2309 = vunpack.c.h.b16 %v549
  %v2310 = vunpack.c.l.b16 %v550
  %v2311 = vunpack.c.h.b16 %v550
  %v2312 = vunpack.c.l.b16 %v551
  %v2313 = vunpack.c.h.b16 %v551
  %v2314 = vunpack.c.l.b16 %v552
  %v2315 = vunpack.c.h.b16 %v552
  %v2316 = vunpack.c.l.b16 %v553
  %v2317 = vunpack.c.h.b16 %v553
  %v2318 = vunpack.c.l.b16 %v554
  %v2319 = vunpack.c.h.b16 %v554
  %v2320 = vunpack.c.l.b16 %v555
  %v2321 = vunpack.c.h.b16 %v555
  %v2322 = vunpack.c.l.b16 %v556
  %v2323 = vunpack.c.h.b16 %v556
  %v2324 = vunpack.c.l.b16 %v557
  %v2325 = vunpack.c.h.b16 %v557
  %v2326 = vunpack.c.l.b16 %v558
  %v2327 = vunpack.c.h.b16 %v558
  %v2328 = vunpack.c.l.b16 %v559
  %v2329 = vunpack.c.h.b16 %v559
  %v2330 = vunpack.c.l.b16 %v560
  %v2331 = vunpack.c.h.b16 %v560
  %v2332 = vunpack.c.l.b16 %v561
  %v2333 = vunpack.c.h.b16 %v561
  %v2334 = vunpack.c.l.b16 %v562
  %v2335 = vunpack.c.h.b16 %v562
  %v2336 = vunpack.c.l.b16 %v563
  %v2337 = vunpack.c.h.b16 %v563
  %v2338 = vunpack.c.l.b16 %v564
  %v2339 = vunpack.c.h.b16 %v564
  %v2340 = vunpack.c.l.b16 %v565
  %v2341 = vunpack.c.h.b16 %v565
  %v2342 = vunpack.c.l.b16 %v566
  %v2343 = vunpack.c.h.b16 %v566
  %v2344 = vunpack.c.l.b16 %v567
  %v2345 = vunpack.c.h.b16 %v567
  %v2346 = vunpack.c.l.b16 %v568
  %v2347 = vunpack.c.h.b16 %v568
  %v2348 = vunpack.c.l.b16 %v569
  %v2349 = vunpack.c.h.b16 %v569
  %v2350 = vunpack.c.l.b16 %v570
  %v2351 = vunpack.c.h.b16 %v570
  %v2352 = vunpack.c.l.b16 %v571
  %v2353 = vunpack.c.h.b16 %v571
  %v2354 = vunpack.c.l.b16 %v572
  %v2355 = vunpack.c.h.b16 %v572
  %v2356 = vunpack.c.l.b16 %v573
  %v2357 = vunpack.c.h.b16 %v573
  %v2358 = vunpack.c.l.b16 %v574
  %v2359 = vunpack.c.h.b16 %v574
  %v2360 = vunpack.c.l.b16 %v575
  %v2361 = vunpack.c.h.b16 %v575
  %v2362 = vunpack.c.l.b16 %v576
  %v2363 = vunpack.c.h.b16 %v576
  %v2364 = vunpack.c.l.b16 %v577
  %v2365 = vunpack.c.h.b16 %v577
  %v2366 = vunpack.c.l.b16 %v578
  %v2367 = vunpack.c.h.b16 %v578
  %v2368 = vunpack.c.l.b16 %v579
  %v2369 = vunpack.c.h.b16 %v579
  %v2370 = vunpack.c.l.b16 %v580
  %v2371 = vunpack.c.h.b16 %v580
  %v2372 = vunpack.c.l.b16 %v581
  %v2373 = vunpack.c.h.b16 %v581
  %v2374 = vunpack.c.l.b16 %v582
  %v2375 = vunpack.c.h.b16 %v582
  %v2376 = vunpack.c.l.b16 %v583
  %v2377 = vunpack.c.h.b16 %v583
  %v2378 = vunpack.c.l.b16 %v584
  %v2379 = vunpack.c.h.b16 %v584
  %v2380 = vunpack.c.l.b16 %v585
  %v2381 = vunpack.c.h.b16 %v585
  %v2382 = vunpack.c.l.b16 %v586
  %v2383 = vunpack.c.h.b16 %v586
  %v2384 = vunpack.c.l.b16 %v587
  %v2385 = vunpack.c.h.b16 %v587
  %v2386 = vunpack.c.l.b16 %v588
  %v2387 = vunpack.c.h.b16 %v588
  %v2388 = vunpack.c.l.b16 %v589
  %v2389 = vunpack.c.h.b16 %v589
  %v2390 = vunpack.c.l.b16 %v590
  %v2391 = vunpack.c.h.b16 %v590
  %v2392 = vunpack.c.l.b16 %v591
  %v2393 = vunpack.c.h.b16 %v591
  %v2394 = vunpack.c.l.b16 %v592
  %v2395 = vunpack.c.h.b16 %v592
  %v2396 = vunpack.c.l.b16 %v593
  %v2397 = vunpack.c.h.b16 %v593
  %v2398 = vunpack.c.l.b16 %v594
  %v2399 = vunpack.c.h.b16 %v594
  %v2400 = vunpack.c.l.b16 %v595
  %v2401 = vunpack.c.h.b16 %v595
  %v2402 = vunpack.c.l.b16 %v596
  %v2403 = vunpack.c.h.b16 %v596
  %v2404 = vunpack.c.l.b16 %v597
  %v2405 = vunpack.c.h.b16 %v597
  %v2406 = vunpack.c.l.b16 %v598
  %v2407 = vunpack.c.h.b16 %v598
  %v2408 = vunpack.c.l.b16 %v599
  %v2409 = vunpack.c.h.b16 %v599
  %v2410 = vunpack.c.l.b16 %v600
  %v2411 = vunpack.c.h.b16 %v600
  %v2412 = vunpack.c.l.b16 %v601
  %v2413 = vunpack.c.h.b16 %v601
  %v2414 = vunpack.c.l.b16 %v602
  %v2415 = vunpack.c.h.b16 %v602
  %v2416 = vunpack.c.l.b16 %v603
  %v2417 = vunpack.c.h.b16 %v603
  %v2418 = vunpack.c.l.b16 %v604
  %v2419 = vunpack.c.h.b16 %v604
  %v2420 = vunpack.c.l.b16 %v605
  %v2421 = vunpack.c.h.b16 %v605
  %v2422 = vunpack.c.l.b16 %v606
  %v2423 = vunpack.c.h.b16 %v606
  %v2424 = vunpack.c.l.b16 %v607
  %v2425 = vunpack.c.h.b16 %v607
  %v2426 = vpack.c.b16 %v1278, %v1274
  %v2427 = vpack.c.b16 %v1279, %v1275
  %v2428 = vpack.c.b16 %v1280, %v1276
  %v2429 = vpack.c.b16 %v1281, %v1277
  %v2430 = vpack.c.b16 %v1286, %v1282
  %v2431 = vpack.c.b16 %v1287, %v1283
  %v2432 = vpack.c.b16 %v1288, %v1284
  %v2433 = vpack.c.b16 %v1289, %v1285
  %v2434 = vpack.c.b16 %v1294, %v1290
  %v2435 = vpack.c.b16 %v1295, %v1291
  %v2436 = vpack.c.b16 %v1296, %v1292
  %v2437 = vpack.c.b16 %v1297, %v1293
  %v2438 = vpack.c.b16 %v1302, %v1298
  %v2439 = vpack.c.b16 %v1303, %v1299
  %v2440 = vpack.c.b16 %v1304, %v1300
  %v2441 = vpack.c.b16 %v1305, %v1301
  %v2442 = vpack.c.b16 %v1310, %v1306
  %v2443 = vpack.c.b16 %v1311, %v1307
  %v2444 = vpack.c.b16 %v1312, %v1308
  %v2445 = vpack.c.b16 %v1313, %v1309
  %v2446 = vpack.c.b16 %v1318, %v1314
  %v2447 = vpack.c.b16 %v1319, %v1315
  %v2448 = vpack.c.b16 %v1320, %v1316
  %v2449 = vpack.c.b16 %v1321, %v1317
  %v2450 = vpack.c.b16 %v1326, %v1322
  %v2451 = vpack.c.b16 %v1327, %v1323
  %v2452 = vpack.c.b16 %v1328, %v1324
  %v2453 = vpack.c.b16 %v1329, %v1325
  %v2454 = vpack.c.b16 %v1334, %v1330
  %v2455 = vpack.c.b16 %v1335, %v1331
  %v2456 = vpack.c.b16 %v1336, %v1332
  %v2457 = vpack.c.b16 %v1337, %v1333
  %v2458 = vpack.c.b16 %v1342, %v1338
  %v2459 = vpack.c.b16 %v1343, %v1339
  %v2460 = vpack.c.b16 %v1344, %v1340
  %v2461 = vpack.c.b16 %v1345, %v1341
  %v2462 = vpack.c.b16 %v1350, %v1346
  %v2463 = vpack.c.b16 %v1351, %v1347
  %v2464 = vpack.c.b16 %v1352, %v1348
  %v2465 = vpack.c.b16 %v1353, %v1349
  %v2466 = vpack.c.b16 %v1358, %v1354
  %v2467 = vpack.c.b16 %v1359, %v1355
  %v2468 = vpack.c.b16 %v1360, %v1356
  %v2469 = vpack.c.b16 %v1361, %v1357
  %v2470 = vpack.c.b16 %v1366, %v1362
  %v2471 = vpack.c.b16 %v1367, %v1363
  %v2472 = vpack.c.b16 %v1368, %v1364
  %v2473 = vpack.c.b16 %v1369, %v1365
  %v2474 = vpack.c.b16 %v1374, %v1370
  %v2475 = vpack.c.b16 %v1375, %v1371
  %v2476 = vpack.c.b16 %v1376, %v1372
  %v2477 = vpack.c.b16 %v1377, %v1373
  %v2478 = vpack.c.b16 %v1382, %v1378
  %v2479 = vpack.c.b16 %v1383, %v1379
  %v2480 = vpack.c.b16 %v1384, %v1380
  %v2481 = vpack.c.b16 %v1385, %v1381
  %v2482 = vpack.c.b16 %v1390, %v1386
  %v2483 = vpack.c.b16 %v1391, %v1387
  %v2484 = vpack.c.b16 %v1392, %v1388
  %v2485 = vpack.c.b16 %v1393, %v1389
  %v2486 = vpack.c.b16 %v1398, %v1394
  %v2487 = vpack.c.b16 %v1399, %v1395
  %v2488 = vpack.c.b16 %v1400, %v1396
  %v2489 = vpack.c.b16 %v1401, %v1397
  %v2490 = vpack.c.b16 %v1406, %v1402
  %v2491 = vpack.c.b16 %v1407, %v1403
  %v2492 = vpack.c.b16 %v1408, %v1404
  %v2493 = vpack.c.b16 %v1409, %v1405
  %v2494 = vpack.c.b16 %v1414, %v1410
  %v2495 = vpack.c.b16 %v1415, %v1411
  %v2496 = vpack.c.b16 %v1416, %v1412
  %v2497 = vpack.c.b16 %v1417, %v1413
  %v2498 = vpack.c.b16 %v1422, %v1418
  %v2499 = vpack.c.b16 %v1423, %v1419
  %v2500 = vpack.c.b16 %v1424, %v1420
  %v2501 = vpack.c.b16 %v1425, %v1421
  %v2502 = vpack.c.b16 %v1430, %v1426
  %v2503 = vpack.c.b16 %v1431, %v1427
  %v2504 = vpack.c.b16 %v1432, %v1428
  %v2505 = vpack.c.b16 %v1433, %v1429
  %v2506 = vpack.c.b16 %v1438, %v1434
  %v2507 = vpack.c.b16 %v1439, %v1435
  %v2508 = vpack.c.b16 %v1440, %v1436
  %v2509 = vpack.c.b16 %v1441, %v1437
  %v2510 = vpack.c.b16 %v1446, %v1442
  %v2511 = vpack.c.b16 %v1447, %v1443
  %v2512 = vpack.c.b16 %v1448, %v1444
  %v2513 = vpack.c.b16 %v1449, %v1445
  %v2514 = vpack.c.b16 %v1454, %v1450
  %v2515 = vpack.c.b16 %v1455, %v1451
  %v2516 = vpack.c.b16 %v1456, %v1452
  %v2517 = vpack.c.b16 %v1457, %v1453
  %v2518 = vpack.c.b16 %v1462, %v1458
  %v2519 = vpack.c.b16 %v1463, %v1459
  %v2520 = vpack.c.b16 %v1464, %v1460
  %v2521 = vpack.c.b16 %v1465, %v1461
  %v2522 = vpack.c.b16 %v1470, %v1466
  %v2523 = vpack.c.b16 %v1471, %v1467
  %v2524 = vpack.c.b16 %v1472, %v1468
  %v2525 = vpack.c.b16 %v1473, %v1469
  %v2526 = vpack.c.b16 %v1478, %v1474
  %v2527 = vpack.c.b16 %v1479, %v1475
  %v2528 = vpack.c.b16 %v1480, %v1476
  %v2529 = vpack.c.b16 %v1481, %v1477
  %v2530 = vpack.c.b16 %v1486, %v1482
  %v2531 = vpack.c.b16 %v1487, %v1483
  %v2532 = vpack.c.b16 %v1488, %v1484
  %v2533 = vpack.c.b16 %v1489, %v1485
  %v2534 = vpack.c.b16 %v1494, %v1490
  %v2535 = vpack.c.b16 %v1495, %v1491
  %v2536 = vpack.c.b16 %v1496, %v1492
  %v2537 = vpack.c.b16 %v1497, %v1493
  %v2538 = vpack.c.b16 %v1502, %v1498
  %v2539 = vpack.c.b16 %v1503, %v1499
  %v2540 = vpack.c.b16 %v1504, %v1500
  %v2541 = vpack.c.b16 %v1505, %v1501
  %v2542 = vpack.c.b16 %v1510, %v1506
  %v2543 = vpack.c.b16 %v1511, %v1507
  %v2544 = vpack.c.b16 %v1512, %v1508
  %v2545 = vpack.c.b16 %v1513, %v1509
  %v2546 = vpack.c.b16 %v1518, %v1514
  %v2547 = vpack.c.b16 %v1519, %v1515
  %v2548 = vpack.c.b16 %v1520, %v1516
  %v2549 = vpack.c.b16 %v1521, %v1517
  %v2550 = vpack.c.b16 %v1526, %v1522
  %v2551 = vpack.c.b16 %v1527, %v1523
  %v2552 = vpack.c.b16 %v1528, %v1524
  %v2553 = vpack.c.b16 %v1529, %v1525
  %v2554 = vpack.c.b16 %v1534, %v1530
  %v2555 = vpack.c.b16 %v1535, %v1531
  %v2556 = vpack.c.b16 %v1536, %v1532
  %v2557 = vpack.c.b16 %v1537, %v1533
  %v2558 = vpack.c.b16 %v1542, %v1538
  %v2559 = vpack.c.b16 %v1543, %v1539
  %v2560 = vpack.c.b16 %v1544, %v1540
  %v2561 = vpack.c.b16 %v1545, %v1541
  %v2562 = vpack.c.b16 %v1550, %v1546
  %v2563 = vpack.c.b16 %v1551, %v1547
  %v2564 = vpack.c.b16 %v1552, %v1548
  %v2565 = vpack.c.b16 %v1553, %v1549
  %v2566 = vpack.c.b16 %v1558, %v1554
  %v2567 = vpack.c.b16 %v1559, %v1555
  %v2568 = vpack.c.b16 %v1560, %v1556
  %v2569 = vpack.c.b16 %v1561, %v1557
  %v2570 = vpack.c.b16 %v1566, %v1562
  %v2571 = vpack.c.b16 %v1567, %v1563
  %v2572 = vpack.c.b16 %v1568, %v1564
  %v2573 = vpack.c.b16 %v1569, %v1565
  %v2574 = vpack.c.b16 %v1574, %v1570
  %v2575 = vpack.c.b16 %v1575, %v1571
  %v2576 = vpack.c.b16 %v1576, %v1572
  %v2577 = vpack.c.b16 %v1577, %v1573
  %v2578 = vpack.c.b16 %v1582, %v1578
  %v2579 = vpack.c.b16 %v1583, %v1579
  %v2580 = vpack.c.b16 %v1584, %v1580
  %v2581 = vpack.c.b16 %v1585, %v1581
  %v2582 = vpack.c.b16 %v1590, %v1586
  %v2583 = vpack.c.b16 %v1591, %v1587
  %v2584 = vpack.c.b16 %v1592, %v1588
  %v2585 = vpack.c.b16 %v1593, %v1589
  %v2586 = vpack.c.b16 %v1598, %v1594
  %v2587 = vpack.c.b16 %v1599, %v1595
  %v2588 = vpack.c.b16 %v1600, %v1596
  %v2589 = vpack.c.b16 %v1601, %v1597
  %v2590 = vpack.c.b16 %v1606, %v1602
  %v2591 = vpack.c.b16 %v1607, %v1603
  %v2592 = vpack.c.b16 %v1608, %v1604
  %v2593 = vpack.c.b16 %v1609, %v1605
  %v2594 = vpack.c.b16 %v1614, %v1610
  %v2595 = vpack.c.b16 %v1615, %v1611
  %v2596 = vpack.c.b16 %v1616, %v1612
  %v2597 = vpack.c.b16 %v1617, %v1613
  %v2598 = vpack.c.b16 %v1622, %v1618
  %v2599 = vpack.c.b16 %v1623, %v1619
  %v2600 = vpack.c.b16 %v1624, %v1620
  %v2601 = vpack.c.b16 %v1625, %v1621
  %v2602 = vpack.c.b16 %v1630, %v1626
  %v2603 = vpack.c.b16 %v1631, %v1627
  %v2604 = vpack.c.b16 %v1632, %v1628
  %v2605 = vpack.c.b16 %v1633, %v1629
  %v2606 = vpack.c.b16 %v1638, %v1634
  %v2607 = vpack.c.b16 %v1639, %v1635
  %v2608 = vpack.c.b16 %v1640, %v1636
  %v2609 = vpack.c.b16 %v1641, %v1637
  %v2610 = vpack.c.b16 %v1646, %v1642
  %v2611 = vpack.c.b16 %v1647, %v1643
  %v2612 = vpack.c.b16 %v1648, %v1644
  %v2613 = vpack.c.b16 %v1649, %v1645
  %v2614 = vpack.c.b16 %v1654, %v1650
  %v2615 = vpack.c.b16 %v1655, %v1651
  %v2616 = vpack.c.b16 %v1656, %v1652
  %v2617 = vpack.c.b16 %v1657, %v1653
  %v2618 = vpack.c.b16 %v1662, %v1658
  %v2619 = vpack.c.b16 %v1663, %v1659
  %v2620 = vpack.c.b16 %v1664, %v1660
  %v2621 = vpack.c.b16 %v1665, %v1661
  %v2622 = vpack.c.b16 %v1670, %v1666
  %v2623 = vpack.c.b16 %v1671, %v1667
  %v2624 = vpack.c.b16 %v1672, %v1668
  %v2625 = vpack.c.b16 %v1673, %v1669
  %v2626 = vpack.c.b16 %v1678, %v1674
  %v2627 = vpack.c.b16 %v1679, %v1675
  %v2628 = vpack.c.b16 %v1680, %v1676
  %v2629 = vpack.c.b16 %v1681, %v1677
  %v2630 = vpack.c.b16 %v1686, %v1682
  %v2631 = vpack.c.b16 %v1687, %v1683
  %v2632 = vpack.c.b16 %v1688, %v1684
  %v2633 = vpack.c.b16 %v1689, %v1685
  %v2634 = vpack.c.b16 %v1694, %v1690
  %v2635 = vpack.c.b16 %v1695, %v1691
  %v2636 = vpack.c.b16 %v1696, %v1692
  %v2637 = vpack.c.b16 %v1697, %v1693
  %v2638 = vpack.c.b16 %v1702, %v1698
  %v2639 = vpack.c.b16 %v1703, %v1699
  %v2640 = vpack.c.b16 %v1704, %v1700
  %v2641 = vpack.c.b16 %v1705, %v1701
  %v2642 = vpack.c.b16 %v1710, %v1706
  %v2643 = vpack.c.b16 %v1711, %v1707
  %v2644 = vpack.c.b16 %v1712, %v1708
  %v2645 = vpack.c.b16 %v1713, %v1709
  %v2646 = vpack.c.b16 %v1718, %v1714
  %v2647 = vpack.c.b16 %v1719, %v1715
  %v2648 = vpack.c.b16 %v1720, %v1716
  %v2649 = vpack.c.b16 %v1721, %v1717
  %v2650 = vpack.c.b16 %v1726, %v1722
  %v2651 = vpack.c.b16 %v1727, %v1723
  %v2652 = vpack.c.b16 %v1728, %v1724
  %v2653 = vpack.c.b16 %v1729, %v1725
  %v2654 = vpack.c.b16 %v1734, %v1730
  %v2655 = vpack.c.b16 %v1735, %v1731
  %v2656 = vpack.c.b16 %v1736, %v1732
  %v2657 = vpack.c.b16 %v1737, %v1733
  %v2658 = vpack.c.b16 %v1742, %v1738
  %v2659 = vpack.c.b16 %v1743, %v1739
  %v2660 = vpack.c.b16 %v1744, %v1740
  %v2661 = vpack.c.b16 %v1745, %v1741
  %v2662 = vpack.c.b16 %v1750, %v1746
  %v2663 = vpack.c.b16 %v1751, %v1747
  %v2664 = vpack.c.b16 %v1752, %v1748
  %v2665 = vpack.c.b16 %v1753, %v1749
  %v2666 = vpack.c.b16 %v1758, %v1754
  %v2667 = vpack.c.b16 %v1759, %v1755
  %v2668 = vpack.c.b16 %v1760, %v1756
  %v2669 = vpack.c.b16 %v1761, %v1757
  %v2670 = vpack.c.b16 %v1766, %v1762
  %v2671 = vpack.c.b16 %v1767, %v1763
  %v2672 = vpack.c.b16 %v1768, %v1764
  %v2673 = vpack.c.b16 %v1769, %v1765
  %v2674 = vpack.c.b16 %v1774, %v1770
  %v2675 = vpack.c.b16 %v1775, %v1771
  %v2676 = vpack.c.b16 %v1776, %v1772
  %v2677 = vpack.c.b16 %v1777, %v1773
  %v2678 = vpack.c.b16 %v1782, %v1778
  %v2679 = vpack.c.b16 %v1783, %v1779
  %v2680 = vpack.c.b16 %v1784, %v1780
  %v2681 = vpack.c.b16 %v1785, %v1781
  %v2682 = vpack.c.b16 %v1790, %v1786
  %v2683 = vpack.c.b16 %v1791, %v1787
  %v2684 = vpack.c.b16 %v1792, %v1788
  %v2685 = vpack.c.b16 %v1793, %v1789
  %v2686 = vpack.c.b16 %v1798, %v1794
  %v2687 = vpack.c.b16 %v1799, %v1795
  %v2688 = vpack.c.b16 %v1800, %v1796
  %v2689 = vpack.c.b16 %v1801, %v1797
  %v2690 = vpack.c.b16 %v1806, %v1802
  %v2691 = vpack.c.b16 %v1807, %v1803
  %v2692 = vpack.c.b16 %v1808, %v1804
  %v2693 = vpack.c.b16 %v1809, %v1805
  %v2694 = vpack.c.b16 %v1814, %v1810
  %v2695 = vpack.c.b16 %v1815, %v1811
  %v2696 = vpack.c.b16 %v1816, %v1812
  %v2697 = vpack.c.b16 %v1817, %v1813
  %v2698 = vpack.c.b16 %v1822, %v1818
  %v2699 = vpack.c.b16 %v1823, %v1819
  %v2700 = vpack.c.b16 %v1824, %v1820
  %v2701 = vpack.c.b16 %v1825, %v1821
  %v2702 = vpack.c.b16 %v1830, %v1826
  %v2703 = vpack.c.b16 %v1831, %v1827
  %v2704 = vpack.c.b16 %v1832, %v1828
  %v2705 = vpack.c.b16 %v1833, %v1829
  %v2706 = vpack.c.b16 %v1838, %v1834
  %v2707 = vpack.c.b16 %v1839, %v1835
  %v2708 = vpack.c.b16 %v1840, %v1836
  %v2709 = vpack.c.b16 %v1841, %v1837
  %v2710 = vpack.c.b16 %v1846, %v1842
  %v2711 = vpack.c.b16 %v1847, %v1843
  %v2712 = vpack.c.b16 %v1848, %v1844
  %v2713 = vpack.c.b16 %v1849, %v1845
  %v2714 = vpack.c.b16 %v1854, %v1850
  %v2715 = vpack.c.b16 %v1855, %v1851
  %v2716 = vpack.c.b16 %v1856, %v1852
  %v2717 = vpack.c.b16 %v1857, %v1853
  %v2718 = vpack.c.b16 %v1862, %v1858
  %v2719 = vpack.c.b16 %v1863, %v1859
  %v2720 = vpack.c.b16 %v1864, %v1860
  %v2721 = vpack.c.b16 %v1865, %v1861
  %v2722 = vpack.c.b16 %v1870, %v1866
  %v2723 = vpack.c.b16 %v1871, %v1867
  %v2724 = vpack.c.b16 %v1872, %v1868
  %v2725 = vpack.c.b16 %v1873, %v1869
  %v2726 = vpack.c.b16 %v1878, %v1874
  %v2727 = vpack.c.b16 %v1879, %v1875
  %v2728 = vpack.c.b16 %v1880, %v1876
  %v2729 = vpack.c.b16 %v1881, %v1877
  %v2730 = vpack.c.b16 %v1886, %v1882
  %v2731 = vpack.c.b16 %v1887, %v1883
  %v2732 = vpack.c.b16 %v1888, %v1884
  %v2733 = vpack.c.b16 %v1889, %v1885
  %v2734 = vpack.c.b16 %v1894, %v1890
  %v2735 = vpack.c.b16 %v1895, %v1891
  %v2736 = vpack.c.b16 %v1896, %v1892
  %v2737 = vpack.c.b16 %v1897, %v1893
  %v2738 = vpack.c.b16 %v1902, %v1898
  %v2739 = vpack.c.b16 %v1903, %v1899
  %v2740 = vpack.c.b16 %v1904, %v1900
  %v2741 = vpack.c.b16 %v1905, %v1901
  %v2742 = vpack.c.b16 %v1910, %v1906
  %v2743 = vpack.c.b16 %v1911, %v1907
  %v2744 = vpack.c.b16 %v1912, %v1908
  %v2745 = vpack.c.b16 %v1913, %v1909
  %v2746 = vpack.c.b16 %v1918, %v1914
  %v2747 = vpack.c.b16 %v1919, %v1915
  %v2748 = vpack.c.b16 %v1920, %v1916
  %v2749 = vpack.c.b16 %v1921, %v1917
  %v2750 = vpack.c.b16 %v1926, %v1922
  %v2751 = vpack.c.b16 %v1927, %v1923
  %v2752 = vpack.c.b16 %v1928, %v1924
  %v2753 = vpack.c.b16 %v1929, %v1925
  %v2754 = vpack.c.b16 %v1934, %v1930
  %v2755 = vpack.c.b16 %v1935, %v1931
  %v2756 = vpack.c.b16 %v1936, %v1932
  %v2757 = vpack.c.b16 %v1937, %v1933
  %v2758 = vpack.c.b16 %v1942, %v1938
  %v2759 = vpack.c.b16 %v1943, %v1939
  %v2760 = vpack.c.b16 %v1944, %v1940
  %v2761 = vpack.c.b16 %v1945, %v1941
  %v2762 = vpack.c.b16 %v1950, %v1946
  %v2763 = vpack.c.b16 %v1951, %v1947
  %v2764 = vpack.c.b16 %v1952, %v1948
  %v2765 = vpack.c.b16 %v1953, %v1949
  %v2766 = vpack.c.b16 %v1958, %v1954
  %v2767 = vpack.c.b16 %v1959, %v1955
  %v2768 = vpack.c.b16 %v1960, %v1956
  %v2769 = vpack.c.b16 %v1961, %v1957
  %v2770 = vpack.c.b16 %v1966, %v1962
  %v2771 = vpack.c.b16 %v1967, %v1963
  %v2772 = vpack.c.b16 %v1968, %v1964
  %v2773 = vpack.c.b16 %v1969, %v1965
  %v2774 = vpack.c.b16 %v1974, %v1970
  %v2775 = vpack.c.b16 %v1975, %v1971
  %v2776 = vpack.c.b16 %v1976, %v1972
  %v2777 = vpack.c.b16 %v1977, %v1973
  %v2778 = vpack.c.b16 %v1982, %v1978
  %v2779 = vpack.c.b16 %v1983, %v1979
  %v2780 = vpack.c.b16 %v1984, %v1980
  %v2781 = vpack.c.b16 %v1985, %v1981
  %v2782 = vpack.c.b16 %v1990, %v1986
  %v2783 = vpack.c.b16 %v1991, %v1987
  %v2784 = vpack.c.b16 %v1992, %v1988
  %v2785 = vpack.c.b16 %v1993, %v1989
  %v2786 = vpack.c.b16 %v1998, %v1994
  %v2787 = vpack.c.b16 %v1999, %v1995
  %v2788 = vpack.c.b16 %v2000, %v1996
  %v2789 = vpack.c.b16 %v2001, %v1997
  %v2790 = vpack.c.b16 %v2006, %v2002
  %v2791 = vpack.c.b16 %v2007, %v2003
  %v2792 = vpack.c.b16 %v2008, %v2004
  %v2793 = vpack.c.b16 %v2009, %v2005
  %v2794 = vpack.c.b16 %v2014, %v2010
  %v2795 = vpack.c.b16 %v2015, %v2011
  %v2796 = vpack.c.b16 %v2016, %v2012
  %v2797 = vpack.c.b16 %v2017, %v2013
  %v2798 = vpack.c.b16 %v2022, %v2018
  %v2799 = vpack.c.b16 %v2023, %v2019
  %v2800 = vpack.c.b16 %v2024, %v2020
  %v2801 = vpack.c.b16 %v2025, %v2021
  %v2802 = vpack.c.b16 %v2030, %v2026
  %v2803 = vpack.c.b16 %v2031, %v2027
  %v2804 = vpack.c.b16 %v2032, %v2028
  %v2805 = vpack.c.b16 %v2033, %v2029
  %v2806 = vpack.c.b16 %v2038, %v2034
  %v2807 = vpack.c.b16 %v2039, %v2035
  %v2808 = vpack.c.b16 %v2040, %v2036
  %v2809 = vpack.c.b16 %v2041, %v2037
  %v2810 = vpack.c.b16 %v2046, %v2042
  %v2811 = vpack.c.b16 %v2047, %v2043
  %v2812 = vpack.c.b16 %v2048, %v2044
  %v2813 = vpack.c.b16 %v2049, %v2045
  %v2814 = vpack.c.b16 %v2054, %v2050
  %v2815 = vpack.c.b16 %v2055, %v2051
  %v2816 = vpack.c.b16 %v2056, %v2052
  %v2817 = vpack.c.b16 %v2057, %v2053
  %v2818 = vpack.c.b16 %v2062, %v2058
  %v2819 = vpack.c.b16 %v2063, %v2059
  %v2820 = vpack.c.b16 %v2064, %v2060
  %v2821 = vpack.c.b16 %v2065, %v2061
  %v2822 = vpack.c.b16 %v2070, %v2066
  %v2823 = vpack.c.b16 %v2071, %v2067
  %v2824 = vpack.c.b16 %v2072, %v2068
  %v2825 = vpack.c.b16 %v2073, %v2069
  %v2826 = vpack.c.b16 %v2078, %v2074
  %v2827 = vpack.c.b16 %v2079, %v2075
  %v2828 = vpack.c.b16 %v2080, %v2076
  %v2829 = vpack.c.b16 %v2081, %v2077
  %v2830 = vpack.c.b16 %v2086, %v2082
  %v2831 = vpack.c.b16 %v2087, %v2083
  %v2832 = vpack.c.b16 %v2088, %v2084
  %v2833 = vpack.c.b16 %v2089, %v2085
  %v2834 = vpack.c.b16 %v2094, %v2090
  %v2835 = vpack.c.b16 %v2095, %v2091
  %v2836 = vpack.c.b16 %v2096, %v2092
  %v2837 = vpack.c.b16 %v2097, %v2093
  %v2838 = vpack.c.b16 %v2102, %v2098
  %v2839 = vpack.c.b16 %v2103, %v2099
  %v2840 = vpack.c.b16 %v2104, %v2100
  %v2841 = vpack.c.b16 %v2105, %v2101
  %v2842 = vpack.c.b16 %v2110, %v2106
  %v2843 = vpack.c.b16 %v2111, %v2107
  %v2844 = vpack.c.b16 %v2112, %v2108
  %v2845 = vpack.c.b16 %v2113, %v2109
  %v2846 = vpack.c.b16 %v2118, %v2114
  %v2847 = vpack.c.b16 %v2119, %v2115
  %v2848 = vpack.c.b16 %v2120, %v2116
  %v2849 = vpack.c.b16 %v2121, %v2117
  %v2850 = vpack.c.b16 %v2126, %v2122
  %v2851 = vpack.c.b16 %v2127, %v2123
  %v2852 = vpack.c.b16 %v2128, %v2124
  %v2853 = vpack.c.b16 %v2129, %v2125
  %v2854 = vpack.c.b16 %v2134, %v2130
  %v2855 = vpack.c.b16 %v2135, %v2131
  %v2856 = vpack.c.b16 %v2136, %v2132
  %v2857 = vpack.c.b16 %v2137, %v2133
  %v2858 = vpack.c.b16 %v2142, %v2138
  %v2859 = vpack.c.b16 %v2143, %v2139
  %v2860 = vpack.c.b16 %v2144, %v2140
  %v2861 = vpack.c.b16 %v2145, %v2141
  %v2862 = vpack.c.b16 %v2150, %v2146
  %v2863 = vpack.c.b16 %v2151, %v2147
  %v2864 = vpack.c.b16 %v2152, %v2148
  %v2865 = vpack.c.b16 %v2153, %v2149
  %v2866 = vpack.c.b16 %v2158, %v2154
  %v2867 = vpack.c.b16 %v2159, %v2155
  %v2868 = vpack.c.b16 %v2160, %v2156
  %v2869 = vpack.c.b16 %v2161, %v2157
  %v2870 = vpack.c.b16 %v2166, %v2162
  %v2871 = vpack.c.b16 %v2167, %v2163
  %v2872 = vpack.c.b16 %v2168, %v2164
  %v2873 = vpack.c.b16 %v2169, %v2165
  %v2874 = vpack.c.b16 %v2174, %v2170
  %v2875 = vpack.c.b16 %v2175, %v2171
  %v2876 = vpack.c.b16 %v2176, %v2172
  %v2877 = vpack.c.b16 %v2177, %v2173
  %v2878 = vpack.c.b16 %v2182, %v2178
  %v2879 = vpack.c.b16 %v2183, %v2179
  %v2880 = vpack.c.b16 %v2184, %v2180
  %v2881 = vpack.c.b16 %v2185, %v2181
  %v2882 = vpack.c.b16 %v2190, %v2186
  %v2883 = vpack.c.b16 %v2191, %v2187
  %v2884 = vpack.c.b16 %v2192, %v2188
  %v2885 = vpack.c.b16 %v2193, %v2189
  %v2886 = vpack.c.b16 %v2198, %v2194
  %v2887 = vpack.c.b16 %v2199, %v2195
  %v2888 = vpack.c.b16 %v2200, %v2196
  %v2889 = vpack.c.b16 %v2201, %v2197
  %v2890 = vpack.c.b16 %v2206, %v2202
  %v2891 = vpack.c.b16 %v2207, %v2203
  %v2892 = vpack.c.b16 %v2208, %v2204
  %v2893 = vpack.c.b16 %v2209, %v2205
  %v2894 = vpack.c.b16 %v2214, %v2210
  %v2895 = vpack.c.b16 %v2215, %v2211
  %v2896 = vpack.c.b16 %v2216, %v2212
  %v2897 = vpack.c.b16 %v2217, %v2213
  %v2898 = vpack.c.b16 %v2222, %v2218
  %v2899 = vpack.c.b16 %v2223, %v2219
  %v2900 = vpack.c.b16 %v2224, %v2220
  %v2901 = vpack.c.b16 %v2225, %v2221
  %v2902 = vpack.c.b16 %v2230, %v2226
  %v2903 = vpack.c.b16 %v2231, %v2227
  %v2904 = vpack.c.b16 %v2232, %v2228
  %v2905 = vpack.c.b16 %v2233, %v2229
  %v2906 = vpack.c.b16 %v2238, %v2234
  %v2907 = vpack.c.b16 %v2239, %v2235
  %v2908 = vpack.c.b16 %v2240, %v2236
  %v2909 = vpack.c.b16 %v2241, %v2237
  %v2910 = vpack.c.b16 %v2246, %v2242
  %v2911 = vpack.c.b16 %v2247, %v2243
  %v2912 = vpack.c.b16 %v2248, %v2244
  %v2913 = vpack.c.b16 %v2249, %v2245
  %v2914 = vpack.c.b16 %v2254, %v2250
  %v2915 = vpack.c.b16 %v2255, %v2251
  %v2916 = vpack.c.b16 %v2256, %v2252
  %v2917 = vpack.c.b16 %v2257, %v2253
  %v2918 = vpack.c.b16 %v2262, %v2258
  %v2919 = vpack.c.b16 %v2263, %v2259
  %v2920 = vpack.c.b16 %v2264, %v2260
  %v2921 = vpack.c.b16 %v2265, %v2261
  %v2922 = vpack.c.b16 %v2270, %v2266
  %v2923 = vpack.c.b16 %v2271, %v2267
  %v2924 = vpack.c.b16 %v2272, %v2268
  %v2925 = vpack.c.b16 %v2273, %v2269
  %v2926 = vpack.c.b16 %v2278, %v2274
  %v2927 = vpack.c.b16 %v2279, %v2275
  %v2928 = vpack.c.b16 %v2280, %v2276
  %v2929 = vpack.c.b16 %v2281, %v2277
  %v2930 = vpack.c.b16 %v2286, %v2282
  %v2931 = vpack.c.b16 %v2287, %v2283
  %v2932 = vpack.c.b16 %v2288, %v2284
  %v2933 = vpack.c.b16 %v2289, %v2285
  %v2934 = vpack.c.b16 %v2294, %v2290
  %v2935 = vpack.c.b16 %v2295, %v2291
  %v2936 = vpack.c.b16 %v2296, %v2292
  %v2937 = vpack.c.b16 %v2297, %v2293
  %v2938 = vpack.c.b16 %v2302, %v2298
  %v2939 = vpack.c.b16 %v2303, %v2299
  %v2940 = vpack.c.b16 %v2304, %v2300
  %v2941 = vpack.c.b16 %v2305, %v2301
  %v2942 = vpack.c.b16 %v2310, %v2306
  %v2943 = vpack.c.b16 %v2311, %v2307
  %v2944 = vpack.c.b16 %v2312, %v2308
  %v2945 = vpack.c.b16 %v2313, %v2309
  %v2946 = vpack.c.b16 %v2318, %v2314
  %v2947 = vpack.c.b16 %v2319, %v2315
  %v2948 = vpack.c.b16 %v2320, %v2316
  %v2949 = vpack.c.b16 %v2321, %v2317
  %v2950 = vpack.c.b16 %v2326, %v2322
  %v2951 = vpack.c.b16 %v2327, %v2323
  %v2952 = vpack.c.b16 %v2328, %v2324
  %v2953 = vpack.c.b16 %v2329, %v2325
  %v2954 = vpack.c.b16 %v2334, %v2330
  %v2955 = vpack.c.b16 %v2335, %v2331
  %v2956 = vpack.c.b16 %v2336, %v2332
  %v2957 = vpack.c.b16 %v2337, %v2333
  %v2958 = vpack.c.b16 %v2342, %v2338
  %v2959 = vpack.c.b16 %v2343, %v2339
  %v2960 = vpack.c.b16 %v2344, %v2340
  %v2961 = vpack.c.b16 %v2345, %v2341
  %v2962 = vpack.c.b16 %v2350, %v2346
  %v2963 = vpack.c.b16 %v2351, %v2347
  %v2964 = vpack.c.b16 %v2352, %v2348
  %v2965 = vpack.c.b16 %v2353, %v2349
  %v2966 = vpack.c.b16 %v2358, %v2354
  %v2967 = vpack.c.b16 %v2359, %v2355
  %v2968 = vpack.c.b16 %v2360, %v2356
  %v2969 = vpack.c.b16 %v2361, %v2357
  %v2970 = vpack.c.b16 %v2366, %v2362
  %v2971 = vpack.c.b16 %v2367, %v2363
  %v2972 = vpack.c.b16 %v2368, %v2364
  %v2973 = vpack.c.b16 %v2369, %v2365
  %v2974 = vpack.c.b16 %v2374, %v2370
  %v2975 = vpack.c.b16 %v2375, %v2371
  %v2976 = vpack.c.b16 %v2376, %v2372
  %v2977 = vpack.c.b16 %v2377, %v2373
  %v2978 = vpack.c.b16 %v2382, %v2378
  %v2979 = vpack.c.b16 %v2383, %v2379
  %v2980 = vpack.c.b16 %v2384, %v2380
  %v2981 = vpack.c.b16 %v2385, %v2381
  %v2982 = vpack.c.b16 %v2390, %v2386
  %v2983 = vpack.c.b16 %v2391, %v2387
  %v2984 = vpack.c.b16 %v2392, %v2388
  %v2985 = vpack.c.b16 %v2393, %v2389
  %v2986 = vpack.c.b16 %v2398, %v2394
  %v2987 = vpack.c.b16 %v2399, %v2395
  %v2988 = vpack.c.b16 %v2400, %v2396
  %v2989 = vpack.c.b16 %v2401, %v2397
  %v2990 = vpack.c.b16 %v2406, %v2402
  %v2991 = vpack.c.b16 %v2407, %v2403
  %v2992 = vpack.c.b16 %v2408, %v2404
  %v2993 = vpack.c.b16 %v2409, %v2405
  %v2994 = vpack.c.b16 %v2414, %v2410
  %v2995 = vpack.c.b16 %v2415, %v2411
  %v2996 = vpack.c.b16 %v2416, %v2412
  %v2997 = vpack.c.b16 %v2417, %v2413
  %v2998 = vpack.c.b16 %v2422, %v2418
  %v2999 = vpack.c.b16 %v2423, %v2419
  %v3000 = vpack.c.b16 %v2424, %v2420
  %v3001 = vpack.c.b16 %v2425, %v2421
  %3578 = vmatprep.subr.bf16.mxu0 %v2427
  %3579 = vmatpush1.bf16.msra.mxu0 %v2426
  %3580 = vmatprep.subr.bf16.mxu0 %v2431
  %3581 = vmatpush1.bf16.msra.mxu0 %v2430
  %3582 = vmatprep.subr.bf16.mxu0 %v2435
  %3583 = vmatpush1.bf16.msra.mxu0 %v2434
  %3584 = vmatprep.subr.bf16.mxu0 %v2439
  %3585 = vmatpush1.bf16.msra.mxu0 %v2438
  %3586 = vmatprep.subr.bf16.mxu0 %v2443
  %3587 = vmatpush1.bf16.msra.mxu0 %v2442
  %3588 = vmatprep.subr.bf16.mxu0 %v2447
  %3589 = vmatpush1.bf16.msra.mxu0 %v2446
  %3590 = vmatprep.subr.bf16.mxu0 %v2451
  %3591 = vmatpush1.bf16.msra.mxu0 %v2450
  %3592 = vmatprep.subr.bf16.mxu0 %v2455
  %3593 = vmatpush1.bf16.msra.mxu0 %v2454
  %3594 = vmatprep.subr.bf16.mxu0 %v2459
  %3595 = vmatpush1.bf16.msra.mxu0 %v2458
  %3596 = vmatprep.subr.bf16.mxu0 %v2463
  %3597 = vmatpush1.bf16.msra.mxu0 %v2462
  %3598 = vmatprep.subr.bf16.mxu0 %v2467
  %3599 = vmatpush1.bf16.msra.mxu0 %v2466
  %3600 = vmatprep.subr.bf16.mxu0 %v2471
  %3601 = vmatpush1.bf16.msra.mxu0 %v2470
  %3602 = vmatprep.subr.bf16.mxu0 %v2475
  %3603 = vmatpush1.bf16.msra.mxu0 %v2474
  %3604 = vmatprep.subr.bf16.mxu0 %v2479
  %3605 = vmatpush1.bf16.msra.mxu0 %v2478
  %3606 = vmatprep.subr.bf16.mxu0 %v2483
  %3607 = vmatpush1.bf16.msra.mxu0 %v2482
  %3608 = vmatprep.subr.bf16.mxu0 %v2487
  %3609 = vmatpush1.bf16.msra.mxu0 %v2486
  %3610 = vmatprep.mubr.bf16.mxu0 %v663
  %3611 = vmatmul.mubr.bf16.gmra.mrb[0].mxu0 %v662
  %v3612 = vpop.f32.mrb[0].mxu0
  %v3613 = vadd.f32 0.0, %v3612
  %v3614 = vpop.f32.mrb[0].mxu0
  %v3615 = vadd.f32 0.0, %v3614
  %v3616 = vpop.f32.mrb[0].mxu0
  %v3617 = vadd.f32 0.0, %v3616
  %v3618 = vpop.f32.mrb[0].mxu0
  %v3619 = vadd.f32 0.0, %v3618
  %3620 = vdwg.mxu0
  %3621 = vmatprep.subr.bf16.mxu0 %v2491
  %3622 = vmatpush1.bf16.msra.mxu0 %v2490
  %3623 = vmatprep.subr.bf16.mxu0 %v2495
  %3624 = vmatpush1.bf16.msra.mxu0 %v2494
  %3625 = vmatprep.subr.bf16.mxu0 %v2499
  %3626 = vmatpush1.bf16.msra.mxu0 %v2498
  %3627 = vmatprep.subr.bf16.mxu0 %v2503
  %3628 = vmatpush1.bf16.msra.mxu0 %v2502
  %3629 = vmatprep.subr.bf16.mxu0 %v2507
  %3630 = vmatpush1.bf16.msra.mxu0 %v2506
  %3631 = vmatprep.subr.bf16.mxu0 %v2511
  %3632 = vmatpush1.bf16.msra.mxu0 %v2510
  %3633 = vmatprep.subr.bf16.mxu0 %v2515
  %3634 = vmatpush1.bf16.msra.mxu0 %v2514
  %3635 = vmatprep.subr.bf16.mxu0 %v2519
  %3636 = vmatpush1.bf16.msra.mxu0 %v2518
  %3637 = vmatprep.subr.bf16.mxu0 %v2523
  %3638 = vmatpush1.bf16.msra.mxu0 %v2522
  %3639 = vmatprep.subr.bf16.mxu0 %v2527
  %3640 = vmatpush1.bf16.msra.mxu0 %v2526
  %3641 = vmatprep.subr.bf16.mxu0 %v2531
  %3642 = vmatpush1.bf16.msra.mxu0 %v2530
  %3643 = vmatprep.subr.bf16.mxu0 %v2535
  %3644 = vmatpush1.bf16.msra.mxu0 %v2534
  %3645 = vmatprep.subr.bf16.mxu0 %v2539
  %3646 = vmatpush1.bf16.msra.mxu0 %v2538
  %3647 = vmatprep.subr.bf16.mxu0 %v2543
  %3648 = vmatpush1.bf16.msra.mxu0 %v2542
  %3649 = vmatprep.subr.bf16.mxu0 %v2547
  %3650 = vmatpush1.bf16.msra.mxu0 %v2546
  %3651 = vmatprep.subr.bf16.mxu0 %v2551
  %3652 = vmatpush1.bf16.msra.mxu0 %v2550
  %3653 = vmatprep.mubr.bf16.mxu0 %v665
  %3654 = vmatmul.mubr.bf16.gmra.mrb[0].mxu0 %v664
  %v3655 = vpop.f32.mrb[0].mxu0
  %v3656 = vadd.f32 %v3613, %v3655
  %v3657 = vpop.f32.mrb[0].mxu0
  %v3658 = vadd.f32 %v3615, %v3657
  %v3659 = vpop.f32.mrb[0].mxu0
  %v3660 = vadd.f32 %v3617, %v3659
  %v3661 = vpop.f32.mrb[0].mxu0
  %v3662 = vadd.f32 %v3619, %v3661
  %3663 = vdwg.mxu0
  %3664 = vmatprep.subr.bf16.mxu0 %v2555
  %3665 = vmatpush1.bf16.msra.mxu0 %v2554
  %3666 = vmatprep.subr.bf16.mxu0 %v2559
  %3667 = vmatpush1.bf16.msra.mxu0 %v2558
  %3668 = vmatprep.subr.bf16.mxu0 %v2563
  %3669 = vmatpush1.bf16.msra.mxu0 %v2562
  %3670 = vmatprep.subr.bf16.mxu0 %v2567
  %3671 = vmatpush1.bf16.msra.mxu0 %v2566
  %3672 = vmatprep.subr.bf16.mxu0 %v2571
  %3673 = vmatpush1.bf16.msra.mxu0 %v2570
  %3674 = vmatprep.subr.bf16.mxu0 %v2575
  %3675 = vmatpush1.bf16.msra.mxu0 %v2574
  %3676 = vmatprep.subr.bf16.mxu0 %v2579
  %3677 = vmatpush1.bf16.msra.mxu0 %v2578
  %3678 = vmatprep.subr.bf16.mxu0 %v2583
  %3679 = vmatpush1.bf16.msra.mxu0 %v2582
  %3680 = vmatprep.subr.bf16.mxu0 %v2587
  %3681 = vmatpush1.bf16.msra.mxu0 %v2586
  %3682 = vmatprep.subr.bf16.mxu0 %v2591
  %3683 = vmatpush1.bf16.msra.mxu0 %v2590
  %3684 = vmatprep.subr.bf16.mxu0 %v2595
  %3685 = vmatpush1.bf16.msra.mxu0 %v2594
  %3686 = vmatprep.subr.bf16.mxu0 %v2599
  %3687 = vmatpush1.bf16.msra.mxu0 %v2598
  %3688 = vmatprep.subr.bf16.mxu0 %v2603
  %3689 = vmatpush1.bf16.msra.mxu0 %v2602
  %3690 = vmatprep.subr.bf16.mxu0 %v2607
  %3691 = vmatpush1.bf16.msra.mxu0 %v2606
  %3692 = vmatprep.subr.bf16.mxu0 %v2611
  %3693 = vmatpush1.bf16.msra.mxu0 %v2610
  %3694 = vmatprep.subr.bf16.mxu0 %v2615
  %3695 = vmatpush1.bf16.msra.mxu0 %v2614
  %3696 = vmatprep.mubr.bf16.mxu0 %v667
  %3697 = vmatmul.mubr.bf16.gmra.mrb[0].mxu0 %v666
  %v3698 = vpop.f32.mrb[0].mxu0
  %v3699 = vadd.f32 %v3656, %v3698
  %v3700 = vpop.f32.mrb[0].mxu0
  %v3701 = vadd.f32 %v3658, %v3700
  %v3702 = vpop.f32.mrb[0].mxu0
  %v3703 = vadd.f32 %v3660, %v3702
  %v3704 = vpop.f32.mrb[0].mxu0
  %v3705 = vadd.f32 %v3662, %v3704
  %3706 = vdwg.mxu0
  %3707 = vmatprep.subr.bf16.mxu0 %v2619
  %3708 = vmatpush1.bf16.msra.mxu0 %v2618
  %3709 = vmatprep.subr.bf16.mxu0 %v2623
  %3710 = vmatpush1.bf16.msra.mxu0 %v2622
  %3711 = vmatprep.subr.bf16.mxu0 %v2627
  %3712 = vmatpush1.bf16.msra.mxu0 %v2626
  %3713 = vmatprep.subr.bf16.mxu0 %v2631
  %3714 = vmatpush1.bf16.msra.mxu0 %v2630
  %3715 = vmatprep.subr.bf16.mxu0 %v2635
  %3716 = vmatpush1.bf16.msra.mxu0 %v2634
  %3717 = vmatprep.subr.bf16.mxu0 %v2639
  %3718 = vmatpush1.bf16.msra.mxu0 %v2638
  %3719 = vmatprep.subr.bf16.mxu0 %v2643
  %3720 = vmatpush1.bf16.msra.mxu0 %v2642
  %3721 = vmatprep.subr.bf16.mxu0 %v2647
  %3722 = vmatpush1.bf16.msra.mxu0 %v2646
  %3723 = vmatprep.subr.bf16.mxu0 %v2651
  %3724 = vmatpush1.bf16.msra.mxu0 %v2650
  %3725 = vmatprep.subr.bf16.mxu0 %v2655
  %3726 = vmatpush1.bf16.msra.mxu0 %v2654
  %3727 = vmatprep.subr.bf16.mxu0 %v2659
  %3728 = vmatpush1.bf16.msra.mxu0 %v2658
  %3729 = vmatprep.subr.bf16.mxu0 %v2663
  %3730 = vmatpush1.bf16.msra.mxu0 %v2662
  %3731 = vmatprep.subr.bf16.mxu0 %v2667
  %3732 = vmatpush1.bf16.msra.mxu0 %v2666
  %3733 = vmatprep.subr.bf16.mxu0 %v2671
  %3734 = vmatpush1.bf16.msra.mxu0 %v2670
  %3735 = vmatprep.subr.bf16.mxu0 %v2675
  %3736 = vmatpush1.bf16.msra.mxu0 %v2674
  %3737 = vmatprep.subr.bf16.mxu0 %v2679
  %3738 = vmatpush1.bf16.msra.mxu0 %v2678
  %3739 = vmatprep.mubr.bf16.mxu0 %v669
  %3740 = vmatmul.mubr.bf16.gmra.mrb[0].mxu0 %v668
  %v3741 = vpop.f32.mrb[0].mxu0
  %v3742 = vadd.f32 %v3699, %v3741
  %v3743 = vpop.f32.mrb[0].mxu0
  %v3744 = vadd.f32 %v3701, %v3743
  %v3745 = vpop.f32.mrb[0].mxu0
  %v3746 = vadd.f32 %v3703, %v3745
  %v3747 = vpop.f32.mrb[0].mxu0
  %v3748 = vadd.f32 %v3705, %v3747
  %3749 = vdwg.mxu0
  %3750 = vmatprep.subr.bf16.mxu0 %v2683
  %3751 = vmatpush1.bf16.msra.mxu0 %v2682
  %3752 = vmatprep.subr.bf16.mxu0 %v2687
  %3753 = vmatpush1.bf16.msra.mxu0 %v2686
  %3754 = vmatprep.subr.bf16.mxu0 %v2691
  %3755 = vmatpush1.bf16.msra.mxu0 %v2690
  %3756 = vmatprep.subr.bf16.mxu0 %v2695
  %3757 = vmatpush1.bf16.msra.mxu0 %v2694
  %3758 = vmatprep.subr.bf16.mxu0 %v2699
  %3759 = vmatpush1.bf16.msra.mxu0 %v2698
  %3760 = vmatprep.subr.bf16.mxu0 %v2703
  %3761 = vmatpush1.bf16.msra.mxu0 %v2702
  %3762 = vmatprep.subr.bf16.mxu0 %v2707
  %3763 = vmatpush1.bf16.msra.mxu0 %v2706
  %3764 = vmatprep.subr.bf16.mxu0 %v2711
  %3765 = vmatpush1.bf16.msra.mxu0 %v2710
  %3766 = vmatprep.subr.bf16.mxu0 %v2715
  %3767 = vmatpush1.bf16.msra.mxu0 %v2714
  %3768 = vmatprep.subr.bf16.mxu0 %v2719
  %3769 = vmatpush1.bf16.msra.mxu0 %v2718
  %3770 = vmatprep.subr.bf16.mxu0 %v2723
  %3771 = vmatpush1.bf16.msra.mxu0 %v2722
  %3772 = vmatprep.subr.bf16.mxu0 %v2727
  %3773 = vmatpush1.bf16.msra.mxu0 %v2726
  %3774 = vmatprep.subr.bf16.mxu0 %v2731
  %3775 = vmatpush1.bf16.msra.mxu0 %v2730
  %3776 = vmatprep.subr.bf16.mxu0 %v2735
  %3777 = vmatpush1.bf16.msra.mxu0 %v2734
  %3778 = vmatprep.subr.bf16.mxu0 %v2739
  %3779 = vmatpush1.bf16.msra.mxu0 %v2738
  %3780 = vmatprep.subr.bf16.mxu0 %v2743
  %3781 = vmatpush1.bf16.msra.mxu0 %v2742
  %3782 = vmatprep.mubr.bf16.mxu0 %v671
  %3783 = vmatmul.mubr.bf16.gmra.mrb[0].mxu0 %v670
  %v3784 = vpop.f32.mrb[0].mxu0
  %v3785 = vadd.f32 %v3742, %v3784
  %v3786 = vpop.f32.mrb[0].mxu0
  %v3787 = vadd.f32 %v3744, %v3786
  %v3788 = vpop.f32.mrb[0].mxu0
  %v3789 = vadd.f32 %v3746, %v3788
  %v3790 = vpop.f32.mrb[0].mxu0
  %v3791 = vadd.f32 %v3748, %v3790
  %3792 = vdwg.mxu0
  %3793 = vmatprep.subr.bf16.mxu0 %v2747
  %3794 = vmatpush1.bf16.msra.mxu0 %v2746
  %3795 = vmatprep.subr.bf16.mxu0 %v2751
  %3796 = vmatpush1.bf16.msra.mxu0 %v2750
  %3797 = vmatprep.subr.bf16.mxu0 %v2755
  %3798 = vmatpush1.bf16.msra.mxu0 %v2754
  %3799 = vmatprep.subr.bf16.mxu0 %v2759
  %3800 = vmatpush1.bf16.msra.mxu0 %v2758
  %3801 = vmatprep.subr.bf16.mxu0 %v2763
  %3802 = vmatpush1.bf16.msra.mxu0 %v2762
  %3803 = vmatprep.subr.bf16.mxu0 %v2767
  %3804 = vmatpush1.bf16.msra.mxu0 %v2766
  %3805 = vmatprep.subr.bf16.mxu0 %v2771
  %3806 = vmatpush1.bf16.msra.mxu0 %v2770
  %3807 = vmatprep.subr.bf16.mxu0 %v2775
  %3808 = vmatpush1.bf16.msra.mxu0 %v2774
  %3809 = vmatprep.subr.bf16.mxu0 %v2779
  %3810 = vmatpush1.bf16.msra.mxu0 %v2778
  %3811 = vmatprep.subr.bf16.mxu0 %v2783
  %3812 = vmatpush1.bf16.msra.mxu0 %v2782
  %3813 = vmatprep.subr.bf16.mxu0 %v2787
  %3814 = vmatpush1.bf16.msra.mxu0 %v2786
  %3815 = vmatprep.subr.bf16.mxu0 %v2791
  %3816 = vmatpush1.bf16.msra.mxu0 %v2790
  %3817 = vmatprep.subr.bf16.mxu0 %v2795
  %3818 = vmatpush1.bf16.msra.mxu0 %v2794
  %3819 = vmatprep.subr.bf16.mxu0 %v2799
  %3820 = vmatpush1.bf16.msra.mxu0 %v2798
  %3821 = vmatprep.subr.bf16.mxu0 %v2803
  %3822 = vmatpush1.bf16.msra.mxu0 %v2802
  %3823 = vmatprep.subr.bf16.mxu0 %v2807
  %3824 = vmatpush1.bf16.msra.mxu0 %v2806
  %3825 = vmatprep.mubr.bf16.mxu0 %v673
  %3826 = vmatmul.mubr.bf16.gmra.mrb[0].mxu0 %v672
  %v3827 = vpop.f32.mrb[0].mxu0
  %v3828 = vadd.f32 %v3785, %v3827
  %v3829 = vpop.f32.mrb[0].mxu0
  %v3830 = vadd.f32 %v3787, %v3829
  %v3831 = vpop.f32.mrb[0].mxu0
  %v3832 = vadd.f32 %v3789, %v3831
  %v3833 = vpop.f32.mrb[0].mxu0
  %v3834 = vadd.f32 %v3791, %v3833
  %3835 = vdwg.mxu0
  %3836 = vmatprep.subr.bf16.mxu0 %v2811
  %3837 = vmatpush1.bf16.msra.mxu0 %v2810
  %3838 = vmatprep.subr.bf16.mxu0 %v2815
  %3839 = vmatpush1.bf16.msra.mxu0 %v2814
  %3840 = vmatprep.subr.bf16.mxu0 %v2819
  %3841 = vmatpush1.bf16.msra.mxu0 %v2818
  %3842 = vmatprep.subr.bf16.mxu0 %v2823
  %3843 = vmatpush1.bf16.msra.mxu0 %v2822
  %3844 = vmatprep.subr.bf16.mxu0 %v2827
  %3845 = vmatpush1.bf16.msra.mxu0 %v2826
  %3846 = vmatprep.subr.bf16.mxu0 %v2831
  %3847 = vmatpush1.bf16.msra.mxu0 %v2830
  %3848 = vmatprep.subr.bf16.mxu0 %v2835
  %3849 = vmatpush1.bf16.msra.mxu0 %v2834
  %3850 = vmatprep.subr.bf16.mxu0 %v2839
  %3851 = vmatpush1.bf16.msra.mxu0 %v2838
  %3852 = vmatprep.subr.bf16.mxu0 %v2843
  %3853 = vmatpush1.bf16.msra.mxu0 %v2842
  %3854 = vmatprep.subr.bf16.mxu0 %v2847
  %3855 = vmatpush1.bf16.msra.mxu0 %v2846
  %3856 = vmatprep.subr.bf16.mxu0 %v2851
  %3857 = vmatpush1.bf16.msra.mxu0 %v2850
  %3858 = vmatprep.subr.bf16.mxu0 %v2855
  %3859 = vmatpush1.bf16.msra.mxu0 %v2854
  %3860 = vmatprep.subr.bf16.mxu0 %v2859
  %3861 = vmatpush1.bf16.msra.mxu0 %v2858
  %3862 = vmatprep.subr.bf16.mxu0 %v2863
  %3863 = vmatpush1.bf16.msra.mxu0 %v2862
  %3864 = vmatprep.subr.bf16.mxu0 %v2867
  %3865 = vmatpush1.bf16.msra.mxu0 %v2866
  %3866 = vmatprep.subr.bf16.mxu0 %v2871
  %3867 = vmatpush1.bf16.msra.mxu0 %v2870
  %3868 = vmatprep.mubr.bf16.mxu0 %v675
  %3869 = vmatmul.mubr.bf16.gmra.mrb[0].mxu0 %v674
  %v3870 = vpop.f32.mrb[0].mxu0
  %v3871 = vadd.f32 %v3828, %v3870
  %v3872 = vpop.f32.mrb[0].mxu0
  %v3873 = vadd.f32 %v3830, %v3872
  %v3874 = vpop.f32.mrb[0].mxu0
  %v3875 = vadd.f32 %v3832, %v3874
  %v3876 = vpop.f32.mrb[0].mxu0
  %v3877 = vadd.f32 %v3834, %v3876
  %3878 = vdwg.mxu0
  %3879 = vmatprep.subr.bf16.mxu0 %v2875
  %3880 = vmatpush1.bf16.msra.mxu0 %v2874
  %3881 = vmatprep.subr.bf16.mxu0 %v2879
  %3882 = vmatpush1.bf16.msra.mxu0 %v2878
  %3883 = vmatprep.subr.bf16.mxu0 %v2883
  %3884 = vmatpush1.bf16.msra.mxu0 %v2882
  %3885 = vmatprep.subr.bf16.mxu0 %v2887
  %3886 = vmatpush1.bf16.msra.mxu0 %v2886
  %3887 = vmatprep.subr.bf16.mxu0 %v2891
  %3888 = vmatpush1.bf16.msra.mxu0 %v2890
  %3889 = vmatprep.subr.bf16.mxu0 %v2895
  %3890 = vmatpush1.bf16.msra.mxu0 %v2894
  %3891 = vmatprep.subr.bf16.mxu0 %v2899
  %3892 = vmatpush1.bf16.msra.mxu0 %v2898
  %3893 = vmatprep.subr.bf16.mxu0 %v2903
  %3894 = vmatpush1.bf16.msra.mxu0 %v2902
  %3895 = vmatprep.subr.bf16.mxu0 %v2907
  %3896 = vmatpush1.bf16.msra.mxu0 %v2906
  %3897 = vmatprep.subr.bf16.mxu0 %v2911
  %3898 = vmatpush1.bf16.msra.mxu0 %v2910
  %3899 = vmatprep.subr.bf16.mxu0 %v2915
  %3900 = vmatpush1.bf16.msra.mxu0 %v2914
  %3901 = vmatprep.subr.bf16.mxu0 %v2919
  %3902 = vmatpush1.bf16.msra.mxu0 %v2918
  %3903 = vmatprep.subr.bf16.mxu0 %v2923
  %3904 = vmatpush1.bf16.msra.mxu0 %v2922
  %3905 = vmatprep.subr.bf16.mxu0 %v2927
  %3906 = vmatpush1.bf16.msra.mxu0 %v2926
  %3907 = vmatprep.subr.bf16.mxu0 %v2931
  %3908 = vmatpush1.bf16.msra.mxu0 %v2930
  %3909 = vmatprep.subr.bf16.mxu0 %v2935
  %3910 = vmatpush1.bf16.msra.mxu0 %v2934
  %3911 = vmatprep.mubr.bf16.mxu0 %v677
  %3912 = vmatmul.mubr.bf16.gmra.mrb[0].mxu0 %v676
  %v3913 = vpop.f32.mrb[0].mxu0
  %v3914 = vadd.f32 %v3871, %v3913
  %v3915 = vpop.f32.mrb[0].mxu0
  %v3916 = vadd.f32 %v3873, %v3915
  %v3917 = vpop.f32.mrb[0].mxu0
  %v3918 = vadd.f32 %v3875, %v3917
  %v3919 = vpop.f32.mrb[0].mxu0
  %v3920 = vadd.f32 %v3877, %v3919
  %3921 = vdwg.mxu0
  %3922 = vmatprep.subr.bf16.mxu0 %v2939
  %3923 = vmatpush1.bf16.msra.mxu0 %v2938
  %3924 = vmatprep.subr.bf16.mxu0 %v2943
  %3925 = vmatpush1.bf16.msra.mxu0 %v2942
  %3926 = vmatprep.subr.bf16.mxu0 %v2947
  %3927 = vmatpush1.bf16.msra.mxu0 %v2946
  %3928 = vmatprep.subr.bf16.mxu0 %v2951
  %3929 = vmatpush1.bf16.msra.mxu0 %v2950
  %3930 = vmatprep.subr.bf16.mxu0 %v2955
  %3931 = vmatpush1.bf16.msra.mxu0 %v2954
  %3932 = vmatprep.subr.bf16.mxu0 %v2959
  %3933 = vmatpush1.bf16.msra.mxu0 %v2958
  %3934 = vmatprep.subr.bf16.mxu0 %v2963
  %3935 = vmatpush1.bf16.msra.mxu0 %v2962
  %3936 = vmatprep.subr.bf16.mxu0 %v2967
  %3937 = vmatpush1.bf16.msra.mxu0 %v2966
  %3938 = vmatprep.subr.bf16.mxu0 %v2971
  %3939 = vmatpush1.bf16.msra.mxu0 %v2970
  %3940 = vmatprep.subr.bf16.mxu0 %v2975
  %3941 = vmatpush1.bf16.msra.mxu0 %v2974
  %3942 = vmatprep.subr.bf16.mxu0 %v2979
  %3943 = vmatpush1.bf16.msra.mxu0 %v2978
  %3944 = vmatprep.subr.bf16.mxu0 %v2983
  %3945 = vmatpush1.bf16.msra.mxu0 %v2982
  %3946 = vmatprep.subr.bf16.mxu0 %v2987
  %3947 = vmatpush1.bf16.msra.mxu0 %v2986
  %3948 = vmatprep.subr.bf16.mxu0 %v2991
  %3949 = vmatpush1.bf16.msra.mxu0 %v2990
  %3950 = vmatprep.subr.bf16.mxu0 %v2995
  %3951 = vmatpush1.bf16.msra.mxu0 %v2994
  %3952 = vmatprep.subr.bf16.mxu0 %v2999
  %3953 = vmatpush1.bf16.msra.mxu0 %v2998
  %3954 = vmatprep.mubr.bf16.mxu0 %v679
  %3955 = vmatmul.mubr.bf16.gmra.mrb[0].mxu0 %v678
  %v3956 = vpop.f32.mrb[0].mxu0
  %v3957 = vadd.f32 %v3914, %v3956
  %v3958 = vpop.f32.mrb[0].mxu0
  %v3959 = vadd.f32 %v3916, %v3958
  %v3960 = vpop.f32.mrb[0].mxu0
  %v3961 = vadd.f32 %v3918, %v3960
  %v3962 = vpop.f32.mrb[0].mxu0
  %v3963 = vadd.f32 %v3920, %v3962
  %3964 = vdwg.mxu0
  %3965 = vmatprep.subr.bf16.mxu0 %v2429
  %3966 = vmatpush1.bf16.msra.mxu0 %v2428
  %3967 = vmatprep.subr.bf16.mxu0 %v2433
  %3968 = vmatpush1.bf16.msra.mxu0 %v2432
  %3969 = vmatprep.subr.bf16.mxu0 %v2437
  %3970 = vmatpush1.bf16.msra.mxu0 %v2436
  %3971 = vmatprep.subr.bf16.mxu0 %v2441
  %3972 = vmatpush1.bf16.msra.mxu0 %v2440
  %3973 = vmatprep.subr.bf16.mxu0 %v2445
  %3974 = vmatpush1.bf16.msra.mxu0 %v2444
  %3975 = vmatprep.subr.bf16.mxu0 %v2449
  %3976 = vmatpush1.bf16.msra.mxu0 %v2448
  %3977 = vmatprep.subr.bf16.mxu0 %v2453
  %3978 = vmatpush1.bf16.msra.mxu0 %v2452
  %3979 = vmatprep.subr.bf16.mxu0 %v2457
  %3980 = vmatpush1.bf16.msra.mxu0 %v2456
  %3981 = vmatprep.subr.bf16.mxu0 %v2461
  %3982 = vmatpush1.bf16.msra.mxu0 %v2460
  %3983 = vmatprep.subr.bf16.mxu0 %v2465
  %3984 = vmatpush1.bf16.msra.mxu0 %v2464
  %3985 = vmatprep.subr.bf16.mxu0 %v2469
  %3986 = vmatpush1.bf16.msra.mxu0 %v2468
  %3987 = vmatprep.subr.bf16.mxu0 %v2473
  %3988 = vmatpush1.bf16.msra.mxu0 %v2472
  %3989 = vmatprep.subr.bf16.mxu0 %v2477
  %3990 = vmatpush1.bf16.msra.mxu0 %v2476
  %3991 = vmatprep.subr.bf16.mxu0 %v2481
  %3992 = vmatpush1.bf16.msra.mxu0 %v2480
  %3993 = vmatprep.subr.bf16.mxu0 %v2485
  %3994 = vmatpush1.bf16.msra.mxu0 %v2484
  %3995 = vmatprep.subr.bf16.mxu0 %v2489
  %3996 = vmatpush1.bf16.msra.mxu0 %v2488
  %3997 = vmatprep.mubr.bf16.mxu0 %v663
  %3998 = vmatmul.mubr.bf16.gmra.mrb[0].mxu0 %v662
  %v3999 = vpop.f32.mrb[0].mxu0
  %v4000 = vadd.f32 0.0, %v3999
  %v4001 = vpop.f32.mrb[0].mxu0
  %v4002 = vadd.f32 0.0, %v4001
  %v4003 = vpop.f32.mrb[0].mxu0
  %v4004 = vadd.f32 0.0, %v4003
  %v4005 = vpop.f32.mrb[0].mxu0
  %v4006 = vadd.f32 0.0, %v4005
  %4007 = vdwg.mxu0
  %4008 = vmatprep.subr.bf16.mxu0 %v2493
  %4009 = vmatpush1.bf16.msra.mxu0 %v2492
  %4010 = vmatprep.subr.bf16.mxu0 %v2497
  %4011 = vmatpush1.bf16.msra.mxu0 %v2496
  %4012 = vmatprep.subr.bf16.mxu0 %v2501
  %4013 = vmatpush1.bf16.msra.mxu0 %v2500
  %4014 = vmatprep.subr.bf16.mxu0 %v2505
  %4015 = vmatpush1.bf16.msra.mxu0 %v2504
  %4016 = vmatprep.subr.bf16.mxu0 %v2509
  %4017 = vmatpush1.bf16.msra.mxu0 %v2508
  %4018 = vmatprep.subr.bf16.mxu0 %v2513
  %4019 = vmatpush1.bf16.msra.mxu0 %v2512
  %4020 = vmatprep.subr.bf16.mxu0 %v2517
  %4021 = vmatpush1.bf16.msra.mxu0 %v2516
  %4022 = vmatprep.subr.bf16.mxu0 %v2521
  %4023 = vmatpush1.bf16.msra.mxu0 %v2520
  %4024 = vmatprep.subr.bf16.mxu0 %v2525
  %4025 = vmatpush1.bf16.msra.mxu0 %v2524
  %4026 = vmatprep.subr.bf16.mxu0 %v2529
  %4027 = vmatpush1.bf16.msra.mxu0 %v2528
  %4028 = vmatprep.subr.bf16.mxu0 %v2533
  %4029 = vmatpush1.bf16.msra.mxu0 %v2532
  %4030 = vmatprep.subr.bf16.mxu0 %v2537
  %4031 = vmatpush1.bf16.msra.mxu0 %v2536
  %4032 = vmatprep.subr.bf16.mxu0 %v2541
  %4033 = vmatpush1.bf16.msra.mxu0 %v2540
  %4034 = vmatprep.subr.bf16.mxu0 %v2545
  %4035 = vmatpush1.bf16.msra.mxu0 %v2544
  %4036 = vmatprep.subr.bf16.mxu0 %v2549
  %4037 = vmatpush1.bf16.msra.mxu0 %v2548
  %4038 = vmatprep.subr.bf16.mxu0 %v2553
  %4039 = vmatpush1.bf16.msra.mxu0 %v2552
  %4040 = vmatprep.mubr.bf16.mxu0 %v665
  %4041 = vmatmul.mubr.bf16.gmra.mrb[0].mxu0 %v664
  %v4042 = vpop.f32.mrb[0].mxu0
  %v4043 = vadd.f32 %v4000, %v4042
  %v4044 = vpop.f32.mrb[0].mxu0
  %v4045 = vadd.f32 %v4002, %v4044
  %v4046 = vpop.f32.mrb[0].mxu0
  %v4047 = vadd.f32 %v4004, %v4046
  %v4048 = vpop.f32.mrb[0].mxu0
  %v4049 = vadd.f32 %v4006, %v4048
  %4050 = vdwg.mxu0
  %4051 = vmatprep.subr.bf16.mxu0 %v2557
  %4052 = vmatpush1.bf16.msra.mxu0 %v2556
  %4053 = vmatprep.subr.bf16.mxu0 %v2561
  %4054 = vmatpush1.bf16.msra.mxu0 %v2560
  %4055 = vmatprep.subr.bf16.mxu0 %v2565
  %4056 = vmatpush1.bf16.msra.mxu0 %v2564
  %4057 = vmatprep.subr.bf16.mxu0 %v2569
  %4058 = vmatpush1.bf16.msra.mxu0 %v2568
  %4059 = vmatprep.subr.bf16.mxu0 %v2573
  %4060 = vmatpush1.bf16.msra.mxu0 %v2572
  %4061 = vmatprep.subr.bf16.mxu0 %v2577
  %4062 = vmatpush1.bf16.msra.mxu0 %v2576
  %4063 = vmatprep.subr.bf16.mxu0 %v2581
  %4064 = vmatpush1.bf16.msra.mxu0 %v2580
  %4065 = vmatprep.subr.bf16.mxu0 %v2585
  %4066 = vmatpush1.bf16.msra.mxu0 %v2584
  %4067 = vmatprep.subr.bf16.mxu0 %v2589
  %4068 = vmatpush1.bf16.msra.mxu0 %v2588
  %4069 = vmatprep.subr.bf16.mxu0 %v2593
  %4070 = vmatpush1.bf16.msra.mxu0 %v2592
  %4071 = vmatprep.subr.bf16.mxu0 %v2597
  %4072 = vmatpush1.bf16.msra.mxu0 %v2596
  %4073 = vmatprep.subr.bf16.mxu0 %v2601
  %4074 = vmatpush1.bf16.msra.mxu0 %v2600
  %4075 = vmatprep.subr.bf16.mxu0 %v2605
  %4076 = vmatpush1.bf16.msra.mxu0 %v2604
  %4077 = vmatprep.subr.bf16.mxu0 %v2609
  %4078 = vmatpush1.bf16.msra.mxu0 %v2608
  %4079 = vmatprep.subr.bf16.mxu0 %v2613
  %4080 = vmatpush1.bf16.msra.mxu0 %v2612
  %4081 = vmatprep.subr.bf16.mxu0 %v2617
  %4082 = vmatpush1.bf16.msra.mxu0 %v2616
  %4083 = vmatprep.mubr.bf16.mxu0 %v667
  %4084 = vmatmul.mubr.bf16.gmra.mrb[0].mxu0 %v666
  %v4085 = vpop.f32.mrb[0].mxu0
  %v4086 = vadd.f32 %v4043, %v4085
  %v4087 = vpop.f32.mrb[0].mxu0
  %v4088 = vadd.f32 %v4045, %v4087
  %v4089 = vpop.f32.mrb[0].mxu0
  %v4090 = vadd.f32 %v4047, %v4089
  %v4091 = vpop.f32.mrb[0].mxu0
  %v4092 = vadd.f32 %v4049, %v4091
  %4093 = vdwg.mxu0
  %4094 = vmatprep.subr.bf16.mxu0 %v2621
  %4095 = vmatpush1.bf16.msra.mxu0 %v2620
  %4096 = vmatprep.subr.bf16.mxu0 %v2625
  %4097 = vmatpush1.bf16.msra.mxu0 %v2624
  %4098 = vmatprep.subr.bf16.mxu0 %v2629
  %4099 = vmatpush1.bf16.msra.mxu0 %v2628
  %4100 = vmatprep.subr.bf16.mxu0 %v2633
  %4101 = vmatpush1.bf16.msra.mxu0 %v2632
  %4102 = vmatprep.subr.bf16.mxu0 %v2637
  %4103 = vmatpush1.bf16.msra.mxu0 %v2636
  %4104 = vmatprep.subr.bf16.mxu0 %v2641
  %4105 = vmatpush1.bf16.msra.mxu0 %v2640
  %4106 = vmatprep.subr.bf16.mxu0 %v2645
  %4107 = vmatpush1.bf16.msra.mxu0 %v2644
  %4108 = vmatprep.subr.bf16.mxu0 %v2649
  %4109 = vmatpush1.bf16.msra.mxu0 %v2648
  %4110 = vmatprep.subr.bf16.mxu0 %v2653
  %4111 = vmatpush1.bf16.msra.mxu0 %v2652
  %4112 = vmatprep.subr.bf16.mxu0 %v2657
  %4113 = vmatpush1.bf16.msra.mxu0 %v2656
  %4114 = vmatprep.subr.bf16.mxu0 %v2661
  %4115 = vmatpush1.bf16.msra.mxu0 %v2660
  %4116 = vmatprep.subr.bf16.mxu0 %v2665
  %4117 = vmatpush1.bf16.msra.mxu0 %v2664
  %4118 = vmatprep.subr.bf16.mxu0 %v2669
  %4119 = vmatpush1.bf16.msra.mxu0 %v2668
  %4120 = vmatprep.subr.bf16.mxu0 %v2673
  %4121 = vmatpush1.bf16.msra.mxu0 %v2672
  %4122 = vmatprep.subr.bf16.mxu0 %v2677
  %4123 = vmatpush1.bf16.msra.mxu0 %v2676
  %4124 = vmatprep.subr.bf16.mxu0 %v2681
  %4125 = vmatpush1.bf16.msra.mxu0 %v2680
  %4126 = vmatprep.mubr.bf16.mxu0 %v669
  %4127 = vmatmul.mubr.bf16.gmra.mrb[0].mxu0 %v668
  %v4128 = vpop.f32.mrb[0].mxu0
  %v4129 = vadd.f32 %v4086, %v4128
  %v4130 = vpop.f32.mrb[0].mxu0
  %v4131 = vadd.f32 %v4088, %v4130
  %v4132 = vpop.f32.mrb[0].mxu0
  %v4133 = vadd.f32 %v4090, %v4132
  %v4134 = vpop.f32.mrb[0].mxu0
  %v4135 = vadd.f32 %v4092, %v4134
  %4136 = vdwg.mxu0
  %4137 = vmatprep.subr.bf16.mxu0 %v2685
  %4138 = vmatpush1.bf16.msra.mxu0 %v2684
  %4139 = vmatprep.subr.bf16.mxu0 %v2689
  %4140 = vmatpush1.bf16.msra.mxu0 %v2688
  %4141 = vmatprep.subr.bf16.mxu0 %v2693
  %4142 = vmatpush1.bf16.msra.mxu0 %v2692
  %4143 = vmatprep.subr.bf16.mxu0 %v2697
  %4144 = vmatpush1.bf16.msra.mxu0 %v2696
  %4145 = vmatprep.subr.bf16.mxu0 %v2701
  %4146 = vmatpush1.bf16.msra.mxu0 %v2700
  %4147 = vmatprep.subr.bf16.mxu0 %v2705
  %4148 = vmatpush1.bf16.msra.mxu0 %v2704
  %4149 = vmatprep.subr.bf16.mxu0 %v2709
  %4150 = vmatpush1.bf16.msra.mxu0 %v2708
  %4151 = vmatprep.subr.bf16.mxu0 %v2713
  %4152 = vmatpush1.bf16.msra.mxu0 %v2712
  %4153 = vmatprep.subr.bf16.mxu0 %v2717
  %4154 = vmatpush1.bf16.msra.mxu0 %v2716
  %4155 = vmatprep.subr.bf16.mxu0 %v2721
  %4156 = vmatpush1.bf16.msra.mxu0 %v2720
  %4157 = vmatprep.subr.bf16.mxu0 %v2725
  %4158 = vmatpush1.bf16.msra.mxu0 %v2724
  %4159 = vmatprep.subr.bf16.mxu0 %v2729
  %4160 = vmatpush1.bf16.msra.mxu0 %v2728
  %4161 = vmatprep.subr.bf16.mxu0 %v2733
  %4162 = vmatpush1.bf16.msra.mxu0 %v2732
  %4163 = vmatprep.subr.bf16.mxu0 %v2737
  %4164 = vmatpush1.bf16.msra.mxu0 %v2736
  %4165 = vmatprep.subr.bf16.mxu0 %v2741
  %4166 = vmatpush1.bf16.msra.mxu0 %v2740
  %4167 = vmatprep.subr.bf16.mxu0 %v2745
  %4168 = vmatpush1.bf16.msra.mxu0 %v2744
  %4169 = vmatprep.mubr.bf16.mxu0 %v671
  %4170 = vmatmul.mubr.bf16.gmra.mrb[0].mxu0 %v670
  %v4171 = vpop.f32.mrb[0].mxu0
  %v4172 = vadd.f32 %v4129, %v4171
  %v4173 = vpop.f32.mrb[0].mxu0
  %v4174 = vadd.f32 %v4131, %v4173
  %v4175 = vpop.f32.mrb[0].mxu0
  %v4176 = vadd.f32 %v4133, %v4175
  %v4177 = vpop.f32.mrb[0].mxu0
  %v4178 = vadd.f32 %v4135, %v4177
  %4179 = vdwg.mxu0
  %4180 = vmatprep.subr.bf16.mxu0 %v2749
  %4181 = vmatpush1.bf16.msra.mxu0 %v2748
  %4182 = vmatprep.subr.bf16.mxu0 %v2753
  %4183 = vmatpush1.bf16.msra.mxu0 %v2752
  %4184 = vmatprep.subr.bf16.mxu0 %v2757
  %4185 = vmatpush1.bf16.msra.mxu0 %v2756
  %4186 = vmatprep.subr.bf16.mxu0 %v2761
  %4187 = vmatpush1.bf16.msra.mxu0 %v2760
  %4188 = vmatprep.subr.bf16.mxu0 %v2765
  %4189 = vmatpush1.bf16.msra.mxu0 %v2764
  %4190 = vmatprep.subr.bf16.mxu0 %v2769
  %4191 = vmatpush1.bf16.msra.mxu0 %v2768
  %4192 = vmatprep.subr.bf16.mxu0 %v2773
  %4193 = vmatpush1.bf16.msra.mxu0 %v2772
  %4194 = vmatprep.subr.bf16.mxu0 %v2777
  %4195 = vmatpush1.bf16.msra.mxu0 %v2776
  %4196 = vmatprep.subr.bf16.mxu0 %v2781
  %4197 = vmatpush1.bf16.msra.mxu0 %v2780
  %4198 = vmatprep.subr.bf16.mxu0 %v2785
  %4199 = vmatpush1.bf16.msra.mxu0 %v2784
  %4200 = vmatprep.subr.bf16.mxu0 %v2789
  %4201 = vmatpush1.bf16.msra.mxu0 %v2788
  %4202 = vmatprep.subr.bf16.mxu0 %v2793
  %4203 = vmatpush1.bf16.msra.mxu0 %v2792
  %4204 = vmatprep.subr.bf16.mxu0 %v2797
  %4205 = vmatpush1.bf16.msra.mxu0 %v2796
  %4206 = vmatprep.subr.bf16.mxu0 %v2801
  %4207 = vmatpush1.bf16.msra.mxu0 %v2800
  %4208 = vmatprep.subr.bf16.mxu0 %v2805
  %4209 = vmatpush1.bf16.msra.mxu0 %v2804
  %4210 = vmatprep.subr.bf16.mxu0 %v2809
  %4211 = vmatpush1.bf16.msra.mxu0 %v2808
  %4212 = vmatprep.mubr.bf16.mxu0 %v673
  %4213 = vmatmul.mubr.bf16.gmra.mrb[0].mxu0 %v672
  %v4214 = vpop.f32.mrb[0].mxu0
  %v4215 = vadd.f32 %v4172, %v4214
  %v4216 = vpop.f32.mrb[0].mxu0
  %v4217 = vadd.f32 %v4174, %v4216
  %v4218 = vpop.f32.mrb[0].mxu0
  %v4219 = vadd.f32 %v4176, %v4218
  %v4220 = vpop.f32.mrb[0].mxu0
  %v4221 = vadd.f32 %v4178, %v4220
  %4222 = vdwg.mxu0
  %4223 = vmatprep.subr.bf16.mxu0 %v2813
  %4224 = vmatpush1.bf16.msra.mxu0 %v2812
  %4225 = vmatprep.subr.bf16.mxu0 %v2817
  %4226 = vmatpush1.bf16.msra.mxu0 %v2816
  %4227 = vmatprep.subr.bf16.mxu0 %v2821
  %4228 = vmatpush1.bf16.msra.mxu0 %v2820
  %4229 = vmatprep.subr.bf16.mxu0 %v2825
  %4230 = vmatpush1.bf16.msra.mxu0 %v2824
  %4231 = vmatprep.subr.bf16.mxu0 %v2829
  %4232 = vmatpush1.bf16.msra.mxu0 %v2828
  %4233 = vmatprep.subr.bf16.mxu0 %v2833
  %4234 = vmatpush1.bf16.msra.mxu0 %v2832
  %4235 = vmatprep.subr.bf16.mxu0 %v2837
  %4236 = vmatpush1.bf16.msra.mxu0 %v2836
  %4237 = vmatprep.subr.bf16.mxu0 %v2841
  %4238 = vmatpush1.bf16.msra.mxu0 %v2840
  %4239 = vmatprep.subr.bf16.mxu0 %v2845
  %4240 = vmatpush1.bf16.msra.mxu0 %v2844
  %4241 = vmatprep.subr.bf16.mxu0 %v2849
  %4242 = vmatpush1.bf16.msra.mxu0 %v2848
  %4243 = vmatprep.subr.bf16.mxu0 %v2853
  %4244 = vmatpush1.bf16.msra.mxu0 %v2852
  %4245 = vmatprep.subr.bf16.mxu0 %v2857
  %4246 = vmatpush1.bf16.msra.mxu0 %v2856
  %4247 = vmatprep.subr.bf16.mxu0 %v2861
  %4248 = vmatpush1.bf16.msra.mxu0 %v2860
  %4249 = vmatprep.subr.bf16.mxu0 %v2865
  %4250 = vmatpush1.bf16.msra.mxu0 %v2864
  %4251 = vmatprep.subr.bf16.mxu0 %v2869
  %4252 = vmatpush1.bf16.msra.mxu0 %v2868
  %4253 = vmatprep.subr.bf16.mxu0 %v2873
  %4254 = vmatpush1.bf16.msra.mxu0 %v2872
  %4255 = vmatprep.mubr.bf16.mxu0 %v675
  %4256 = vmatmul.mubr.bf16.gmra.mrb[0].mxu0 %v674
  %v4257 = vpop.f32.mrb[0].mxu0
  %v4258 = vadd.f32 %v4215, %v4257
  %v4259 = vpop.f32.mrb[0].mxu0
  %v4260 = vadd.f32 %v4217, %v4259
  %v4261 = vpop.f32.mrb[0].mxu0
  %v4262 = vadd.f32 %v4219, %v4261
  %v4263 = vpop.f32.mrb[0].mxu0
  %v4264 = vadd.f32 %v4221, %v4263
  %4265 = vdwg.mxu0
  %4266 = vmatprep.subr.bf16.mxu0 %v2877
  %4267 = vmatpush1.bf16.msra.mxu0 %v2876
  %4268 = vmatprep.subr.bf16.mxu0 %v2881
  %4269 = vmatpush1.bf16.msra.mxu0 %v2880
  %4270 = vmatprep.subr.bf16.mxu0 %v2885
  %4271 = vmatpush1.bf16.msra.mxu0 %v2884
  %4272 = vmatprep.subr.bf16.mxu0 %v2889
  %4273 = vmatpush1.bf16.msra.mxu0 %v2888
  %4274 = vmatprep.subr.bf16.mxu0 %v2893
  %4275 = vmatpush1.bf16.msra.mxu0 %v2892
  %4276 = vmatprep.subr.bf16.mxu0 %v2897
  %4277 = vmatpush1.bf16.msra.mxu0 %v2896
  %4278 = vmatprep.subr.bf16.mxu0 %v2901
  %4279 = vmatpush1.bf16.msra.mxu0 %v2900
  %4280 = vmatprep.subr.bf16.mxu0 %v2905
  %4281 = vmatpush1.bf16.msra.mxu0 %v2904
  %4282 = vmatprep.subr.bf16.mxu0 %v2909
  %4283 = vmatpush1.bf16.msra.mxu0 %v2908
  %4284 = vmatprep.subr.bf16.mxu0 %v2913
  %4285 = vmatpush1.bf16.msra.mxu0 %v2912
  %4286 = vmatprep.subr.bf16.mxu0 %v2917
  %4287 = vmatpush1.bf16.msra.mxu0 %v2916
  %4288 = vmatprep.subr.bf16.mxu0 %v2921
  %4289 = vmatpush1.bf16.msra.mxu0 %v2920
  %4290 = vmatprep.subr.bf16.mxu0 %v2925
  %4291 = vmatpush1.bf16.msra.mxu0 %v2924
  %4292 = vmatprep.subr.bf16.mxu0 %v2929
  %4293 = vmatpush1.bf16.msra.mxu0 %v2928
  %4294 = vmatprep.subr.bf16.mxu0 %v2933
  %4295 = vmatpush1.bf16.msra.mxu0 %v2932
  %4296 = vmatprep.subr.bf16.mxu0 %v2937
  %4297 = vmatpush1.bf16.msra.mxu0 %v2936
  %4298 = vmatprep.mubr.bf16.mxu0 %v677
  %4299 = vmatmul.mubr.bf16.gmra.mrb[0].mxu0 %v676
  %v4300 = vpop.f32.mrb[0].mxu0
  %v4301 = vadd.f32 %v4258, %v4300
  %v4302 = vpop.f32.mrb[0].mxu0
  %v4303 = vadd.f32 %v4260, %v4302
  %v4304 = vpop.f32.mrb[0].mxu0
  %v4305 = vadd.f32 %v4262, %v4304
  %v4306 = vpop.f32.mrb[0].mxu0
  %v4307 = vadd.f32 %v4264, %v4306
  %4308 = vdwg.mxu0
  %4309 = vmatprep.subr.bf16.mxu0 %v2941
  %4310 = vmatpush1.bf16.msra.mxu0 %v2940
  %4311 = vmatprep.subr.bf16.mxu0 %v2945
  %4312 = vmatpush1.bf16.msra.mxu0 %v2944
  %4313 = vmatprep.subr.bf16.mxu0 %v2949
  %4314 = vmatpush1.bf16.msra.mxu0 %v2948
  %4315 = vmatprep.subr.bf16.mxu0 %v2953
  %4316 = vmatpush1.bf16.msra.mxu0 %v2952
  %4317 = vmatprep.subr.bf16.mxu0 %v2957
  %4318 = vmatpush1.bf16.msra.mxu0 %v2956
  %4319 = vmatprep.subr.bf16.mxu0 %v2961
  %4320 = vmatpush1.bf16.msra.mxu0 %v2960
  %4321 = vmatprep.subr.bf16.mxu0 %v2965
  %4322 = vmatpush1.bf16.msra.mxu0 %v2964
  %4323 = vmatprep.subr.bf16.mxu0 %v2969
  %4324 = vmatpush1.bf16.msra.mxu0 %v2968
  %4325 = vmatprep.subr.bf16.mxu0 %v2973
  %4326 = vmatpush1.bf16.msra.mxu0 %v2972
  %4327 = vmatprep.subr.bf16.mxu0 %v2977
  %4328 = vmatpush1.bf16.msra.mxu0 %v2976
  %4329 = vmatprep.subr.bf16.mxu0 %v2981
  %4330 = vmatpush1.bf16.msra.mxu0 %v2980
  %4331 = vmatprep.subr.bf16.mxu0 %v2985
  %4332 = vmatpush1.bf16.msra.mxu0 %v2984
  %4333 = vmatprep.subr.bf16.mxu0 %v2989
  %4334 = vmatpush1.bf16.msra.mxu0 %v2988
  %4335 = vmatprep.subr.bf16.mxu0 %v2993
  %4336 = vmatpush1.bf16.msra.mxu0 %v2992
  %4337 = vmatprep.subr.bf16.mxu0 %v2997
  %4338 = vmatpush1.bf16.msra.mxu0 %v2996
  %4339 = vmatprep.subr.bf16.mxu0 %v3001
  %4340 = vmatpush1.bf16.msra.mxu0 %v3000
  %4341 = vmatprep.mubr.bf16.mxu0 %v679
  %4342 = vmatmul.mubr.bf16.gmra.mrb[0].mxu0 %v678
  %v4343 = vpop.f32.mrb[0].mxu0
  %v4344 = vadd.f32 %v4301, %v4343
  %v4345 = vpop.f32.mrb[0].mxu0
  %v4346 = vadd.f32 %v4303, %v4345
  %v4347 = vpop.f32.mrb[0].mxu0
  %v4348 = vadd.f32 %v4305, %v4347
  %v4349 = vpop.f32.mrb[0].mxu0
  %v4350 = vadd.f32 %v4307, %v4349
  %4351 = vdwg.mxu0
  %v4352 = vpack.c.bf16 %v3961, %v3957
  %v4353 = vpack.c.bf16 %v3963, %v3959
  %v4354 = vpack.c.bf16 %v4348, %v4344
  %v4355 = vpack.c.bf16 %v4350, %v4346
  %v4360 = vunpack.c.l.b16 %v4352
  %v4361 = vunpack.c.l.b16 %v4353
  %v4362 = vunpack.c.l.b16 %v4354
  %v4363 = vunpack.c.l.b16 %v4355
  %v4364 = vunpack.c.h.b16 %v4352
  %v4365 = vunpack.c.h.b16 %v4353
  %v4366 = vunpack.c.h.b16 %v4354
  %v4367 = vunpack.c.h.b16 %v4355
  %v4368 = vpack.c.b16 %v4361, %v4360
  %v4369 = vpack.c.b16 %v4363, %v4362
  %v4370 = vpack.c.b16 %v4365, %v4364
  %v4371 = vpack.c.b16 %v4367, %v4366
  %4376 = vst [vmem:[%s2] sm:$0xff] %v4368
  %4377 = vst [vmem:[%s2 + $0x8] sm:$0xff] %v4369
  %4378 = vst [vmem:[%s2 + $0x10] sm:$0xff] %v4370
  %4379 = vst [vmem:[%s2 + $0x18] sm:$0xff] %v4371
  %v4380 = vadd.f32 %v3957, %v3961
  %v4381 = vrot.slane %v4380, 4
  %v4382 = vadd.f32 %v4380, %v4381
  %v4383 = vrot.slane %v4382, 2
  %v4384 = vadd.f32 %v4382, %v4383
  %v4385 = vrot.slane %v4384, 1
  %v4386 = vadd.f32 %v4384, %v4385
  %v4387 = vadd.f32 %v3959, %v3963
  %v4388 = vrot.slane %v4387, 4
  %v4389 = vadd.f32 %v4387, %v4388
  %v4390 = vrot.slane %v4389, 2
  %v4391 = vadd.f32 %v4389, %v4390
  %v4392 = vrot.slane %v4391, 1
  %v4393 = vadd.f32 %v4391, %v4392
  %v4394 = vadd.f32 %v4344, %v4348
  %v4395 = vrot.slane %v4394, 4
  %v4396 = vadd.f32 %v4394, %v4395
  %v4397 = vrot.slane %v4396, 2
  %v4398 = vadd.f32 %v4396, %v4397
  %v4399 = vrot.slane %v4398, 1
  %v4400 = vadd.f32 %v4398, %v4399
  %v4401 = vadd.f32 %v4346, %v4350
  %v4402 = vrot.slane %v4401, 4
  %v4403 = vadd.f32 %v4401, %v4402
  %v4404 = vrot.slane %v4403, 2
  %v4405 = vadd.f32 %v4403, %v4404
  %v4406 = vrot.slane %v4405, 1
  %v4407 = vadd.f32 %v4405, %v4406
  %v4412 = vcombine.low %v4386, %v4393
  %v4413 = vcombine.low %v4400, %v4407
  %v4415 = vunpack.c.l.s4 1966171168
  %v4416 = vunpack.c.0.s8 %v4415
  %v4417 = vlaneseq
  %v4418 = vshrl.u32 %v4417, 7
  %v4419 = vsub.s32 %v4416, %v4418
  %v4420 = vrot.slane %v4412, %v4419
  %v4422 = vunpack.c.l.s4 1966171168
  %v4423 = vunpack.c.0.s8 %v4422
  %v4424 = vlaneseq
  %v4425 = vshrl.u32 %v4424, 7
  %v4426 = vsub.s32 %v4423, %v4425
  %v4427 = vrot.slane %v4413, %v4426
  %v4428 = vcombine.low %v4420, %v4427
  %v4430 = vunpack.c.l.s4 1966171168
  %v4431 = vunpack.c.0.s8 %v4430
  %v4432 = vlaneseq
  %v4433 = vshrl.u32 %v4432, 7
  %v4434 = vsub.s32 %v4431, %v4433
  %v4435 = vrot.slane %v4428, %v4434
  %v4437 = vlaneseq
  %vm4438 = vcmp.ge.s32.totalorder %v4437, 0
  %vm4439 = vcmp.lt.s32.totalorder %v4437, 512
  %vm4440 = vmand %vm4438, %vm4439
  %4441 = vst.msk [vmem:[%s3] sm:$0xf] %vm4440, %v4435
  %v4442 = vmul.f32 %v3957, %v3957
  %v4443 = vmul.f32 %v3959, %v3959
  %v4444 = vmul.f32 %v4344, %v4344
  %v4445 = vmul.f32 %v4346, %v4346
  %v4446 = vmul.f32 %v3961, %v3961
  %v4447 = vmul.f32 %v3963, %v3963
  %v4448 = vmul.f32 %v4348, %v4348
  %v4449 = vmul.f32 %v4350, %v4350
  %v4450 = vadd.f32 %v4442, %v4446
  %v4451 = vrot.slane %v4450, 4
  %v4452 = vadd.f32 %v4450, %v4451
  %v4453 = vrot.slane %v4452, 2
  %v4454 = vadd.f32 %v4452, %v4453
  %v4455 = vrot.slane %v4454, 1
  %v4456 = vadd.f32 %v4454, %v4455
  %v4457 = vadd.f32 %v4443, %v4447
  %v4458 = vrot.slane %v4457, 4
  %v4459 = vadd.f32 %v4457, %v4458
  %v4460 = vrot.slane %v4459, 2
  %v4461 = vadd.f32 %v4459, %v4460
  %v4462 = vrot.slane %v4461, 1
  %v4463 = vadd.f32 %v4461, %v4462
  %v4464 = vadd.f32 %v4444, %v4448
  %v4465 = vrot.slane %v4464, 4
  %v4466 = vadd.f32 %v4464, %v4465
  %v4467 = vrot.slane %v4466, 2
  %v4468 = vadd.f32 %v4466, %v4467
  %v4469 = vrot.slane %v4468, 1
  %v4470 = vadd.f32 %v4468, %v4469
  %v4471 = vadd.f32 %v4445, %v4449
  %v4472 = vrot.slane %v4471, 4
  %v4473 = vadd.f32 %v4471, %v4472
  %v4474 = vrot.slane %v4473, 2
  %v4475 = vadd.f32 %v4473, %v4474
  %v4476 = vrot.slane %v4475, 1
  %v4477 = vadd.f32 %v4475, %v4476
  %v4482 = vcombine.low %v4456, %v4463
  %v4483 = vcombine.low %v4470, %v4477
  %v4485 = vunpack.c.l.s4 1966171168
  %v4486 = vunpack.c.0.s8 %v4485
  %v4487 = vlaneseq
  %v4488 = vshrl.u32 %v4487, 7
  %v4489 = vsub.s32 %v4486, %v4488
  %v4490 = vrot.slane %v4482, %v4489
  %v4492 = vunpack.c.l.s4 1966171168
  %v4493 = vunpack.c.0.s8 %v4492
  %v4494 = vlaneseq
  %v4495 = vshrl.u32 %v4494, 7
  %v4496 = vsub.s32 %v4493, %v4495
  %v4497 = vrot.slane %v4483, %v4496
  %v4498 = vcombine.low %v4490, %v4497
  %v4500 = vunpack.c.l.s4 1966171168
  %v4501 = vunpack.c.0.s8 %v4500
  %v4502 = vlaneseq
  %v4503 = vshrl.u32 %v4502, 7
  %v4504 = vsub.s32 %v4501, %v4503
  %v4505 = vrot.slane %v4498, %v4504
  %4507 = vst.msk [vmem:[%s4] sm:$0xf] %vm4440, %v4505
  // Predicated region
  $region10: #{simple_hrnet_forward.14} parent=0 // pred_check
    _
  $region11: #{simple_hrnet_forward.14} parent=0 // pred_check_branch
    %4509 = sbr.rel (0) target = $region13
  $region12: #{simple_hrnet_forward.14} parent=0 // pred_region
    _
  $region13: #{simple_hrnet_forward.14} parent=0 // pred_fallthru
    _
  // Predicated region
  $region14: #{simple_hrnet_forward.14} parent=0 // pred_check
    _
  $region15: #{simple_hrnet_forward.14} parent=0 // pred_check_branch
    %4511 = sbr.rel (0) target = $region17
  $region16: #{simple_hrnet_forward.14} parent=0 // pred_region
    _
  $region17: #{simple_hrnet_forward.14} parent=0 // pred_fallthru
    _
  // Predicated region
  $region18: #{simple_hrnet_forward.14} parent=0 // pred_check
    _
  $region19: #{simple_hrnet_forward.14} parent=0 // pred_check_branch
    %4513 = sbr.rel (0) target = $region21
  $region20: #{simple_hrnet_forward.14} parent=0 // pred_region
    _
  $region21: #{simple_hrnet_forward.14} parent=0 // pred_fallthru
    _
  // Predicated region
  $region22: #{simple_hrnet_forward.14} parent=0 // pred_check
    _
  $region23: #{simple_hrnet_forward.14} parent=0 // pred_check_branch
    %4515 = sbr.rel (0) target = $region25
  $region24: #{simple_hrnet_forward.14} parent=0 // pred_region
    _
  $region25: #{simple_hrnet_forward.14} parent=0 // pred_fallthru
    _
  // Predicated region
  $region26: #{simple_hrnet_forward.14} parent=0 // pred_check
    _
  $region27: #{simple_hrnet_forward.14} parent=0 // pred_check_branch
    %4517 = sbr.rel (0) target = $region29
  $region28: #{simple_hrnet_forward.14} parent=0 // pred_region
    _
  $region29: #{simple_hrnet_forward.14} parent=0 // pred_fallthru
    _
  // Predicated region
  $region30: #{simple_hrnet_forward.14} parent=0 // pred_check
    _
  $region31: #{simple_hrnet_forward.14} parent=0 // pred_check_branch
    %4519 = sbr.rel (0) target = $region33
  $region32: #{simple_hrnet_forward.14} parent=0 // pred_region
    _
  $region33: #{simple_hrnet_forward.14} parent=0 // pred_fallthru
    _

</llo_original>
